<compile_context>
chip_gen: v6e
topology: v6e:2x2x1
jax: 0.10.0
libtpu: 0.0.40
codegen_flags: <defaults>
</compile_context>

<pallas_src>
import functools

import jax
import jax.numpy as jnp
from jax import lax
from jax.experimental import pallas as pl
from jax.experimental.pallas import tpu as pltpu

# ---- configuration matching the module's __init__ args ----------------------
SPATIAL = True
MD_S = 1
MD_R = 64
TRAIN_STEPS = 6
EVAL_STEPS = 7
INV_T = 100.0
ETA = 0.9            # unused by the forward pass (only the VQ/CD variants use it)
RAND_INIT = True
RETURN_BASES = False
EPS = 1e-6

MXU_DTYPE = jnp.bfloat16   # MXU operand dtype; accumulation/elementwise stay f32


def _mm(a, b):
    """A @ B (contract last dim of A with first of B). bf16 operands, f32 acc."""
    return lax.dot_general(a, b, (((1,), (0,)), ((), ())),
                           preferred_element_type=jnp.float32)


def _mm_tn(a, b):
    """A^T @ B (contract dim 0 of both)."""
    return lax.dot_general(a, b, (((0,), (0,)), ((), ())),
                           preferred_element_type=jnp.float32)


def _mm_nt(a, b):
    """A @ B^T (contract last dim of both)."""
    return lax.dot_general(a, b, (((1,), (1,)), ((), ())),
                           preferred_element_type=jnp.float32)


# ---- Pallas kernel -----------------------------------------------------------
def _nmf_kernel(x_nd_ref, x_dn_ref, bases0_ref, out_ref, *bases_out_refs,
                inv_t, steps):
    # x_nd_ref:   (1, N, D)  bf16  -- x^T, streams N rows on the MXU
    # x_dn_ref:   (1, D, N)  bf16  -- x,   streams D rows on the MXU
    # bases0_ref: (1, D, R)  f32
    # out_ref:    (1, D, N)
    # optional bases_out_refs[0]: (1, R, D)   (lane-dense; wrapper transposes back)
    x_nd = x_nd_ref[0]
    x_dn = x_dn_ref[0]
    bases = bases0_ref[0].astype(jnp.float32)          # (D, R)
    bases_bf = bases.astype(MXU_DTYPE)

    # ---- init: coef = softmax(INV_T * (x^T @ bases), dim=-1) -----------------
    num_c = _mm(x_nd, bases_bf)                         # (N, R) f32
    m = jnp.max(num_c, axis=-1, keepdims=True)
    e = jnp.exp(inv_t * (num_c - m))                    # INV_T fused into exp arg
    coef = e / jnp.sum(e, axis=-1, keepdims=True)       # exact divide (accuracy)
    coef_bf = coef.astype(MXU_DTYPE)

    def coef_update(coef, coef_bf, bases_bf, num_c, *, exact):
        # coef <- coef * (x^T bases) / (coef (bases^T bases) + eps)
        btb = _mm_tn(bases_bf, bases_bf)                # (R, R)
        den = _mm(coef_bf, btb.astype(MXU_DTYPE))       # (N, R), streams N
        if exact:
            coef = coef * num_c / (den + EPS)
        else:
            coef = coef * num_c * pl.reciprocal(den + EPS, approx=True)
        return coef, coef.astype(MXU_DTYPE)

    # local_inference loop (static unroll; `steps` is a compile-time constant)
    for step in range(steps):
        if step > 0:                                    # step 0 reuses softmax logits
            num_c = _mm(x_nd, bases_bf)
        coef, coef_bf = coef_update(coef, coef_bf, bases_bf, num_c, exact=False)
        # bases <- bases * (x coef) / (bases (coef^T coef) + eps)
        num_b = _mm(x_dn, coef_bf)                      # (D, R), streams D
        ctc = _mm_tn(coef_bf, coef_bf)                  # (R, R)
        den_b = _mm(bases_bf, ctc.astype(MXU_DTYPE))    # (D, R)
        bases = bases * num_b * pl.reciprocal(den_b + EPS, approx=True)
        bases_bf = bases.astype(MXU_DTYPE)

    # ---- compute_coef: final multiplicative coef update (exact divide) -------
    num_c = _mm(x_nd, bases_bf)
    coef, coef_bf = coef_update(coef, coef_bf, bases_bf, num_c, exact=True)

    # ---- x_rec = bases @ coef^T : (D, N), lane-dense writeback ----------------
    out_ref[0] = _mm_nt(bases_bf, coef_bf).astype(out_ref.dtype)
    if bases_out_refs:
        bases_out_refs[0][0] = bases.T.astype(bases_out_refs[0].dtype)   # (R, D)


# ---- wrapper -----------------------------------------------------------------
def matrix_decomposition_2d(x_nchw, bases_init, *, training=True,
                            return_bases=RETURN_BASES, out_dtype=None):
    """Forward pass of _MatrixDecomposition2DBase (NMF2D concretization).

    x_nchw:     (B, C, H, W) float32
    bases_init: (B * MD_S, D, MD_R) float32  (the RAND_INIT bases)
    out_dtype:  None -> match x (f32, module semantics); pass jnp.bfloat16 to
                halve writeback traffic / output VMEM if the consumer allows it.
    """
    B, C, H, W = x_nchw.shape
    S, R = MD_S, MD_R
    if SPATIAL:
        D = C // S
        N = H * W
        x_dn = x_nchw.reshape(B * S, D, N)
    else:
        # TODO(synk): non-SPATIAL branch implemented but not exercised by the
        # module's default args (SPATIAL=True).
        D = H * W
        N = C // S
        x_dn = jnp.swapaxes(x_nchw.reshape(B * S, N, D), 1, 2)

    BS = B * S
    steps = TRAIN_STEPS if training else EVAL_STEPS
    out_dtype = jnp.dtype(x_nchw.dtype) if out_dtype is None else jnp.dtype(out_dtype)

    # x in both orientations, bf16 MXU operands (f32 accumulate in-kernel).
    x_dn_bf = x_dn.astype(MXU_DTYPE)
    x_nd_bf = jnp.swapaxes(x_dn, 1, 2).astype(MXU_DTYPE)

    kernel = functools.partial(_nmf_kernel, inv_t=INV_T, steps=steps)

    out_shape = [jax.ShapeDtypeStruct((BS, D, N), out_dtype)]
    out_specs = [pl.BlockSpec((1, D, N), lambda b: (b, 0, 0))]
    if return_bases:
        out_shape.append(jax.ShapeDtypeStruct((BS, R, D), x_nchw.dtype))
        out_specs.append(pl.BlockSpec((1, R, D), lambda b: (b, 0, 0)))

    # One buffer set per grid step; explicit scoped-VMEM limit so the kernel
    # also compiles at real SegNeXt sizes (D=512, N=4096) on every chip.
    block_bytes = 2 * N * D * 2 + D * R * 4 + D * N * out_dtype.itemsize
    vmem_limit = int(min(64 * 2**20, max(32 * 2**20, 4 * block_bytes)))

    # Advisory cost estimate so XLA schedules neighbours around a long kernel.
    macs_iter = 2 * N * D * R + 2 * N * R * R + 2 * D * R * R
    macs_chain = steps * macs_iter + 3 * N * D * R + N * R * R + D * R * R
    cost = pl.CostEstimate(
        flops=int(2 * BS * macs_chain),
        transcendentals=int(BS * (N * R + (steps + 1) * (N * R + D * R))),
        bytes_accessed=int(BS * block_bytes),
    )

    outs = pl.pallas_call(
        kernel,
        out_shape=tuple(out_shape),
        grid_spec=pltpu.PrefetchScalarGridSpec(
            num_scalar_prefetch=0,
            grid=(BS,),                       # one chain per step; fills both v7x TCs
            in_specs=[
                pl.BlockSpec((1, N, D), lambda b: (b, 0, 0)),
                pl.BlockSpec((1, D, N), lambda b: (b, 0, 0)),
                pl.BlockSpec((1, D, R), lambda b: (b, 0, 0)),
            ],
            out_specs=tuple(out_specs),
        ),
        compiler_params=pltpu.CompilerParams(
            dimension_semantics=("parallel",),
            vmem_limit_bytes=vmem_limit),
        cost_estimate=cost,
    )(x_nd_bf, x_dn_bf, bases_init)

    out = outs[0]
    if SPATIAL:
        x_out = out.reshape(B, C, H, W)
    else:
        x_out = jnp.swapaxes(out, 1, 2).reshape(B, C, H, W)
    if return_bases:
        bases_out = jnp.swapaxes(outs[1], 1, 2).reshape(B, S, D, R)
        return x_out, bases_out
    return x_out


def build_bases(key, batch_size, S, D, R):
    """NMF2D._build_bases: uniform[0,1) then L2-normalize along the D axis."""
    bases = jax.random.uniform(key, (batch_size * S, D, R), dtype=jnp.float32)
    norm = jnp.sqrt(jnp.sum(bases * bases, axis=1, keepdims=True))
    return bases / jnp.maximum(norm, 1e-12)


# ---- main --------------------------------------------------------------------
if __name__ == "__main__":
    key = jax.random.PRNGKey(0)
    kx, kb = jax.random.split(key)

    B, C, H, W = 2, 128, 16, 16   # D = C // MD_S = 128, N = H*W = 256, R = 64
    # Non-negative activations (in SegNeXt a ReLU precedes the decomposition).
    x = jax.random.uniform(kx, (B, C, H, W), dtype=jnp.float32)
    bases0 = build_bases(kb, B, MD_S, C // MD_S, MD_R)

    y = matrix_decomposition_2d(x, bases0, training=True)
    y = jax.block_until_ready(y)
    assert y.shape == (B, C, H, W) and y.dtype == jnp.float32
    assert bool(jnp.all(jnp.isfinite(y)))
    print("KERNEL_OK")
</pallas_src>

<mosaic_0001>
module attributes {stable_mosaic.version = 11 : i64} {
  func.func @_nmf_kernel(%arg0: i32, %arg1: memref<1x256x128xbf16, #tpu.memory_space<vmem>>, %arg2: memref<1x128x256xbf16, #tpu.memory_space<vmem>>, %arg3: memref<1x128x64xf32, #tpu.memory_space<vmem>>, %arg4: memref<1x128x256xf32, #tpu.memory_space<vmem>>) attributes {dimension_semantics = [#tpu.dimension_semantics<parallel>], iteration_bounds = array<i64: 2>, scalar_prefetch = 0 : i64, scratch_operands = 0 : i64, tpu.core_type = #tpu.core_type<tc>, window_params = [{transform_indices = @transform_0, window_bounds = array<i64: 1, 256, 128>}, {transform_indices = @transform_1, window_bounds = array<i64: 1, 128, 256>}, {transform_indices = @transform_2, window_bounds = array<i64: 1, 128, 64>}, {transform_indices = @transform_3, window_bounds = array<i64: 1, 128, 256>}]} {
    %c0 = arith.constant 0 : index
    %c0_0 = arith.constant 0 : index
    %c0_1 = arith.constant 0 : index
    %0 = vector.load %arg1[%c0, %c0_0, %c0_1] : memref<1x256x128xbf16, #tpu.memory_space<vmem>>, vector<1x256x128xbf16>
    %1 = vector.shape_cast %0 : vector<1x256x128xbf16> to vector<256x128xbf16>
    %c0_2 = arith.constant 0 : index
    %c0_3 = arith.constant 0 : index
    %c0_4 = arith.constant 0 : index
    %2 = vector.load %arg2[%c0_2, %c0_3, %c0_4] : memref<1x128x256xbf16, #tpu.memory_space<vmem>>, vector<1x128x256xbf16>
    %3 = vector.shape_cast %2 : vector<1x128x256xbf16> to vector<128x256xbf16>
    %c0_5 = arith.constant 0 : index
    %c0_6 = arith.constant 0 : index
    %c0_7 = arith.constant 0 : index
    %4 = vector.load %arg3[%c0_5, %c0_6, %c0_7] : memref<1x128x64xf32, #tpu.memory_space<vmem>>, vector<1x128x64xf32>
    %5 = vector.shape_cast %4 : vector<1x128x64xf32> to vector<128x64xf32>
    %6 = arith.truncf %5 : vector<128x64xf32> to vector<128x64xbf16>
    %cst = arith.constant dense<0.000000e+00> : vector<256x64xf32>
    %7 = tpu.matmul %1, %6, %cst {dimension_numbers = #tpu.dot_dimension_numbers<[1], [0], [0], [1], [0, 0, 1, 1], [], []>} : vector<256x128xbf16>, vector<128x64xbf16>, vector<256x64xf32> -> vector<256x64xf32>
    %cst_8 = arith.constant dense<0xFF800000> : vector<256xf32>
    %8 = vector.multi_reduction <maximumf>, %7, %cst_8 [1] : vector<256x64xf32> to vector<256xf32>
    %9 = vector.shape_cast %8 : vector<256xf32> to vector<256x1xf32>
    %10 = vector.broadcast %9 : vector<256x1xf32> to vector<256x64xf32>
    %11 = arith.subf %7, %10 : vector<256x64xf32>
    %cst_9 = arith.constant 1.000000e+02 : f32
    %12 = vector.broadcast %cst_9 : f32 to vector<256x64xf32>
    %13 = arith.mulf %12, %11 : vector<256x64xf32>
    %14 = math.exp %13 : vector<256x64xf32>
    %cst_10 = arith.constant dense<0.000000e+00> : vector<256xf32>
    %15 = vector.multi_reduction <add>, %14, %cst_10 [1] : vector<256x64xf32> to vector<256xf32>
    %16 = vector.shape_cast %15 : vector<256xf32> to vector<256x1xf32>
    %17 = vector.broadcast %16 : vector<256x1xf32> to vector<256x64xf32>
    %18 = arith.divf %14, %17 : vector<256x64xf32>
    %19 = arith.truncf %18 : vector<256x64xf32> to vector<256x64xbf16>
    %cst_11 = arith.constant dense<0.000000e+00> : vector<64x64xf32>
    %20 = tpu.matmul %6, %6, %cst_11 {dimension_numbers = #tpu.dot_dimension_numbers<[0], [0], [1], [1], [0, 1, 1, 1], [], []>} : vector<128x64xbf16>, vector<128x64xbf16>, vector<64x64xf32> -> vector<64x64xf32>
    %21 = arith.truncf %20 : vector<64x64xf32> to vector<64x64xbf16>
    %cst_12 = arith.constant dense<0.000000e+00> : vector<256x64xf32>
    %22 = tpu.matmul %19, %21, %cst_12 {dimension_numbers = #tpu.dot_dimension_numbers<[1], [0], [0], [1], [0, 0, 1, 1], [], []>} : vector<256x64xbf16>, vector<64x64xbf16>, vector<256x64xf32> -> vector<256x64xf32>
    %23 = arith.mulf %18, %7 : vector<256x64xf32>
    %cst_13 = arith.constant 9.99999997E-7 : f32
    %24 = vector.broadcast %cst_13 : f32 to vector<256x64xf32>
    %25 = arith.addf %22, %24 : vector<256x64xf32>
    %26 = tpu.reciprocal %25 {approx = true} : vector<256x64xf32> -> vector<256x64xf32>
    %27 = arith.mulf %23, %26 : vector<256x64xf32>
    %28 = arith.truncf %27 : vector<256x64xf32> to vector<256x64xbf16>
    %cst_14 = arith.constant dense<0.000000e+00> : vector<128x64xf32>
    %29 = tpu.matmul %3, %28, %cst_14 {dimension_numbers = #tpu.dot_dimension_numbers<[1], [0], [0], [1], [0, 0, 1, 1], [], []>} : vector<128x256xbf16>, vector<256x64xbf16>, vector<128x64xf32> -> vector<128x64xf32>
    %cst_15 = arith.constant dense<0.000000e+00> : vector<64x64xf32>
    %30 = tpu.matmul %28, %28, %cst_15 {dimension_numbers = #tpu.dot_dimension_numbers<[0], [0], [1], [1], [0, 1, 1, 1], [], []>} : vector<256x64xbf16>, vector<256x64xbf16>, vector<64x64xf32> -> vector<64x64xf32>
    %31 = arith.truncf %30 : vector<64x64xf32> to vector<64x64xbf16>
    %cst_16 = arith.constant dense<0.000000e+00> : vector<128x64xf32>
    %32 = tpu.matmul %6, %31, %cst_16 {dimension_numbers = #tpu.dot_dimension_numbers<[1], [0], [0], [1], [0, 0, 1, 1], [], []>} : vector<128x64xbf16>, vector<64x64xbf16>, vector<128x64xf32> -> vector<128x64xf32>
    %33 = arith.mulf %5, %29 : vector<128x64xf32>
    %cst_17 = arith.constant 9.99999997E-7 : f32
    %34 = vector.broadcast %cst_17 : f32 to vector<128x64xf32>
    %35 = arith.addf %32, %34 : vector<128x64xf32>
    %36 = tpu.reciprocal %35 {approx = true} : vector<128x64xf32> -> vector<128x64xf32>
    %37 = arith.mulf %33, %36 : vector<128x64xf32>
    %38 = arith.truncf %37 : vector<128x64xf32> to vector<128x64xbf16>
    %cst_18 = arith.constant dense<0.000000e+00> : vector<256x64xf32>
    %39 = tpu.matmul %1, %38, %cst_18 {dimension_numbers = #tpu.dot_dimension_numbers<[1], [0], [0], [1], [0, 0, 1, 1], [], []>} : vector<256x128xbf16>, vector<128x64xbf16>, vector<256x64xf32> -> vector<256x64xf32>
    %cst_19 = arith.constant dense<0.000000e+00> : vector<64x64xf32>
    %40 = tpu.matmul %38, %38, %cst_19 {dimension_numbers = #tpu.dot_dimension_numbers<[0], [0], [1], [1], [0, 1, 1, 1], [], []>} : vector<128x64xbf16>, vector<128x64xbf16>, vector<64x64xf32> -> vector<64x64xf32>
    %41 = arith.truncf %40 : vector<64x64xf32> to vector<64x64xbf16>
    %cst_20 = arith.constant dense<0.000000e+00> : vector<256x64xf32>
    %42 = tpu.matmul %28, %41, %cst_20 {dimension_numbers = #tpu.dot_dimension_numbers<[1], [0], [0], [1], [0, 0, 1, 1], [], []>} : vector<256x64xbf16>, vector<64x64xbf16>, vector<256x64xf32> -> vector<256x64xf32>
    %43 = arith.mulf %27, %39 : vector<256x64xf32>
    %cst_21 = arith.constant 9.99999997E-7 : f32
    %44 = vector.broadcast %cst_21 : f32 to vector<256x64xf32>
    %45 = arith.addf %42, %44 : vector<256x64xf32>
    %46 = tpu.reciprocal %45 {approx = true} : vector<256x64xf32> -> vector<256x64xf32>
    %47 = arith.mulf %43, %46 : vector<256x64xf32>
    %48 = arith.truncf %47 : vector<256x64xf32> to vector<256x64xbf16>
    %cst_22 = arith.constant dense<0.000000e+00> : vector<128x64xf32>
    %49 = tpu.matmul %3, %48, %cst_22 {dimension_numbers = #tpu.dot_dimension_numbers<[1], [0], [0], [1], [0, 0, 1, 1], [], []>} : vector<128x256xbf16>, vector<256x64xbf16>, vector<128x64xf32> -> vector<128x64xf32>
    %cst_23 = arith.constant dense<0.000000e+00> : vector<64x64xf32>
    %50 = tpu.matmul %48, %48, %cst_23 {dimension_numbers = #tpu.dot_dimension_numbers<[0], [0], [1], [1], [0, 1, 1, 1], [], []>} : vector<256x64xbf16>, vector<256x64xbf16>, vector<64x64xf32> -> vector<64x64xf32>
    %51 = arith.truncf %50 : vector<64x64xf32> to vector<64x64xbf16>
    %cst_24 = arith.constant dense<0.000000e+00> : vector<128x64xf32>
    %52 = tpu.matmul %38, %51, %cst_24 {dimension_numbers = #tpu.dot_dimension_numbers<[1], [0], [0], [1], [0, 0, 1, 1], [], []>} : vector<128x64xbf16>, vector<64x64xbf16>, vector<128x64xf32> -> vector<128x64xf32>
    %53 = arith.mulf %37, %49 : vector<128x64xf32>
    %cst_25 = arith.constant 9.99999997E-7 : f32
    %54 = vector.broadcast %cst_25 : f32 to vector<128x64xf32>
    %55 = arith.addf %52, %54 : vector<128x64xf32>
    %56 = tpu.reciprocal %55 {approx = true} : vector<128x64xf32> -> vector<128x64xf32>
    %57 = arith.mulf %53, %56 : vector<128x64xf32>
    %58 = arith.truncf %57 : vector<128x64xf32> to vector<128x64xbf16>
    %cst_26 = arith.constant dense<0.000000e+00> : vector<256x64xf32>
    %59 = tpu.matmul %1, %58, %cst_26 {dimension_numbers = #tpu.dot_dimension_numbers<[1], [0], [0], [1], [0, 0, 1, 1], [], []>} : vector<256x128xbf16>, vector<128x64xbf16>, vector<256x64xf32> -> vector<256x64xf32>
    %cst_27 = arith.constant dense<0.000000e+00> : vector<64x64xf32>
    %60 = tpu.matmul %58, %58, %cst_27 {dimension_numbers = #tpu.dot_dimension_numbers<[0], [0], [1], [1], [0, 1, 1, 1], [], []>} : vector<128x64xbf16>, vector<128x64xbf16>, vector<64x64xf32> -> vector<64x64xf32>
    %61 = arith.truncf %60 : vector<64x64xf32> to vector<64x64xbf16>
    %cst_28 = arith.constant dense<0.000000e+00> : vector<256x64xf32>
    %62 = tpu.matmul %48, %61, %cst_28 {dimension_numbers = #tpu.dot_dimension_numbers<[1], [0], [0], [1], [0, 0, 1, 1], [], []>} : vector<256x64xbf16>, vector<64x64xbf16>, vector<256x64xf32> -> vector<256x64xf32>
    %63 = arith.mulf %47, %59 : vector<256x64xf32>
    %cst_29 = arith.constant 9.99999997E-7 : f32
    %64 = vector.broadcast %cst_29 : f32 to vector<256x64xf32>
    %65 = arith.addf %62, %64 : vector<256x64xf32>
    %66 = tpu.reciprocal %65 {approx = true} : vector<256x64xf32> -> vector<256x64xf32>
    %67 = arith.mulf %63, %66 : vector<256x64xf32>
    %68 = arith.truncf %67 : vector<256x64xf32> to vector<256x64xbf16>
    %cst_30 = arith.constant dense<0.000000e+00> : vector<128x64xf32>
    %69 = tpu.matmul %3, %68, %cst_30 {dimension_numbers = #tpu.dot_dimension_numbers<[1], [0], [0], [1], [0, 0, 1, 1], [], []>} : vector<128x256xbf16>, vector<256x64xbf16>, vector<128x64xf32> -> vector<128x64xf32>
    %cst_31 = arith.constant dense<0.000000e+00> : vector<64x64xf32>
    %70 = tpu.matmul %68, %68, %cst_31 {dimension_numbers = #tpu.dot_dimension_numbers<[0], [0], [1], [1], [0, 1, 1, 1], [], []>} : vector<256x64xbf16>, vector<256x64xbf16>, vector<64x64xf32> -> vector<64x64xf32>
    %71 = arith.truncf %70 : vector<64x64xf32> to vector<64x64xbf16>
    %cst_32 = arith.constant dense<0.000000e+00> : vector<128x64xf32>
    %72 = tpu.matmul %58, %71, %cst_32 {dimension_numbers = #tpu.dot_dimension_numbers<[1], [0], [0], [1], [0, 0, 1, 1], [], []>} : vector<128x64xbf16>, vector<64x64xbf16>, vector<128x64xf32> -> vector<128x64xf32>
    %73 = arith.mulf %57, %69 : vector<128x64xf32>
    %cst_33 = arith.constant 9.99999997E-7 : f32
    %74 = vector.broadcast %cst_33 : f32 to vector<128x64xf32>
    %75 = arith.addf %72, %74 : vector<128x64xf32>
    %76 = tpu.reciprocal %75 {approx = true} : vector<128x64xf32> -> vector<128x64xf32>
    %77 = arith.mulf %73, %76 : vector<128x64xf32>
    %78 = arith.truncf %77 : vector<128x64xf32> to vector<128x64xbf16>
    %cst_34 = arith.constant dense<0.000000e+00> : vector<256x64xf32>
    %79 = tpu.matmul %1, %78, %cst_34 {dimension_numbers = #tpu.dot_dimension_numbers<[1], [0], [0], [1], [0, 0, 1, 1], [], []>} : vector<256x128xbf16>, vector<128x64xbf16>, vector<256x64xf32> -> vector<256x64xf32>
    %cst_35 = arith.constant dense<0.000000e+00> : vector<64x64xf32>
    %80 = tpu.matmul %78, %78, %cst_35 {dimension_numbers = #tpu.dot_dimension_numbers<[0], [0], [1], [1], [0, 1, 1, 1], [], []>} : vector<128x64xbf16>, vector<128x64xbf16>, vector<64x64xf32> -> vector<64x64xf32>
    %81 = arith.truncf %80 : vector<64x64xf32> to vector<64x64xbf16>
    %cst_36 = arith.constant dense<0.000000e+00> : vector<256x64xf32>
    %82 = tpu.matmul %68, %81, %cst_36 {dimension_numbers = #tpu.dot_dimension_numbers<[1], [0], [0], [1], [0, 0, 1, 1], [], []>} : vector<256x64xbf16>, vector<64x64xbf16>, vector<256x64xf32> -> vector<256x64xf32>
    %83 = arith.mulf %67, %79 : vector<256x64xf32>
    %cst_37 = arith.constant 9.99999997E-7 : f32
    %84 = vector.broadcast %cst_37 : f32 to vector<256x64xf32>
    %85 = arith.addf %82, %84 : vector<256x64xf32>
    %86 = tpu.reciprocal %85 {approx = true} : vector<256x64xf32> -> vector<256x64xf32>
    %87 = arith.mulf %83, %86 : vector<256x64xf32>
    %88 = arith.truncf %87 : vector<256x64xf32> to vector<256x64xbf16>
    %cst_38 = arith.constant dense<0.000000e+00> : vector<128x64xf32>
    %89 = tpu.matmul %3, %88, %cst_38 {dimension_numbers = #tpu.dot_dimension_numbers<[1], [0], [0], [1], [0, 0, 1, 1], [], []>} : vector<128x256xbf16>, vector<256x64xbf16>, vector<128x64xf32> -> vector<128x64xf32>
    %cst_39 = arith.constant dense<0.000000e+00> : vector<64x64xf32>
    %90 = tpu.matmul %88, %88, %cst_39 {dimension_numbers = #tpu.dot_dimension_numbers<[0], [0], [1], [1], [0, 1, 1, 1], [], []>} : vector<256x64xbf16>, vector<256x64xbf16>, vector<64x64xf32> -> vector<64x64xf32>
    %91 = arith.truncf %90 : vector<64x64xf32> to vector<64x64xbf16>
    %cst_40 = arith.constant dense<0.000000e+00> : vector<128x64xf32>
    %92 = tpu.matmul %78, %91, %cst_40 {dimension_numbers = #tpu.dot_dimension_numbers<[1], [0], [0], [1], [0, 0, 1, 1], [], []>} : vector<128x64xbf16>, vector<64x64xbf16>, vector<128x64xf32> -> vector<128x64xf32>
    %93 = arith.mulf %77, %89 : vector<128x64xf32>
    %cst_41 = arith.constant 9.99999997E-7 : f32
    %94 = vector.broadcast %cst_41 : f32 to vector<128x64xf32>
    %95 = arith.addf %92, %94 : vector<128x64xf32>
    %96 = tpu.reciprocal %95 {approx = true} : vector<128x64xf32> -> vector<128x64xf32>
    %97 = arith.mulf %93, %96 : vector<128x64xf32>
    %98 = arith.truncf %97 : vector<128x64xf32> to vector<128x64xbf16>
    %cst_42 = arith.constant dense<0.000000e+00> : vector<256x64xf32>
    %99 = tpu.matmul %1, %98, %cst_42 {dimension_numbers = #tpu.dot_dimension_numbers<[1], [0], [0], [1], [0, 0, 1, 1], [], []>} : vector<256x128xbf16>, vector<128x64xbf16>, vector<256x64xf32> -> vector<256x64xf32>
    %cst_43 = arith.constant dense<0.000000e+00> : vector<64x64xf32>
    %100 = tpu.matmul %98, %98, %cst_43 {dimension_numbers = #tpu.dot_dimension_numbers<[0], [0], [1], [1], [0, 1, 1, 1], [], []>} : vector<128x64xbf16>, vector<128x64xbf16>, vector<64x64xf32> -> vector<64x64xf32>
    %101 = arith.truncf %100 : vector<64x64xf32> to vector<64x64xbf16>
    %cst_44 = arith.constant dense<0.000000e+00> : vector<256x64xf32>
    %102 = tpu.matmul %88, %101, %cst_44 {dimension_numbers = #tpu.dot_dimension_numbers<[1], [0], [0], [1], [0, 0, 1, 1], [], []>} : vector<256x64xbf16>, vector<64x64xbf16>, vector<256x64xf32> -> vector<256x64xf32>
    %103 = arith.mulf %87, %99 : vector<256x64xf32>
    %cst_45 = arith.constant 9.99999997E-7 : f32
    %104 = vector.broadcast %cst_45 : f32 to vector<256x64xf32>
    %105 = arith.addf %102, %104 : vector<256x64xf32>
    %106 = tpu.reciprocal %105 {approx = true} : vector<256x64xf32> -> vector<256x64xf32>
    %107 = arith.mulf %103, %106 : vector<256x64xf32>
    %108 = arith.truncf %107 : vector<256x64xf32> to vector<256x64xbf16>
    %cst_46 = arith.constant dense<0.000000e+00> : vector<128x64xf32>
    %109 = tpu.matmul %3, %108, %cst_46 {dimension_numbers = #tpu.dot_dimension_numbers<[1], [0], [0], [1], [0, 0, 1, 1], [], []>} : vector<128x256xbf16>, vector<256x64xbf16>, vector<128x64xf32> -> vector<128x64xf32>
    %cst_47 = arith.constant dense<0.000000e+00> : vector<64x64xf32>
    %110 = tpu.matmul %108, %108, %cst_47 {dimension_numbers = #tpu.dot_dimension_numbers<[0], [0], [1], [1], [0, 1, 1, 1], [], []>} : vector<256x64xbf16>, vector<256x64xbf16>, vector<64x64xf32> -> vector<64x64xf32>
    %111 = arith.truncf %110 : vector<64x64xf32> to vector<64x64xbf16>
    %cst_48 = arith.constant dense<0.000000e+00> : vector<128x64xf32>
    %112 = tpu.matmul %98, %111, %cst_48 {dimension_numbers = #tpu.dot_dimension_numbers<[1], [0], [0], [1], [0, 0, 1, 1], [], []>} : vector<128x64xbf16>, vector<64x64xbf16>, vector<128x64xf32> -> vector<128x64xf32>
    %113 = arith.mulf %97, %109 : vector<128x64xf32>
    %cst_49 = arith.constant 9.99999997E-7 : f32
    %114 = vector.broadcast %cst_49 : f32 to vector<128x64xf32>
    %115 = arith.addf %112, %114 : vector<128x64xf32>
    %116 = tpu.reciprocal %115 {approx = true} : vector<128x64xf32> -> vector<128x64xf32>
    %117 = arith.mulf %113, %116 : vector<128x64xf32>
    %118 = arith.truncf %117 : vector<128x64xf32> to vector<128x64xbf16>
    %cst_50 = arith.constant dense<0.000000e+00> : vector<256x64xf32>
    %119 = tpu.matmul %1, %118, %cst_50 {dimension_numbers = #tpu.dot_dimension_numbers<[1], [0], [0], [1], [0, 0, 1, 1], [], []>} : vector<256x128xbf16>, vector<128x64xbf16>, vector<256x64xf32> -> vector<256x64xf32>
    %cst_51 = arith.constant dense<0.000000e+00> : vector<64x64xf32>
    %120 = tpu.matmul %118, %118, %cst_51 {dimension_numbers = #tpu.dot_dimension_numbers<[0], [0], [1], [1], [0, 1, 1, 1], [], []>} : vector<128x64xbf16>, vector<128x64xbf16>, vector<64x64xf32> -> vector<64x64xf32>
    %121 = arith.truncf %120 : vector<64x64xf32> to vector<64x64xbf16>
    %cst_52 = arith.constant dense<0.000000e+00> : vector<256x64xf32>
    %122 = tpu.matmul %108, %121, %cst_52 {dimension_numbers = #tpu.dot_dimension_numbers<[1], [0], [0], [1], [0, 0, 1, 1], [], []>} : vector<256x64xbf16>, vector<64x64xbf16>, vector<256x64xf32> -> vector<256x64xf32>
    %123 = arith.mulf %107, %119 : vector<256x64xf32>
    %cst_53 = arith.constant 9.99999997E-7 : f32
    %124 = vector.broadcast %cst_53 : f32 to vector<256x64xf32>
    %125 = arith.addf %122, %124 : vector<256x64xf32>
    %126 = tpu.reciprocal %125 {approx = true} : vector<256x64xf32> -> vector<256x64xf32>
    %127 = arith.mulf %123, %126 : vector<256x64xf32>
    %128 = arith.truncf %127 : vector<256x64xf32> to vector<256x64xbf16>
    %cst_54 = arith.constant dense<0.000000e+00> : vector<128x64xf32>
    %129 = tpu.matmul %3, %128, %cst_54 {dimension_numbers = #tpu.dot_dimension_numbers<[1], [0], [0], [1], [0, 0, 1, 1], [], []>} : vector<128x256xbf16>, vector<256x64xbf16>, vector<128x64xf32> -> vector<128x64xf32>
    %cst_55 = arith.constant dense<0.000000e+00> : vector<64x64xf32>
    %130 = tpu.matmul %128, %128, %cst_55 {dimension_numbers = #tpu.dot_dimension_numbers<[0], [0], [1], [1], [0, 1, 1, 1], [], []>} : vector<256x64xbf16>, vector<256x64xbf16>, vector<64x64xf32> -> vector<64x64xf32>
    %131 = arith.truncf %130 : vector<64x64xf32> to vector<64x64xbf16>
    %cst_56 = arith.constant dense<0.000000e+00> : vector<128x64xf32>
    %132 = tpu.matmul %118, %131, %cst_56 {dimension_numbers = #tpu.dot_dimension_numbers<[1], [0], [0], [1], [0, 0, 1, 1], [], []>} : vector<128x64xbf16>, vector<64x64xbf16>, vector<128x64xf32> -> vector<128x64xf32>
    %133 = arith.mulf %117, %129 : vector<128x64xf32>
    %cst_57 = arith.constant 9.99999997E-7 : f32
    %134 = vector.broadcast %cst_57 : f32 to vector<128x64xf32>
    %135 = arith.addf %132, %134 : vector<128x64xf32>
    %136 = tpu.reciprocal %135 {approx = true} : vector<128x64xf32> -> vector<128x64xf32>
    %137 = arith.mulf %133, %136 : vector<128x64xf32>
    %138 = arith.truncf %137 : vector<128x64xf32> to vector<128x64xbf16>
    %cst_58 = arith.constant dense<0.000000e+00> : vector<256x64xf32>
    %139 = tpu.matmul %1, %138, %cst_58 {dimension_numbers = #tpu.dot_dimension_numbers<[1], [0], [0], [1], [0, 0, 1, 1], [], []>} : vector<256x128xbf16>, vector<128x64xbf16>, vector<256x64xf32> -> vector<256x64xf32>
    %cst_59 = arith.constant dense<0.000000e+00> : vector<64x64xf32>
    %140 = tpu.matmul %138, %138, %cst_59 {dimension_numbers = #tpu.dot_dimension_numbers<[0], [0], [1], [1], [0, 1, 1, 1], [], []>} : vector<128x64xbf16>, vector<128x64xbf16>, vector<64x64xf32> -> vector<64x64xf32>
    %141 = arith.truncf %140 : vector<64x64xf32> to vector<64x64xbf16>
    %cst_60 = arith.constant dense<0.000000e+00> : vector<256x64xf32>
    %142 = tpu.matmul %128, %141, %cst_60 {dimension_numbers = #tpu.dot_dimension_numbers<[1], [0], [0], [1], [0, 0, 1, 1], [], []>} : vector<256x64xbf16>, vector<64x64xbf16>, vector<256x64xf32> -> vector<256x64xf32>
    %143 = arith.mulf %127, %139 : vector<256x64xf32>
    %cst_61 = arith.constant 9.99999997E-7 : f32
    %144 = vector.broadcast %cst_61 : f32 to vector<256x64xf32>
    %145 = arith.addf %142, %144 : vector<256x64xf32>
    %146 = arith.divf %143, %145 : vector<256x64xf32>
    %147 = arith.truncf %146 : vector<256x64xf32> to vector<256x64xbf16>
    %cst_62 = arith.constant dense<0.000000e+00> : vector<128x256xf32>
    %148 = tpu.matmul %138, %147, %cst_62 {dimension_numbers = #tpu.dot_dimension_numbers<[1], [1], [0], [0], [0, 0, 1, 0], [], []>} : vector<128x64xbf16>, vector<256x64xbf16>, vector<128x256xf32> -> vector<128x256xf32>
    %c0_63 = arith.constant 0 : index
    %c0_64 = arith.constant 0 : index
    %c0_65 = arith.constant 0 : index
    %149 = vector.load %arg4[%c0_63, %c0_64, %c0_65] : memref<1x128x256xf32, #tpu.memory_space<vmem>>, vector<1x128x256xf32>
    %150 = vector.shape_cast %149 : vector<1x128x256xf32> to vector<128x256xf32>
    %151 = vector.shape_cast %148 : vector<128x256xf32> to vector<1x128x256xf32>
    tpu.vector_store %arg4[%c0_63, %c0_64, %c0_65], %151 {strides = array<i32>} : memref<1x128x256xf32, #tpu.memory_space<vmem>>, vector<1x128x256xf32>,
    return
  }
  func.func @transform_0(%arg0: i32) -> (i32, i32, i32) {
    %c0_i32 = arith.constant 0 : i32
    %c0_i32_0 = arith.constant 0 : i32
    %c0_i32_1 = arith.constant 0 : i32
    return %arg0, %c0_i32, %c0_i32_0 : i32, i32, i32
  }
  func.func @transform_1(%arg0: i32) -> (i32, i32, i32) {
    %c0_i32 = arith.constant 0 : i32
    %c0_i32_0 = arith.constant 0 : i32
    %c0_i32_1 = arith.constant 0 : i32
    return %arg0, %c0_i32, %c0_i32_0 : i32, i32, i32
  }
  func.func @transform_2(%arg0: i32) -> (i32, i32, i32) {
    %c0_i32 = arith.constant 0 : i32
    %c0_i32_0 = arith.constant 0 : i32
    %c0_i32_1 = arith.constant 0 : i32
    return %arg0, %c0_i32, %c0_i32_0 : i32, i32, i32
  }
  func.func @transform_3(%arg0: i32) -> (i32, i32, i32) {
    %c0_i32 = arith.constant 0 : i32
    %c0_i32_0 = arith.constant 0 : i32
    %c0_i32_1 = arith.constant 0 : i32
    return %arg0, %c0_i32, %c0_i32_0 : i32, i32, i32
  }
}

</mosaic_0001>

<llo_original>
// kernel: tpu_custom_call.1
$region0: #{tpu_custom_call.1}
  #allocation0 [shape = 'u32[]', space=smem, size = 0x4, offset = 0x4, fixed_abs, tag = 'smem constant byte address 0x4 - core index']
  #allocation1 [shape = 'u32[144,128]{1,0:T(1,128)}', space=vmem, size = 0x12000, scoped, tag = 'internal scratch']
  %s0 = inlined_call_operand.vmem [shape: bf16[2,256,128], index: 0, kind: input, shape index: {}]
  %s1 = inlined_call_operand.hbm [shape: bf16[2,128,256], index: 1, kind: input, shape index: {}]
  %s2 = inlined_call_operand.vmem [shape: f32[2,128,64], index: 2, kind: input, shape index: {}]
  %s3 = inlined_call_operand.hbm [shape: f32[2,128,256], index: 3, kind: output, shape index: {}]
  %s4 = sld [smem:[#allocation0]]
  $region49: #{tpu_custom_call.1} parent=0
    _
  %s6 = ssub.s32 1, %s4
  %s7 = scalar_select 0, %s6, %s4
  $region1: #{tpu_custom_call.1} parent=0
    #allocation2 [shape = 'u8[131072]{0}', space=vmem, size = 0x20000, scoped, tag = 'input window, operand 1']
    #allocation3 [shape = 's32[2]{0}', space=sflag, size = 0x8, scoped, tag = 'scoped memory for tpu_custom_call.1']
    #allocation4 [shape = 's32[2]{0}', space=sflag, size = 0x8, scoped, tag = 'scoped memory for tpu_custom_call.1']
    #allocation5 [shape = 'u8[262144]{0}', space=vmem, size = 0x40000, scoped, tag = 'output window, operand 0']
    %8 = vsyncpa [#allocation3], 0
    %s9 = scalar_lea.sflag [#allocation3], 1
    %10 = vsyncpa %s9, 0
    %11 = vsyncpa [#allocation4], 0
    %s12 = scalar_lea.sflag [#allocation4], 1
    %13 = vsyncpa %s12, 0
    loop: start=0, step=1, limit=4
    $region2: #{tpu_custom_call.1} parent=1 // loop_pre_header
      _
    $region3: #{tpu_custom_call.1} parent=1 // loop_header
      %s15 = sphi 0, %s19
      %p16 = scmp.ge.s32.totalorder %s15, 4
      %s25 = sphi 0, %s27
      %s28 = sphi 0, %s25
      %s29 = sphi 0, %s28
      %s45 = sphi 0, %s29
      %s51 = sphi 0, %s53
      %s54 = sphi 0, %s51
      %s55 = sphi 0, %s54
      %s71 = sphi 0, %s55
      %s77 = sphi 0, %s79
      %s80 = sphi 0, %s77
      %s81 = sphi 0, %s80
      %s97 = sphi 0, %s81
      %s103 = sphi 0, %s105
      %s106 = sphi 0, %s103
      %s107 = sphi 0, %s106
      %s123 = sphi 0, %s107
    $region4: #{tpu_custom_call.1} parent=1 // loop_header_branch
      %18 = sbr.rel (%p16) target = $region8
    $region5: #{tpu_custom_call.1} parent=1 // loop_body
      %s20 = ssub.s32 %s15, 1
      %s21 = ssub.s32 %s15, 2
      %s22 = sadd.s32 %s15, 1
      %s23 = ssub.s32 %s15, %s22
      %p24 = scmp.eq.s32.totalorder %s23, 0
      %s26 = sadd.s32 %s25, 1
      %s27 = scalar_select %p24, %s25, %s26
      %p30 = pneg %p24
      %p31 = scmp.eq.s32.totalorder %s15, 1
      %p32 = por %p30, %p31
      %p33 = scmp.ne.s32.totalorder %s25, %s28
      %p34 = scmp.eq.s32.totalorder %s15, 0
      %p35 = por %p33, %p34
      %p36 = scmp.ne.s32.totalorder %s25, %s28
      %p37 = scmp.eq.s32.totalorder %s20, 1
      %p38 = por %p36, %p37
      %p39 = scmp.ne.s32.totalorder %s28, %s29
      %p40 = scmp.eq.s32.totalorder %s20, 0
      %p41 = por %p39, %p40
      %p42 = scmp.ne.s32.totalorder %s28, %s29
      %p43 = scmp.eq.s32.totalorder %s21, 1
      %p44 = por %p42, %p43
      %p46 = scmp.ne.s32.totalorder %s29, %s45
      %p47 = scmp.eq.s32.totalorder %s21, 0
      %p48 = por %p46, %p47
      %s49 = ssub.s32 %s15, %s22
      %p50 = scmp.eq.s32.totalorder %s49, 0
      %s52 = sadd.s32 %s51, 1
      %s53 = scalar_select %p50, %s51, %s52
      %p56 = pneg %p50
      %p57 = scmp.eq.s32.totalorder %s15, 1
      %p58 = por %p56, %p57
      %p59 = scmp.ne.s32.totalorder %s51, %s54
      %p60 = scmp.eq.s32.totalorder %s15, 0
      %p61 = por %p59, %p60
      %p62 = scmp.ne.s32.totalorder %s51, %s54
      %p63 = scmp.eq.s32.totalorder %s20, 1
      %p64 = por %p62, %p63
      %p65 = scmp.ne.s32.totalorder %s54, %s55
      %p66 = scmp.eq.s32.totalorder %s20, 0
      %p67 = por %p65, %p66
      %p68 = scmp.ne.s32.totalorder %s54, %s55
      %p69 = scmp.eq.s32.totalorder %s21, 1
      %p70 = por %p68, %p69
      %p72 = scmp.ne.s32.totalorder %s55, %s71
      %p73 = scmp.eq.s32.totalorder %s21, 0
      %p74 = por %p72, %p73
      %s75 = ssub.s32 %s15, %s22
      %p76 = scmp.eq.s32.totalorder %s75, 0
      %s78 = sadd.s32 %s77, 1
      %s79 = scalar_select %p76, %s77, %s78
      %p82 = pneg %p76
      %p83 = scmp.eq.s32.totalorder %s15, 1
      %p84 = por %p82, %p83
      %p85 = scmp.ne.s32.totalorder %s77, %s80
      %p86 = scmp.eq.s32.totalorder %s15, 0
      %p87 = por %p85, %p86
      %p88 = scmp.ne.s32.totalorder %s77, %s80
      %p89 = scmp.eq.s32.totalorder %s20, 1
      %p90 = por %p88, %p89
      %p91 = scmp.ne.s32.totalorder %s80, %s81
      %p92 = scmp.eq.s32.totalorder %s20, 0
      %p93 = por %p91, %p92
      %p94 = scmp.ne.s32.totalorder %s80, %s81
      %p95 = scmp.eq.s32.totalorder %s21, 1
      %p96 = por %p94, %p95
      %p98 = scmp.ne.s32.totalorder %s81, %s97
      %p99 = scmp.eq.s32.totalorder %s21, 0
      %p100 = por %p98, %p99
      %s101 = ssub.s32 %s15, %s22
      %p102 = scmp.eq.s32.totalorder %s101, 0
      %s104 = sadd.s32 %s103, 1
      %s105 = scalar_select %p102, %s103, %s104
      %p108 = pneg %p102
      %p109 = scmp.eq.s32.totalorder %s15, 1
      %p110 = por %p108, %p109
      %p111 = scmp.ne.s32.totalorder %s103, %s106
      %p112 = scmp.eq.s32.totalorder %s15, 0
      %p113 = por %p111, %p112
      %p114 = scmp.ne.s32.totalorder %s103, %s106
      %p115 = scmp.eq.s32.totalorder %s20, 1
      %p116 = por %p114, %p115
      %p117 = scmp.ne.s32.totalorder %s106, %s107
      %p118 = scmp.eq.s32.totalorder %s20, 0
      %p119 = por %p117, %p118
      %p120 = scmp.ne.s32.totalorder %s106, %s107
      %p121 = scmp.eq.s32.totalorder %s21, 1
      %p122 = por %p120, %p121
      %p124 = scmp.ne.s32.totalorder %s107, %s123
      %p125 = scmp.eq.s32.totalorder %s21, 0
      %p126 = por %p124, %p125
      %p127 = scmp.le.s32.totalorder 1, %s15
      %p128 = scmp.lt.s32.totalorder %s15, 3
      %p129 = pnand %p127, %p128
      %p130 = pneg %p129
      // Predicated region
      $region9: #{tpu_custom_call.1} parent=5 // pred_check
        _
      $region10: #{tpu_custom_call.1} parent=5 // pred_check_branch
        %132 = sbr.rel (%p129) target = $region12
      $region11: #{tpu_custom_call.1} parent=5 // pred_region
        %s133 = ssub.s32 %s15, 1
      $region12: #{tpu_custom_call.1} parent=5 // pred_fallthru
        _
      %p134 = scmp.lt.s32.totalorder %s15, 2
      // Predicated region
      $region13: #{tpu_custom_call.1} parent=5 // pred_check
        %p135 = pneg %p134
      $region14: #{tpu_custom_call.1} parent=5 // pred_check_branch
        %137 = sbr.rel (%p135) target = $region16
      $region15: #{tpu_custom_call.1} parent=5 // pred_region
        // Predicated region
        $region17: #{tpu_custom_call.1} parent=15 // pred_check
          %p138 = pneg %p35
        $region18: #{tpu_custom_call.1} parent=15 // pred_check_branch
          %140 = sbr.rel (%p138) target = $region20
        $region19: #{tpu_custom_call.1} parent=15 // pred_region
          %p141 = scmp.lt.s32.totalorder %s15, 1
          %s142 = scalar_select %p141, %s15, 1
          %s143 = smul.addr %s142, 32
          %s144 = smul.addr %s143, 4
          %s145 = scalar_lea.vmem %s0, %s144
        $region20: #{tpu_custom_call.1} parent=15 // pred_fallthru
          _
        // Predicated region
        $region21: #{tpu_custom_call.1} parent=15 // pred_check
          %p146 = pneg %p61
        $region22: #{tpu_custom_call.1} parent=15 // pred_check_branch
          %148 = sbr.rel (%p146) target = $region24
        $region23: #{tpu_custom_call.1} parent=15 // pred_region
          %s149 = sand.u32 %s51, 1
          %s150 = scalar_lea.sflag [#allocation3], %s149
          %s151 = sand.u32 %s51, 1
          %s152 = smul.addr %s151, 128
          %s153 = scalar_lea.vmem [#allocation2], %s152
          %s155 = ssub.s32 2048, 2048
          %156 = vsyncadd %s150, %s155
          %s157 = smul.addr %s15, 32
          %s158 = smul.addr %s157, 64
          %s159 = scalar_lea.hbm %s1, %s158
          %s160 = sshll.u32 %s153, 4
          %s161 = int_to_ptr.vmem [resolvable:$true] %s160
          %166 = dma.hbm_to_vmem [thread:$0]  %s159, 2048, %s161, %s150, 128, 128, 8
        $region24: #{tpu_custom_call.1} parent=15 // pred_fallthru
          _
        // Predicated region
        $region25: #{tpu_custom_call.1} parent=15 // pred_check
          %p167 = pneg %p87
        $region26: #{tpu_custom_call.1} parent=15 // pred_check_branch
          %169 = sbr.rel (%p167) target = $region28
        $region27: #{tpu_custom_call.1} parent=15 // pred_region
          %p170 = scmp.lt.s32.totalorder %s15, 1
          %s171 = scalar_select %p170, %s15, 1
          %s172 = smul.addr %s171, 16
          %s173 = smul.addr %s172, 8
          %s174 = scalar_lea.vmem %s2, %s173
        $region28: #{tpu_custom_call.1} parent=15 // pred_fallthru
          _
      $region16: #{tpu_custom_call.1} parent=5 // pred_fallthru
        _
      %p175 = scmp.le.s32.totalorder 1, %s15
      %p176 = scmp.lt.s32.totalorder %s15, 3
      %p177 = pnand %p175, %p176
      %p178 = pneg %p177
      // Predicated region
      $region29: #{tpu_custom_call.1} parent=5 // pred_check
        _
      $region30: #{tpu_custom_call.1} parent=5 // pred_check_branch
        %180 = sbr.rel (%p177) target = $region32
      $region31: #{tpu_custom_call.1} parent=5 // pred_region
        %s181 = ssub.s32 %s15, 1
        %s182 = sand.u32 %s54, 1
        %s183 = scalar_lea.sflag [#allocation3], %s182
        %s184 = sand.u32 %s54, 1
        %s185 = smul.addr %s184, 128
        %s186 = scalar_lea.vmem [#allocation2], %s185
        // Predicated region
        $region33: #{tpu_custom_call.1} parent=31 // pred_check
          %p187 = pneg %p67
        $region34: #{tpu_custom_call.1} parent=31 // pred_check_branch
          %189 = sbr.rel (%p187) target = $region36
        $region35: #{tpu_custom_call.1} parent=31 // pred_region
          %190 = dma.done %s183, 2048
        $region36: #{tpu_custom_call.1} parent=31 // pred_fallthru
          _
        %p191 = scmp.lt.s32.totalorder %s20, 1
        %s192 = scalar_select %p191, %s20, 1
        %s193 = smul.addr %s192, 32
        %s194 = smul.addr %s193, 4
        %s195 = scalar_lea.vmem %s0, %s194
        %p196 = pneg %p41
        %p197 = pneg %p38
        %s198 = sand.u32 %s54, 1
        %s199 = scalar_lea.sflag [#allocation3], %s198
        %s200 = sand.u32 %s54, 1
        %s201 = smul.addr %s200, 128
        %s202 = scalar_lea.vmem [#allocation2], %s201
        %p203 = pneg %p67
        %p204 = pneg %p64
        %p205 = scmp.lt.s32.totalorder %s20, 1
        %s206 = scalar_select %p205, %s20, 1
        %s207 = smul.addr %s206, 16
        %s208 = smul.addr %s207, 8
        %s209 = scalar_lea.vmem %s2, %s208
        %p210 = pneg %p93
        %p211 = pneg %p90
        %p212 = pneg %p119
        %p213 = pneg %p116
        %s214 = sand.u32 %s106, 1
        %s215 = scalar_lea.sflag [#allocation4], %s214
        %s216 = sand.u32 %s106, 1
        %s217 = smul.addr %s216, 256
        %s218 = scalar_lea.vmem [#allocation5], %s217
        %p219 = scmp.lt.s32.totalorder %s20, 1
        %s220 = scalar_select %p219, %s20, 1
        %s221 = smul.addr %s220, 32
        %s222 = smul.addr %s221, 4
        %s223 = scalar_lea.vmem %s0, %s222
        %p224 = scmp.lt.s32.totalorder %s20, 1
        %s225 = scalar_select %p224, %s20, 1
        %s226 = smul.addr %s225, 16
        %s227 = smul.addr %s226, 8
        %s228 = scalar_lea.vmem %s2, %s227
        %v230 = vld [vmem:[%s223] sm:$0xf]
        %v231 = vld [vmem:[%s223 + $0x4] sm:$0xf]
        %v232 = vld [vmem:[%s223 + $0x8] sm:$0xf]
        %v233 = vld [vmem:[%s223 + $0xc] sm:$0xf]
        %v234 = vld [vmem:[%s223 + $0x10] sm:$0xf]
        %v235 = vld [vmem:[%s223 + $0x14] sm:$0xf]
        %v236 = vld [vmem:[%s223 + $0x18] sm:$0xf]
        %v237 = vld [vmem:[%s223 + $0x1c] sm:$0xf]
        %v238 = vld [vmem:[%s223 + $0x20] sm:$0xf]
        %v239 = vld [vmem:[%s223 + $0x24] sm:$0xf]
        %v240 = vld [vmem:[%s223 + $0x28] sm:$0xf]
        %v241 = vld [vmem:[%s223 + $0x2c] sm:$0xf]
        %v242 = vld [vmem:[%s223 + $0x30] sm:$0xf]
        %v243 = vld [vmem:[%s223 + $0x34] sm:$0xf]
        %v244 = vld [vmem:[%s223 + $0x38] sm:$0xf]
        %v245 = vld [vmem:[%s223 + $0x3c] sm:$0xf]
        %v246 = vld [vmem:[%s223 + $0x40] sm:$0xf]
        %v247 = vld [vmem:[%s223 + $0x44] sm:$0xf]
        %v248 = vld [vmem:[%s223 + $0x48] sm:$0xf]
        %v249 = vld [vmem:[%s223 + $0x4c] sm:$0xf]
        %v250 = vld [vmem:[%s223 + $0x50] sm:$0xf]
        %v251 = vld [vmem:[%s223 + $0x54] sm:$0xf]
        %v252 = vld [vmem:[%s223 + $0x58] sm:$0xf]
        %v253 = vld [vmem:[%s223 + $0x5c] sm:$0xf]
        %v254 = vld [vmem:[%s223 + $0x60] sm:$0xf]
        %v255 = vld [vmem:[%s223 + $0x64] sm:$0xf]
        %v256 = vld [vmem:[%s223 + $0x68] sm:$0xf]
        %v257 = vld [vmem:[%s223 + $0x6c] sm:$0xf]
        %v258 = vld [vmem:[%s223 + $0x70] sm:$0xf]
        %v259 = vld [vmem:[%s223 + $0x74] sm:$0xf]
        %v260 = vld [vmem:[%s223 + $0x78] sm:$0xf]
        %v261 = vld [vmem:[%s223 + $0x7c] sm:$0xf]
        %v262 = vld [vmem:[%s186] sm:$0xff]
        %v263 = vld [vmem:[%s186 + $0x8] sm:$0xff]
        %v264 = vld [vmem:[%s186 + $0x10] sm:$0xff]
        %v265 = vld [vmem:[%s186 + $0x18] sm:$0xff]
        %v266 = vld [vmem:[%s186 + $0x20] sm:$0xff]
        %v267 = vld [vmem:[%s186 + $0x28] sm:$0xff]
        %v268 = vld [vmem:[%s186 + $0x30] sm:$0xff]
        %v269 = vld [vmem:[%s186 + $0x38] sm:$0xff]
        %v270 = vld [vmem:[%s186 + $0x40] sm:$0xff]
        %v271 = vld [vmem:[%s186 + $0x48] sm:$0xff]
        %v272 = vld [vmem:[%s186 + $0x50] sm:$0xff]
        %v273 = vld [vmem:[%s186 + $0x58] sm:$0xff]
        %v274 = vld [vmem:[%s186 + $0x60] sm:$0xff]
        %v275 = vld [vmem:[%s186 + $0x68] sm:$0xff]
        %v276 = vld [vmem:[%s186 + $0x70] sm:$0xff]
        %v277 = vld [vmem:[%s186 + $0x78] sm:$0xff]
        %v278 = vld [vmem:[%s228] sm:$0xff]
        %v279 = vld [vmem:[%s228 + $0x8] sm:$0xff]
        %v280 = vld [vmem:[%s228 + $0x10] sm:$0xff]
        %v281 = vld [vmem:[%s228 + $0x18] sm:$0xff]
        %v282 = vld [vmem:[%s228 + $0x20] sm:$0xff]
        %v283 = vld [vmem:[%s228 + $0x28] sm:$0xff]
        %v284 = vld [vmem:[%s228 + $0x30] sm:$0xff]
        %v285 = vld [vmem:[%s228 + $0x38] sm:$0xff]
        %v286 = vld [vmem:[%s228 + $0x40] sm:$0xff]
        %v287 = vld [vmem:[%s228 + $0x48] sm:$0xff]
        %v288 = vld [vmem:[%s228 + $0x50] sm:$0xff]
        %v289 = vld [vmem:[%s228 + $0x58] sm:$0xff]
        %v290 = vld [vmem:[%s228 + $0x60] sm:$0xff]
        %v291 = vld [vmem:[%s228 + $0x68] sm:$0xff]
        %v292 = vld [vmem:[%s228 + $0x70] sm:$0xff]
        %v293 = vld [vmem:[%s228 + $0x78] sm:$0xff]
        %v294 = vpack.c.bf16 %v279, %v278
        %v295 = vpack.c.bf16 %v281, %v280
        %v296 = vpack.c.bf16 %v283, %v282
        %v297 = vpack.c.bf16 %v285, %v284
        %v298 = vpack.c.bf16 %v287, %v286
        %v299 = vpack.c.bf16 %v289, %v288
        %v300 = vpack.c.bf16 %v291, %v290
        %v301 = vpack.c.bf16 %v293, %v292
        %v334 = vunpack.c.l.b16 %v230
        %v335 = vunpack.c.l.b16 %v231
        %v336 = vunpack.c.l.b16 %v232
        %v337 = vunpack.c.l.b16 %v233
        %v338 = vunpack.c.l.b16 %v234
        %v339 = vunpack.c.l.b16 %v235
        %v340 = vunpack.c.l.b16 %v236
        %v341 = vunpack.c.l.b16 %v237
        %v342 = vunpack.c.l.b16 %v238
        %v343 = vunpack.c.l.b16 %v239
        %v344 = vunpack.c.l.b16 %v240
        %v345 = vunpack.c.l.b16 %v241
        %v346 = vunpack.c.l.b16 %v242
        %v347 = vunpack.c.l.b16 %v243
        %v348 = vunpack.c.l.b16 %v244
        %v349 = vunpack.c.l.b16 %v245
        %v350 = vunpack.c.l.b16 %v246
        %v351 = vunpack.c.l.b16 %v247
        %v352 = vunpack.c.l.b16 %v248
        %v353 = vunpack.c.l.b16 %v249
        %v354 = vunpack.c.l.b16 %v250
        %v355 = vunpack.c.l.b16 %v251
        %v356 = vunpack.c.l.b16 %v252
        %v357 = vunpack.c.l.b16 %v253
        %v358 = vunpack.c.l.b16 %v254
        %v359 = vunpack.c.l.b16 %v255
        %v360 = vunpack.c.l.b16 %v256
        %v361 = vunpack.c.l.b16 %v257
        %v362 = vunpack.c.l.b16 %v258
        %v363 = vunpack.c.l.b16 %v259
        %v364 = vunpack.c.l.b16 %v260
        %v365 = vunpack.c.l.b16 %v261
        %v366 = vpack.c.b16 %v335, %v334
        %v367 = vpack.c.b16 %v337, %v336
        %v368 = vpack.c.b16 %v339, %v338
        %v369 = vpack.c.b16 %v341, %v340
        %v370 = vpack.c.b16 %v343, %v342
        %v371 = vpack.c.b16 %v345, %v344
        %v372 = vpack.c.b16 %v347, %v346
        %v373 = vpack.c.b16 %v349, %v348
        %v374 = vpack.c.b16 %v351, %v350
        %v375 = vpack.c.b16 %v353, %v352
        %v376 = vpack.c.b16 %v355, %v354
        %v377 = vpack.c.b16 %v357, %v356
        %v378 = vpack.c.b16 %v359, %v358
        %v379 = vpack.c.b16 %v361, %v360
        %v380 = vpack.c.b16 %v363, %v362
        %v381 = vpack.c.b16 %v365, %v364
        %398 = vmatprep.subr.bf16.mxu0 0
        %399 = vmatpush1.bf16.msra.mxu0 %v301
        %400 = vmatprep.subr.bf16.mxu0 0
        %401 = vmatpush1.bf16.msra.mxu0 %v300
        %402 = vmatprep.subr.bf16.mxu0 0
        %403 = vmatpush1.bf16.msra.mxu0 %v299
        %404 = vmatprep.subr.bf16.mxu0 0
        %405 = vmatpush1.bf16.msra.mxu0 %v298
        %406 = vmatprep.subr.bf16.mxu0 0
        %407 = vmatpush1.bf16.msra.mxu0 %v297
        %408 = vmatprep.subr.bf16.mxu0 0
        %409 = vmatpush1.bf16.msra.mxu0 %v296
        %410 = vmatprep.subr.bf16.mxu0 0
        %411 = vmatpush1.bf16.msra.mxu0 %v295
        %412 = vmatprep.subr.bf16.mxu0 0
        %413 = vmatpush1.bf16.msra.mxu0 %v294
        %414 = vmatprep.subr.bf16.mxu0 0
        %415 = vmatpush2.bf16.msra.mxu0 0
        %416 = vmatprep.subr.bf16.mxu0 0
        %417 = vmatpush2.bf16.msra.mxu0 0
        %418 = vmatprep.subr.bf16.mxu0 0
        %419 = vmatpush2.bf16.msra.mxu0 0
        %420 = vmatprep.subr.bf16.mxu0 0
        %421 = vmatpush2.bf16.msra.mxu0 0
        %422 = vmatprep.subr.bf16.mxu0 0
        %423 = vmatpush2.bf16.msra.mxu0 0
        %424 = vmatprep.subr.bf16.mxu0 0
        %425 = vmatpush2.bf16.msra.mxu0 0
        %426 = vmatprep.subr.bf16.mxu0 0
        %427 = vmatpush2.bf16.msra.mxu0 0
        %428 = vmatprep.subr.bf16.mxu0 0
        %429 = vmatpush2.bf16.msra.mxu0 0
        %430 = vmatprep.mubr.bf16.mxu0 0
        %431 = vmatmul.mubr.bf16.gmra.mxu0 %v366
        %v432 = vpop.f32.mrf.mxu0
        %v433 = vadd.f32 0.0, %v432
        %v434 = vpop.f32.mrf.mxu0
        %v435 = vpop.f32.mrf.mxu0
        %v436 = vadd.f32 0.0, %v435
        %v437 = vpop.f32.mrf.mxu0
        %438 = vmatprep.mubr.bf16.mxu0 0
        %439 = vmatmul.mubr.bf16.gmra.mxu0 %v367
        %v440 = vpop.f32.mrf.mxu0
        %v441 = vadd.f32 0.0, %v440
        %v442 = vpop.f32.mrf.mxu0
        %v443 = vpop.f32.mrf.mxu0
        %v444 = vadd.f32 0.0, %v443
        %v445 = vpop.f32.mrf.mxu0
        %446 = vmatprep.mubr.bf16.mxu0 0
        %447 = vmatmul.mubr.bf16.gmra.mxu0 %v368
        %v448 = vpop.f32.mrf.mxu0
        %v449 = vadd.f32 0.0, %v448
        %v450 = vpop.f32.mrf.mxu0
        %v451 = vpop.f32.mrf.mxu0
        %v452 = vadd.f32 0.0, %v451
        %v453 = vpop.f32.mrf.mxu0
        %454 = vmatprep.mubr.bf16.mxu0 0
        %455 = vmatmul.mubr.bf16.gmra.mxu0 %v369
        %v456 = vpop.f32.mrf.mxu0
        %v457 = vadd.f32 0.0, %v456
        %v458 = vpop.f32.mrf.mxu0
        %v459 = vpop.f32.mrf.mxu0
        %v460 = vadd.f32 0.0, %v459
        %v461 = vpop.f32.mrf.mxu0
        %462 = vmatprep.mubr.bf16.mxu0 0
        %463 = vmatmul.mubr.bf16.gmra.mxu0 %v370
        %v464 = vpop.f32.mrf.mxu0
        %v465 = vadd.f32 0.0, %v464
        %v466 = vpop.f32.mrf.mxu0
        %v467 = vpop.f32.mrf.mxu0
        %v468 = vadd.f32 0.0, %v467
        %v469 = vpop.f32.mrf.mxu0
        %470 = vmatprep.mubr.bf16.mxu0 0
        %471 = vmatmul.mubr.bf16.gmra.mxu0 %v371
        %v472 = vpop.f32.mrf.mxu0
        %v473 = vadd.f32 0.0, %v472
        %v474 = vpop.f32.mrf.mxu0
        %v475 = vpop.f32.mrf.mxu0
        %v476 = vadd.f32 0.0, %v475
        %v477 = vpop.f32.mrf.mxu0
        %478 = vmatprep.mubr.bf16.mxu0 0
        %479 = vmatmul.mubr.bf16.gmra.mxu0 %v372
        %v480 = vpop.f32.mrf.mxu0
        %v481 = vadd.f32 0.0, %v480
        %v482 = vpop.f32.mrf.mxu0
        %v483 = vpop.f32.mrf.mxu0
        %v484 = vadd.f32 0.0, %v483
        %v485 = vpop.f32.mrf.mxu0
        %486 = vmatprep.mubr.bf16.mxu0 0
        %487 = vmatmul.mubr.bf16.gmra.mxu0 %v373
        %v488 = vpop.f32.mrf.mxu0
        %v489 = vadd.f32 0.0, %v488
        %v490 = vpop.f32.mrf.mxu0
        %v491 = vpop.f32.mrf.mxu0
        %v492 = vadd.f32 0.0, %v491
        %v493 = vpop.f32.mrf.mxu0
        %494 = vmatprep.mubr.bf16.mxu0 0
        %495 = vmatmul.mubr.bf16.gmra.mxu0 %v374
        %v496 = vpop.f32.mrf.mxu0
        %v497 = vadd.f32 0.0, %v496
        %v498 = vpop.f32.mrf.mxu0
        %v499 = vpop.f32.mrf.mxu0
        %v500 = vadd.f32 0.0, %v499
        %v501 = vpop.f32.mrf.mxu0
        %502 = vmatprep.mubr.bf16.mxu0 0
        %503 = vmatmul.mubr.bf16.gmra.mxu0 %v375
        %v504 = vpop.f32.mrf.mxu0
        %v505 = vadd.f32 0.0, %v504
        %v506 = vpop.f32.mrf.mxu0
        %v507 = vpop.f32.mrf.mxu0
        %v508 = vadd.f32 0.0, %v507
        %v509 = vpop.f32.mrf.mxu0
        %510 = vmatprep.mubr.bf16.mxu0 0
        %511 = vmatmul.mubr.bf16.gmra.mxu0 %v376
        %v512 = vpop.f32.mrf.mxu0
        %v513 = vadd.f32 0.0, %v512
        %v514 = vpop.f32.mrf.mxu0
        %v515 = vpop.f32.mrf.mxu0
        %v516 = vadd.f32 0.0, %v515
        %v517 = vpop.f32.mrf.mxu0
        %518 = vmatprep.mubr.bf16.mxu0 0
        %519 = vmatmul.mubr.bf16.gmra.mxu0 %v377
        %v520 = vpop.f32.mrf.mxu0
        %v521 = vadd.f32 0.0, %v520
        %v522 = vpop.f32.mrf.mxu0
        %v523 = vpop.f32.mrf.mxu0
        %v524 = vadd.f32 0.0, %v523
        %v525 = vpop.f32.mrf.mxu0
        %526 = vmatprep.mubr.bf16.mxu0 0
        %527 = vmatmul.mubr.bf16.gmra.mxu0 %v378
        %v528 = vpop.f32.mrf.mxu0
        %v529 = vadd.f32 0.0, %v528
        %v530 = vpop.f32.mrf.mxu0
        %v531 = vpop.f32.mrf.mxu0
        %v532 = vadd.f32 0.0, %v531
        %v533 = vpop.f32.mrf.mxu0
        %534 = vmatprep.mubr.bf16.mxu0 0
        %535 = vmatmul.mubr.bf16.gmra.mxu0 %v379
        %v536 = vpop.f32.mrf.mxu0
        %v537 = vadd.f32 0.0, %v536
        %v538 = vpop.f32.mrf.mxu0
        %v539 = vpop.f32.mrf.mxu0
        %v540 = vadd.f32 0.0, %v539
        %v541 = vpop.f32.mrf.mxu0
        %542 = vmatprep.mubr.bf16.mxu0 0
        %543 = vmatmul.mubr.bf16.gmra.mxu0 %v380
        %v544 = vpop.f32.mrf.mxu0
        %v545 = vadd.f32 0.0, %v544
        %v546 = vpop.f32.mrf.mxu0
        %v547 = vpop.f32.mrf.mxu0
        %v548 = vadd.f32 0.0, %v547
        %v549 = vpop.f32.mrf.mxu0
        %550 = vmatprep.mubr.bf16.mxu0 0
        %551 = vmatmul.mubr.bf16.gmra.mxu0 %v381
        %v552 = vpop.f32.mrf.mxu0
        %v553 = vadd.f32 0.0, %v552
        %v554 = vpop.f32.mrf.mxu0
        %v555 = vpop.f32.mrf.mxu0
        %v556 = vadd.f32 0.0, %v555
        %v557 = vpop.f32.mrf.mxu0
        %558 = vdwg.mxu0
        %vm559 = vcmask 523264
        %v560 = vsel %vm559, %v433, -inf
        %561 = vmax.xlane.f32.xlu0 %v560
        %v562 = vpop.xlane.xlu0 %561
        %v563 = vsel %vm559, %v436, -inf
        %564 = vmax.xlane.f32.xlu0 %v563
        %v565 = vpop.xlane.xlu0 %564
        %v566 = vsel %vm559, %v441, -inf
        %567 = vmax.xlane.f32.xlu0 %v566
        %v568 = vpop.xlane.xlu0 %567
        %v569 = vsel %vm559, %v444, -inf
        %570 = vmax.xlane.f32.xlu0 %v569
        %v571 = vpop.xlane.xlu0 %570
        %v572 = vsel %vm559, %v449, -inf
        %573 = vmax.xlane.f32.xlu0 %v572
        %v574 = vpop.xlane.xlu0 %573
        %v575 = vsel %vm559, %v452, -inf
        %576 = vmax.xlane.f32.xlu0 %v575
        %v577 = vpop.xlane.xlu0 %576
        %v578 = vsel %vm559, %v457, -inf
        %579 = vmax.xlane.f32.xlu0 %v578
        %v580 = vpop.xlane.xlu0 %579
        %v581 = vsel %vm559, %v460, -inf
        %582 = vmax.xlane.f32.xlu0 %v581
        %v583 = vpop.xlane.xlu0 %582
        %v584 = vsel %vm559, %v465, -inf
        %585 = vmax.xlane.f32.xlu0 %v584
        %v586 = vpop.xlane.xlu0 %585
        %v587 = vsel %vm559, %v468, -inf
        %588 = vmax.xlane.f32.xlu0 %v587
        %v589 = vpop.xlane.xlu0 %588
        %v590 = vsel %vm559, %v473, -inf
        %591 = vmax.xlane.f32.xlu0 %v590
        %v592 = vpop.xlane.xlu0 %591
        %v593 = vsel %vm559, %v476, -inf
        %594 = vmax.xlane.f32.xlu0 %v593
        %v595 = vpop.xlane.xlu0 %594
        %v596 = vsel %vm559, %v481, -inf
        %597 = vmax.xlane.f32.xlu0 %v596
        %v598 = vpop.xlane.xlu0 %597
        %v599 = vsel %vm559, %v484, -inf
        %600 = vmax.xlane.f32.xlu0 %v599
        %v601 = vpop.xlane.xlu0 %600
        %v602 = vsel %vm559, %v489, -inf
        %603 = vmax.xlane.f32.xlu0 %v602
        %v604 = vpop.xlane.xlu0 %603
        %v605 = vsel %vm559, %v492, -inf
        %606 = vmax.xlane.f32.xlu0 %v605
        %v607 = vpop.xlane.xlu0 %606
        %v608 = vsel %vm559, %v497, -inf
        %609 = vmax.xlane.f32.xlu0 %v608
        %v610 = vpop.xlane.xlu0 %609
        %v611 = vsel %vm559, %v500, -inf
        %612 = vmax.xlane.f32.xlu0 %v611
        %v613 = vpop.xlane.xlu0 %612
        %v614 = vsel %vm559, %v505, -inf
        %615 = vmax.xlane.f32.xlu0 %v614
        %v616 = vpop.xlane.xlu0 %615
        %v617 = vsel %vm559, %v508, -inf
        %618 = vmax.xlane.f32.xlu0 %v617
        %v619 = vpop.xlane.xlu0 %618
        %v620 = vsel %vm559, %v513, -inf
        %621 = vmax.xlane.f32.xlu0 %v620
        %v622 = vpop.xlane.xlu0 %621
        %v623 = vsel %vm559, %v516, -inf
        %624 = vmax.xlane.f32.xlu0 %v623
        %v625 = vpop.xlane.xlu0 %624
        %v626 = vsel %vm559, %v521, -inf
        %627 = vmax.xlane.f32.xlu0 %v626
        %v628 = vpop.xlane.xlu0 %627
        %v629 = vsel %vm559, %v524, -inf
        %630 = vmax.xlane.f32.xlu0 %v629
        %v631 = vpop.xlane.xlu0 %630
        %v632 = vsel %vm559, %v529, -inf
        %633 = vmax.xlane.f32.xlu0 %v632
        %v634 = vpop.xlane.xlu0 %633
        %v635 = vsel %vm559, %v532, -inf
        %636 = vmax.xlane.f32.xlu0 %v635
        %v637 = vpop.xlane.xlu0 %636
        %v638 = vsel %vm559, %v537, -inf
        %639 = vmax.xlane.f32.xlu0 %v638
        %v640 = vpop.xlane.xlu0 %639
        %v641 = vsel %vm559, %v540, -inf
        %642 = vmax.xlane.f32.xlu0 %v641
        %v643 = vpop.xlane.xlu0 %642
        %v644 = vsel %vm559, %v545, -inf
        %645 = vmax.xlane.f32.xlu0 %v644
        %v646 = vpop.xlane.xlu0 %645
        %v647 = vsel %vm559, %v548, -inf
        %648 = vmax.xlane.f32.xlu0 %v647
        %v649 = vpop.xlane.xlu0 %648
        %v650 = vsel %vm559, %v553, -inf
        %651 = vmax.xlane.f32.xlu0 %v650
        %v652 = vpop.xlane.xlu0 %651
        %v653 = vsel %vm559, %v556, -inf
        %654 = vmax.xlane.f32.xlu0 %v653
        %v655 = vpop.xlane.xlu0 %654
        %v656 = vsub.f32 %v433, %v562
        %v657 = vsub.f32 %v436, %v565
        %v658 = vsub.f32 %v441, %v568
        %v659 = vsub.f32 %v444, %v571
        %v660 = vsub.f32 %v449, %v574
        %v661 = vsub.f32 %v452, %v577
        %v662 = vsub.f32 %v457, %v580
        %v663 = vsub.f32 %v460, %v583
        %v664 = vsub.f32 %v465, %v586
        %v665 = vsub.f32 %v468, %v589
        %v666 = vsub.f32 %v473, %v592
        %v667 = vsub.f32 %v476, %v595
        %v668 = vsub.f32 %v481, %v598
        %v669 = vsub.f32 %v484, %v601
        %v670 = vsub.f32 %v489, %v604
        %v671 = vsub.f32 %v492, %v607
        %v672 = vsub.f32 %v497, %v610
        %v673 = vsub.f32 %v500, %v613
        %v674 = vsub.f32 %v505, %v616
        %v675 = vsub.f32 %v508, %v619
        %v676 = vsub.f32 %v513, %v622
        %v677 = vsub.f32 %v516, %v625
        %v678 = vsub.f32 %v521, %v628
        %v679 = vsub.f32 %v524, %v631
        %v680 = vsub.f32 %v529, %v634
        %v681 = vsub.f32 %v532, %v637
        %v682 = vsub.f32 %v537, %v640
        %v683 = vsub.f32 %v540, %v643
        %v684 = vsub.f32 %v545, %v646
        %v685 = vsub.f32 %v548, %v649
        %v686 = vsub.f32 %v553, %v652
        %v687 = vsub.f32 %v556, %v655
        %v688 = vmul.f32 %v656, 100.0
        %v689 = vmul.f32 %v657, 100.0
        %v690 = vmul.f32 %v658, 100.0
        %v691 = vmul.f32 %v659, 100.0
        %v692 = vmul.f32 %v660, 100.0
        %v693 = vmul.f32 %v661, 100.0
        %v694 = vmul.f32 %v662, 100.0
        %v695 = vmul.f32 %v663, 100.0
        %v696 = vmul.f32 %v664, 100.0
        %v697 = vmul.f32 %v665, 100.0
        %v698 = vmul.f32 %v666, 100.0
        %v699 = vmul.f32 %v667, 100.0
        %v700 = vmul.f32 %v668, 100.0
        %v701 = vmul.f32 %v669, 100.0
        %v702 = vmul.f32 %v670, 100.0
        %v703 = vmul.f32 %v671, 100.0
        %v704 = vmul.f32 %v672, 100.0
        %v705 = vmul.f32 %v673, 100.0
        %v706 = vmul.f32 %v674, 100.0
        %v707 = vmul.f32 %v675, 100.0
        %v708 = vmul.f32 %v676, 100.0
        %v709 = vmul.f32 %v677, 100.0
        %v710 = vmul.f32 %v678, 100.0
        %v711 = vmul.f32 %v679, 100.0
        %v712 = vmul.f32 %v680, 100.0
        %v713 = vmul.f32 %v681, 100.0
        %v714 = vmul.f32 %v682, 100.0
        %v715 = vmul.f32 %v683, 100.0
        %v716 = vmul.f32 %v684, 100.0
        %v717 = vmul.f32 %v685, 100.0
        %v718 = vmul.f32 %v686, 100.0
        %v719 = vmul.f32 %v687, 100.0
        %v720 = vmul.f32 %v688, 1.442695
        %v721 = vpow.pop %v720
        %v722 = vmul.f32 %v689, 1.442695
        %v723 = vpow.pop %v722
        %v724 = vmul.f32 %v690, 1.442695
        %v725 = vpow.pop %v724
        %v726 = vmul.f32 %v691, 1.442695
        %v727 = vpow.pop %v726
        %v728 = vmul.f32 %v692, 1.442695
        %v729 = vpow.pop %v728
        %v730 = vmul.f32 %v693, 1.442695
        %v731 = vpow.pop %v730
        %v732 = vmul.f32 %v694, 1.442695
        %v733 = vpow.pop %v732
        %v734 = vmul.f32 %v695, 1.442695
        %v735 = vpow.pop %v734
        %v736 = vmul.f32 %v696, 1.442695
        %v737 = vpow.pop %v736
        %v738 = vmul.f32 %v697, 1.442695
        %v739 = vpow.pop %v738
        %v740 = vmul.f32 %v698, 1.442695
        %v741 = vpow.pop %v740
        %v742 = vmul.f32 %v699, 1.442695
        %v743 = vpow.pop %v742
        %v744 = vmul.f32 %v700, 1.442695
        %v745 = vpow.pop %v744
        %v746 = vmul.f32 %v701, 1.442695
        %v747 = vpow.pop %v746
        %v748 = vmul.f32 %v702, 1.442695
        %v749 = vpow.pop %v748
        %v750 = vmul.f32 %v703, 1.442695
        %v751 = vpow.pop %v750
        %v752 = vmul.f32 %v704, 1.442695
        %v753 = vpow.pop %v752
        %v754 = vmul.f32 %v705, 1.442695
        %v755 = vpow.pop %v754
        %v756 = vmul.f32 %v706, 1.442695
        %v757 = vpow.pop %v756
        %v758 = vmul.f32 %v707, 1.442695
        %v759 = vpow.pop %v758
        %v760 = vmul.f32 %v708, 1.442695
        %v761 = vpow.pop %v760
        %v762 = vmul.f32 %v709, 1.442695
        %v763 = vpow.pop %v762
        %v764 = vmul.f32 %v710, 1.442695
        %v765 = vpow.pop %v764
        %v766 = vmul.f32 %v711, 1.442695
        %v767 = vpow.pop %v766
        %v768 = vmul.f32 %v712, 1.442695
        %v769 = vpow.pop %v768
        %v770 = vmul.f32 %v713, 1.442695
        %v771 = vpow.pop %v770
        %v772 = vmul.f32 %v714, 1.442695
        %v773 = vpow.pop %v772
        %v774 = vmul.f32 %v715, 1.442695
        %v775 = vpow.pop %v774
        %v776 = vmul.f32 %v716, 1.442695
        %v777 = vpow.pop %v776
        %v778 = vmul.f32 %v717, 1.442695
        %v779 = vpow.pop %v778
        %v780 = vmul.f32 %v718, 1.442695
        %v781 = vpow.pop %v780
        %v782 = vmul.f32 %v719, 1.442695
        %v783 = vpow.pop %v782
        %v784 = vsel %vm559, %v721, 0.0
        %785 = vadd.xlane.f32.xlu0 %v784
        %v786 = vpop.xlane.xlu0 %785
        %v787 = vsel %vm559, %v723, 0.0
        %788 = vadd.xlane.f32.xlu0 %v787
        %v789 = vpop.xlane.xlu0 %788
        %v790 = vsel %vm559, %v725, 0.0
        %791 = vadd.xlane.f32.xlu0 %v790
        %v792 = vpop.xlane.xlu0 %791
        %v793 = vsel %vm559, %v727, 0.0
        %794 = vadd.xlane.f32.xlu0 %v793
        %v795 = vpop.xlane.xlu0 %794
        %v796 = vsel %vm559, %v729, 0.0
        %797 = vadd.xlane.f32.xlu0 %v796
        %v798 = vpop.xlane.xlu0 %797
        %v799 = vsel %vm559, %v731, 0.0
        %800 = vadd.xlane.f32.xlu0 %v799
        %v801 = vpop.xlane.xlu0 %800
        %v802 = vsel %vm559, %v733, 0.0
        %803 = vadd.xlane.f32.xlu0 %v802
        %v804 = vpop.xlane.xlu0 %803
        %v805 = vsel %vm559, %v735, 0.0
        %806 = vadd.xlane.f32.xlu0 %v805
        %v807 = vpop.xlane.xlu0 %806
        %v808 = vsel %vm559, %v737, 0.0
        %809 = vadd.xlane.f32.xlu0 %v808
        %v810 = vpop.xlane.xlu0 %809
        %v811 = vsel %vm559, %v739, 0.0
        %812 = vadd.xlane.f32.xlu0 %v811
        %v813 = vpop.xlane.xlu0 %812
        %v814 = vsel %vm559, %v741, 0.0
        %815 = vadd.xlane.f32.xlu0 %v814
        %v816 = vpop.xlane.xlu0 %815
        %v817 = vsel %vm559, %v743, 0.0
        %818 = vadd.xlane.f32.xlu0 %v817
        %v819 = vpop.xlane.xlu0 %818
        %v820 = vsel %vm559, %v745, 0.0
        %821 = vadd.xlane.f32.xlu0 %v820
        %v822 = vpop.xlane.xlu0 %821
        %v823 = vsel %vm559, %v747, 0.0
        %824 = vadd.xlane.f32.xlu0 %v823
        %v825 = vpop.xlane.xlu0 %824
        %v826 = vsel %vm559, %v749, 0.0
        %827 = vadd.xlane.f32.xlu0 %v826
        %v828 = vpop.xlane.xlu0 %827
        %v829 = vsel %vm559, %v751, 0.0
        %830 = vadd.xlane.f32.xlu0 %v829
        %v831 = vpop.xlane.xlu0 %830
        %v832 = vsel %vm559, %v753, 0.0
        %833 = vadd.xlane.f32.xlu0 %v832
        %v834 = vpop.xlane.xlu0 %833
        %v835 = vsel %vm559, %v755, 0.0
        %836 = vadd.xlane.f32.xlu0 %v835
        %v837 = vpop.xlane.xlu0 %836
        %v838 = vsel %vm559, %v757, 0.0
        %839 = vadd.xlane.f32.xlu0 %v838
        %v840 = vpop.xlane.xlu0 %839
        %v841 = vsel %vm559, %v759, 0.0
        %842 = vadd.xlane.f32.xlu0 %v841
        %v843 = vpop.xlane.xlu0 %842
        %v844 = vsel %vm559, %v761, 0.0
        %845 = vadd.xlane.f32.xlu0 %v844
        %v846 = vpop.xlane.xlu0 %845
        %v847 = vsel %vm559, %v763, 0.0
        %848 = vadd.xlane.f32.xlu0 %v847
        %v849 = vpop.xlane.xlu0 %848
        %v850 = vsel %vm559, %v765, 0.0
        %851 = vadd.xlane.f32.xlu0 %v850
        %v852 = vpop.xlane.xlu0 %851
        %v853 = vsel %vm559, %v767, 0.0
        %854 = vadd.xlane.f32.xlu0 %v853
        %v855 = vpop.xlane.xlu0 %854
        %v856 = vsel %vm559, %v769, 0.0
        %857 = vadd.xlane.f32.xlu0 %v856
        %v858 = vpop.xlane.xlu0 %857
        %v859 = vsel %vm559, %v771, 0.0
        %860 = vadd.xlane.f32.xlu0 %v859
        %v861 = vpop.xlane.xlu0 %860
        %v862 = vsel %vm559, %v773, 0.0
        %863 = vadd.xlane.f32.xlu0 %v862
        %v864 = vpop.xlane.xlu0 %863
        %v865 = vsel %vm559, %v775, 0.0
        %866 = vadd.xlane.f32.xlu0 %v865
        %v867 = vpop.xlane.xlu0 %866
        %v868 = vsel %vm559, %v777, 0.0
        %869 = vadd.xlane.f32.xlu0 %v868
        %v870 = vpop.xlane.xlu0 %869
        %v871 = vsel %vm559, %v779, 0.0
        %872 = vadd.xlane.f32.xlu0 %v871
        %v873 = vpop.xlane.xlu0 %872
        %v874 = vsel %vm559, %v781, 0.0
        %875 = vadd.xlane.f32.xlu0 %v874
        %v876 = vpop.xlane.xlu0 %875
        %v877 = vsel %vm559, %v783, 0.0
        %878 = vadd.xlane.f32.xlu0 %v877
        %v879 = vpop.xlane.xlu0 %878
        %v880 = vrcp.pop %v786
        %v881 = vmul.f32 %v721, %v880
        %v882 = vrcp.pop %v789
        %v883 = vmul.f32 %v723, %v882
        %v884 = vrcp.pop %v792
        %v885 = vmul.f32 %v725, %v884
        %v886 = vrcp.pop %v795
        %v887 = vmul.f32 %v727, %v886
        %v888 = vrcp.pop %v798
        %v889 = vmul.f32 %v729, %v888
        %v890 = vrcp.pop %v801
        %v891 = vmul.f32 %v731, %v890
        %v892 = vrcp.pop %v804
        %v893 = vmul.f32 %v733, %v892
        %v894 = vrcp.pop %v807
        %v895 = vmul.f32 %v735, %v894
        %v896 = vrcp.pop %v810
        %v897 = vmul.f32 %v737, %v896
        %v898 = vrcp.pop %v813
        %v899 = vmul.f32 %v739, %v898
        %v900 = vrcp.pop %v816
        %v901 = vmul.f32 %v741, %v900
        %v902 = vrcp.pop %v819
        %v903 = vmul.f32 %v743, %v902
        %v904 = vrcp.pop %v822
        %v905 = vmul.f32 %v745, %v904
        %v906 = vrcp.pop %v825
        %v907 = vmul.f32 %v747, %v906
        %v908 = vrcp.pop %v828
        %v909 = vmul.f32 %v749, %v908
        %v910 = vrcp.pop %v831
        %v911 = vmul.f32 %v751, %v910
        %v912 = vrcp.pop %v834
        %v913 = vmul.f32 %v753, %v912
        %v914 = vrcp.pop %v837
        %v915 = vmul.f32 %v755, %v914
        %v916 = vrcp.pop %v840
        %v917 = vmul.f32 %v757, %v916
        %v918 = vrcp.pop %v843
        %v919 = vmul.f32 %v759, %v918
        %v920 = vrcp.pop %v846
        %v921 = vmul.f32 %v761, %v920
        %v922 = vrcp.pop %v849
        %v923 = vmul.f32 %v763, %v922
        %v924 = vrcp.pop %v852
        %v925 = vmul.f32 %v765, %v924
        %v926 = vrcp.pop %v855
        %v927 = vmul.f32 %v767, %v926
        %v928 = vrcp.pop %v858
        %v929 = vmul.f32 %v769, %v928
        %v930 = vrcp.pop %v861
        %v931 = vmul.f32 %v771, %v930
        %v932 = vrcp.pop %v864
        %v933 = vmul.f32 %v773, %v932
        %v934 = vrcp.pop %v867
        %v935 = vmul.f32 %v775, %v934
        %v936 = vrcp.pop %v870
        %v937 = vmul.f32 %v777, %v936
        %v938 = vrcp.pop %v873
        %v939 = vmul.f32 %v779, %v938
        %v940 = vrcp.pop %v876
        %v941 = vmul.f32 %v781, %v940
        %v942 = vrcp.pop %v879
        %v943 = vmul.f32 %v783, %v942
        %v944 = vpack.c.bf16 %v883, %v881
        %v945 = vpack.c.bf16 %v887, %v885
        %v946 = vpack.c.bf16 %v891, %v889
        %v947 = vpack.c.bf16 %v895, %v893
        %v948 = vpack.c.bf16 %v899, %v897
        %v949 = vpack.c.bf16 %v903, %v901
        %v950 = vpack.c.bf16 %v907, %v905
        %v951 = vpack.c.bf16 %v911, %v909
        %v952 = vpack.c.bf16 %v915, %v913
        %v953 = vpack.c.bf16 %v919, %v917
        %v954 = vpack.c.bf16 %v923, %v921
        %v955 = vpack.c.bf16 %v927, %v925
        %v956 = vpack.c.bf16 %v931, %v929
        %v957 = vpack.c.bf16 %v935, %v933
        %v958 = vpack.c.bf16 %v939, %v937
        %v959 = vpack.c.bf16 %v943, %v941
        %960 = vxpose.xlu0.c.b16.start [1/8] %v294, 128
        %961 = vxpose.xlu0.c.b16.cont [2/8] %v295, 128
        %962 = vxpose.xlu0.c.b16.cont [3/8] %v296, 128
        %963 = vxpose.xlu0.c.b16.cont [4/8] %v297, 128
        %964 = vxpose.xlu0.c.b16.cont [5/8] %v298, 128
        %965 = vxpose.xlu0.c.b16.cont [6/8] %v299, 128
        %966 = vxpose.xlu0.c.b16.cont [7/8] %v300, 128
        %967 = vxpose.xlu0.c.b16.end [8/8] %v301, 128
        %v968 = vpop.trf.xlu0
        %v969 = vpop.trf.xlu0
        %v970 = vpop.trf.xlu0
        %v971 = vpop.trf.xlu0
        %v972 = vpop.trf.xlu0
        %v973 = vpop.trf.xlu0
        %v974 = vpop.trf.xlu0
        %v975 = vpop.trf.xlu0
        %976 = vmatprep.subr.bf16.mxu0 0
        %977 = vmatpush1.bf16.msra.mxu0 %v301
        %978 = vmatprep.subr.bf16.mxu0 0
        %979 = vmatpush1.bf16.msra.mxu0 %v300
        %980 = vmatprep.subr.bf16.mxu0 0
        %981 = vmatpush1.bf16.msra.mxu0 %v299
        %982 = vmatprep.subr.bf16.mxu0 0
        %983 = vmatpush1.bf16.msra.mxu0 %v298
        %984 = vmatprep.subr.bf16.mxu0 0
        %985 = vmatpush1.bf16.msra.mxu0 %v297
        %986 = vmatprep.subr.bf16.mxu0 0
        %987 = vmatpush1.bf16.msra.mxu0 %v296
        %988 = vmatprep.subr.bf16.mxu0 0
        %989 = vmatpush1.bf16.msra.mxu0 %v295
        %990 = vmatprep.subr.bf16.mxu0 0
        %991 = vmatpush1.bf16.msra.mxu0 %v294
        %992 = vmatprep.subr.bf16.mxu0 0
        %993 = vmatpush2.bf16.msra.mxu0 0
        %994 = vmatprep.subr.bf16.mxu0 0
        %995 = vmatpush2.bf16.msra.mxu0 0
        %996 = vmatprep.subr.bf16.mxu0 0
        %997 = vmatpush2.bf16.msra.mxu0 0
        %998 = vmatprep.subr.bf16.mxu0 0
        %999 = vmatpush2.bf16.msra.mxu0 0
        %1000 = vmatprep.subr.bf16.mxu0 0
        %1001 = vmatpush2.bf16.msra.mxu0 0
        %1002 = vmatprep.subr.bf16.mxu0 0
        %1003 = vmatpush2.bf16.msra.mxu0 0
        %1004 = vmatprep.subr.bf16.mxu0 0
        %1005 = vmatpush2.bf16.msra.mxu0 0
        %1006 = vmatprep.subr.bf16.mxu0 0
        %1007 = vmatpush2.bf16.msra.mxu0 0
        %1008 = vmatprep.mubr.bf16.mxu0 0
        %1009 = vmatmul.mubr.bf16.gmra.mxu0 %v968
        %v1010 = vpop.f32.mrf.mxu0
        %v1011 = vadd.f32 0.0, %v1010
        %v1012 = vpop.f32.mrf.mxu0
        %v1013 = vpop.f32.mrf.mxu0
        %v1014 = vadd.f32 0.0, %v1013
        %v1015 = vpop.f32.mrf.mxu0
        %1016 = vmatprep.mubr.bf16.mxu0 0
        %1017 = vmatmul.mubr.bf16.gmra.mxu0 %v969
        %v1018 = vpop.f32.mrf.mxu0
        %v1019 = vadd.f32 0.0, %v1018
        %v1020 = vpop.f32.mrf.mxu0
        %v1021 = vpop.f32.mrf.mxu0
        %v1022 = vadd.f32 0.0, %v1021
        %v1023 = vpop.f32.mrf.mxu0
        %1024 = vmatprep.mubr.bf16.mxu0 0
        %1025 = vmatmul.mubr.bf16.gmra.mxu0 %v970
        %v1026 = vpop.f32.mrf.mxu0
        %v1027 = vadd.f32 0.0, %v1026
        %v1028 = vpop.f32.mrf.mxu0
        %v1029 = vpop.f32.mrf.mxu0
        %v1030 = vadd.f32 0.0, %v1029
        %v1031 = vpop.f32.mrf.mxu0
        %1032 = vmatprep.mubr.bf16.mxu0 0
        %1033 = vmatmul.mubr.bf16.gmra.mxu0 %v971
        %v1034 = vpop.f32.mrf.mxu0
        %v1035 = vadd.f32 0.0, %v1034
        %v1036 = vpop.f32.mrf.mxu0
        %v1037 = vpop.f32.mrf.mxu0
        %v1038 = vadd.f32 0.0, %v1037
        %v1039 = vpop.f32.mrf.mxu0
        %1040 = vdwg.mxu0
        %v1041 = vpack.c.bf16 %v1014, %v1011
        %v1042 = vpack.c.bf16 %v1022, %v1019
        %v1043 = vpack.c.bf16 %v1030, %v1027
        %v1044 = vpack.c.bf16 %v1038, %v1035
        %v1045 = vmul.f32 %v881, %v433
        %v1046 = vmul.f32 %v883, %v436
        %v1047 = vmul.f32 %v885, %v441
        %v1048 = vmul.f32 %v887, %v444
        %v1049 = vmul.f32 %v889, %v449
        %v1050 = vmul.f32 %v891, %v452
        %v1051 = vmul.f32 %v893, %v457
        %v1052 = vmul.f32 %v895, %v460
        %v1053 = vmul.f32 %v897, %v465
        %v1054 = vmul.f32 %v899, %v468
        %v1055 = vmul.f32 %v901, %v473
        %v1056 = vmul.f32 %v903, %v476
        %v1057 = vmul.f32 %v905, %v481
        %v1058 = vmul.f32 %v907, %v484
        %v1059 = vmul.f32 %v909, %v489
        %v1060 = vmul.f32 %v911, %v492
        %v1061 = vmul.f32 %v913, %v497
        %v1062 = vmul.f32 %v915, %v500
        %v1063 = vmul.f32 %v917, %v505
        %v1064 = vmul.f32 %v919, %v508
        %v1065 = vmul.f32 %v921, %v513
        %v1066 = vmul.f32 %v923, %v516
        %v1067 = vmul.f32 %v925, %v521
        %v1068 = vmul.f32 %v927, %v524
        %v1069 = vmul.f32 %v929, %v529
        %v1070 = vmul.f32 %v931, %v532
        %v1071 = vmul.f32 %v933, %v537
        %v1072 = vmul.f32 %v935, %v540
        %v1073 = vmul.f32 %v937, %v545
        %v1074 = vmul.f32 %v939, %v548
        %v1075 = vmul.f32 %v941, %v553
        %v1076 = vmul.f32 %v943, %v556
        %v1078 = vsel %vm559, %v944, 0
        %v1081 = vsel %vm559, %v945, 0
        %v1084 = vsel %vm559, %v946, 0
        %v1087 = vsel %vm559, %v947, 0
        %v1090 = vsel %vm559, %v948, 0
        %v1093 = vsel %vm559, %v949, 0
        %v1096 = vsel %vm559, %v950, 0
        %v1099 = vsel %vm559, %v951, 0
        %v1102 = vsel %vm559, %v952, 0
        %v1105 = vsel %vm559, %v953, 0
        %v1108 = vsel %vm559, %v954, 0
        %v1111 = vsel %vm559, %v955, 0
        %v1114 = vsel %vm559, %v956, 0
        %v1117 = vsel %vm559, %v957, 0
        %v1120 = vsel %vm559, %v958, 0
        %v1123 = vsel %vm559, %v959, 0
        %1125 = vmatprep.subr.bf16.mxu0 0
        %1126 = vmatpush1.bf16.msra.mxu0 0
        %1127 = vmatprep.subr.bf16.mxu0 0
        %1128 = vmatpush1.bf16.msra.mxu0 0
        %1129 = vmatprep.subr.bf16.mxu0 0
        %1130 = vmatpush1.bf16.msra.mxu0 0
        %1131 = vmatprep.subr.bf16.mxu0 0
        %1132 = vmatpush1.bf16.msra.mxu0 0
        %1133 = vmatprep.subr.bf16.mxu0 0
        %1134 = vmatpush1.bf16.msra.mxu0 %v1044
        %1135 = vmatprep.subr.bf16.mxu0 0
        %1136 = vmatpush1.bf16.msra.mxu0 %v1043
        %1137 = vmatprep.subr.bf16.mxu0 0
        %1138 = vmatpush1.bf16.msra.mxu0 %v1042
        %1139 = vmatprep.subr.bf16.mxu0 0
        %1140 = vmatpush1.bf16.msra.mxu0 %v1041
        %1141 = vmatprep.subr.bf16.mxu0 0
        %1142 = vmatpush2.bf16.msra.mxu0 0
        %1143 = vmatprep.subr.bf16.mxu0 0
        %1144 = vmatpush2.bf16.msra.mxu0 0
        %1145 = vmatprep.subr.bf16.mxu0 0
        %1146 = vmatpush2.bf16.msra.mxu0 0
        %1147 = vmatprep.subr.bf16.mxu0 0
        %1148 = vmatpush2.bf16.msra.mxu0 0
        %1149 = vmatprep.subr.bf16.mxu0 0
        %1150 = vmatpush2.bf16.msra.mxu0 0
        %1151 = vmatprep.subr.bf16.mxu0 0
        %1152 = vmatpush2.bf16.msra.mxu0 0
        %1153 = vmatprep.subr.bf16.mxu0 0
        %1154 = vmatpush2.bf16.msra.mxu0 0
        %1155 = vmatprep.subr.bf16.mxu0 0
        %1156 = vmatpush2.bf16.msra.mxu0 0
        %1157 = vmatprep.mubr.bf16.mxu0 0
        %1158 = vmatmul.mubr.bf16.gmra.mxu0 %v1078
        %v1159 = vpop.f32.mrf.mxu0
        %v1160 = vadd.f32 1e-06, %v1159
        %v1161 = vpop.f32.mrf.mxu0
        %v1162 = vpop.f32.mrf.mxu0
        %v1163 = vadd.f32 1e-06, %v1162
        %v1164 = vpop.f32.mrf.mxu0
        %1165 = vmatprep.mubr.bf16.mxu0 0
        %1166 = vmatmul.mubr.bf16.gmra.mxu0 %v1081
        %v1167 = vpop.f32.mrf.mxu0
        %v1168 = vadd.f32 1e-06, %v1167
        %v1169 = vpop.f32.mrf.mxu0
        %v1170 = vpop.f32.mrf.mxu0
        %v1171 = vadd.f32 1e-06, %v1170
        %v1172 = vpop.f32.mrf.mxu0
        %1173 = vmatprep.mubr.bf16.mxu0 0
        %1174 = vmatmul.mubr.bf16.gmra.mxu0 %v1084
        %v1175 = vpop.f32.mrf.mxu0
        %v1176 = vadd.f32 1e-06, %v1175
        %v1177 = vpop.f32.mrf.mxu0
        %v1178 = vpop.f32.mrf.mxu0
        %v1179 = vadd.f32 1e-06, %v1178
        %v1180 = vpop.f32.mrf.mxu0
        %1181 = vmatprep.mubr.bf16.mxu0 0
        %1182 = vmatmul.mubr.bf16.gmra.mxu0 %v1087
        %v1183 = vpop.f32.mrf.mxu0
        %v1184 = vadd.f32 1e-06, %v1183
        %v1185 = vpop.f32.mrf.mxu0
        %v1186 = vpop.f32.mrf.mxu0
        %v1187 = vadd.f32 1e-06, %v1186
        %v1188 = vpop.f32.mrf.mxu0
        %1189 = vmatprep.mubr.bf16.mxu0 0
        %1190 = vmatmul.mubr.bf16.gmra.mxu0 %v1090
        %v1191 = vpop.f32.mrf.mxu0
        %v1192 = vadd.f32 1e-06, %v1191
        %v1193 = vpop.f32.mrf.mxu0
        %v1194 = vpop.f32.mrf.mxu0
        %v1195 = vadd.f32 1e-06, %v1194
        %v1196 = vpop.f32.mrf.mxu0
        %1197 = vmatprep.mubr.bf16.mxu0 0
        %1198 = vmatmul.mubr.bf16.gmra.mxu0 %v1093
        %v1199 = vpop.f32.mrf.mxu0
        %v1200 = vadd.f32 1e-06, %v1199
        %v1201 = vpop.f32.mrf.mxu0
        %v1202 = vpop.f32.mrf.mxu0
        %v1203 = vadd.f32 1e-06, %v1202
        %v1204 = vpop.f32.mrf.mxu0
        %1205 = vmatprep.mubr.bf16.mxu0 0
        %1206 = vmatmul.mubr.bf16.gmra.mxu0 %v1096
        %v1207 = vpop.f32.mrf.mxu0
        %v1208 = vadd.f32 1e-06, %v1207
        %v1209 = vpop.f32.mrf.mxu0
        %v1210 = vpop.f32.mrf.mxu0
        %v1211 = vadd.f32 1e-06, %v1210
        %v1212 = vpop.f32.mrf.mxu0
        %1213 = vmatprep.mubr.bf16.mxu0 0
        %1214 = vmatmul.mubr.bf16.gmra.mxu0 %v1099
        %v1215 = vpop.f32.mrf.mxu0
        %v1216 = vadd.f32 1e-06, %v1215
        %v1217 = vpop.f32.mrf.mxu0
        %v1218 = vpop.f32.mrf.mxu0
        %v1219 = vadd.f32 1e-06, %v1218
        %v1220 = vpop.f32.mrf.mxu0
        %1221 = vmatprep.mubr.bf16.mxu0 0
        %1222 = vmatmul.mubr.bf16.gmra.mxu0 %v1102
        %v1223 = vpop.f32.mrf.mxu0
        %v1224 = vadd.f32 1e-06, %v1223
        %v1225 = vpop.f32.mrf.mxu0
        %v1226 = vpop.f32.mrf.mxu0
        %v1227 = vadd.f32 1e-06, %v1226
        %v1228 = vpop.f32.mrf.mxu0
        %1229 = vmatprep.mubr.bf16.mxu0 0
        %1230 = vmatmul.mubr.bf16.gmra.mxu0 %v1105
        %v1231 = vpop.f32.mrf.mxu0
        %v1232 = vadd.f32 1e-06, %v1231
        %v1233 = vpop.f32.mrf.mxu0
        %v1234 = vpop.f32.mrf.mxu0
        %v1235 = vadd.f32 1e-06, %v1234
        %v1236 = vpop.f32.mrf.mxu0
        %1237 = vmatprep.mubr.bf16.mxu0 0
        %1238 = vmatmul.mubr.bf16.gmra.mxu0 %v1108
        %v1239 = vpop.f32.mrf.mxu0
        %v1240 = vadd.f32 1e-06, %v1239
        %v1241 = vpop.f32.mrf.mxu0
        %v1242 = vpop.f32.mrf.mxu0
        %v1243 = vadd.f32 1e-06, %v1242
        %v1244 = vpop.f32.mrf.mxu0
        %1245 = vmatprep.mubr.bf16.mxu0 0
        %1246 = vmatmul.mubr.bf16.gmra.mxu0 %v1111
        %v1247 = vpop.f32.mrf.mxu0
        %v1248 = vadd.f32 1e-06, %v1247
        %v1249 = vpop.f32.mrf.mxu0
        %v1250 = vpop.f32.mrf.mxu0
        %v1251 = vadd.f32 1e-06, %v1250
        %v1252 = vpop.f32.mrf.mxu0
        %1253 = vmatprep.mubr.bf16.mxu0 0
        %1254 = vmatmul.mubr.bf16.gmra.mxu0 %v1114
        %v1255 = vpop.f32.mrf.mxu0
        %v1256 = vadd.f32 1e-06, %v1255
        %v1257 = vpop.f32.mrf.mxu0
        %v1258 = vpop.f32.mrf.mxu0
        %v1259 = vadd.f32 1e-06, %v1258
        %v1260 = vpop.f32.mrf.mxu0
        %1261 = vmatprep.mubr.bf16.mxu0 0
        %1262 = vmatmul.mubr.bf16.gmra.mxu0 %v1117
        %v1263 = vpop.f32.mrf.mxu0
        %v1264 = vadd.f32 1e-06, %v1263
        %v1265 = vpop.f32.mrf.mxu0
        %v1266 = vpop.f32.mrf.mxu0
        %v1267 = vadd.f32 1e-06, %v1266
        %v1268 = vpop.f32.mrf.mxu0
        %1269 = vmatprep.mubr.bf16.mxu0 0
        %1270 = vmatmul.mubr.bf16.gmra.mxu0 %v1120
        %v1271 = vpop.f32.mrf.mxu0
        %v1272 = vadd.f32 1e-06, %v1271
        %v1273 = vpop.f32.mrf.mxu0
        %v1274 = vpop.f32.mrf.mxu0
        %v1275 = vadd.f32 1e-06, %v1274
        %v1276 = vpop.f32.mrf.mxu0
        %1277 = vmatprep.mubr.bf16.mxu0 0
        %1278 = vmatmul.mubr.bf16.gmra.mxu0 %v1123
        %v1279 = vpop.f32.mrf.mxu0
        %v1280 = vadd.f32 1e-06, %v1279
        %v1281 = vpop.f32.mrf.mxu0
        %v1282 = vpop.f32.mrf.mxu0
        %v1283 = vadd.f32 1e-06, %v1282
        %v1284 = vpop.f32.mrf.mxu0
        %1285 = vdwg.mxu0
        %v1286 = vrcp.pop %v1160
        %v1287 = vrcp.pop %v1163
        %v1288 = vrcp.pop %v1168
        %v1289 = vrcp.pop %v1171
        %v1290 = vrcp.pop %v1176
        %v1291 = vrcp.pop %v1179
        %v1292 = vrcp.pop %v1184
        %v1293 = vrcp.pop %v1187
        %v1294 = vrcp.pop %v1192
        %v1295 = vrcp.pop %v1195
        %v1296 = vrcp.pop %v1200
        %v1297 = vrcp.pop %v1203
        %v1298 = vrcp.pop %v1208
        %v1299 = vrcp.pop %v1211
        %v1300 = vrcp.pop %v1216
        %v1301 = vrcp.pop %v1219
        %v1302 = vrcp.pop %v1224
        %v1303 = vrcp.pop %v1227
        %v1304 = vrcp.pop %v1232
        %v1305 = vrcp.pop %v1235
        %v1306 = vrcp.pop %v1240
        %v1307 = vrcp.pop %v1243
        %v1308 = vrcp.pop %v1248
        %v1309 = vrcp.pop %v1251
        %v1310 = vrcp.pop %v1256
        %v1311 = vrcp.pop %v1259
        %v1312 = vrcp.pop %v1264
        %v1313 = vrcp.pop %v1267
        %v1314 = vrcp.pop %v1272
        %v1315 = vrcp.pop %v1275
        %v1316 = vrcp.pop %v1280
        %v1317 = vrcp.pop %v1283
        %v1318 = vmul.f32 %v1045, %v1286
        %v1319 = vmul.f32 %v1046, %v1287
        %v1320 = vmul.f32 %v1047, %v1288
        %v1321 = vmul.f32 %v1048, %v1289
        %v1322 = vmul.f32 %v1049, %v1290
        %v1323 = vmul.f32 %v1050, %v1291
        %v1324 = vmul.f32 %v1051, %v1292
        %v1325 = vmul.f32 %v1052, %v1293
        %v1326 = vmul.f32 %v1053, %v1294
        %v1327 = vmul.f32 %v1054, %v1295
        %v1328 = vmul.f32 %v1055, %v1296
        %v1329 = vmul.f32 %v1056, %v1297
        %v1330 = vmul.f32 %v1057, %v1298
        %v1331 = vmul.f32 %v1058, %v1299
        %v1332 = vmul.f32 %v1059, %v1300
        %v1333 = vmul.f32 %v1060, %v1301
        %v1334 = vmul.f32 %v1061, %v1302
        %v1335 = vmul.f32 %v1062, %v1303
        %v1336 = vmul.f32 %v1063, %v1304
        %v1337 = vmul.f32 %v1064, %v1305
        %v1338 = vmul.f32 %v1065, %v1306
        %v1339 = vmul.f32 %v1066, %v1307
        %v1340 = vmul.f32 %v1067, %v1308
        %v1341 = vmul.f32 %v1068, %v1309
        %v1342 = vmul.f32 %v1069, %v1310
        %v1343 = vmul.f32 %v1070, %v1311
        %v1344 = vmul.f32 %v1071, %v1312
        %v1345 = vmul.f32 %v1072, %v1313
        %v1346 = vmul.f32 %v1073, %v1314
        %v1347 = vmul.f32 %v1074, %v1315
        %v1348 = vmul.f32 %v1075, %v1316
        %v1349 = vmul.f32 %v1076, %v1317
        %v1350 = vpack.c.bf16 %v1319, %v1318
        %v1351 = vpack.c.bf16 %v1321, %v1320
        %v1352 = vpack.c.bf16 %v1323, %v1322
        %v1353 = vpack.c.bf16 %v1325, %v1324
        %v1354 = vpack.c.bf16 %v1327, %v1326
        %v1355 = vpack.c.bf16 %v1329, %v1328
        %v1356 = vpack.c.bf16 %v1331, %v1330
        %v1357 = vpack.c.bf16 %v1333, %v1332
        %v1358 = vpack.c.bf16 %v1335, %v1334
        %v1359 = vpack.c.bf16 %v1337, %v1336
        %v1360 = vpack.c.bf16 %v1339, %v1338
        %v1361 = vpack.c.bf16 %v1341, %v1340
        %v1362 = vpack.c.bf16 %v1343, %v1342
        %v1363 = vpack.c.bf16 %v1345, %v1344
        %v1364 = vpack.c.bf16 %v1347, %v1346
        %v1365 = vpack.c.bf16 %v1349, %v1348
        %v1382 = vunpack.c.l.b16 %v262
        %v1383 = vunpack.c.h.b16 %v262
        %v1384 = vunpack.c.l.b16 %v263
        %v1385 = vunpack.c.h.b16 %v263
        %v1386 = vunpack.c.l.b16 %v264
        %v1387 = vunpack.c.h.b16 %v264
        %v1388 = vunpack.c.l.b16 %v265
        %v1389 = vunpack.c.h.b16 %v265
        %v1390 = vunpack.c.l.b16 %v266
        %v1391 = vunpack.c.h.b16 %v266
        %v1392 = vunpack.c.l.b16 %v267
        %v1393 = vunpack.c.h.b16 %v267
        %v1394 = vunpack.c.l.b16 %v268
        %v1395 = vunpack.c.h.b16 %v268
        %v1396 = vunpack.c.l.b16 %v269
        %v1397 = vunpack.c.h.b16 %v269
        %v1398 = vunpack.c.l.b16 %v270
        %v1399 = vunpack.c.h.b16 %v270
        %v1400 = vunpack.c.l.b16 %v271
        %v1401 = vunpack.c.h.b16 %v271
        %v1402 = vunpack.c.l.b16 %v272
        %v1403 = vunpack.c.h.b16 %v272
        %v1404 = vunpack.c.l.b16 %v273
        %v1405 = vunpack.c.h.b16 %v273
        %v1406 = vunpack.c.l.b16 %v274
        %v1407 = vunpack.c.h.b16 %v274
        %v1408 = vunpack.c.l.b16 %v275
        %v1409 = vunpack.c.h.b16 %v275
        %v1410 = vunpack.c.l.b16 %v276
        %v1411 = vunpack.c.h.b16 %v276
        %v1412 = vunpack.c.l.b16 %v277
        %v1413 = vunpack.c.h.b16 %v277
        %v1414 = vpack.c.b16 %v1384, %v1382
        %v1415 = vpack.c.b16 %v1385, %v1383
        %v1416 = vpack.c.b16 %v1388, %v1386
        %v1417 = vpack.c.b16 %v1389, %v1387
        %v1418 = vpack.c.b16 %v1392, %v1390
        %v1419 = vpack.c.b16 %v1393, %v1391
        %v1420 = vpack.c.b16 %v1396, %v1394
        %v1421 = vpack.c.b16 %v1397, %v1395
        %v1422 = vpack.c.b16 %v1400, %v1398
        %v1423 = vpack.c.b16 %v1401, %v1399
        %v1424 = vpack.c.b16 %v1404, %v1402
        %v1425 = vpack.c.b16 %v1405, %v1403
        %v1426 = vpack.c.b16 %v1408, %v1406
        %v1427 = vpack.c.b16 %v1409, %v1407
        %v1428 = vpack.c.b16 %v1412, %v1410
        %v1429 = vpack.c.b16 %v1413, %v1411
        %1446 = vmatprep.subr.bf16.mxu0 0
        %1447 = vmatpush1.bf16.msra.mxu0 %v1357
        %1448 = vmatprep.subr.bf16.mxu0 0
        %1449 = vmatpush1.bf16.msra.mxu0 %v1356
        %1450 = vmatprep.subr.bf16.mxu0 0
        %1451 = vmatpush1.bf16.msra.mxu0 %v1355
        %1452 = vmatprep.subr.bf16.mxu0 0
        %1453 = vmatpush1.bf16.msra.mxu0 %v1354
        %1454 = vmatprep.subr.bf16.mxu0 0
        %1455 = vmatpush1.bf16.msra.mxu0 %v1353
        %1456 = vmatprep.subr.bf16.mxu0 0
        %1457 = vmatpush1.bf16.msra.mxu0 %v1352
        %1458 = vmatprep.subr.bf16.mxu0 0
        %1459 = vmatpush1.bf16.msra.mxu0 %v1351
        %1460 = vmatprep.subr.bf16.mxu0 0
        %1461 = vmatpush1.bf16.msra.mxu0 %v1350
        %1462 = vmatprep.subr.bf16.mxu0 0
        %1463 = vmatpush2.bf16.msra.mxu0 %v1365
        %1464 = vmatprep.subr.bf16.mxu0 0
        %1465 = vmatpush2.bf16.msra.mxu0 %v1364
        %1466 = vmatprep.subr.bf16.mxu0 0
        %1467 = vmatpush2.bf16.msra.mxu0 %v1363
        %1468 = vmatprep.subr.bf16.mxu0 0
        %1469 = vmatpush2.bf16.msra.mxu0 %v1362
        %1470 = vmatprep.subr.bf16.mxu0 0
        %1471 = vmatpush2.bf16.msra.mxu0 %v1361
        %1472 = vmatprep.subr.bf16.mxu0 0
        %1473 = vmatpush2.bf16.msra.mxu0 %v1360
        %1474 = vmatprep.subr.bf16.mxu0 0
        %1475 = vmatpush2.bf16.msra.mxu0 %v1359
        %1476 = vmatprep.subr.bf16.mxu0 0
        %1477 = vmatpush2.bf16.msra.mxu0 %v1358
        %1478 = vmatprep.mubr.bf16.mxu0 %v1415
        %1479 = vmatmul.mubr.bf16.gmra.mxu0 %v1414
        %v1480 = vpop.f32.mrf.mxu0
        %v1481 = vadd.f32 0.0, %v1480
        %v1482 = vpop.f32.mrf.mxu0
        %v1483 = vpop.f32.mrf.mxu0
        %v1484 = vadd.f32 0.0, %v1483
        %v1485 = vpop.f32.mrf.mxu0
        %1486 = vmatprep.mubr.bf16.mxu0 %v1417
        %1487 = vmatmul.mubr.bf16.gmra.mxu0 %v1416
        %v1488 = vpop.f32.mrf.mxu0
        %v1489 = vadd.f32 0.0, %v1488
        %v1490 = vpop.f32.mrf.mxu0
        %v1491 = vpop.f32.mrf.mxu0
        %v1492 = vadd.f32 0.0, %v1491
        %v1493 = vpop.f32.mrf.mxu0
        %1494 = vmatprep.mubr.bf16.mxu0 %v1419
        %1495 = vmatmul.mubr.bf16.gmra.mxu0 %v1418
        %v1496 = vpop.f32.mrf.mxu0
        %v1497 = vadd.f32 0.0, %v1496
        %v1498 = vpop.f32.mrf.mxu0
        %v1499 = vpop.f32.mrf.mxu0
        %v1500 = vadd.f32 0.0, %v1499
        %v1501 = vpop.f32.mrf.mxu0
        %1502 = vmatprep.mubr.bf16.mxu0 %v1421
        %1503 = vmatmul.mubr.bf16.gmra.mxu0 %v1420
        %v1504 = vpop.f32.mrf.mxu0
        %v1505 = vadd.f32 0.0, %v1504
        %v1506 = vpop.f32.mrf.mxu0
        %v1507 = vpop.f32.mrf.mxu0
        %v1508 = vadd.f32 0.0, %v1507
        %v1509 = vpop.f32.mrf.mxu0
        %1510 = vmatprep.mubr.bf16.mxu0 %v1423
        %1511 = vmatmul.mubr.bf16.gmra.mxu0 %v1422
        %v1512 = vpop.f32.mrf.mxu0
        %v1513 = vadd.f32 0.0, %v1512
        %v1514 = vpop.f32.mrf.mxu0
        %v1515 = vpop.f32.mrf.mxu0
        %v1516 = vadd.f32 0.0, %v1515
        %v1517 = vpop.f32.mrf.mxu0
        %1518 = vmatprep.mubr.bf16.mxu0 %v1425
        %1519 = vmatmul.mubr.bf16.gmra.mxu0 %v1424
        %v1520 = vpop.f32.mrf.mxu0
        %v1521 = vadd.f32 0.0, %v1520
        %v1522 = vpop.f32.mrf.mxu0
        %v1523 = vpop.f32.mrf.mxu0
        %v1524 = vadd.f32 0.0, %v1523
        %v1525 = vpop.f32.mrf.mxu0
        %1526 = vmatprep.mubr.bf16.mxu0 %v1427
        %1527 = vmatmul.mubr.bf16.gmra.mxu0 %v1426
        %v1528 = vpop.f32.mrf.mxu0
        %v1529 = vadd.f32 0.0, %v1528
        %v1530 = vpop.f32.mrf.mxu0
        %v1531 = vpop.f32.mrf.mxu0
        %v1532 = vadd.f32 0.0, %v1531
        %v1533 = vpop.f32.mrf.mxu0
        %1534 = vmatprep.mubr.bf16.mxu0 %v1429
        %1535 = vmatmul.mubr.bf16.gmra.mxu0 %v1428
        %v1536 = vpop.f32.mrf.mxu0
        %v1537 = vadd.f32 0.0, %v1536
        %v1538 = vpop.f32.mrf.mxu0
        %v1539 = vpop.f32.mrf.mxu0
        %v1540 = vadd.f32 0.0, %v1539
        %v1541 = vpop.f32.mrf.mxu0
        %1542 = vdwg.mxu0
        %1543 = vxpose.xlu0.c.b16.start [1/8] %v1350, 128
        %1544 = vxpose.xlu0.c.b16.cont [2/8] %v1351, 128
        %1545 = vxpose.xlu0.c.b16.cont [3/8] %v1352, 128
        %1546 = vxpose.xlu0.c.b16.cont [4/8] %v1353, 128
        %1547 = vxpose.xlu0.c.b16.cont [5/8] %v1354, 128
        %1548 = vxpose.xlu0.c.b16.cont [6/8] %v1355, 128
        %1549 = vxpose.xlu0.c.b16.cont [7/8] %v1356, 128
        %1550 = vxpose.xlu0.c.b16.end [8/8] %v1357, 128
        %v1551 = vpop.trf.xlu0
        %v1552 = vpop.trf.xlu0
        %v1553 = vpop.trf.xlu0
        %v1554 = vpop.trf.xlu0
        %v1555 = vpop.trf.xlu0
        %v1556 = vpop.trf.xlu0
        %v1557 = vpop.trf.xlu0
        %v1558 = vpop.trf.xlu0
        %1559 = vxpose.xlu0.c.b16.start [1/8] %v1358, 128
        %1560 = vxpose.xlu0.c.b16.cont [2/8] %v1359, 128
        %1561 = vxpose.xlu0.c.b16.cont [3/8] %v1360, 128
        %1562 = vxpose.xlu0.c.b16.cont [4/8] %v1361, 128
        %1563 = vxpose.xlu0.c.b16.cont [5/8] %v1362, 128
        %1564 = vxpose.xlu0.c.b16.cont [6/8] %v1363, 128
        %1565 = vxpose.xlu0.c.b16.cont [7/8] %v1364, 128
        %1566 = vxpose.xlu0.c.b16.end [8/8] %v1365, 128
        %v1567 = vpop.trf.xlu0
        %v1568 = vpop.trf.xlu0
        %v1569 = vpop.trf.xlu0
        %v1570 = vpop.trf.xlu0
        %v1571 = vpop.trf.xlu0
        %v1572 = vpop.trf.xlu0
        %v1573 = vpop.trf.xlu0
        %v1574 = vpop.trf.xlu0
        %1575 = vmatprep.subr.bf16.mxu0 0
        %1576 = vmatpush1.bf16.msra.mxu0 %v1357
        %1577 = vmatprep.subr.bf16.mxu0 0
        %1578 = vmatpush1.bf16.msra.mxu0 %v1356
        %1579 = vmatprep.subr.bf16.mxu0 0
        %1580 = vmatpush1.bf16.msra.mxu0 %v1355
        %1581 = vmatprep.subr.bf16.mxu0 0
        %1582 = vmatpush1.bf16.msra.mxu0 %v1354
        %1583 = vmatprep.subr.bf16.mxu0 0
        %1584 = vmatpush1.bf16.msra.mxu0 %v1353
        %1585 = vmatprep.subr.bf16.mxu0 0
        %1586 = vmatpush1.bf16.msra.mxu0 %v1352
        %1587 = vmatprep.subr.bf16.mxu0 0
        %1588 = vmatpush1.bf16.msra.mxu0 %v1351
        %1589 = vmatprep.subr.bf16.mxu0 0
        %1590 = vmatpush1.bf16.msra.mxu0 %v1350
        %1591 = vmatprep.subr.bf16.mxu0 0
        %1592 = vmatpush2.bf16.msra.mxu0 %v1365
        %1593 = vmatprep.subr.bf16.mxu0 0
        %1594 = vmatpush2.bf16.msra.mxu0 %v1364
        %1595 = vmatprep.subr.bf16.mxu0 0
        %1596 = vmatpush2.bf16.msra.mxu0 %v1363
        %1597 = vmatprep.subr.bf16.mxu0 0
        %1598 = vmatpush2.bf16.msra.mxu0 %v1362
        %1599 = vmatprep.subr.bf16.mxu0 0
        %1600 = vmatpush2.bf16.msra.mxu0 %v1361
        %1601 = vmatprep.subr.bf16.mxu0 0
        %1602 = vmatpush2.bf16.msra.mxu0 %v1360
        %1603 = vmatprep.subr.bf16.mxu0 0
        %1604 = vmatpush2.bf16.msra.mxu0 %v1359
        %1605 = vmatprep.subr.bf16.mxu0 0
        %1606 = vmatpush2.bf16.msra.mxu0 %v1358
        %1607 = vmatprep.mubr.bf16.mxu0 %v1567
        %1608 = vmatmul.mubr.bf16.gmra.mxu0 %v1551
        %v1609 = vpop.f32.mrf.mxu0
        %v1610 = vadd.f32 0.0, %v1609
        %v1611 = vpop.f32.mrf.mxu0
        %v1612 = vpop.f32.mrf.mxu0
        %v1613 = vadd.f32 0.0, %v1612
        %v1614 = vpop.f32.mrf.mxu0
        %1615 = vmatprep.mubr.bf16.mxu0 %v1568
        %1616 = vmatmul.mubr.bf16.gmra.mxu0 %v1552
        %v1617 = vpop.f32.mrf.mxu0
        %v1618 = vadd.f32 0.0, %v1617
        %v1619 = vpop.f32.mrf.mxu0
        %v1620 = vpop.f32.mrf.mxu0
        %v1621 = vadd.f32 0.0, %v1620
        %v1622 = vpop.f32.mrf.mxu0
        %1623 = vmatprep.mubr.bf16.mxu0 %v1569
        %1624 = vmatmul.mubr.bf16.gmra.mxu0 %v1553
        %v1625 = vpop.f32.mrf.mxu0
        %v1626 = vadd.f32 0.0, %v1625
        %v1627 = vpop.f32.mrf.mxu0
        %v1628 = vpop.f32.mrf.mxu0
        %v1629 = vadd.f32 0.0, %v1628
        %v1630 = vpop.f32.mrf.mxu0
        %1631 = vmatprep.mubr.bf16.mxu0 %v1570
        %1632 = vmatmul.mubr.bf16.gmra.mxu0 %v1554
        %v1633 = vpop.f32.mrf.mxu0
        %v1634 = vadd.f32 0.0, %v1633
        %v1635 = vpop.f32.mrf.mxu0
        %v1636 = vpop.f32.mrf.mxu0
        %v1637 = vadd.f32 0.0, %v1636
        %v1638 = vpop.f32.mrf.mxu0
        %1639 = vdwg.mxu0
        %v1640 = vpack.c.bf16 %v1613, %v1610
        %v1641 = vpack.c.bf16 %v1621, %v1618
        %v1642 = vpack.c.bf16 %v1629, %v1626
        %v1643 = vpack.c.bf16 %v1637, %v1634
        %v1644 = vmul.f32 %v278, %v1481
        %v1645 = vmul.f32 %v279, %v1484
        %v1646 = vmul.f32 %v280, %v1489
        %v1647 = vmul.f32 %v281, %v1492
        %v1648 = vmul.f32 %v282, %v1497
        %v1649 = vmul.f32 %v283, %v1500
        %v1650 = vmul.f32 %v284, %v1505
        %v1651 = vmul.f32 %v285, %v1508
        %v1652 = vmul.f32 %v286, %v1513
        %v1653 = vmul.f32 %v287, %v1516
        %v1654 = vmul.f32 %v288, %v1521
        %v1655 = vmul.f32 %v289, %v1524
        %v1656 = vmul.f32 %v290, %v1529
        %v1657 = vmul.f32 %v291, %v1532
        %v1658 = vmul.f32 %v292, %v1537
        %v1659 = vmul.f32 %v293, %v1540
        %v1661 = vsel %vm559, %v294, 0
        %v1664 = vsel %vm559, %v295, 0
        %v1667 = vsel %vm559, %v296, 0
        %v1670 = vsel %vm559, %v297, 0
        %v1673 = vsel %vm559, %v298, 0
        %v1676 = vsel %vm559, %v299, 0
        %v1679 = vsel %vm559, %v300, 0
        %v1682 = vsel %vm559, %v301, 0
        %1684 = vmatprep.subr.bf16.mxu0 0
        %1685 = vmatpush1.bf16.msra.mxu0 0
        %1686 = vmatprep.subr.bf16.mxu0 0
        %1687 = vmatpush1.bf16.msra.mxu0 0
        %1688 = vmatprep.subr.bf16.mxu0 0
        %1689 = vmatpush1.bf16.msra.mxu0 0
        %1690 = vmatprep.subr.bf16.mxu0 0
        %1691 = vmatpush1.bf16.msra.mxu0 0
        %1692 = vmatprep.subr.bf16.mxu0 0
        %1693 = vmatpush1.bf16.msra.mxu0 %v1643
        %1694 = vmatprep.subr.bf16.mxu0 0
        %1695 = vmatpush1.bf16.msra.mxu0 %v1642
        %1696 = vmatprep.subr.bf16.mxu0 0
        %1697 = vmatpush1.bf16.msra.mxu0 %v1641
        %1698 = vmatprep.subr.bf16.mxu0 0
        %1699 = vmatpush1.bf16.msra.mxu0 %v1640
        %1700 = vmatprep.subr.bf16.mxu0 0
        %1701 = vmatpush2.bf16.msra.mxu0 0
        %1702 = vmatprep.subr.bf16.mxu0 0
        %1703 = vmatpush2.bf16.msra.mxu0 0
        %1704 = vmatprep.subr.bf16.mxu0 0
        %1705 = vmatpush2.bf16.msra.mxu0 0
        %1706 = vmatprep.subr.bf16.mxu0 0
        %1707 = vmatpush2.bf16.msra.mxu0 0
        %1708 = vmatprep.subr.bf16.mxu0 0
        %1709 = vmatpush2.bf16.msra.mxu0 0
        %1710 = vmatprep.subr.bf16.mxu0 0
        %1711 = vmatpush2.bf16.msra.mxu0 0
        %1712 = vmatprep.subr.bf16.mxu0 0
        %1713 = vmatpush2.bf16.msra.mxu0 0
        %1714 = vmatprep.subr.bf16.mxu0 0
        %1715 = vmatpush2.bf16.msra.mxu0 0
        %1716 = vmatprep.mubr.bf16.mxu0 0
        %1717 = vmatmul.mubr.bf16.gmra.mxu0 %v1661
        %v1718 = vpop.f32.mrf.mxu0
        %v1719 = vadd.f32 1e-06, %v1718
        %v1720 = vpop.f32.mrf.mxu0
        %v1721 = vpop.f32.mrf.mxu0
        %v1722 = vadd.f32 1e-06, %v1721
        %v1723 = vpop.f32.mrf.mxu0
        %1724 = vmatprep.mubr.bf16.mxu0 0
        %1725 = vmatmul.mubr.bf16.gmra.mxu0 %v1664
        %v1726 = vpop.f32.mrf.mxu0
        %v1727 = vadd.f32 1e-06, %v1726
        %v1728 = vpop.f32.mrf.mxu0
        %v1729 = vpop.f32.mrf.mxu0
        %v1730 = vadd.f32 1e-06, %v1729
        %v1731 = vpop.f32.mrf.mxu0
        %1732 = vmatprep.mubr.bf16.mxu0 0
        %1733 = vmatmul.mubr.bf16.gmra.mxu0 %v1667
        %v1734 = vpop.f32.mrf.mxu0
        %v1735 = vadd.f32 1e-06, %v1734
        %v1736 = vpop.f32.mrf.mxu0
        %v1737 = vpop.f32.mrf.mxu0
        %v1738 = vadd.f32 1e-06, %v1737
        %v1739 = vpop.f32.mrf.mxu0
        %1740 = vmatprep.mubr.bf16.mxu0 0
        %1741 = vmatmul.mubr.bf16.gmra.mxu0 %v1670
        %v1742 = vpop.f32.mrf.mxu0
        %v1743 = vadd.f32 1e-06, %v1742
        %v1744 = vpop.f32.mrf.mxu0
        %v1745 = vpop.f32.mrf.mxu0
        %v1746 = vadd.f32 1e-06, %v1745
        %v1747 = vpop.f32.mrf.mxu0
        %1748 = vmatprep.mubr.bf16.mxu0 0
        %1749 = vmatmul.mubr.bf16.gmra.mxu0 %v1673
        %v1750 = vpop.f32.mrf.mxu0
        %v1751 = vadd.f32 1e-06, %v1750
        %v1752 = vpop.f32.mrf.mxu0
        %v1753 = vpop.f32.mrf.mxu0
        %v1754 = vadd.f32 1e-06, %v1753
        %v1755 = vpop.f32.mrf.mxu0
        %1756 = vmatprep.mubr.bf16.mxu0 0
        %1757 = vmatmul.mubr.bf16.gmra.mxu0 %v1676
        %v1758 = vpop.f32.mrf.mxu0
        %v1759 = vadd.f32 1e-06, %v1758
        %v1760 = vpop.f32.mrf.mxu0
        %v1761 = vpop.f32.mrf.mxu0
        %v1762 = vadd.f32 1e-06, %v1761
        %v1763 = vpop.f32.mrf.mxu0
        %1764 = vmatprep.mubr.bf16.mxu0 0
        %1765 = vmatmul.mubr.bf16.gmra.mxu0 %v1679
        %v1766 = vpop.f32.mrf.mxu0
        %v1767 = vadd.f32 1e-06, %v1766
        %v1768 = vpop.f32.mrf.mxu0
        %v1769 = vpop.f32.mrf.mxu0
        %v1770 = vadd.f32 1e-06, %v1769
        %v1771 = vpop.f32.mrf.mxu0
        %1772 = vmatprep.mubr.bf16.mxu0 0
        %1773 = vmatmul.mubr.bf16.gmra.mxu0 %v1682
        %v1774 = vpop.f32.mrf.mxu0
        %v1775 = vadd.f32 1e-06, %v1774
        %v1776 = vpop.f32.mrf.mxu0
        %v1777 = vpop.f32.mrf.mxu0
        %v1778 = vadd.f32 1e-06, %v1777
        %v1779 = vpop.f32.mrf.mxu0
        %1780 = vdwg.mxu0
        %v1781 = vrcp.pop %v1719
        %v1782 = vrcp.pop %v1722
        %v1783 = vrcp.pop %v1727
        %v1784 = vrcp.pop %v1730
        %v1785 = vrcp.pop %v1735
        %v1786 = vrcp.pop %v1738
        %v1787 = vrcp.pop %v1743
        %v1788 = vrcp.pop %v1746
        %v1789 = vrcp.pop %v1751
        %v1790 = vrcp.pop %v1754
        %v1791 = vrcp.pop %v1759
        %v1792 = vrcp.pop %v1762
        %v1793 = vrcp.pop %v1767
        %v1794 = vrcp.pop %v1770
        %v1795 = vrcp.pop %v1775
        %v1796 = vrcp.pop %v1778
        %v1797 = vmul.f32 %v1644, %v1781
        %v1798 = vmul.f32 %v1645, %v1782
        %v1799 = vmul.f32 %v1646, %v1783
        %v1800 = vmul.f32 %v1647, %v1784
        %v1801 = vmul.f32 %v1648, %v1785
        %v1802 = vmul.f32 %v1649, %v1786
        %v1803 = vmul.f32 %v1650, %v1787
        %v1804 = vmul.f32 %v1651, %v1788
        %v1805 = vmul.f32 %v1652, %v1789
        %v1806 = vmul.f32 %v1653, %v1790
        %v1807 = vmul.f32 %v1654, %v1791
        %v1808 = vmul.f32 %v1655, %v1792
        %v1809 = vmul.f32 %v1656, %v1793
        %v1810 = vmul.f32 %v1657, %v1794
        %v1811 = vmul.f32 %v1658, %v1795
        %v1812 = vmul.f32 %v1659, %v1796
        %v1813 = vpack.c.bf16 %v1798, %v1797
        %v1814 = vpack.c.bf16 %v1800, %v1799
        %v1815 = vpack.c.bf16 %v1802, %v1801
        %v1816 = vpack.c.bf16 %v1804, %v1803
        %v1817 = vpack.c.bf16 %v1806, %v1805
        %v1818 = vpack.c.bf16 %v1808, %v1807
        %v1819 = vpack.c.bf16 %v1810, %v1809
        %v1820 = vpack.c.bf16 %v1812, %v1811
        %1821 = vmatprep.subr.bf16.mxu0 0
        %1822 = vmatpush1.bf16.msra.mxu0 %v1820
        %1823 = vmatprep.subr.bf16.mxu0 0
        %1824 = vmatpush1.bf16.msra.mxu0 %v1819
        %1825 = vmatprep.subr.bf16.mxu0 0
        %1826 = vmatpush1.bf16.msra.mxu0 %v1818
        %1827 = vmatprep.subr.bf16.mxu0 0
        %1828 = vmatpush1.bf16.msra.mxu0 %v1817
        %1829 = vmatprep.subr.bf16.mxu0 0
        %1830 = vmatpush1.bf16.msra.mxu0 %v1816
        %1831 = vmatprep.subr.bf16.mxu0 0
        %1832 = vmatpush1.bf16.msra.mxu0 %v1815
        %1833 = vmatprep.subr.bf16.mxu0 0
        %1834 = vmatpush1.bf16.msra.mxu0 %v1814
        %1835 = vmatprep.subr.bf16.mxu0 0
        %1836 = vmatpush1.bf16.msra.mxu0 %v1813
        %1837 = vmatprep.subr.bf16.mxu0 0
        %1838 = vmatpush2.bf16.msra.mxu0 0
        %1839 = vmatprep.subr.bf16.mxu0 0
        %1840 = vmatpush2.bf16.msra.mxu0 0
        %1841 = vmatprep.subr.bf16.mxu0 0
        %1842 = vmatpush2.bf16.msra.mxu0 0
        %1843 = vmatprep.subr.bf16.mxu0 0
        %1844 = vmatpush2.bf16.msra.mxu0 0
        %1845 = vmatprep.subr.bf16.mxu0 0
        %1846 = vmatpush2.bf16.msra.mxu0 0
        %1847 = vmatprep.subr.bf16.mxu0 0
        %1848 = vmatpush2.bf16.msra.mxu0 0
        %1849 = vmatprep.subr.bf16.mxu0 0
        %1850 = vmatpush2.bf16.msra.mxu0 0
        %1851 = vmatprep.subr.bf16.mxu0 0
        %1852 = vmatpush2.bf16.msra.mxu0 0
        %1853 = vmatprep.mubr.bf16.mxu0 0
        %1854 = vmatmul.mubr.bf16.gmra.mxu0 %v366
        %v1855 = vpop.f32.mrf.mxu0
        %v1856 = vadd.f32 0.0, %v1855
        %v1857 = vpop.f32.mrf.mxu0
        %v1858 = vpop.f32.mrf.mxu0
        %v1859 = vadd.f32 0.0, %v1858
        %v1860 = vpop.f32.mrf.mxu0
        %1861 = vmatprep.mubr.bf16.mxu0 0
        %1862 = vmatmul.mubr.bf16.gmra.mxu0 %v367
        %v1863 = vpop.f32.mrf.mxu0
        %v1864 = vadd.f32 0.0, %v1863
        %v1865 = vpop.f32.mrf.mxu0
        %v1866 = vpop.f32.mrf.mxu0
        %v1867 = vadd.f32 0.0, %v1866
        %v1868 = vpop.f32.mrf.mxu0
        %1869 = vmatprep.mubr.bf16.mxu0 0
        %1870 = vmatmul.mubr.bf16.gmra.mxu0 %v368
        %v1871 = vpop.f32.mrf.mxu0
        %v1872 = vadd.f32 0.0, %v1871
        %v1873 = vpop.f32.mrf.mxu0
        %v1874 = vpop.f32.mrf.mxu0
        %v1875 = vadd.f32 0.0, %v1874
        %v1876 = vpop.f32.mrf.mxu0
        %1877 = vmatprep.mubr.bf16.mxu0 0
        %1878 = vmatmul.mubr.bf16.gmra.mxu0 %v369
        %v1879 = vpop.f32.mrf.mxu0
        %v1880 = vadd.f32 0.0, %v1879
        %v1881 = vpop.f32.mrf.mxu0
        %v1882 = vpop.f32.mrf.mxu0
        %v1883 = vadd.f32 0.0, %v1882
        %v1884 = vpop.f32.mrf.mxu0
        %1885 = vmatprep.mubr.bf16.mxu0 0
        %1886 = vmatmul.mubr.bf16.gmra.mxu0 %v370
        %v1887 = vpop.f32.mrf.mxu0
        %v1888 = vadd.f32 0.0, %v1887
        %v1889 = vpop.f32.mrf.mxu0
        %v1890 = vpop.f32.mrf.mxu0
        %v1891 = vadd.f32 0.0, %v1890
        %v1892 = vpop.f32.mrf.mxu0
        %1893 = vmatprep.mubr.bf16.mxu0 0
        %1894 = vmatmul.mubr.bf16.gmra.mxu0 %v371
        %v1895 = vpop.f32.mrf.mxu0
        %v1896 = vadd.f32 0.0, %v1895
        %v1897 = vpop.f32.mrf.mxu0
        %v1898 = vpop.f32.mrf.mxu0
        %v1899 = vadd.f32 0.0, %v1898
        %v1900 = vpop.f32.mrf.mxu0
        %1901 = vmatprep.mubr.bf16.mxu0 0
        %1902 = vmatmul.mubr.bf16.gmra.mxu0 %v372
        %v1903 = vpop.f32.mrf.mxu0
        %v1904 = vadd.f32 0.0, %v1903
        %v1905 = vpop.f32.mrf.mxu0
        %v1906 = vpop.f32.mrf.mxu0
        %v1907 = vadd.f32 0.0, %v1906
        %v1908 = vpop.f32.mrf.mxu0
        %1909 = vmatprep.mubr.bf16.mxu0 0
        %1910 = vmatmul.mubr.bf16.gmra.mxu0 %v373
        %v1911 = vpop.f32.mrf.mxu0
        %v1912 = vadd.f32 0.0, %v1911
        %v1913 = vpop.f32.mrf.mxu0
        %v1914 = vpop.f32.mrf.mxu0
        %v1915 = vadd.f32 0.0, %v1914
        %v1916 = vpop.f32.mrf.mxu0
        %1917 = vmatprep.mubr.bf16.mxu0 0
        %1918 = vmatmul.mubr.bf16.gmra.mxu0 %v374
        %v1919 = vpop.f32.mrf.mxu0
        %v1920 = vadd.f32 0.0, %v1919
        %v1921 = vpop.f32.mrf.mxu0
        %v1922 = vpop.f32.mrf.mxu0
        %v1923 = vadd.f32 0.0, %v1922
        %v1924 = vpop.f32.mrf.mxu0
        %1925 = vmatprep.mubr.bf16.mxu0 0
        %1926 = vmatmul.mubr.bf16.gmra.mxu0 %v375
        %v1927 = vpop.f32.mrf.mxu0
        %v1928 = vadd.f32 0.0, %v1927
        %v1929 = vpop.f32.mrf.mxu0
        %v1930 = vpop.f32.mrf.mxu0
        %v1931 = vadd.f32 0.0, %v1930
        %v1932 = vpop.f32.mrf.mxu0
        %1933 = vmatprep.mubr.bf16.mxu0 0
        %1934 = vmatmul.mubr.bf16.gmra.mxu0 %v376
        %v1935 = vpop.f32.mrf.mxu0
        %v1936 = vadd.f32 0.0, %v1935
        %v1937 = vpop.f32.mrf.mxu0
        %v1938 = vpop.f32.mrf.mxu0
        %v1939 = vadd.f32 0.0, %v1938
        %v1940 = vpop.f32.mrf.mxu0
        %1941 = vmatprep.mubr.bf16.mxu0 0
        %1942 = vmatmul.mubr.bf16.gmra.mxu0 %v377
        %v1943 = vpop.f32.mrf.mxu0
        %v1944 = vadd.f32 0.0, %v1943
        %v1945 = vpop.f32.mrf.mxu0
        %v1946 = vpop.f32.mrf.mxu0
        %v1947 = vadd.f32 0.0, %v1946
        %v1948 = vpop.f32.mrf.mxu0
        %1949 = vmatprep.mubr.bf16.mxu0 0
        %1950 = vmatmul.mubr.bf16.gmra.mxu0 %v378
        %v1951 = vpop.f32.mrf.mxu0
        %v1952 = vadd.f32 0.0, %v1951
        %v1953 = vpop.f32.mrf.mxu0
        %v1954 = vpop.f32.mrf.mxu0
        %v1955 = vadd.f32 0.0, %v1954
        %v1956 = vpop.f32.mrf.mxu0
        %1957 = vmatprep.mubr.bf16.mxu0 0
        %1958 = vmatmul.mubr.bf16.gmra.mxu0 %v379
        %v1959 = vpop.f32.mrf.mxu0
        %v1960 = vadd.f32 0.0, %v1959
        %v1961 = vpop.f32.mrf.mxu0
        %v1962 = vpop.f32.mrf.mxu0
        %v1963 = vadd.f32 0.0, %v1962
        %v1964 = vpop.f32.mrf.mxu0
        %1965 = vmatprep.mubr.bf16.mxu0 0
        %1966 = vmatmul.mubr.bf16.gmra.mxu0 %v380
        %v1967 = vpop.f32.mrf.mxu0
        %v1968 = vadd.f32 0.0, %v1967
        %v1969 = vpop.f32.mrf.mxu0
        %v1970 = vpop.f32.mrf.mxu0
        %v1971 = vadd.f32 0.0, %v1970
        %v1972 = vpop.f32.mrf.mxu0
        %1973 = vmatprep.mubr.bf16.mxu0 0
        %1974 = vmatmul.mubr.bf16.gmra.mxu0 %v381
        %v1975 = vpop.f32.mrf.mxu0
        %v1976 = vadd.f32 0.0, %v1975
        %v1977 = vpop.f32.mrf.mxu0
        %v1978 = vpop.f32.mrf.mxu0
        %v1979 = vadd.f32 0.0, %v1978
        %v1980 = vpop.f32.mrf.mxu0
        %1981 = vdwg.mxu0
        %1982 = vxpose.xlu0.c.b16.start [1/8] %v1813, 128
        %1983 = vxpose.xlu0.c.b16.cont [2/8] %v1814, 128
        %1984 = vxpose.xlu0.c.b16.cont [3/8] %v1815, 128
        %1985 = vxpose.xlu0.c.b16.cont [4/8] %v1816, 128
        %1986 = vxpose.xlu0.c.b16.cont [5/8] %v1817, 128
        %1987 = vxpose.xlu0.c.b16.cont [6/8] %v1818, 128
        %1988 = vxpose.xlu0.c.b16.cont [7/8] %v1819, 128
        %1989 = vxpose.xlu0.c.b16.end [8/8] %v1820, 128
        %v1990 = vpop.trf.xlu0
        %v1991 = vpop.trf.xlu0
        %v1992 = vpop.trf.xlu0
        %v1993 = vpop.trf.xlu0
        %v1994 = vpop.trf.xlu0
        %v1995 = vpop.trf.xlu0
        %v1996 = vpop.trf.xlu0
        %v1997 = vpop.trf.xlu0
        %1998 = vmatprep.subr.bf16.mxu0 0
        %1999 = vmatpush1.bf16.msra.mxu0 %v1820
        %2000 = vmatprep.subr.bf16.mxu0 0
        %2001 = vmatpush1.bf16.msra.mxu0 %v1819
        %2002 = vmatprep.subr.bf16.mxu0 0
        %2003 = vmatpush1.bf16.msra.mxu0 %v1818
        %2004 = vmatprep.subr.bf16.mxu0 0
        %2005 = vmatpush1.bf16.msra.mxu0 %v1817
        %2006 = vmatprep.subr.bf16.mxu0 0
        %2007 = vmatpush1.bf16.msra.mxu0 %v1816
        %2008 = vmatprep.subr.bf16.mxu0 0
        %2009 = vmatpush1.bf16.msra.mxu0 %v1815
        %2010 = vmatprep.subr.bf16.mxu0 0
        %2011 = vmatpush1.bf16.msra.mxu0 %v1814
        %2012 = vmatprep.subr.bf16.mxu0 0
        %2013 = vmatpush1.bf16.msra.mxu0 %v1813
        %2014 = vmatprep.subr.bf16.mxu0 0
        %2015 = vmatpush2.bf16.msra.mxu0 0
        %2016 = vmatprep.subr.bf16.mxu0 0
        %2017 = vmatpush2.bf16.msra.mxu0 0
        %2018 = vmatprep.subr.bf16.mxu0 0
        %2019 = vmatpush2.bf16.msra.mxu0 0
        %2020 = vmatprep.subr.bf16.mxu0 0
        %2021 = vmatpush2.bf16.msra.mxu0 0
        %2022 = vmatprep.subr.bf16.mxu0 0
        %2023 = vmatpush2.bf16.msra.mxu0 0
        %2024 = vmatprep.subr.bf16.mxu0 0
        %2025 = vmatpush2.bf16.msra.mxu0 0
        %2026 = vmatprep.subr.bf16.mxu0 0
        %2027 = vmatpush2.bf16.msra.mxu0 0
        %2028 = vmatprep.subr.bf16.mxu0 0
        %2029 = vmatpush2.bf16.msra.mxu0 0
        %2030 = vmatprep.mubr.bf16.mxu0 0
        %2031 = vmatmul.mubr.bf16.gmra.mxu0 %v1990
        %v2032 = vpop.f32.mrf.mxu0
        %v2033 = vadd.f32 0.0, %v2032
        %v2034 = vpop.f32.mrf.mxu0
        %v2035 = vpop.f32.mrf.mxu0
        %v2036 = vadd.f32 0.0, %v2035
        %v2037 = vpop.f32.mrf.mxu0
        %2038 = vmatprep.mubr.bf16.mxu0 0
        %2039 = vmatmul.mubr.bf16.gmra.mxu0 %v1991
        %v2040 = vpop.f32.mrf.mxu0
        %v2041 = vadd.f32 0.0, %v2040
        %v2042 = vpop.f32.mrf.mxu0
        %v2043 = vpop.f32.mrf.mxu0
        %v2044 = vadd.f32 0.0, %v2043
        %v2045 = vpop.f32.mrf.mxu0
        %2046 = vmatprep.mubr.bf16.mxu0 0
        %2047 = vmatmul.mubr.bf16.gmra.mxu0 %v1992
        %v2048 = vpop.f32.mrf.mxu0
        %v2049 = vadd.f32 0.0, %v2048
        %v2050 = vpop.f32.mrf.mxu0
        %v2051 = vpop.f32.mrf.mxu0
        %v2052 = vadd.f32 0.0, %v2051
        %v2053 = vpop.f32.mrf.mxu0
        %2054 = vmatprep.mubr.bf16.mxu0 0
        %2055 = vmatmul.mubr.bf16.gmra.mxu0 %v1993
        %v2056 = vpop.f32.mrf.mxu0
        %v2057 = vadd.f32 0.0, %v2056
        %v2058 = vpop.f32.mrf.mxu0
        %v2059 = vpop.f32.mrf.mxu0
        %v2060 = vadd.f32 0.0, %v2059
        %v2061 = vpop.f32.mrf.mxu0
        %2062 = vdwg.mxu0
        %v2063 = vpack.c.bf16 %v2036, %v2033
        %v2064 = vpack.c.bf16 %v2044, %v2041
        %v2065 = vpack.c.bf16 %v2052, %v2049
        %v2066 = vpack.c.bf16 %v2060, %v2057
        %v2067 = vmul.f32 %v1318, %v1856
        %v2068 = vmul.f32 %v1319, %v1859
        %v2069 = vmul.f32 %v1320, %v1864
        %v2070 = vmul.f32 %v1321, %v1867
        %v2071 = vmul.f32 %v1322, %v1872
        %v2072 = vmul.f32 %v1323, %v1875
        %v2073 = vmul.f32 %v1324, %v1880
        %v2074 = vmul.f32 %v1325, %v1883
        %v2075 = vmul.f32 %v1326, %v1888
        %v2076 = vmul.f32 %v1327, %v1891
        %v2077 = vmul.f32 %v1328, %v1896
        %v2078 = vmul.f32 %v1329, %v1899
        %v2079 = vmul.f32 %v1330, %v1904
        %v2080 = vmul.f32 %v1331, %v1907
        %v2081 = vmul.f32 %v1332, %v1912
        %v2082 = vmul.f32 %v1333, %v1915
        %v2083 = vmul.f32 %v1334, %v1920
        %v2084 = vmul.f32 %v1335, %v1923
        %v2085 = vmul.f32 %v1336, %v1928
        %v2086 = vmul.f32 %v1337, %v1931
        %v2087 = vmul.f32 %v1338, %v1936
        %v2088 = vmul.f32 %v1339, %v1939
        %v2089 = vmul.f32 %v1340, %v1944
        %v2090 = vmul.f32 %v1341, %v1947
        %v2091 = vmul.f32 %v1342, %v1952
        %v2092 = vmul.f32 %v1343, %v1955
        %v2093 = vmul.f32 %v1344, %v1960
        %v2094 = vmul.f32 %v1345, %v1963
        %v2095 = vmul.f32 %v1346, %v1968
        %v2096 = vmul.f32 %v1347, %v1971
        %v2097 = vmul.f32 %v1348, %v1976
        %v2098 = vmul.f32 %v1349, %v1979
        %v2100 = vsel %vm559, %v1350, 0
        %v2103 = vsel %vm559, %v1351, 0
        %v2106 = vsel %vm559, %v1352, 0
        %v2109 = vsel %vm559, %v1353, 0
        %v2112 = vsel %vm559, %v1354, 0
        %v2115 = vsel %vm559, %v1355, 0
        %v2118 = vsel %vm559, %v1356, 0
        %v2121 = vsel %vm559, %v1357, 0
        %v2124 = vsel %vm559, %v1358, 0
        %v2127 = vsel %vm559, %v1359, 0
        %v2130 = vsel %vm559, %v1360, 0
        %v2133 = vsel %vm559, %v1361, 0
        %v2136 = vsel %vm559, %v1362, 0
        %v2139 = vsel %vm559, %v1363, 0
        %v2142 = vsel %vm559, %v1364, 0
        %v2145 = vsel %vm559, %v1365, 0
        %2147 = vmatprep.subr.bf16.mxu0 0
        %2148 = vmatpush1.bf16.msra.mxu0 0
        %2149 = vmatprep.subr.bf16.mxu0 0
        %2150 = vmatpush1.bf16.msra.mxu0 0
        %2151 = vmatprep.subr.bf16.mxu0 0
        %2152 = vmatpush1.bf16.msra.mxu0 0
        %2153 = vmatprep.subr.bf16.mxu0 0
        %2154 = vmatpush1.bf16.msra.mxu0 0
        %2155 = vmatprep.subr.bf16.mxu0 0
        %2156 = vmatpush1.bf16.msra.mxu0 %v2066
        %2157 = vmatprep.subr.bf16.mxu0 0
        %2158 = vmatpush1.bf16.msra.mxu0 %v2065
        %2159 = vmatprep.subr.bf16.mxu0 0
        %2160 = vmatpush1.bf16.msra.mxu0 %v2064
        %2161 = vmatprep.subr.bf16.mxu0 0
        %2162 = vmatpush1.bf16.msra.mxu0 %v2063
        %2163 = vmatprep.subr.bf16.mxu0 0
        %2164 = vmatpush2.bf16.msra.mxu0 0
        %2165 = vmatprep.subr.bf16.mxu0 0
        %2166 = vmatpush2.bf16.msra.mxu0 0
        %2167 = vmatprep.subr.bf16.mxu0 0
        %2168 = vmatpush2.bf16.msra.mxu0 0
        %2169 = vmatprep.subr.bf16.mxu0 0
        %2170 = vmatpush2.bf16.msra.mxu0 0
        %2171 = vmatprep.subr.bf16.mxu0 0
        %2172 = vmatpush2.bf16.msra.mxu0 0
        %2173 = vmatprep.subr.bf16.mxu0 0
        %2174 = vmatpush2.bf16.msra.mxu0 0
        %2175 = vmatprep.subr.bf16.mxu0 0
        %2176 = vmatpush2.bf16.msra.mxu0 0
        %2177 = vmatprep.subr.bf16.mxu0 0
        %2178 = vmatpush2.bf16.msra.mxu0 0
        %2179 = vmatprep.mubr.bf16.mxu0 0
        %2180 = vmatmul.mubr.bf16.gmra.mxu0 %v2100
        %v2181 = vpop.f32.mrf.mxu0
        %v2182 = vadd.f32 1e-06, %v2181
        %v2183 = vpop.f32.mrf.mxu0
        %v2184 = vpop.f32.mrf.mxu0
        %v2185 = vadd.f32 1e-06, %v2184
        %v2186 = vpop.f32.mrf.mxu0
        %2187 = vmatprep.mubr.bf16.mxu0 0
        %2188 = vmatmul.mubr.bf16.gmra.mxu0 %v2103
        %v2189 = vpop.f32.mrf.mxu0
        %v2190 = vadd.f32 1e-06, %v2189
        %v2191 = vpop.f32.mrf.mxu0
        %v2192 = vpop.f32.mrf.mxu0
        %v2193 = vadd.f32 1e-06, %v2192
        %v2194 = vpop.f32.mrf.mxu0
        %2195 = vmatprep.mubr.bf16.mxu0 0
        %2196 = vmatmul.mubr.bf16.gmra.mxu0 %v2106
        %v2197 = vpop.f32.mrf.mxu0
        %v2198 = vadd.f32 1e-06, %v2197
        %v2199 = vpop.f32.mrf.mxu0
        %v2200 = vpop.f32.mrf.mxu0
        %v2201 = vadd.f32 1e-06, %v2200
        %v2202 = vpop.f32.mrf.mxu0
        %2203 = vmatprep.mubr.bf16.mxu0 0
        %2204 = vmatmul.mubr.bf16.gmra.mxu0 %v2109
        %v2205 = vpop.f32.mrf.mxu0
        %v2206 = vadd.f32 1e-06, %v2205
        %v2207 = vpop.f32.mrf.mxu0
        %v2208 = vpop.f32.mrf.mxu0
        %v2209 = vadd.f32 1e-06, %v2208
        %v2210 = vpop.f32.mrf.mxu0
        %2211 = vmatprep.mubr.bf16.mxu0 0
        %2212 = vmatmul.mubr.bf16.gmra.mxu0 %v2112
        %v2213 = vpop.f32.mrf.mxu0
        %v2214 = vadd.f32 1e-06, %v2213
        %v2215 = vpop.f32.mrf.mxu0
        %v2216 = vpop.f32.mrf.mxu0
        %v2217 = vadd.f32 1e-06, %v2216
        %v2218 = vpop.f32.mrf.mxu0
        %2219 = vmatprep.mubr.bf16.mxu0 0
        %2220 = vmatmul.mubr.bf16.gmra.mxu0 %v2115
        %v2221 = vpop.f32.mrf.mxu0
        %v2222 = vadd.f32 1e-06, %v2221
        %v2223 = vpop.f32.mrf.mxu0
        %v2224 = vpop.f32.mrf.mxu0
        %v2225 = vadd.f32 1e-06, %v2224
        %v2226 = vpop.f32.mrf.mxu0
        %2227 = vmatprep.mubr.bf16.mxu0 0
        %2228 = vmatmul.mubr.bf16.gmra.mxu0 %v2118
        %v2229 = vpop.f32.mrf.mxu0
        %v2230 = vadd.f32 1e-06, %v2229
        %v2231 = vpop.f32.mrf.mxu0
        %v2232 = vpop.f32.mrf.mxu0
        %v2233 = vadd.f32 1e-06, %v2232
        %v2234 = vpop.f32.mrf.mxu0
        %2235 = vmatprep.mubr.bf16.mxu0 0
        %2236 = vmatmul.mubr.bf16.gmra.mxu0 %v2121
        %v2237 = vpop.f32.mrf.mxu0
        %v2238 = vadd.f32 1e-06, %v2237
        %v2239 = vpop.f32.mrf.mxu0
        %v2240 = vpop.f32.mrf.mxu0
        %v2241 = vadd.f32 1e-06, %v2240
        %v2242 = vpop.f32.mrf.mxu0
        %2243 = vmatprep.mubr.bf16.mxu0 0
        %2244 = vmatmul.mubr.bf16.gmra.mxu0 %v2124
        %v2245 = vpop.f32.mrf.mxu0
        %v2246 = vadd.f32 1e-06, %v2245
        %v2247 = vpop.f32.mrf.mxu0
        %v2248 = vpop.f32.mrf.mxu0
        %v2249 = vadd.f32 1e-06, %v2248
        %v2250 = vpop.f32.mrf.mxu0
        %2251 = vmatprep.mubr.bf16.mxu0 0
        %2252 = vmatmul.mubr.bf16.gmra.mxu0 %v2127
        %v2253 = vpop.f32.mrf.mxu0
        %v2254 = vadd.f32 1e-06, %v2253
        %v2255 = vpop.f32.mrf.mxu0
        %v2256 = vpop.f32.mrf.mxu0
        %v2257 = vadd.f32 1e-06, %v2256
        %v2258 = vpop.f32.mrf.mxu0
        %2259 = vmatprep.mubr.bf16.mxu0 0
        %2260 = vmatmul.mubr.bf16.gmra.mxu0 %v2130
        %v2261 = vpop.f32.mrf.mxu0
        %v2262 = vadd.f32 1e-06, %v2261
        %v2263 = vpop.f32.mrf.mxu0
        %v2264 = vpop.f32.mrf.mxu0
        %v2265 = vadd.f32 1e-06, %v2264
        %v2266 = vpop.f32.mrf.mxu0
        %2267 = vmatprep.mubr.bf16.mxu0 0
        %2268 = vmatmul.mubr.bf16.gmra.mxu0 %v2133
        %v2269 = vpop.f32.mrf.mxu0
        %v2270 = vadd.f32 1e-06, %v2269
        %v2271 = vpop.f32.mrf.mxu0
        %v2272 = vpop.f32.mrf.mxu0
        %v2273 = vadd.f32 1e-06, %v2272
        %v2274 = vpop.f32.mrf.mxu0
        %2275 = vmatprep.mubr.bf16.mxu0 0
        %2276 = vmatmul.mubr.bf16.gmra.mxu0 %v2136
        %v2277 = vpop.f32.mrf.mxu0
        %v2278 = vadd.f32 1e-06, %v2277
        %v2279 = vpop.f32.mrf.mxu0
        %v2280 = vpop.f32.mrf.mxu0
        %v2281 = vadd.f32 1e-06, %v2280
        %v2282 = vpop.f32.mrf.mxu0
        %2283 = vmatprep.mubr.bf16.mxu0 0
        %2284 = vmatmul.mubr.bf16.gmra.mxu0 %v2139
        %v2285 = vpop.f32.mrf.mxu0
        %v2286 = vadd.f32 1e-06, %v2285
        %v2287 = vpop.f32.mrf.mxu0
        %v2288 = vpop.f32.mrf.mxu0
        %v2289 = vadd.f32 1e-06, %v2288
        %v2290 = vpop.f32.mrf.mxu0
        %2291 = vmatprep.mubr.bf16.mxu0 0
        %2292 = vmatmul.mubr.bf16.gmra.mxu0 %v2142
        %v2293 = vpop.f32.mrf.mxu0
        %v2294 = vadd.f32 1e-06, %v2293
        %v2295 = vpop.f32.mrf.mxu0
        %v2296 = vpop.f32.mrf.mxu0
        %v2297 = vadd.f32 1e-06, %v2296
        %v2298 = vpop.f32.mrf.mxu0
        %2299 = vmatprep.mubr.bf16.mxu0 0
        %2300 = vmatmul.mubr.bf16.gmra.mxu0 %v2145
        %v2301 = vpop.f32.mrf.mxu0
        %v2302 = vadd.f32 1e-06, %v2301
        %v2303 = vpop.f32.mrf.mxu0
        %v2304 = vpop.f32.mrf.mxu0
        %v2305 = vadd.f32 1e-06, %v2304
        %v2306 = vpop.f32.mrf.mxu0
        %2307 = vdwg.mxu0
        %v2308 = vrcp.pop %v2182
        %v2309 = vrcp.pop %v2185
        %v2310 = vrcp.pop %v2190
        %v2311 = vrcp.pop %v2193
        %v2312 = vrcp.pop %v2198
        %v2313 = vrcp.pop %v2201
        %v2314 = vrcp.pop %v2206
        %v2315 = vrcp.pop %v2209
        %v2316 = vrcp.pop %v2214
        %v2317 = vrcp.pop %v2217
        %v2318 = vrcp.pop %v2222
        %v2319 = vrcp.pop %v2225
        %v2320 = vrcp.pop %v2230
        %v2321 = vrcp.pop %v2233
        %v2322 = vrcp.pop %v2238
        %v2323 = vrcp.pop %v2241
        %v2324 = vrcp.pop %v2246
        %v2325 = vrcp.pop %v2249
        %v2326 = vrcp.pop %v2254
        %v2327 = vrcp.pop %v2257
        %v2328 = vrcp.pop %v2262
        %v2329 = vrcp.pop %v2265
        %v2330 = vrcp.pop %v2270
        %v2331 = vrcp.pop %v2273
        %v2332 = vrcp.pop %v2278
        %v2333 = vrcp.pop %v2281
        %v2334 = vrcp.pop %v2286
        %v2335 = vrcp.pop %v2289
        %v2336 = vrcp.pop %v2294
        %v2337 = vrcp.pop %v2297
        %v2338 = vrcp.pop %v2302
        %v2339 = vrcp.pop %v2305
        %v2340 = vmul.f32 %v2067, %v2308
        %v2341 = vmul.f32 %v2068, %v2309
        %v2342 = vmul.f32 %v2069, %v2310
        %v2343 = vmul.f32 %v2070, %v2311
        %v2344 = vmul.f32 %v2071, %v2312
        %v2345 = vmul.f32 %v2072, %v2313
        %v2346 = vmul.f32 %v2073, %v2314
        %v2347 = vmul.f32 %v2074, %v2315
        %v2348 = vmul.f32 %v2075, %v2316
        %v2349 = vmul.f32 %v2076, %v2317
        %v2350 = vmul.f32 %v2077, %v2318
        %v2351 = vmul.f32 %v2078, %v2319
        %v2352 = vmul.f32 %v2079, %v2320
        %v2353 = vmul.f32 %v2080, %v2321
        %v2354 = vmul.f32 %v2081, %v2322
        %v2355 = vmul.f32 %v2082, %v2323
        %v2356 = vmul.f32 %v2083, %v2324
        %v2357 = vmul.f32 %v2084, %v2325
        %v2358 = vmul.f32 %v2085, %v2326
        %v2359 = vmul.f32 %v2086, %v2327
        %v2360 = vmul.f32 %v2087, %v2328
        %v2361 = vmul.f32 %v2088, %v2329
        %v2362 = vmul.f32 %v2089, %v2330
        %v2363 = vmul.f32 %v2090, %v2331
        %v2364 = vmul.f32 %v2091, %v2332
        %v2365 = vmul.f32 %v2092, %v2333
        %v2366 = vmul.f32 %v2093, %v2334
        %v2367 = vmul.f32 %v2094, %v2335
        %v2368 = vmul.f32 %v2095, %v2336
        %v2369 = vmul.f32 %v2096, %v2337
        %v2370 = vmul.f32 %v2097, %v2338
        %v2371 = vmul.f32 %v2098, %v2339
        %v2372 = vpack.c.bf16 %v2341, %v2340
        %v2373 = vpack.c.bf16 %v2343, %v2342
        %v2374 = vpack.c.bf16 %v2345, %v2344
        %v2375 = vpack.c.bf16 %v2347, %v2346
        %v2376 = vpack.c.bf16 %v2349, %v2348
        %v2377 = vpack.c.bf16 %v2351, %v2350
        %v2378 = vpack.c.bf16 %v2353, %v2352
        %v2379 = vpack.c.bf16 %v2355, %v2354
        %v2380 = vpack.c.bf16 %v2357, %v2356
        %v2381 = vpack.c.bf16 %v2359, %v2358
        %v2382 = vpack.c.bf16 %v2361, %v2360
        %v2383 = vpack.c.bf16 %v2363, %v2362
        %v2384 = vpack.c.bf16 %v2365, %v2364
        %v2385 = vpack.c.bf16 %v2367, %v2366
        %v2386 = vpack.c.bf16 %v2369, %v2368
        %v2387 = vpack.c.bf16 %v2371, %v2370
        %2388 = vmatprep.subr.bf16.mxu0 0
        %2389 = vmatpush1.bf16.msra.mxu0 %v2379
        %2390 = vmatprep.subr.bf16.mxu0 0
        %2391 = vmatpush1.bf16.msra.mxu0 %v2378
        %2392 = vmatprep.subr.bf16.mxu0 0
        %2393 = vmatpush1.bf16.msra.mxu0 %v2377
        %2394 = vmatprep.subr.bf16.mxu0 0
        %2395 = vmatpush1.bf16.msra.mxu0 %v2376
        %2396 = vmatprep.subr.bf16.mxu0 0
        %2397 = vmatpush1.bf16.msra.mxu0 %v2375
        %2398 = vmatprep.subr.bf16.mxu0 0
        %2399 = vmatpush1.bf16.msra.mxu0 %v2374
        %2400 = vmatprep.subr.bf16.mxu0 0
        %2401 = vmatpush1.bf16.msra.mxu0 %v2373
        %2402 = vmatprep.subr.bf16.mxu0 0
        %2403 = vmatpush1.bf16.msra.mxu0 %v2372
        %2404 = vmatprep.subr.bf16.mxu0 0
        %2405 = vmatpush2.bf16.msra.mxu0 %v2387
        %2406 = vmatprep.subr.bf16.mxu0 0
        %2407 = vmatpush2.bf16.msra.mxu0 %v2386
        %2408 = vmatprep.subr.bf16.mxu0 0
        %2409 = vmatpush2.bf16.msra.mxu0 %v2385
        %2410 = vmatprep.subr.bf16.mxu0 0
        %2411 = vmatpush2.bf16.msra.mxu0 %v2384
        %2412 = vmatprep.subr.bf16.mxu0 0
        %2413 = vmatpush2.bf16.msra.mxu0 %v2383
        %2414 = vmatprep.subr.bf16.mxu0 0
        %2415 = vmatpush2.bf16.msra.mxu0 %v2382
        %2416 = vmatprep.subr.bf16.mxu0 0
        %2417 = vmatpush2.bf16.msra.mxu0 %v2381
        %2418 = vmatprep.subr.bf16.mxu0 0
        %2419 = vmatpush2.bf16.msra.mxu0 %v2380
        %2420 = vmatprep.mubr.bf16.mxu0 %v1415
        %2421 = vmatmul.mubr.bf16.gmra.mxu0 %v1414
        %v2422 = vpop.f32.mrf.mxu0
        %v2423 = vadd.f32 0.0, %v2422
        %v2424 = vpop.f32.mrf.mxu0
        %v2425 = vpop.f32.mrf.mxu0
        %v2426 = vadd.f32 0.0, %v2425
        %v2427 = vpop.f32.mrf.mxu0
        %2428 = vmatprep.mubr.bf16.mxu0 %v1417
        %2429 = vmatmul.mubr.bf16.gmra.mxu0 %v1416
        %v2430 = vpop.f32.mrf.mxu0
        %v2431 = vadd.f32 0.0, %v2430
        %v2432 = vpop.f32.mrf.mxu0
        %v2433 = vpop.f32.mrf.mxu0
        %v2434 = vadd.f32 0.0, %v2433
        %v2435 = vpop.f32.mrf.mxu0
        %2436 = vmatprep.mubr.bf16.mxu0 %v1419
        %2437 = vmatmul.mubr.bf16.gmra.mxu0 %v1418
        %v2438 = vpop.f32.mrf.mxu0
        %v2439 = vadd.f32 0.0, %v2438
        %v2440 = vpop.f32.mrf.mxu0
        %v2441 = vpop.f32.mrf.mxu0
        %v2442 = vadd.f32 0.0, %v2441
        %v2443 = vpop.f32.mrf.mxu0
        %2444 = vmatprep.mubr.bf16.mxu0 %v1421
        %2445 = vmatmul.mubr.bf16.gmra.mxu0 %v1420
        %v2446 = vpop.f32.mrf.mxu0
        %v2447 = vadd.f32 0.0, %v2446
        %v2448 = vpop.f32.mrf.mxu0
        %v2449 = vpop.f32.mrf.mxu0
        %v2450 = vadd.f32 0.0, %v2449
        %v2451 = vpop.f32.mrf.mxu0
        %2452 = vmatprep.mubr.bf16.mxu0 %v1423
        %2453 = vmatmul.mubr.bf16.gmra.mxu0 %v1422
        %v2454 = vpop.f32.mrf.mxu0
        %v2455 = vadd.f32 0.0, %v2454
        %v2456 = vpop.f32.mrf.mxu0
        %v2457 = vpop.f32.mrf.mxu0
        %v2458 = vadd.f32 0.0, %v2457
        %v2459 = vpop.f32.mrf.mxu0
        %2460 = vmatprep.mubr.bf16.mxu0 %v1425
        %2461 = vmatmul.mubr.bf16.gmra.mxu0 %v1424
        %v2462 = vpop.f32.mrf.mxu0
        %v2463 = vadd.f32 0.0, %v2462
        %v2464 = vpop.f32.mrf.mxu0
        %v2465 = vpop.f32.mrf.mxu0
        %v2466 = vadd.f32 0.0, %v2465
        %v2467 = vpop.f32.mrf.mxu0
        %2468 = vmatprep.mubr.bf16.mxu0 %v1427
        %2469 = vmatmul.mubr.bf16.gmra.mxu0 %v1426
        %v2470 = vpop.f32.mrf.mxu0
        %v2471 = vadd.f32 0.0, %v2470
        %v2472 = vpop.f32.mrf.mxu0
        %v2473 = vpop.f32.mrf.mxu0
        %v2474 = vadd.f32 0.0, %v2473
        %v2475 = vpop.f32.mrf.mxu0
        %2476 = vmatprep.mubr.bf16.mxu0 %v1429
        %2477 = vmatmul.mubr.bf16.gmra.mxu0 %v1428
        %v2478 = vpop.f32.mrf.mxu0
        %v2479 = vadd.f32 0.0, %v2478
        %v2480 = vpop.f32.mrf.mxu0
        %v2481 = vpop.f32.mrf.mxu0
        %v2482 = vadd.f32 0.0, %v2481
        %v2483 = vpop.f32.mrf.mxu0
        %2484 = vdwg.mxu0
        %2485 = vxpose.xlu0.c.b16.start [1/8] %v2372, 128
        %2486 = vxpose.xlu0.c.b16.cont [2/8] %v2373, 128
        %2487 = vxpose.xlu0.c.b16.cont [3/8] %v2374, 128
        %2488 = vxpose.xlu0.c.b16.cont [4/8] %v2375, 128
        %2489 = vxpose.xlu0.c.b16.cont [5/8] %v2376, 128
        %2490 = vxpose.xlu0.c.b16.cont [6/8] %v2377, 128
        %2491 = vxpose.xlu0.c.b16.cont [7/8] %v2378, 128
        %2492 = vxpose.xlu0.c.b16.end [8/8] %v2379, 128
        %v2493 = vpop.trf.xlu0
        %v2494 = vpop.trf.xlu0
        %v2495 = vpop.trf.xlu0
        %v2496 = vpop.trf.xlu0
        %v2497 = vpop.trf.xlu0
        %v2498 = vpop.trf.xlu0
        %v2499 = vpop.trf.xlu0
        %v2500 = vpop.trf.xlu0
        %2501 = vxpose.xlu0.c.b16.start [1/8] %v2380, 128
        %2502 = vxpose.xlu0.c.b16.cont [2/8] %v2381, 128
        %2503 = vxpose.xlu0.c.b16.cont [3/8] %v2382, 128
        %2504 = vxpose.xlu0.c.b16.cont [4/8] %v2383, 128
        %2505 = vxpose.xlu0.c.b16.cont [5/8] %v2384, 128
        %2506 = vxpose.xlu0.c.b16.cont [6/8] %v2385, 128
        %2507 = vxpose.xlu0.c.b16.cont [7/8] %v2386, 128
        %2508 = vxpose.xlu0.c.b16.end [8/8] %v2387, 128
        %v2509 = vpop.trf.xlu0
        %v2510 = vpop.trf.xlu0
        %v2511 = vpop.trf.xlu0
        %v2512 = vpop.trf.xlu0
        %v2513 = vpop.trf.xlu0
        %v2514 = vpop.trf.xlu0
        %v2515 = vpop.trf.xlu0
        %v2516 = vpop.trf.xlu0
        %2517 = vmatprep.subr.bf16.mxu0 0
        %2518 = vmatpush1.bf16.msra.mxu0 %v2379
        %2519 = vmatprep.subr.bf16.mxu0 0
        %2520 = vmatpush1.bf16.msra.mxu0 %v2378
        %2521 = vmatprep.subr.bf16.mxu0 0
        %2522 = vmatpush1.bf16.msra.mxu0 %v2377
        %2523 = vmatprep.subr.bf16.mxu0 0
        %2524 = vmatpush1.bf16.msra.mxu0 %v2376
        %2525 = vmatprep.subr.bf16.mxu0 0
        %2526 = vmatpush1.bf16.msra.mxu0 %v2375
        %2527 = vmatprep.subr.bf16.mxu0 0
        %2528 = vmatpush1.bf16.msra.mxu0 %v2374
        %2529 = vmatprep.subr.bf16.mxu0 0
        %2530 = vmatpush1.bf16.msra.mxu0 %v2373
        %2531 = vmatprep.subr.bf16.mxu0 0
        %2532 = vmatpush1.bf16.msra.mxu0 %v2372
        %2533 = vmatprep.subr.bf16.mxu0 0
        %2534 = vmatpush2.bf16.msra.mxu0 %v2387
        %2535 = vmatprep.subr.bf16.mxu0 0
        %2536 = vmatpush2.bf16.msra.mxu0 %v2386
        %2537 = vmatprep.subr.bf16.mxu0 0
        %2538 = vmatpush2.bf16.msra.mxu0 %v2385
        %2539 = vmatprep.subr.bf16.mxu0 0
        %2540 = vmatpush2.bf16.msra.mxu0 %v2384
        %2541 = vmatprep.subr.bf16.mxu0 0
        %2542 = vmatpush2.bf16.msra.mxu0 %v2383
        %2543 = vmatprep.subr.bf16.mxu0 0
        %2544 = vmatpush2.bf16.msra.mxu0 %v2382
        %2545 = vmatprep.subr.bf16.mxu0 0
        %2546 = vmatpush2.bf16.msra.mxu0 %v2381
        %2547 = vmatprep.subr.bf16.mxu0 0
        %2548 = vmatpush2.bf16.msra.mxu0 %v2380
        %2549 = vmatprep.mubr.bf16.mxu0 %v2509
        %2550 = vmatmul.mubr.bf16.gmra.mxu0 %v2493
        %v2551 = vpop.f32.mrf.mxu0
        %v2552 = vadd.f32 0.0, %v2551
        %v2553 = vpop.f32.mrf.mxu0
        %v2554 = vpop.f32.mrf.mxu0
        %v2555 = vadd.f32 0.0, %v2554
        %v2556 = vpop.f32.mrf.mxu0
        %2557 = vmatprep.mubr.bf16.mxu0 %v2510
        %2558 = vmatmul.mubr.bf16.gmra.mxu0 %v2494
        %v2559 = vpop.f32.mrf.mxu0
        %v2560 = vadd.f32 0.0, %v2559
        %v2561 = vpop.f32.mrf.mxu0
        %v2562 = vpop.f32.mrf.mxu0
        %v2563 = vadd.f32 0.0, %v2562
        %v2564 = vpop.f32.mrf.mxu0
        %2565 = vmatprep.mubr.bf16.mxu0 %v2511
        %2566 = vmatmul.mubr.bf16.gmra.mxu0 %v2495
        %v2567 = vpop.f32.mrf.mxu0
        %v2568 = vadd.f32 0.0, %v2567
        %v2569 = vpop.f32.mrf.mxu0
        %v2570 = vpop.f32.mrf.mxu0
        %v2571 = vadd.f32 0.0, %v2570
        %v2572 = vpop.f32.mrf.mxu0
        %2573 = vmatprep.mubr.bf16.mxu0 %v2512
        %2574 = vmatmul.mubr.bf16.gmra.mxu0 %v2496
        %v2575 = vpop.f32.mrf.mxu0
        %v2576 = vadd.f32 0.0, %v2575
        %v2577 = vpop.f32.mrf.mxu0
        %v2578 = vpop.f32.mrf.mxu0
        %v2579 = vadd.f32 0.0, %v2578
        %v2580 = vpop.f32.mrf.mxu0
        %2581 = vdwg.mxu0
        %v2582 = vpack.c.bf16 %v2555, %v2552
        %v2583 = vpack.c.bf16 %v2563, %v2560
        %v2584 = vpack.c.bf16 %v2571, %v2568
        %v2585 = vpack.c.bf16 %v2579, %v2576
        %v2586 = vmul.f32 %v1797, %v2423
        %v2587 = vmul.f32 %v1798, %v2426
        %v2588 = vmul.f32 %v1799, %v2431
        %v2589 = vmul.f32 %v1800, %v2434
        %v2590 = vmul.f32 %v1801, %v2439
        %v2591 = vmul.f32 %v1802, %v2442
        %v2592 = vmul.f32 %v1803, %v2447
        %v2593 = vmul.f32 %v1804, %v2450
        %v2594 = vmul.f32 %v1805, %v2455
        %v2595 = vmul.f32 %v1806, %v2458
        %v2596 = vmul.f32 %v1807, %v2463
        %v2597 = vmul.f32 %v1808, %v2466
        %v2598 = vmul.f32 %v1809, %v2471
        %v2599 = vmul.f32 %v1810, %v2474
        %v2600 = vmul.f32 %v1811, %v2479
        %v2601 = vmul.f32 %v1812, %v2482
        %v2603 = vsel %vm559, %v1813, 0
        %v2606 = vsel %vm559, %v1814, 0
        %v2609 = vsel %vm559, %v1815, 0
        %v2612 = vsel %vm559, %v1816, 0
        %v2615 = vsel %vm559, %v1817, 0
        %v2618 = vsel %vm559, %v1818, 0
        %v2621 = vsel %vm559, %v1819, 0
        %v2624 = vsel %vm559, %v1820, 0
        %2626 = vmatprep.subr.bf16.mxu0 0
        %2627 = vmatpush1.bf16.msra.mxu0 0
        %2628 = vmatprep.subr.bf16.mxu0 0
        %2629 = vmatpush1.bf16.msra.mxu0 0
        %2630 = vmatprep.subr.bf16.mxu0 0
        %2631 = vmatpush1.bf16.msra.mxu0 0
        %2632 = vmatprep.subr.bf16.mxu0 0
        %2633 = vmatpush1.bf16.msra.mxu0 0
        %2634 = vmatprep.subr.bf16.mxu0 0
        %2635 = vmatpush1.bf16.msra.mxu0 %v2585
        %2636 = vmatprep.subr.bf16.mxu0 0
        %2637 = vmatpush1.bf16.msra.mxu0 %v2584
        %2638 = vmatprep.subr.bf16.mxu0 0
        %2639 = vmatpush1.bf16.msra.mxu0 %v2583
        %2640 = vmatprep.subr.bf16.mxu0 0
        %2641 = vmatpush1.bf16.msra.mxu0 %v2582
        %2642 = vmatprep.subr.bf16.mxu0 0
        %2643 = vmatpush2.bf16.msra.mxu0 0
        %2644 = vmatprep.subr.bf16.mxu0 0
        %2645 = vmatpush2.bf16.msra.mxu0 0
        %2646 = vmatprep.subr.bf16.mxu0 0
        %2647 = vmatpush2.bf16.msra.mxu0 0
        %2648 = vmatprep.subr.bf16.mxu0 0
        %2649 = vmatpush2.bf16.msra.mxu0 0
        %2650 = vmatprep.subr.bf16.mxu0 0
        %2651 = vmatpush2.bf16.msra.mxu0 0
        %2652 = vmatprep.subr.bf16.mxu0 0
        %2653 = vmatpush2.bf16.msra.mxu0 0
        %2654 = vmatprep.subr.bf16.mxu0 0
        %2655 = vmatpush2.bf16.msra.mxu0 0
        %2656 = vmatprep.subr.bf16.mxu0 0
        %2657 = vmatpush2.bf16.msra.mxu0 0
        %2658 = vmatprep.mubr.bf16.mxu0 0
        %2659 = vmatmul.mubr.bf16.gmra.mxu0 %v2603
        %v2660 = vpop.f32.mrf.mxu0
        %v2661 = vadd.f32 1e-06, %v2660
        %v2662 = vpop.f32.mrf.mxu0
        %v2663 = vpop.f32.mrf.mxu0
        %v2664 = vadd.f32 1e-06, %v2663
        %v2665 = vpop.f32.mrf.mxu0
        %2666 = vmatprep.mubr.bf16.mxu0 0
        %2667 = vmatmul.mubr.bf16.gmra.mxu0 %v2606
        %v2668 = vpop.f32.mrf.mxu0
        %v2669 = vadd.f32 1e-06, %v2668
        %v2670 = vpop.f32.mrf.mxu0
        %v2671 = vpop.f32.mrf.mxu0
        %v2672 = vadd.f32 1e-06, %v2671
        %v2673 = vpop.f32.mrf.mxu0
        %2674 = vmatprep.mubr.bf16.mxu0 0
        %2675 = vmatmul.mubr.bf16.gmra.mxu0 %v2609
        %v2676 = vpop.f32.mrf.mxu0
        %v2677 = vadd.f32 1e-06, %v2676
        %v2678 = vpop.f32.mrf.mxu0
        %v2679 = vpop.f32.mrf.mxu0
        %v2680 = vadd.f32 1e-06, %v2679
        %v2681 = vpop.f32.mrf.mxu0
        %2682 = vmatprep.mubr.bf16.mxu0 0
        %2683 = vmatmul.mubr.bf16.gmra.mxu0 %v2612
        %v2684 = vpop.f32.mrf.mxu0
        %v2685 = vadd.f32 1e-06, %v2684
        %v2686 = vpop.f32.mrf.mxu0
        %v2687 = vpop.f32.mrf.mxu0
        %v2688 = vadd.f32 1e-06, %v2687
        %v2689 = vpop.f32.mrf.mxu0
        %2690 = vmatprep.mubr.bf16.mxu0 0
        %2691 = vmatmul.mubr.bf16.gmra.mxu0 %v2615
        %v2692 = vpop.f32.mrf.mxu0
        %v2693 = vadd.f32 1e-06, %v2692
        %v2694 = vpop.f32.mrf.mxu0
        %v2695 = vpop.f32.mrf.mxu0
        %v2696 = vadd.f32 1e-06, %v2695
        %v2697 = vpop.f32.mrf.mxu0
        %2698 = vmatprep.mubr.bf16.mxu0 0
        %2699 = vmatmul.mubr.bf16.gmra.mxu0 %v2618
        %v2700 = vpop.f32.mrf.mxu0
        %v2701 = vadd.f32 1e-06, %v2700
        %v2702 = vpop.f32.mrf.mxu0
        %v2703 = vpop.f32.mrf.mxu0
        %v2704 = vadd.f32 1e-06, %v2703
        %v2705 = vpop.f32.mrf.mxu0
        %2706 = vmatprep.mubr.bf16.mxu0 0
        %2707 = vmatmul.mubr.bf16.gmra.mxu0 %v2621
        %v2708 = vpop.f32.mrf.mxu0
        %v2709 = vadd.f32 1e-06, %v2708
        %v2710 = vpop.f32.mrf.mxu0
        %v2711 = vpop.f32.mrf.mxu0
        %v2712 = vadd.f32 1e-06, %v2711
        %v2713 = vpop.f32.mrf.mxu0
        %2714 = vmatprep.mubr.bf16.mxu0 0
        %2715 = vmatmul.mubr.bf16.gmra.mxu0 %v2624
        %v2716 = vpop.f32.mrf.mxu0
        %v2717 = vadd.f32 1e-06, %v2716
        %v2718 = vpop.f32.mrf.mxu0
        %v2719 = vpop.f32.mrf.mxu0
        %v2720 = vadd.f32 1e-06, %v2719
        %v2721 = vpop.f32.mrf.mxu0
        %2722 = vdwg.mxu0
        %v2723 = vrcp.pop %v2661
        %v2724 = vrcp.pop %v2664
        %v2725 = vrcp.pop %v2669
        %v2726 = vrcp.pop %v2672
        %v2727 = vrcp.pop %v2677
        %v2728 = vrcp.pop %v2680
        %v2729 = vrcp.pop %v2685
        %v2730 = vrcp.pop %v2688
        %v2731 = vrcp.pop %v2693
        %v2732 = vrcp.pop %v2696
        %v2733 = vrcp.pop %v2701
        %v2734 = vrcp.pop %v2704
        %v2735 = vrcp.pop %v2709
        %v2736 = vrcp.pop %v2712
        %v2737 = vrcp.pop %v2717
        %v2738 = vrcp.pop %v2720
        %v2739 = vmul.f32 %v2586, %v2723
        %v2740 = vmul.f32 %v2587, %v2724
        %v2741 = vmul.f32 %v2588, %v2725
        %v2742 = vmul.f32 %v2589, %v2726
        %v2743 = vmul.f32 %v2590, %v2727
        %v2744 = vmul.f32 %v2591, %v2728
        %v2745 = vmul.f32 %v2592, %v2729
        %v2746 = vmul.f32 %v2593, %v2730
        %v2747 = vmul.f32 %v2594, %v2731
        %v2748 = vmul.f32 %v2595, %v2732
        %v2749 = vmul.f32 %v2596, %v2733
        %v2750 = vmul.f32 %v2597, %v2734
        %v2751 = vmul.f32 %v2598, %v2735
        %v2752 = vmul.f32 %v2599, %v2736
        %v2753 = vmul.f32 %v2600, %v2737
        %v2754 = vmul.f32 %v2601, %v2738
        %v2755 = vpack.c.bf16 %v2740, %v2739
        %v2756 = vpack.c.bf16 %v2742, %v2741
        %v2757 = vpack.c.bf16 %v2744, %v2743
        %v2758 = vpack.c.bf16 %v2746, %v2745
        %v2759 = vpack.c.bf16 %v2748, %v2747
        %v2760 = vpack.c.bf16 %v2750, %v2749
        %v2761 = vpack.c.bf16 %v2752, %v2751
        %v2762 = vpack.c.bf16 %v2754, %v2753
        %2763 = vmatprep.subr.bf16.mxu0 0
        %2764 = vmatpush1.bf16.msra.mxu0 %v2762
        %2765 = vmatprep.subr.bf16.mxu0 0
        %2766 = vmatpush1.bf16.msra.mxu0 %v2761
        %2767 = vmatprep.subr.bf16.mxu0 0
        %2768 = vmatpush1.bf16.msra.mxu0 %v2760
        %2769 = vmatprep.subr.bf16.mxu0 0
        %2770 = vmatpush1.bf16.msra.mxu0 %v2759
        %2771 = vmatprep.subr.bf16.mxu0 0
        %2772 = vmatpush1.bf16.msra.mxu0 %v2758
        %2773 = vmatprep.subr.bf16.mxu0 0
        %2774 = vmatpush1.bf16.msra.mxu0 %v2757
        %2775 = vmatprep.subr.bf16.mxu0 0
        %2776 = vmatpush1.bf16.msra.mxu0 %v2756
        %2777 = vmatprep.subr.bf16.mxu0 0
        %2778 = vmatpush1.bf16.msra.mxu0 %v2755
        %2779 = vmatprep.subr.bf16.mxu0 0
        %2780 = vmatpush2.bf16.msra.mxu0 0
        %2781 = vmatprep.subr.bf16.mxu0 0
        %2782 = vmatpush2.bf16.msra.mxu0 0
        %2783 = vmatprep.subr.bf16.mxu0 0
        %2784 = vmatpush2.bf16.msra.mxu0 0
        %2785 = vmatprep.subr.bf16.mxu0 0
        %2786 = vmatpush2.bf16.msra.mxu0 0
        %2787 = vmatprep.subr.bf16.mxu0 0
        %2788 = vmatpush2.bf16.msra.mxu0 0
        %2789 = vmatprep.subr.bf16.mxu0 0
        %2790 = vmatpush2.bf16.msra.mxu0 0
        %2791 = vmatprep.subr.bf16.mxu0 0
        %2792 = vmatpush2.bf16.msra.mxu0 0
        %2793 = vmatprep.subr.bf16.mxu0 0
        %2794 = vmatpush2.bf16.msra.mxu0 0
        %2795 = vmatprep.mubr.bf16.mxu0 0
        %2796 = vmatmul.mubr.bf16.gmra.mxu0 %v366
        %v2797 = vpop.f32.mrf.mxu0
        %v2798 = vadd.f32 0.0, %v2797
        %v2799 = vpop.f32.mrf.mxu0
        %v2800 = vpop.f32.mrf.mxu0
        %v2801 = vadd.f32 0.0, %v2800
        %v2802 = vpop.f32.mrf.mxu0
        %2803 = vmatprep.mubr.bf16.mxu0 0
        %2804 = vmatmul.mubr.bf16.gmra.mxu0 %v367
        %v2805 = vpop.f32.mrf.mxu0
        %v2806 = vadd.f32 0.0, %v2805
        %v2807 = vpop.f32.mrf.mxu0
        %v2808 = vpop.f32.mrf.mxu0
        %v2809 = vadd.f32 0.0, %v2808
        %v2810 = vpop.f32.mrf.mxu0
        %2811 = vmatprep.mubr.bf16.mxu0 0
        %2812 = vmatmul.mubr.bf16.gmra.mxu0 %v368
        %v2813 = vpop.f32.mrf.mxu0
        %v2814 = vadd.f32 0.0, %v2813
        %v2815 = vpop.f32.mrf.mxu0
        %v2816 = vpop.f32.mrf.mxu0
        %v2817 = vadd.f32 0.0, %v2816
        %v2818 = vpop.f32.mrf.mxu0
        %2819 = vmatprep.mubr.bf16.mxu0 0
        %2820 = vmatmul.mubr.bf16.gmra.mxu0 %v369
        %v2821 = vpop.f32.mrf.mxu0
        %v2822 = vadd.f32 0.0, %v2821
        %v2823 = vpop.f32.mrf.mxu0
        %v2824 = vpop.f32.mrf.mxu0
        %v2825 = vadd.f32 0.0, %v2824
        %v2826 = vpop.f32.mrf.mxu0
        %2827 = vmatprep.mubr.bf16.mxu0 0
        %2828 = vmatmul.mubr.bf16.gmra.mxu0 %v370
        %v2829 = vpop.f32.mrf.mxu0
        %v2830 = vadd.f32 0.0, %v2829
        %v2831 = vpop.f32.mrf.mxu0
        %v2832 = vpop.f32.mrf.mxu0
        %v2833 = vadd.f32 0.0, %v2832
        %v2834 = vpop.f32.mrf.mxu0
        %2835 = vmatprep.mubr.bf16.mxu0 0
        %2836 = vmatmul.mubr.bf16.gmra.mxu0 %v371
        %v2837 = vpop.f32.mrf.mxu0
        %v2838 = vadd.f32 0.0, %v2837
        %v2839 = vpop.f32.mrf.mxu0
        %v2840 = vpop.f32.mrf.mxu0
        %v2841 = vadd.f32 0.0, %v2840
        %v2842 = vpop.f32.mrf.mxu0
        %2843 = vmatprep.mubr.bf16.mxu0 0
        %2844 = vmatmul.mubr.bf16.gmra.mxu0 %v372
        %v2845 = vpop.f32.mrf.mxu0
        %v2846 = vadd.f32 0.0, %v2845
        %v2847 = vpop.f32.mrf.mxu0
        %v2848 = vpop.f32.mrf.mxu0
        %v2849 = vadd.f32 0.0, %v2848
        %v2850 = vpop.f32.mrf.mxu0
        %2851 = vmatprep.mubr.bf16.mxu0 0
        %2852 = vmatmul.mubr.bf16.gmra.mxu0 %v373
        %v2853 = vpop.f32.mrf.mxu0
        %v2854 = vadd.f32 0.0, %v2853
        %v2855 = vpop.f32.mrf.mxu0
        %v2856 = vpop.f32.mrf.mxu0
        %v2857 = vadd.f32 0.0, %v2856
        %v2858 = vpop.f32.mrf.mxu0
        %2859 = vmatprep.mubr.bf16.mxu0 0
        %2860 = vmatmul.mubr.bf16.gmra.mxu0 %v374
        %v2861 = vpop.f32.mrf.mxu0
        %v2862 = vadd.f32 0.0, %v2861
        %v2863 = vpop.f32.mrf.mxu0
        %v2864 = vpop.f32.mrf.mxu0
        %v2865 = vadd.f32 0.0, %v2864
        %v2866 = vpop.f32.mrf.mxu0
        %2867 = vmatprep.mubr.bf16.mxu0 0
        %2868 = vmatmul.mubr.bf16.gmra.mxu0 %v375
        %v2869 = vpop.f32.mrf.mxu0
        %v2870 = vadd.f32 0.0, %v2869
        %v2871 = vpop.f32.mrf.mxu0
        %v2872 = vpop.f32.mrf.mxu0
        %v2873 = vadd.f32 0.0, %v2872
        %v2874 = vpop.f32.mrf.mxu0
        %2875 = vmatprep.mubr.bf16.mxu0 0
        %2876 = vmatmul.mubr.bf16.gmra.mxu0 %v376
        %v2877 = vpop.f32.mrf.mxu0
        %v2878 = vadd.f32 0.0, %v2877
        %v2879 = vpop.f32.mrf.mxu0
        %v2880 = vpop.f32.mrf.mxu0
        %v2881 = vadd.f32 0.0, %v2880
        %v2882 = vpop.f32.mrf.mxu0
        %2883 = vmatprep.mubr.bf16.mxu0 0
        %2884 = vmatmul.mubr.bf16.gmra.mxu0 %v377
        %v2885 = vpop.f32.mrf.mxu0
        %v2886 = vadd.f32 0.0, %v2885
        %v2887 = vpop.f32.mrf.mxu0
        %v2888 = vpop.f32.mrf.mxu0
        %v2889 = vadd.f32 0.0, %v2888
        %v2890 = vpop.f32.mrf.mxu0
        %2891 = vmatprep.mubr.bf16.mxu0 0
        %2892 = vmatmul.mubr.bf16.gmra.mxu0 %v378
        %v2893 = vpop.f32.mrf.mxu0
        %v2894 = vadd.f32 0.0, %v2893
        %v2895 = vpop.f32.mrf.mxu0
        %v2896 = vpop.f32.mrf.mxu0
        %v2897 = vadd.f32 0.0, %v2896
        %v2898 = vpop.f32.mrf.mxu0
        %2899 = vmatprep.mubr.bf16.mxu0 0
        %2900 = vmatmul.mubr.bf16.gmra.mxu0 %v379
        %v2901 = vpop.f32.mrf.mxu0
        %v2902 = vadd.f32 0.0, %v2901
        %v2903 = vpop.f32.mrf.mxu0
        %v2904 = vpop.f32.mrf.mxu0
        %v2905 = vadd.f32 0.0, %v2904
        %v2906 = vpop.f32.mrf.mxu0
        %2907 = vmatprep.mubr.bf16.mxu0 0
        %2908 = vmatmul.mubr.bf16.gmra.mxu0 %v380
        %v2909 = vpop.f32.mrf.mxu0
        %v2910 = vadd.f32 0.0, %v2909
        %v2911 = vpop.f32.mrf.mxu0
        %v2912 = vpop.f32.mrf.mxu0
        %v2913 = vadd.f32 0.0, %v2912
        %v2914 = vpop.f32.mrf.mxu0
        %2915 = vmatprep.mubr.bf16.mxu0 0
        %2916 = vmatmul.mubr.bf16.gmra.mxu0 %v381
        %v2917 = vpop.f32.mrf.mxu0
        %v2918 = vadd.f32 0.0, %v2917
        %v2919 = vpop.f32.mrf.mxu0
        %v2920 = vpop.f32.mrf.mxu0
        %v2921 = vadd.f32 0.0, %v2920
        %v2922 = vpop.f32.mrf.mxu0
        %2923 = vdwg.mxu0
        %2924 = vxpose.xlu0.c.b16.start [1/8] %v2755, 128
        %2925 = vxpose.xlu0.c.b16.cont [2/8] %v2756, 128
        %2926 = vxpose.xlu0.c.b16.cont [3/8] %v2757, 128
        %2927 = vxpose.xlu0.c.b16.cont [4/8] %v2758, 128
        %2928 = vxpose.xlu0.c.b16.cont [5/8] %v2759, 128
        %2929 = vxpose.xlu0.c.b16.cont [6/8] %v2760, 128
        %2930 = vxpose.xlu0.c.b16.cont [7/8] %v2761, 128
        %2931 = vxpose.xlu0.c.b16.end [8/8] %v2762, 128
        %v2932 = vpop.trf.xlu0
        %v2933 = vpop.trf.xlu0
        %v2934 = vpop.trf.xlu0
        %v2935 = vpop.trf.xlu0
        %v2936 = vpop.trf.xlu0
        %v2937 = vpop.trf.xlu0
        %v2938 = vpop.trf.xlu0
        %v2939 = vpop.trf.xlu0
        %2940 = vmatprep.subr.bf16.mxu0 0
        %2941 = vmatpush1.bf16.msra.mxu0 %v2762
        %2942 = vmatprep.subr.bf16.mxu0 0
        %2943 = vmatpush1.bf16.msra.mxu0 %v2761
        %2944 = vmatprep.subr.bf16.mxu0 0
        %2945 = vmatpush1.bf16.msra.mxu0 %v2760
        %2946 = vmatprep.subr.bf16.mxu0 0
        %2947 = vmatpush1.bf16.msra.mxu0 %v2759
        %2948 = vmatprep.subr.bf16.mxu0 0
        %2949 = vmatpush1.bf16.msra.mxu0 %v2758
        %2950 = vmatprep.subr.bf16.mxu0 0
        %2951 = vmatpush1.bf16.msra.mxu0 %v2757
        %2952 = vmatprep.subr.bf16.mxu0 0
        %2953 = vmatpush1.bf16.msra.mxu0 %v2756
        %2954 = vmatprep.subr.bf16.mxu0 0
        %2955 = vmatpush1.bf16.msra.mxu0 %v2755
        %2956 = vmatprep.subr.bf16.mxu0 0
        %2957 = vmatpush2.bf16.msra.mxu0 0
        %2958 = vmatprep.subr.bf16.mxu0 0
        %2959 = vmatpush2.bf16.msra.mxu0 0
        %2960 = vmatprep.subr.bf16.mxu0 0
        %2961 = vmatpush2.bf16.msra.mxu0 0
        %2962 = vmatprep.subr.bf16.mxu0 0
        %2963 = vmatpush2.bf16.msra.mxu0 0
        %2964 = vmatprep.subr.bf16.mxu0 0
        %2965 = vmatpush2.bf16.msra.mxu0 0
        %2966 = vmatprep.subr.bf16.mxu0 0
        %2967 = vmatpush2.bf16.msra.mxu0 0
        %2968 = vmatprep.subr.bf16.mxu0 0
        %2969 = vmatpush2.bf16.msra.mxu0 0
        %2970 = vmatprep.subr.bf16.mxu0 0
        %2971 = vmatpush2.bf16.msra.mxu0 0
        %2972 = vmatprep.mubr.bf16.mxu0 0
        %2973 = vmatmul.mubr.bf16.gmra.mxu0 %v2932
        %v2974 = vpop.f32.mrf.mxu0
        %v2975 = vadd.f32 0.0, %v2974
        %v2976 = vpop.f32.mrf.mxu0
        %v2977 = vpop.f32.mrf.mxu0
        %v2978 = vadd.f32 0.0, %v2977
        %v2979 = vpop.f32.mrf.mxu0
        %2980 = vmatprep.mubr.bf16.mxu0 0
        %2981 = vmatmul.mubr.bf16.gmra.mxu0 %v2933
        %v2982 = vpop.f32.mrf.mxu0
        %v2983 = vadd.f32 0.0, %v2982
        %v2984 = vpop.f32.mrf.mxu0
        %v2985 = vpop.f32.mrf.mxu0
        %v2986 = vadd.f32 0.0, %v2985
        %v2987 = vpop.f32.mrf.mxu0
        %2988 = vmatprep.mubr.bf16.mxu0 0
        %2989 = vmatmul.mubr.bf16.gmra.mxu0 %v2934
        %v2990 = vpop.f32.mrf.mxu0
        %v2991 = vadd.f32 0.0, %v2990
        %v2992 = vpop.f32.mrf.mxu0
        %v2993 = vpop.f32.mrf.mxu0
        %v2994 = vadd.f32 0.0, %v2993
        %v2995 = vpop.f32.mrf.mxu0
        %2996 = vmatprep.mubr.bf16.mxu0 0
        %2997 = vmatmul.mubr.bf16.gmra.mxu0 %v2935
        %v2998 = vpop.f32.mrf.mxu0
        %v2999 = vadd.f32 0.0, %v2998
        %v3000 = vpop.f32.mrf.mxu0
        %v3001 = vpop.f32.mrf.mxu0
        %v3002 = vadd.f32 0.0, %v3001
        %v3003 = vpop.f32.mrf.mxu0
        %3004 = vdwg.mxu0
        %v3005 = vpack.c.bf16 %v2978, %v2975
        %v3006 = vpack.c.bf16 %v2986, %v2983
        %v3007 = vpack.c.bf16 %v2994, %v2991
        %v3008 = vpack.c.bf16 %v3002, %v2999
        %v3009 = vmul.f32 %v2340, %v2798
        %v3010 = vmul.f32 %v2341, %v2801
        %v3011 = vmul.f32 %v2342, %v2806
        %v3012 = vmul.f32 %v2343, %v2809
        %v3013 = vmul.f32 %v2344, %v2814
        %v3014 = vmul.f32 %v2345, %v2817
        %v3015 = vmul.f32 %v2346, %v2822
        %v3016 = vmul.f32 %v2347, %v2825
        %v3017 = vmul.f32 %v2348, %v2830
        %v3018 = vmul.f32 %v2349, %v2833
        %v3019 = vmul.f32 %v2350, %v2838
        %v3020 = vmul.f32 %v2351, %v2841
        %v3021 = vmul.f32 %v2352, %v2846
        %v3022 = vmul.f32 %v2353, %v2849
        %v3023 = vmul.f32 %v2354, %v2854
        %v3024 = vmul.f32 %v2355, %v2857
        %v3025 = vmul.f32 %v2356, %v2862
        %v3026 = vmul.f32 %v2357, %v2865
        %v3027 = vmul.f32 %v2358, %v2870
        %v3028 = vmul.f32 %v2359, %v2873
        %v3029 = vmul.f32 %v2360, %v2878
        %v3030 = vmul.f32 %v2361, %v2881
        %v3031 = vmul.f32 %v2362, %v2886
        %v3032 = vmul.f32 %v2363, %v2889
        %v3033 = vmul.f32 %v2364, %v2894
        %v3034 = vmul.f32 %v2365, %v2897
        %v3035 = vmul.f32 %v2366, %v2902
        %v3036 = vmul.f32 %v2367, %v2905
        %v3037 = vmul.f32 %v2368, %v2910
        %v3038 = vmul.f32 %v2369, %v2913
        %v3039 = vmul.f32 %v2370, %v2918
        %v3040 = vmul.f32 %v2371, %v2921
        %v3042 = vsel %vm559, %v2372, 0
        %v3045 = vsel %vm559, %v2373, 0
        %v3048 = vsel %vm559, %v2374, 0
        %v3051 = vsel %vm559, %v2375, 0
        %v3054 = vsel %vm559, %v2376, 0
        %v3057 = vsel %vm559, %v2377, 0
        %v3060 = vsel %vm559, %v2378, 0
        %v3063 = vsel %vm559, %v2379, 0
        %v3066 = vsel %vm559, %v2380, 0
        %v3069 = vsel %vm559, %v2381, 0
        %v3072 = vsel %vm559, %v2382, 0
        %v3075 = vsel %vm559, %v2383, 0
        %v3078 = vsel %vm559, %v2384, 0
        %v3081 = vsel %vm559, %v2385, 0
        %v3084 = vsel %vm559, %v2386, 0
        %v3087 = vsel %vm559, %v2387, 0
        %3089 = vmatprep.subr.bf16.mxu0 0
        %3090 = vmatpush1.bf16.msra.mxu0 0
        %3091 = vmatprep.subr.bf16.mxu0 0
        %3092 = vmatpush1.bf16.msra.mxu0 0
        %3093 = vmatprep.subr.bf16.mxu0 0
        %3094 = vmatpush1.bf16.msra.mxu0 0
        %3095 = vmatprep.subr.bf16.mxu0 0
        %3096 = vmatpush1.bf16.msra.mxu0 0
        %3097 = vmatprep.subr.bf16.mxu0 0
        %3098 = vmatpush1.bf16.msra.mxu0 %v3008
        %3099 = vmatprep.subr.bf16.mxu0 0
        %3100 = vmatpush1.bf16.msra.mxu0 %v3007
        %3101 = vmatprep.subr.bf16.mxu0 0
        %3102 = vmatpush1.bf16.msra.mxu0 %v3006
        %3103 = vmatprep.subr.bf16.mxu0 0
        %3104 = vmatpush1.bf16.msra.mxu0 %v3005
        %3105 = vmatprep.subr.bf16.mxu0 0
        %3106 = vmatpush2.bf16.msra.mxu0 0
        %3107 = vmatprep.subr.bf16.mxu0 0
        %3108 = vmatpush2.bf16.msra.mxu0 0
        %3109 = vmatprep.subr.bf16.mxu0 0
        %3110 = vmatpush2.bf16.msra.mxu0 0
        %3111 = vmatprep.subr.bf16.mxu0 0
        %3112 = vmatpush2.bf16.msra.mxu0 0
        %3113 = vmatprep.subr.bf16.mxu0 0
        %3114 = vmatpush2.bf16.msra.mxu0 0
        %3115 = vmatprep.subr.bf16.mxu0 0
        %3116 = vmatpush2.bf16.msra.mxu0 0
        %3117 = vmatprep.subr.bf16.mxu0 0
        %3118 = vmatpush2.bf16.msra.mxu0 0
        %3119 = vmatprep.subr.bf16.mxu0 0
        %3120 = vmatpush2.bf16.msra.mxu0 0
        %3121 = vmatprep.mubr.bf16.mxu0 0
        %3122 = vmatmul.mubr.bf16.gmra.mxu0 %v3042
        %v3123 = vpop.f32.mrf.mxu0
        %v3124 = vadd.f32 1e-06, %v3123
        %v3125 = vpop.f32.mrf.mxu0
        %v3126 = vpop.f32.mrf.mxu0
        %v3127 = vadd.f32 1e-06, %v3126
        %v3128 = vpop.f32.mrf.mxu0
        %3129 = vmatprep.mubr.bf16.mxu0 0
        %3130 = vmatmul.mubr.bf16.gmra.mxu0 %v3045
        %v3131 = vpop.f32.mrf.mxu0
        %v3132 = vadd.f32 1e-06, %v3131
        %v3133 = vpop.f32.mrf.mxu0
        %v3134 = vpop.f32.mrf.mxu0
        %v3135 = vadd.f32 1e-06, %v3134
        %v3136 = vpop.f32.mrf.mxu0
        %3137 = vmatprep.mubr.bf16.mxu0 0
        %3138 = vmatmul.mubr.bf16.gmra.mxu0 %v3048
        %v3139 = vpop.f32.mrf.mxu0
        %v3140 = vadd.f32 1e-06, %v3139
        %v3141 = vpop.f32.mrf.mxu0
        %v3142 = vpop.f32.mrf.mxu0
        %v3143 = vadd.f32 1e-06, %v3142
        %v3144 = vpop.f32.mrf.mxu0
        %3145 = vmatprep.mubr.bf16.mxu0 0
        %3146 = vmatmul.mubr.bf16.gmra.mxu0 %v3051
        %v3147 = vpop.f32.mrf.mxu0
        %v3148 = vadd.f32 1e-06, %v3147
        %v3149 = vpop.f32.mrf.mxu0
        %v3150 = vpop.f32.mrf.mxu0
        %v3151 = vadd.f32 1e-06, %v3150
        %v3152 = vpop.f32.mrf.mxu0
        %3153 = vmatprep.mubr.bf16.mxu0 0
        %3154 = vmatmul.mubr.bf16.gmra.mxu0 %v3054
        %v3155 = vpop.f32.mrf.mxu0
        %v3156 = vadd.f32 1e-06, %v3155
        %v3157 = vpop.f32.mrf.mxu0
        %v3158 = vpop.f32.mrf.mxu0
        %v3159 = vadd.f32 1e-06, %v3158
        %v3160 = vpop.f32.mrf.mxu0
        %3161 = vmatprep.mubr.bf16.mxu0 0
        %3162 = vmatmul.mubr.bf16.gmra.mxu0 %v3057
        %v3163 = vpop.f32.mrf.mxu0
        %v3164 = vadd.f32 1e-06, %v3163
        %v3165 = vpop.f32.mrf.mxu0
        %v3166 = vpop.f32.mrf.mxu0
        %v3167 = vadd.f32 1e-06, %v3166
        %v3168 = vpop.f32.mrf.mxu0
        %3169 = vmatprep.mubr.bf16.mxu0 0
        %3170 = vmatmul.mubr.bf16.gmra.mxu0 %v3060
        %v3171 = vpop.f32.mrf.mxu0
        %v3172 = vadd.f32 1e-06, %v3171
        %v3173 = vpop.f32.mrf.mxu0
        %v3174 = vpop.f32.mrf.mxu0
        %v3175 = vadd.f32 1e-06, %v3174
        %v3176 = vpop.f32.mrf.mxu0
        %3177 = vmatprep.mubr.bf16.mxu0 0
        %3178 = vmatmul.mubr.bf16.gmra.mxu0 %v3063
        %v3179 = vpop.f32.mrf.mxu0
        %v3180 = vadd.f32 1e-06, %v3179
        %v3181 = vpop.f32.mrf.mxu0
        %v3182 = vpop.f32.mrf.mxu0
        %v3183 = vadd.f32 1e-06, %v3182
        %v3184 = vpop.f32.mrf.mxu0
        %3185 = vmatprep.mubr.bf16.mxu0 0
        %3186 = vmatmul.mubr.bf16.gmra.mxu0 %v3066
        %v3187 = vpop.f32.mrf.mxu0
        %v3188 = vadd.f32 1e-06, %v3187
        %v3189 = vpop.f32.mrf.mxu0
        %v3190 = vpop.f32.mrf.mxu0
        %v3191 = vadd.f32 1e-06, %v3190
        %v3192 = vpop.f32.mrf.mxu0
        %3193 = vmatprep.mubr.bf16.mxu0 0
        %3194 = vmatmul.mubr.bf16.gmra.mxu0 %v3069
        %v3195 = vpop.f32.mrf.mxu0
        %v3196 = vadd.f32 1e-06, %v3195
        %v3197 = vpop.f32.mrf.mxu0
        %v3198 = vpop.f32.mrf.mxu0
        %v3199 = vadd.f32 1e-06, %v3198
        %v3200 = vpop.f32.mrf.mxu0
        %3201 = vmatprep.mubr.bf16.mxu0 0
        %3202 = vmatmul.mubr.bf16.gmra.mxu0 %v3072
        %v3203 = vpop.f32.mrf.mxu0
        %v3204 = vadd.f32 1e-06, %v3203
        %v3205 = vpop.f32.mrf.mxu0
        %v3206 = vpop.f32.mrf.mxu0
        %v3207 = vadd.f32 1e-06, %v3206
        %v3208 = vpop.f32.mrf.mxu0
        %3209 = vmatprep.mubr.bf16.mxu0 0
        %3210 = vmatmul.mubr.bf16.gmra.mxu0 %v3075
        %v3211 = vpop.f32.mrf.mxu0
        %v3212 = vadd.f32 1e-06, %v3211
        %v3213 = vpop.f32.mrf.mxu0
        %v3214 = vpop.f32.mrf.mxu0
        %v3215 = vadd.f32 1e-06, %v3214
        %v3216 = vpop.f32.mrf.mxu0
        %3217 = vmatprep.mubr.bf16.mxu0 0
        %3218 = vmatmul.mubr.bf16.gmra.mxu0 %v3078
        %v3219 = vpop.f32.mrf.mxu0
        %v3220 = vadd.f32 1e-06, %v3219
        %v3221 = vpop.f32.mrf.mxu0
        %v3222 = vpop.f32.mrf.mxu0
        %v3223 = vadd.f32 1e-06, %v3222
        %v3224 = vpop.f32.mrf.mxu0
        %3225 = vmatprep.mubr.bf16.mxu0 0
        %3226 = vmatmul.mubr.bf16.gmra.mxu0 %v3081
        %v3227 = vpop.f32.mrf.mxu0
        %v3228 = vadd.f32 1e-06, %v3227
        %v3229 = vpop.f32.mrf.mxu0
        %v3230 = vpop.f32.mrf.mxu0
        %v3231 = vadd.f32 1e-06, %v3230
        %v3232 = vpop.f32.mrf.mxu0
        %3233 = vmatprep.mubr.bf16.mxu0 0
        %3234 = vmatmul.mubr.bf16.gmra.mxu0 %v3084
        %v3235 = vpop.f32.mrf.mxu0
        %v3236 = vadd.f32 1e-06, %v3235
        %v3237 = vpop.f32.mrf.mxu0
        %v3238 = vpop.f32.mrf.mxu0
        %v3239 = vadd.f32 1e-06, %v3238
        %v3240 = vpop.f32.mrf.mxu0
        %3241 = vmatprep.mubr.bf16.mxu0 0
        %3242 = vmatmul.mubr.bf16.gmra.mxu0 %v3087
        %v3243 = vpop.f32.mrf.mxu0
        %v3244 = vadd.f32 1e-06, %v3243
        %v3245 = vpop.f32.mrf.mxu0
        %v3246 = vpop.f32.mrf.mxu0
        %v3247 = vadd.f32 1e-06, %v3246
        %v3248 = vpop.f32.mrf.mxu0
        %3249 = vdwg.mxu0
        %v3250 = vrcp.pop %v3124
        %v3251 = vrcp.pop %v3127
        %v3252 = vrcp.pop %v3132
        %v3253 = vrcp.pop %v3135
        %v3254 = vrcp.pop %v3140
        %v3255 = vrcp.pop %v3143
        %v3256 = vrcp.pop %v3148
        %v3257 = vrcp.pop %v3151
        %v3258 = vrcp.pop %v3156
        %v3259 = vrcp.pop %v3159
        %v3260 = vrcp.pop %v3164
        %v3261 = vrcp.pop %v3167
        %v3262 = vrcp.pop %v3172
        %v3263 = vrcp.pop %v3175
        %v3264 = vrcp.pop %v3180
        %v3265 = vrcp.pop %v3183
        %v3266 = vrcp.pop %v3188
        %v3267 = vrcp.pop %v3191
        %v3268 = vrcp.pop %v3196
        %v3269 = vrcp.pop %v3199
        %v3270 = vrcp.pop %v3204
        %v3271 = vrcp.pop %v3207
        %v3272 = vrcp.pop %v3212
        %v3273 = vrcp.pop %v3215
        %v3274 = vrcp.pop %v3220
        %v3275 = vrcp.pop %v3223
        %v3276 = vrcp.pop %v3228
        %v3277 = vrcp.pop %v3231
        %v3278 = vrcp.pop %v3236
        %v3279 = vrcp.pop %v3239
        %v3280 = vrcp.pop %v3244
        %v3281 = vrcp.pop %v3247
        %v3282 = vmul.f32 %v3009, %v3250
        %v3283 = vmul.f32 %v3010, %v3251
        %v3284 = vmul.f32 %v3011, %v3252
        %v3285 = vmul.f32 %v3012, %v3253
        %v3286 = vmul.f32 %v3013, %v3254
        %v3287 = vmul.f32 %v3014, %v3255
        %v3288 = vmul.f32 %v3015, %v3256
        %v3289 = vmul.f32 %v3016, %v3257
        %v3290 = vmul.f32 %v3017, %v3258
        %v3291 = vmul.f32 %v3018, %v3259
        %v3292 = vmul.f32 %v3019, %v3260
        %v3293 = vmul.f32 %v3020, %v3261
        %v3294 = vmul.f32 %v3021, %v3262
        %v3295 = vmul.f32 %v3022, %v3263
        %v3296 = vmul.f32 %v3023, %v3264
        %v3297 = vmul.f32 %v3024, %v3265
        %v3298 = vmul.f32 %v3025, %v3266
        %v3299 = vmul.f32 %v3026, %v3267
        %v3300 = vmul.f32 %v3027, %v3268
        %v3301 = vmul.f32 %v3028, %v3269
        %v3302 = vmul.f32 %v3029, %v3270
        %v3303 = vmul.f32 %v3030, %v3271
        %v3304 = vmul.f32 %v3031, %v3272
        %v3305 = vmul.f32 %v3032, %v3273
        %v3306 = vmul.f32 %v3033, %v3274
        %v3307 = vmul.f32 %v3034, %v3275
        %v3308 = vmul.f32 %v3035, %v3276
        %v3309 = vmul.f32 %v3036, %v3277
        %v3310 = vmul.f32 %v3037, %v3278
        %v3311 = vmul.f32 %v3038, %v3279
        %v3312 = vmul.f32 %v3039, %v3280
        %v3313 = vmul.f32 %v3040, %v3281
        %v3314 = vpack.c.bf16 %v3283, %v3282
        %v3315 = vpack.c.bf16 %v3285, %v3284
        %v3316 = vpack.c.bf16 %v3287, %v3286
        %v3317 = vpack.c.bf16 %v3289, %v3288
        %v3318 = vpack.c.bf16 %v3291, %v3290
        %v3319 = vpack.c.bf16 %v3293, %v3292
        %v3320 = vpack.c.bf16 %v3295, %v3294
        %v3321 = vpack.c.bf16 %v3297, %v3296
        %v3322 = vpack.c.bf16 %v3299, %v3298
        %v3323 = vpack.c.bf16 %v3301, %v3300
        %v3324 = vpack.c.bf16 %v3303, %v3302
        %v3325 = vpack.c.bf16 %v3305, %v3304
        %v3326 = vpack.c.bf16 %v3307, %v3306
        %v3327 = vpack.c.bf16 %v3309, %v3308
        %v3328 = vpack.c.bf16 %v3311, %v3310
        %v3329 = vpack.c.bf16 %v3313, %v3312
        %3330 = vmatprep.subr.bf16.mxu0 0
        %3331 = vmatpush1.bf16.msra.mxu0 %v3321
        %3332 = vmatprep.subr.bf16.mxu0 0
        %3333 = vmatpush1.bf16.msra.mxu0 %v3320
        %3334 = vmatprep.subr.bf16.mxu0 0
        %3335 = vmatpush1.bf16.msra.mxu0 %v3319
        %3336 = vmatprep.subr.bf16.mxu0 0
        %3337 = vmatpush1.bf16.msra.mxu0 %v3318
        %3338 = vmatprep.subr.bf16.mxu0 0
        %3339 = vmatpush1.bf16.msra.mxu0 %v3317
        %3340 = vmatprep.subr.bf16.mxu0 0
        %3341 = vmatpush1.bf16.msra.mxu0 %v3316
        %3342 = vmatprep.subr.bf16.mxu0 0
        %3343 = vmatpush1.bf16.msra.mxu0 %v3315
        %3344 = vmatprep.subr.bf16.mxu0 0
        %3345 = vmatpush1.bf16.msra.mxu0 %v3314
        %3346 = vmatprep.subr.bf16.mxu0 0
        %3347 = vmatpush2.bf16.msra.mxu0 %v3329
        %3348 = vmatprep.subr.bf16.mxu0 0
        %3349 = vmatpush2.bf16.msra.mxu0 %v3328
        %3350 = vmatprep.subr.bf16.mxu0 0
        %3351 = vmatpush2.bf16.msra.mxu0 %v3327
        %3352 = vmatprep.subr.bf16.mxu0 0
        %3353 = vmatpush2.bf16.msra.mxu0 %v3326
        %3354 = vmatprep.subr.bf16.mxu0 0
        %3355 = vmatpush2.bf16.msra.mxu0 %v3325
        %3356 = vmatprep.subr.bf16.mxu0 0
        %3357 = vmatpush2.bf16.msra.mxu0 %v3324
        %3358 = vmatprep.subr.bf16.mxu0 0
        %3359 = vmatpush2.bf16.msra.mxu0 %v3323
        %3360 = vmatprep.subr.bf16.mxu0 0
        %3361 = vmatpush2.bf16.msra.mxu0 %v3322
        %3362 = vmatprep.mubr.bf16.mxu0 %v1415
        %3363 = vmatmul.mubr.bf16.gmra.mxu0 %v1414
        %v3364 = vpop.f32.mrf.mxu0
        %v3365 = vadd.f32 0.0, %v3364
        %v3366 = vpop.f32.mrf.mxu0
        %v3367 = vpop.f32.mrf.mxu0
        %v3368 = vadd.f32 0.0, %v3367
        %v3369 = vpop.f32.mrf.mxu0
        %3370 = vmatprep.mubr.bf16.mxu0 %v1417
        %3371 = vmatmul.mubr.bf16.gmra.mxu0 %v1416
        %v3372 = vpop.f32.mrf.mxu0
        %v3373 = vadd.f32 0.0, %v3372
        %v3374 = vpop.f32.mrf.mxu0
        %v3375 = vpop.f32.mrf.mxu0
        %v3376 = vadd.f32 0.0, %v3375
        %v3377 = vpop.f32.mrf.mxu0
        %3378 = vmatprep.mubr.bf16.mxu0 %v1419
        %3379 = vmatmul.mubr.bf16.gmra.mxu0 %v1418
        %v3380 = vpop.f32.mrf.mxu0
        %v3381 = vadd.f32 0.0, %v3380
        %v3382 = vpop.f32.mrf.mxu0
        %v3383 = vpop.f32.mrf.mxu0
        %v3384 = vadd.f32 0.0, %v3383
        %v3385 = vpop.f32.mrf.mxu0
        %3386 = vmatprep.mubr.bf16.mxu0 %v1421
        %3387 = vmatmul.mubr.bf16.gmra.mxu0 %v1420
        %v3388 = vpop.f32.mrf.mxu0
        %v3389 = vadd.f32 0.0, %v3388
        %v3390 = vpop.f32.mrf.mxu0
        %v3391 = vpop.f32.mrf.mxu0
        %v3392 = vadd.f32 0.0, %v3391
        %v3393 = vpop.f32.mrf.mxu0
        %3394 = vmatprep.mubr.bf16.mxu0 %v1423
        %3395 = vmatmul.mubr.bf16.gmra.mxu0 %v1422
        %v3396 = vpop.f32.mrf.mxu0
        %v3397 = vadd.f32 0.0, %v3396
        %v3398 = vpop.f32.mrf.mxu0
        %v3399 = vpop.f32.mrf.mxu0
        %v3400 = vadd.f32 0.0, %v3399
        %v3401 = vpop.f32.mrf.mxu0
        %3402 = vmatprep.mubr.bf16.mxu0 %v1425
        %3403 = vmatmul.mubr.bf16.gmra.mxu0 %v1424
        %v3404 = vpop.f32.mrf.mxu0
        %v3405 = vadd.f32 0.0, %v3404
        %v3406 = vpop.f32.mrf.mxu0
        %v3407 = vpop.f32.mrf.mxu0
        %v3408 = vadd.f32 0.0, %v3407
        %v3409 = vpop.f32.mrf.mxu0
        %3410 = vmatprep.mubr.bf16.mxu0 %v1427
        %3411 = vmatmul.mubr.bf16.gmra.mxu0 %v1426
        %v3412 = vpop.f32.mrf.mxu0
        %v3413 = vadd.f32 0.0, %v3412
        %v3414 = vpop.f32.mrf.mxu0
        %v3415 = vpop.f32.mrf.mxu0
        %v3416 = vadd.f32 0.0, %v3415
        %v3417 = vpop.f32.mrf.mxu0
        %3418 = vmatprep.mubr.bf16.mxu0 %v1429
        %3419 = vmatmul.mubr.bf16.gmra.mxu0 %v1428
        %v3420 = vpop.f32.mrf.mxu0
        %v3421 = vadd.f32 0.0, %v3420
        %v3422 = vpop.f32.mrf.mxu0
        %v3423 = vpop.f32.mrf.mxu0
        %v3424 = vadd.f32 0.0, %v3423
        %v3425 = vpop.f32.mrf.mxu0
        %3426 = vdwg.mxu0
        %3427 = vxpose.xlu0.c.b16.start [1/8] %v3314, 128
        %3428 = vxpose.xlu0.c.b16.cont [2/8] %v3315, 128
        %3429 = vxpose.xlu0.c.b16.cont [3/8] %v3316, 128
        %3430 = vxpose.xlu0.c.b16.cont [4/8] %v3317, 128
        %3431 = vxpose.xlu0.c.b16.cont [5/8] %v3318, 128
        %3432 = vxpose.xlu0.c.b16.cont [6/8] %v3319, 128
        %3433 = vxpose.xlu0.c.b16.cont [7/8] %v3320, 128
        %3434 = vxpose.xlu0.c.b16.end [8/8] %v3321, 128
        %v3435 = vpop.trf.xlu0
        %v3436 = vpop.trf.xlu0
        %v3437 = vpop.trf.xlu0
        %v3438 = vpop.trf.xlu0
        %v3439 = vpop.trf.xlu0
        %v3440 = vpop.trf.xlu0
        %v3441 = vpop.trf.xlu0
        %v3442 = vpop.trf.xlu0
        %3443 = vxpose.xlu0.c.b16.start [1/8] %v3322, 128
        %3444 = vxpose.xlu0.c.b16.cont [2/8] %v3323, 128
        %3445 = vxpose.xlu0.c.b16.cont [3/8] %v3324, 128
        %3446 = vxpose.xlu0.c.b16.cont [4/8] %v3325, 128
        %3447 = vxpose.xlu0.c.b16.cont [5/8] %v3326, 128
        %3448 = vxpose.xlu0.c.b16.cont [6/8] %v3327, 128
        %3449 = vxpose.xlu0.c.b16.cont [7/8] %v3328, 128
        %3450 = vxpose.xlu0.c.b16.end [8/8] %v3329, 128
        %v3451 = vpop.trf.xlu0
        %v3452 = vpop.trf.xlu0
        %v3453 = vpop.trf.xlu0
        %v3454 = vpop.trf.xlu0
        %v3455 = vpop.trf.xlu0
        %v3456 = vpop.trf.xlu0
        %v3457 = vpop.trf.xlu0
        %v3458 = vpop.trf.xlu0
        %3459 = vmatprep.subr.bf16.mxu0 0
        %3460 = vmatpush1.bf16.msra.mxu0 %v3321
        %3461 = vmatprep.subr.bf16.mxu0 0
        %3462 = vmatpush1.bf16.msra.mxu0 %v3320
        %3463 = vmatprep.subr.bf16.mxu0 0
        %3464 = vmatpush1.bf16.msra.mxu0 %v3319
        %3465 = vmatprep.subr.bf16.mxu0 0
        %3466 = vmatpush1.bf16.msra.mxu0 %v3318
        %3467 = vmatprep.subr.bf16.mxu0 0
        %3468 = vmatpush1.bf16.msra.mxu0 %v3317
        %3469 = vmatprep.subr.bf16.mxu0 0
        %3470 = vmatpush1.bf16.msra.mxu0 %v3316
        %3471 = vmatprep.subr.bf16.mxu0 0
        %3472 = vmatpush1.bf16.msra.mxu0 %v3315
        %3473 = vmatprep.subr.bf16.mxu0 0
        %3474 = vmatpush1.bf16.msra.mxu0 %v3314
        %3475 = vmatprep.subr.bf16.mxu0 0
        %3476 = vmatpush2.bf16.msra.mxu0 %v3329
        %3477 = vmatprep.subr.bf16.mxu0 0
        %3478 = vmatpush2.bf16.msra.mxu0 %v3328
        %3479 = vmatprep.subr.bf16.mxu0 0
        %3480 = vmatpush2.bf16.msra.mxu0 %v3327
        %3481 = vmatprep.subr.bf16.mxu0 0
        %3482 = vmatpush2.bf16.msra.mxu0 %v3326
        %3483 = vmatprep.subr.bf16.mxu0 0
        %3484 = vmatpush2.bf16.msra.mxu0 %v3325
        %3485 = vmatprep.subr.bf16.mxu0 0
        %3486 = vmatpush2.bf16.msra.mxu0 %v3324
        %3487 = vmatprep.subr.bf16.mxu0 0
        %3488 = vmatpush2.bf16.msra.mxu0 %v3323
        %3489 = vmatprep.subr.bf16.mxu0 0
        %3490 = vmatpush2.bf16.msra.mxu0 %v3322
        %3491 = vmatprep.mubr.bf16.mxu0 %v3451
        %3492 = vmatmul.mubr.bf16.gmra.mxu0 %v3435
        %v3493 = vpop.f32.mrf.mxu0
        %v3494 = vadd.f32 0.0, %v3493
        %v3495 = vpop.f32.mrf.mxu0
        %v3496 = vpop.f32.mrf.mxu0
        %v3497 = vadd.f32 0.0, %v3496
        %v3498 = vpop.f32.mrf.mxu0
        %3499 = vmatprep.mubr.bf16.mxu0 %v3452
        %3500 = vmatmul.mubr.bf16.gmra.mxu0 %v3436
        %v3501 = vpop.f32.mrf.mxu0
        %v3502 = vadd.f32 0.0, %v3501
        %v3503 = vpop.f32.mrf.mxu0
        %v3504 = vpop.f32.mrf.mxu0
        %v3505 = vadd.f32 0.0, %v3504
        %v3506 = vpop.f32.mrf.mxu0
        %3507 = vmatprep.mubr.bf16.mxu0 %v3453
        %3508 = vmatmul.mubr.bf16.gmra.mxu0 %v3437
        %v3509 = vpop.f32.mrf.mxu0
        %v3510 = vadd.f32 0.0, %v3509
        %v3511 = vpop.f32.mrf.mxu0
        %v3512 = vpop.f32.mrf.mxu0
        %v3513 = vadd.f32 0.0, %v3512
        %v3514 = vpop.f32.mrf.mxu0
        %3515 = vmatprep.mubr.bf16.mxu0 %v3454
        %3516 = vmatmul.mubr.bf16.gmra.mxu0 %v3438
        %v3517 = vpop.f32.mrf.mxu0
        %v3518 = vadd.f32 0.0, %v3517
        %v3519 = vpop.f32.mrf.mxu0
        %v3520 = vpop.f32.mrf.mxu0
        %v3521 = vadd.f32 0.0, %v3520
        %v3522 = vpop.f32.mrf.mxu0
        %3523 = vdwg.mxu0
        %v3524 = vpack.c.bf16 %v3497, %v3494
        %v3525 = vpack.c.bf16 %v3505, %v3502
        %v3526 = vpack.c.bf16 %v3513, %v3510
        %v3527 = vpack.c.bf16 %v3521, %v3518
        %v3528 = vmul.f32 %v2739, %v3365
        %v3529 = vmul.f32 %v2740, %v3368
        %v3530 = vmul.f32 %v2741, %v3373
        %v3531 = vmul.f32 %v2742, %v3376
        %v3532 = vmul.f32 %v2743, %v3381
        %v3533 = vmul.f32 %v2744, %v3384
        %v3534 = vmul.f32 %v2745, %v3389
        %v3535 = vmul.f32 %v2746, %v3392
        %v3536 = vmul.f32 %v2747, %v3397
        %v3537 = vmul.f32 %v2748, %v3400
        %v3538 = vmul.f32 %v2749, %v3405
        %v3539 = vmul.f32 %v2750, %v3408
        %v3540 = vmul.f32 %v2751, %v3413
        %v3541 = vmul.f32 %v2752, %v3416
        %v3542 = vmul.f32 %v2753, %v3421
        %v3543 = vmul.f32 %v2754, %v3424
        %v3545 = vsel %vm559, %v2755, 0
        %v3548 = vsel %vm559, %v2756, 0
        %v3551 = vsel %vm559, %v2757, 0
        %v3554 = vsel %vm559, %v2758, 0
        %v3557 = vsel %vm559, %v2759, 0
        %v3560 = vsel %vm559, %v2760, 0
        %v3563 = vsel %vm559, %v2761, 0
        %v3566 = vsel %vm559, %v2762, 0
        %3568 = vmatprep.subr.bf16.mxu0 0
        %3569 = vmatpush1.bf16.msra.mxu0 0
        %3570 = vmatprep.subr.bf16.mxu0 0
        %3571 = vmatpush1.bf16.msra.mxu0 0
        %3572 = vmatprep.subr.bf16.mxu0 0
        %3573 = vmatpush1.bf16.msra.mxu0 0
        %3574 = vmatprep.subr.bf16.mxu0 0
        %3575 = vmatpush1.bf16.msra.mxu0 0
        %3576 = vmatprep.subr.bf16.mxu0 0
        %3577 = vmatpush1.bf16.msra.mxu0 %v3527
        %3578 = vmatprep.subr.bf16.mxu0 0
        %3579 = vmatpush1.bf16.msra.mxu0 %v3526
        %3580 = vmatprep.subr.bf16.mxu0 0
        %3581 = vmatpush1.bf16.msra.mxu0 %v3525
        %3582 = vmatprep.subr.bf16.mxu0 0
        %3583 = vmatpush1.bf16.msra.mxu0 %v3524
        %3584 = vmatprep.subr.bf16.mxu0 0
        %3585 = vmatpush2.bf16.msra.mxu0 0
        %3586 = vmatprep.subr.bf16.mxu0 0
        %3587 = vmatpush2.bf16.msra.mxu0 0
        %3588 = vmatprep.subr.bf16.mxu0 0
        %3589 = vmatpush2.bf16.msra.mxu0 0
        %3590 = vmatprep.subr.bf16.mxu0 0
        %3591 = vmatpush2.bf16.msra.mxu0 0
        %3592 = vmatprep.subr.bf16.mxu0 0
        %3593 = vmatpush2.bf16.msra.mxu0 0
        %3594 = vmatprep.subr.bf16.mxu0 0
        %3595 = vmatpush2.bf16.msra.mxu0 0
        %3596 = vmatprep.subr.bf16.mxu0 0
        %3597 = vmatpush2.bf16.msra.mxu0 0
        %3598 = vmatprep.subr.bf16.mxu0 0
        %3599 = vmatpush2.bf16.msra.mxu0 0
        %3600 = vmatprep.mubr.bf16.mxu0 0
        %3601 = vmatmul.mubr.bf16.gmra.mxu0 %v3545
        %v3602 = vpop.f32.mrf.mxu0
        %v3603 = vadd.f32 1e-06, %v3602
        %v3604 = vpop.f32.mrf.mxu0
        %v3605 = vpop.f32.mrf.mxu0
        %v3606 = vadd.f32 1e-06, %v3605
        %v3607 = vpop.f32.mrf.mxu0
        %3608 = vmatprep.mubr.bf16.mxu0 0
        %3609 = vmatmul.mubr.bf16.gmra.mxu0 %v3548
        %v3610 = vpop.f32.mrf.mxu0
        %v3611 = vadd.f32 1e-06, %v3610
        %v3612 = vpop.f32.mrf.mxu0
        %v3613 = vpop.f32.mrf.mxu0
        %v3614 = vadd.f32 1e-06, %v3613
        %v3615 = vpop.f32.mrf.mxu0
        %3616 = vmatprep.mubr.bf16.mxu0 0
        %3617 = vmatmul.mubr.bf16.gmra.mxu0 %v3551
        %v3618 = vpop.f32.mrf.mxu0
        %v3619 = vadd.f32 1e-06, %v3618
        %v3620 = vpop.f32.mrf.mxu0
        %v3621 = vpop.f32.mrf.mxu0
        %v3622 = vadd.f32 1e-06, %v3621
        %v3623 = vpop.f32.mrf.mxu0
        %3624 = vmatprep.mubr.bf16.mxu0 0
        %3625 = vmatmul.mubr.bf16.gmra.mxu0 %v3554
        %v3626 = vpop.f32.mrf.mxu0
        %v3627 = vadd.f32 1e-06, %v3626
        %v3628 = vpop.f32.mrf.mxu0
        %v3629 = vpop.f32.mrf.mxu0
        %v3630 = vadd.f32 1e-06, %v3629
        %v3631 = vpop.f32.mrf.mxu0
        %3632 = vmatprep.mubr.bf16.mxu0 0
        %3633 = vmatmul.mubr.bf16.gmra.mxu0 %v3557
        %v3634 = vpop.f32.mrf.mxu0
        %v3635 = vadd.f32 1e-06, %v3634
        %v3636 = vpop.f32.mrf.mxu0
        %v3637 = vpop.f32.mrf.mxu0
        %v3638 = vadd.f32 1e-06, %v3637
        %v3639 = vpop.f32.mrf.mxu0
        %3640 = vmatprep.mubr.bf16.mxu0 0
        %3641 = vmatmul.mubr.bf16.gmra.mxu0 %v3560
        %v3642 = vpop.f32.mrf.mxu0
        %v3643 = vadd.f32 1e-06, %v3642
        %v3644 = vpop.f32.mrf.mxu0
        %v3645 = vpop.f32.mrf.mxu0
        %v3646 = vadd.f32 1e-06, %v3645
        %v3647 = vpop.f32.mrf.mxu0
        %3648 = vmatprep.mubr.bf16.mxu0 0
        %3649 = vmatmul.mubr.bf16.gmra.mxu0 %v3563
        %v3650 = vpop.f32.mrf.mxu0
        %v3651 = vadd.f32 1e-06, %v3650
        %v3652 = vpop.f32.mrf.mxu0
        %v3653 = vpop.f32.mrf.mxu0
        %v3654 = vadd.f32 1e-06, %v3653
        %v3655 = vpop.f32.mrf.mxu0
        %3656 = vmatprep.mubr.bf16.mxu0 0
        %3657 = vmatmul.mubr.bf16.gmra.mxu0 %v3566
        %v3658 = vpop.f32.mrf.mxu0
        %v3659 = vadd.f32 1e-06, %v3658
        %v3660 = vpop.f32.mrf.mxu0
        %v3661 = vpop.f32.mrf.mxu0
        %v3662 = vadd.f32 1e-06, %v3661
        %v3663 = vpop.f32.mrf.mxu0
        %3664 = vdwg.mxu0
        %v3665 = vrcp.pop %v3603
        %v3666 = vrcp.pop %v3606
        %v3667 = vrcp.pop %v3611
        %v3668 = vrcp.pop %v3614
        %v3669 = vrcp.pop %v3619
        %v3670 = vrcp.pop %v3622
        %v3671 = vrcp.pop %v3627
        %v3672 = vrcp.pop %v3630
        %v3673 = vrcp.pop %v3635
        %v3674 = vrcp.pop %v3638
        %v3675 = vrcp.pop %v3643
        %v3676 = vrcp.pop %v3646
        %v3677 = vrcp.pop %v3651
        %v3678 = vrcp.pop %v3654
        %v3679 = vrcp.pop %v3659
        %v3680 = vrcp.pop %v3662
        %v3681 = vmul.f32 %v3528, %v3665
        %v3682 = vmul.f32 %v3529, %v3666
        %v3683 = vmul.f32 %v3530, %v3667
        %v3684 = vmul.f32 %v3531, %v3668
        %v3685 = vmul.f32 %v3532, %v3669
        %v3686 = vmul.f32 %v3533, %v3670
        %v3687 = vmul.f32 %v3534, %v3671
        %v3688 = vmul.f32 %v3535, %v3672
        %v3689 = vmul.f32 %v3536, %v3673
        %v3690 = vmul.f32 %v3537, %v3674
        %v3691 = vmul.f32 %v3538, %v3675
        %v3692 = vmul.f32 %v3539, %v3676
        %v3693 = vmul.f32 %v3540, %v3677
        %v3694 = vmul.f32 %v3541, %v3678
        %v3695 = vmul.f32 %v3542, %v3679
        %v3696 = vmul.f32 %v3543, %v3680
        %v3697 = vpack.c.bf16 %v3682, %v3681
        %v3698 = vpack.c.bf16 %v3684, %v3683
        %v3699 = vpack.c.bf16 %v3686, %v3685
        %v3700 = vpack.c.bf16 %v3688, %v3687
        %v3701 = vpack.c.bf16 %v3690, %v3689
        %v3702 = vpack.c.bf16 %v3692, %v3691
        %v3703 = vpack.c.bf16 %v3694, %v3693
        %v3704 = vpack.c.bf16 %v3696, %v3695
        %3705 = vmatprep.subr.bf16.mxu0 0
        %3706 = vmatpush1.bf16.msra.mxu0 %v3704
        %3707 = vmatprep.subr.bf16.mxu0 0
        %3708 = vmatpush1.bf16.msra.mxu0 %v3703
        %3709 = vmatprep.subr.bf16.mxu0 0
        %3710 = vmatpush1.bf16.msra.mxu0 %v3702
        %3711 = vmatprep.subr.bf16.mxu0 0
        %3712 = vmatpush1.bf16.msra.mxu0 %v3701
        %3713 = vmatprep.subr.bf16.mxu0 0
        %3714 = vmatpush1.bf16.msra.mxu0 %v3700
        %3715 = vmatprep.subr.bf16.mxu0 0
        %3716 = vmatpush1.bf16.msra.mxu0 %v3699
        %3717 = vmatprep.subr.bf16.mxu0 0
        %3718 = vmatpush1.bf16.msra.mxu0 %v3698
        %3719 = vmatprep.subr.bf16.mxu0 0
        %3720 = vmatpush1.bf16.msra.mxu0 %v3697
        %3721 = vmatprep.subr.bf16.mxu0 0
        %3722 = vmatpush2.bf16.msra.mxu0 0
        %3723 = vmatprep.subr.bf16.mxu0 0
        %3724 = vmatpush2.bf16.msra.mxu0 0
        %3725 = vmatprep.subr.bf16.mxu0 0
        %3726 = vmatpush2.bf16.msra.mxu0 0
        %3727 = vmatprep.subr.bf16.mxu0 0
        %3728 = vmatpush2.bf16.msra.mxu0 0
        %3729 = vmatprep.subr.bf16.mxu0 0
        %3730 = vmatpush2.bf16.msra.mxu0 0
        %3731 = vmatprep.subr.bf16.mxu0 0
        %3732 = vmatpush2.bf16.msra.mxu0 0
        %3733 = vmatprep.subr.bf16.mxu0 0
        %3734 = vmatpush2.bf16.msra.mxu0 0
        %3735 = vmatprep.subr.bf16.mxu0 0
        %3736 = vmatpush2.bf16.msra.mxu0 0
        %3737 = vmatprep.mubr.bf16.mxu0 0
        %3738 = vmatmul.mubr.bf16.gmra.mxu0 %v366
        %v3739 = vpop.f32.mrf.mxu0
        %v3740 = vadd.f32 0.0, %v3739
        %v3741 = vpop.f32.mrf.mxu0
        %v3742 = vpop.f32.mrf.mxu0
        %v3743 = vadd.f32 0.0, %v3742
        %v3744 = vpop.f32.mrf.mxu0
        %3745 = vmatprep.mubr.bf16.mxu0 0
        %3746 = vmatmul.mubr.bf16.gmra.mxu0 %v367
        %v3747 = vpop.f32.mrf.mxu0
        %v3748 = vadd.f32 0.0, %v3747
        %v3749 = vpop.f32.mrf.mxu0
        %v3750 = vpop.f32.mrf.mxu0
        %v3751 = vadd.f32 0.0, %v3750
        %v3752 = vpop.f32.mrf.mxu0
        %3753 = vmatprep.mubr.bf16.mxu0 0
        %3754 = vmatmul.mubr.bf16.gmra.mxu0 %v368
        %v3755 = vpop.f32.mrf.mxu0
        %v3756 = vadd.f32 0.0, %v3755
        %v3757 = vpop.f32.mrf.mxu0
        %v3758 = vpop.f32.mrf.mxu0
        %v3759 = vadd.f32 0.0, %v3758
        %v3760 = vpop.f32.mrf.mxu0
        %3761 = vmatprep.mubr.bf16.mxu0 0
        %3762 = vmatmul.mubr.bf16.gmra.mxu0 %v369
        %v3763 = vpop.f32.mrf.mxu0
        %v3764 = vadd.f32 0.0, %v3763
        %v3765 = vpop.f32.mrf.mxu0
        %v3766 = vpop.f32.mrf.mxu0
        %v3767 = vadd.f32 0.0, %v3766
        %v3768 = vpop.f32.mrf.mxu0
        %3769 = vmatprep.mubr.bf16.mxu0 0
        %3770 = vmatmul.mubr.bf16.gmra.mxu0 %v370
        %v3771 = vpop.f32.mrf.mxu0
        %v3772 = vadd.f32 0.0, %v3771
        %v3773 = vpop.f32.mrf.mxu0
        %v3774 = vpop.f32.mrf.mxu0
        %v3775 = vadd.f32 0.0, %v3774
        %v3776 = vpop.f32.mrf.mxu0
        %3777 = vmatprep.mubr.bf16.mxu0 0
        %3778 = vmatmul.mubr.bf16.gmra.mxu0 %v371
        %v3779 = vpop.f32.mrf.mxu0
        %v3780 = vadd.f32 0.0, %v3779
        %v3781 = vpop.f32.mrf.mxu0
        %v3782 = vpop.f32.mrf.mxu0
        %v3783 = vadd.f32 0.0, %v3782
        %v3784 = vpop.f32.mrf.mxu0
        %3785 = vmatprep.mubr.bf16.mxu0 0
        %3786 = vmatmul.mubr.bf16.gmra.mxu0 %v372
        %v3787 = vpop.f32.mrf.mxu0
        %v3788 = vadd.f32 0.0, %v3787
        %v3789 = vpop.f32.mrf.mxu0
        %v3790 = vpop.f32.mrf.mxu0
        %v3791 = vadd.f32 0.0, %v3790
        %v3792 = vpop.f32.mrf.mxu0
        %3793 = vmatprep.mubr.bf16.mxu0 0
        %3794 = vmatmul.mubr.bf16.gmra.mxu0 %v373
        %v3795 = vpop.f32.mrf.mxu0
        %v3796 = vadd.f32 0.0, %v3795
        %v3797 = vpop.f32.mrf.mxu0
        %v3798 = vpop.f32.mrf.mxu0
        %v3799 = vadd.f32 0.0, %v3798
        %v3800 = vpop.f32.mrf.mxu0
        %3801 = vmatprep.mubr.bf16.mxu0 0
        %3802 = vmatmul.mubr.bf16.gmra.mxu0 %v374
        %v3803 = vpop.f32.mrf.mxu0
        %v3804 = vadd.f32 0.0, %v3803
        %v3805 = vpop.f32.mrf.mxu0
        %v3806 = vpop.f32.mrf.mxu0
        %v3807 = vadd.f32 0.0, %v3806
        %v3808 = vpop.f32.mrf.mxu0
        %3809 = vmatprep.mubr.bf16.mxu0 0
        %3810 = vmatmul.mubr.bf16.gmra.mxu0 %v375
        %v3811 = vpop.f32.mrf.mxu0
        %v3812 = vadd.f32 0.0, %v3811
        %v3813 = vpop.f32.mrf.mxu0
        %v3814 = vpop.f32.mrf.mxu0
        %v3815 = vadd.f32 0.0, %v3814
        %v3816 = vpop.f32.mrf.mxu0
        %3817 = vmatprep.mubr.bf16.mxu0 0
        %3818 = vmatmul.mubr.bf16.gmra.mxu0 %v376
        %v3819 = vpop.f32.mrf.mxu0
        %v3820 = vadd.f32 0.0, %v3819
        %v3821 = vpop.f32.mrf.mxu0
        %v3822 = vpop.f32.mrf.mxu0
        %v3823 = vadd.f32 0.0, %v3822
        %v3824 = vpop.f32.mrf.mxu0
        %3825 = vmatprep.mubr.bf16.mxu0 0
        %3826 = vmatmul.mubr.bf16.gmra.mxu0 %v377
        %v3827 = vpop.f32.mrf.mxu0
        %v3828 = vadd.f32 0.0, %v3827
        %v3829 = vpop.f32.mrf.mxu0
        %v3830 = vpop.f32.mrf.mxu0
        %v3831 = vadd.f32 0.0, %v3830
        %v3832 = vpop.f32.mrf.mxu0
        %3833 = vmatprep.mubr.bf16.mxu0 0
        %3834 = vmatmul.mubr.bf16.gmra.mxu0 %v378
        %v3835 = vpop.f32.mrf.mxu0
        %v3836 = vadd.f32 0.0, %v3835
        %v3837 = vpop.f32.mrf.mxu0
        %v3838 = vpop.f32.mrf.mxu0
        %v3839 = vadd.f32 0.0, %v3838
        %v3840 = vpop.f32.mrf.mxu0
        %3841 = vmatprep.mubr.bf16.mxu0 0
        %3842 = vmatmul.mubr.bf16.gmra.mxu0 %v379
        %v3843 = vpop.f32.mrf.mxu0
        %v3844 = vadd.f32 0.0, %v3843
        %v3845 = vpop.f32.mrf.mxu0
        %v3846 = vpop.f32.mrf.mxu0
        %v3847 = vadd.f32 0.0, %v3846
        %v3848 = vpop.f32.mrf.mxu0
        %3849 = vmatprep.mubr.bf16.mxu0 0
        %3850 = vmatmul.mubr.bf16.gmra.mxu0 %v380
        %v3851 = vpop.f32.mrf.mxu0
        %v3852 = vadd.f32 0.0, %v3851
        %v3853 = vpop.f32.mrf.mxu0
        %v3854 = vpop.f32.mrf.mxu0
        %v3855 = vadd.f32 0.0, %v3854
        %v3856 = vpop.f32.mrf.mxu0
        %3857 = vmatprep.mubr.bf16.mxu0 0
        %3858 = vmatmul.mubr.bf16.gmra.mxu0 %v381
        %v3859 = vpop.f32.mrf.mxu0
        %v3860 = vadd.f32 0.0, %v3859
        %v3861 = vpop.f32.mrf.mxu0
        %v3862 = vpop.f32.mrf.mxu0
        %v3863 = vadd.f32 0.0, %v3862
        %v3864 = vpop.f32.mrf.mxu0
        %3865 = vdwg.mxu0
        %3866 = vxpose.xlu0.c.b16.start [1/8] %v3697, 128
        %3867 = vxpose.xlu0.c.b16.cont [2/8] %v3698, 128
        %3868 = vxpose.xlu0.c.b16.cont [3/8] %v3699, 128
        %3869 = vxpose.xlu0.c.b16.cont [4/8] %v3700, 128
        %3870 = vxpose.xlu0.c.b16.cont [5/8] %v3701, 128
        %3871 = vxpose.xlu0.c.b16.cont [6/8] %v3702, 128
        %3872 = vxpose.xlu0.c.b16.cont [7/8] %v3703, 128
        %3873 = vxpose.xlu0.c.b16.end [8/8] %v3704, 128
        %v3874 = vpop.trf.xlu0
        %v3875 = vpop.trf.xlu0
        %v3876 = vpop.trf.xlu0
        %v3877 = vpop.trf.xlu0
        %v3878 = vpop.trf.xlu0
        %v3879 = vpop.trf.xlu0
        %v3880 = vpop.trf.xlu0
        %v3881 = vpop.trf.xlu0
        %3882 = vmatprep.subr.bf16.mxu0 0
        %3883 = vmatpush1.bf16.msra.mxu0 %v3704
        %3884 = vmatprep.subr.bf16.mxu0 0
        %3885 = vmatpush1.bf16.msra.mxu0 %v3703
        %3886 = vmatprep.subr.bf16.mxu0 0
        %3887 = vmatpush1.bf16.msra.mxu0 %v3702
        %3888 = vmatprep.subr.bf16.mxu0 0
        %3889 = vmatpush1.bf16.msra.mxu0 %v3701
        %3890 = vmatprep.subr.bf16.mxu0 0
        %3891 = vmatpush1.bf16.msra.mxu0 %v3700
        %3892 = vmatprep.subr.bf16.mxu0 0
        %3893 = vmatpush1.bf16.msra.mxu0 %v3699
        %3894 = vmatprep.subr.bf16.mxu0 0
        %3895 = vmatpush1.bf16.msra.mxu0 %v3698
        %3896 = vmatprep.subr.bf16.mxu0 0
        %3897 = vmatpush1.bf16.msra.mxu0 %v3697
        %3898 = vmatprep.subr.bf16.mxu0 0
        %3899 = vmatpush2.bf16.msra.mxu0 0
        %3900 = vmatprep.subr.bf16.mxu0 0
        %3901 = vmatpush2.bf16.msra.mxu0 0
        %3902 = vmatprep.subr.bf16.mxu0 0
        %3903 = vmatpush2.bf16.msra.mxu0 0
        %3904 = vmatprep.subr.bf16.mxu0 0
        %3905 = vmatpush2.bf16.msra.mxu0 0
        %3906 = vmatprep.subr.bf16.mxu0 0
        %3907 = vmatpush2.bf16.msra.mxu0 0
        %3908 = vmatprep.subr.bf16.mxu0 0
        %3909 = vmatpush2.bf16.msra.mxu0 0
        %3910 = vmatprep.subr.bf16.mxu0 0
        %3911 = vmatpush2.bf16.msra.mxu0 0
        %3912 = vmatprep.subr.bf16.mxu0 0
        %3913 = vmatpush2.bf16.msra.mxu0 0
        %3914 = vmatprep.mubr.bf16.mxu0 0
        %3915 = vmatmul.mubr.bf16.gmra.mxu0 %v3874
        %v3916 = vpop.f32.mrf.mxu0
        %v3917 = vadd.f32 0.0, %v3916
        %v3918 = vpop.f32.mrf.mxu0
        %v3919 = vpop.f32.mrf.mxu0
        %v3920 = vadd.f32 0.0, %v3919
        %v3921 = vpop.f32.mrf.mxu0
        %3922 = vmatprep.mubr.bf16.mxu0 0
        %3923 = vmatmul.mubr.bf16.gmra.mxu0 %v3875
        %v3924 = vpop.f32.mrf.mxu0
        %v3925 = vadd.f32 0.0, %v3924
        %v3926 = vpop.f32.mrf.mxu0
        %v3927 = vpop.f32.mrf.mxu0
        %v3928 = vadd.f32 0.0, %v3927
        %v3929 = vpop.f32.mrf.mxu0
        %3930 = vmatprep.mubr.bf16.mxu0 0
        %3931 = vmatmul.mubr.bf16.gmra.mxu0 %v3876
        %v3932 = vpop.f32.mrf.mxu0
        %v3933 = vadd.f32 0.0, %v3932
        %v3934 = vpop.f32.mrf.mxu0
        %v3935 = vpop.f32.mrf.mxu0
        %v3936 = vadd.f32 0.0, %v3935
        %v3937 = vpop.f32.mrf.mxu0
        %3938 = vmatprep.mubr.bf16.mxu0 0
        %3939 = vmatmul.mubr.bf16.gmra.mxu0 %v3877
        %v3940 = vpop.f32.mrf.mxu0
        %v3941 = vadd.f32 0.0, %v3940
        %v3942 = vpop.f32.mrf.mxu0
        %v3943 = vpop.f32.mrf.mxu0
        %v3944 = vadd.f32 0.0, %v3943
        %v3945 = vpop.f32.mrf.mxu0
        %3946 = vdwg.mxu0
        %v3947 = vpack.c.bf16 %v3920, %v3917
        %v3948 = vpack.c.bf16 %v3928, %v3925
        %v3949 = vpack.c.bf16 %v3936, %v3933
        %v3950 = vpack.c.bf16 %v3944, %v3941
        %v3951 = vmul.f32 %v3282, %v3740
        %v3952 = vmul.f32 %v3283, %v3743
        %v3953 = vmul.f32 %v3284, %v3748
        %v3954 = vmul.f32 %v3285, %v3751
        %v3955 = vmul.f32 %v3286, %v3756
        %v3956 = vmul.f32 %v3287, %v3759
        %v3957 = vmul.f32 %v3288, %v3764
        %v3958 = vmul.f32 %v3289, %v3767
        %v3959 = vmul.f32 %v3290, %v3772
        %v3960 = vmul.f32 %v3291, %v3775
        %v3961 = vmul.f32 %v3292, %v3780
        %v3962 = vmul.f32 %v3293, %v3783
        %v3963 = vmul.f32 %v3294, %v3788
        %v3964 = vmul.f32 %v3295, %v3791
        %v3965 = vmul.f32 %v3296, %v3796
        %v3966 = vmul.f32 %v3297, %v3799
        %v3967 = vmul.f32 %v3298, %v3804
        %v3968 = vmul.f32 %v3299, %v3807
        %v3969 = vmul.f32 %v3300, %v3812
        %v3970 = vmul.f32 %v3301, %v3815
        %v3971 = vmul.f32 %v3302, %v3820
        %v3972 = vmul.f32 %v3303, %v3823
        %v3973 = vmul.f32 %v3304, %v3828
        %v3974 = vmul.f32 %v3305, %v3831
        %v3975 = vmul.f32 %v3306, %v3836
        %v3976 = vmul.f32 %v3307, %v3839
        %v3977 = vmul.f32 %v3308, %v3844
        %v3978 = vmul.f32 %v3309, %v3847
        %v3979 = vmul.f32 %v3310, %v3852
        %v3980 = vmul.f32 %v3311, %v3855
        %v3981 = vmul.f32 %v3312, %v3860
        %v3982 = vmul.f32 %v3313, %v3863
        %v3984 = vsel %vm559, %v3314, 0
        %v3987 = vsel %vm559, %v3315, 0
        %v3990 = vsel %vm559, %v3316, 0
        %v3993 = vsel %vm559, %v3317, 0
        %v3996 = vsel %vm559, %v3318, 0
        %v3999 = vsel %vm559, %v3319, 0
        %v4002 = vsel %vm559, %v3320, 0
        %v4005 = vsel %vm559, %v3321, 0
        %v4008 = vsel %vm559, %v3322, 0
        %v4011 = vsel %vm559, %v3323, 0
        %v4014 = vsel %vm559, %v3324, 0
        %v4017 = vsel %vm559, %v3325, 0
        %v4020 = vsel %vm559, %v3326, 0
        %v4023 = vsel %vm559, %v3327, 0
        %v4026 = vsel %vm559, %v3328, 0
        %v4029 = vsel %vm559, %v3329, 0
        %4031 = vmatprep.subr.bf16.mxu0 0
        %4032 = vmatpush1.bf16.msra.mxu0 0
        %4033 = vmatprep.subr.bf16.mxu0 0
        %4034 = vmatpush1.bf16.msra.mxu0 0
        %4035 = vmatprep.subr.bf16.mxu0 0
        %4036 = vmatpush1.bf16.msra.mxu0 0
        %4037 = vmatprep.subr.bf16.mxu0 0
        %4038 = vmatpush1.bf16.msra.mxu0 0
        %4039 = vmatprep.subr.bf16.mxu0 0
        %4040 = vmatpush1.bf16.msra.mxu0 %v3950
        %4041 = vmatprep.subr.bf16.mxu0 0
        %4042 = vmatpush1.bf16.msra.mxu0 %v3949
        %4043 = vmatprep.subr.bf16.mxu0 0
        %4044 = vmatpush1.bf16.msra.mxu0 %v3948
        %4045 = vmatprep.subr.bf16.mxu0 0
        %4046 = vmatpush1.bf16.msra.mxu0 %v3947
        %4047 = vmatprep.subr.bf16.mxu0 0
        %4048 = vmatpush2.bf16.msra.mxu0 0
        %4049 = vmatprep.subr.bf16.mxu0 0
        %4050 = vmatpush2.bf16.msra.mxu0 0
        %4051 = vmatprep.subr.bf16.mxu0 0
        %4052 = vmatpush2.bf16.msra.mxu0 0
        %4053 = vmatprep.subr.bf16.mxu0 0
        %4054 = vmatpush2.bf16.msra.mxu0 0
        %4055 = vmatprep.subr.bf16.mxu0 0
        %4056 = vmatpush2.bf16.msra.mxu0 0
        %4057 = vmatprep.subr.bf16.mxu0 0
        %4058 = vmatpush2.bf16.msra.mxu0 0
        %4059 = vmatprep.subr.bf16.mxu0 0
        %4060 = vmatpush2.bf16.msra.mxu0 0
        %4061 = vmatprep.subr.bf16.mxu0 0
        %4062 = vmatpush2.bf16.msra.mxu0 0
        %4063 = vmatprep.mubr.bf16.mxu0 0
        %4064 = vmatmul.mubr.bf16.gmra.mxu0 %v3984
        %v4065 = vpop.f32.mrf.mxu0
        %v4066 = vadd.f32 1e-06, %v4065
        %v4067 = vpop.f32.mrf.mxu0
        %v4068 = vpop.f32.mrf.mxu0
        %v4069 = vadd.f32 1e-06, %v4068
        %v4070 = vpop.f32.mrf.mxu0
        %4071 = vmatprep.mubr.bf16.mxu0 0
        %4072 = vmatmul.mubr.bf16.gmra.mxu0 %v3987
        %v4073 = vpop.f32.mrf.mxu0
        %v4074 = vadd.f32 1e-06, %v4073
        %v4075 = vpop.f32.mrf.mxu0
        %v4076 = vpop.f32.mrf.mxu0
        %v4077 = vadd.f32 1e-06, %v4076
        %v4078 = vpop.f32.mrf.mxu0
        %4079 = vmatprep.mubr.bf16.mxu0 0
        %4080 = vmatmul.mubr.bf16.gmra.mxu0 %v3990
        %v4081 = vpop.f32.mrf.mxu0
        %v4082 = vadd.f32 1e-06, %v4081
        %v4083 = vpop.f32.mrf.mxu0
        %v4084 = vpop.f32.mrf.mxu0
        %v4085 = vadd.f32 1e-06, %v4084
        %v4086 = vpop.f32.mrf.mxu0
        %4087 = vmatprep.mubr.bf16.mxu0 0
        %4088 = vmatmul.mubr.bf16.gmra.mxu0 %v3993
        %v4089 = vpop.f32.mrf.mxu0
        %v4090 = vadd.f32 1e-06, %v4089
        %v4091 = vpop.f32.mrf.mxu0
        %v4092 = vpop.f32.mrf.mxu0
        %v4093 = vadd.f32 1e-06, %v4092
        %v4094 = vpop.f32.mrf.mxu0
        %4095 = vmatprep.mubr.bf16.mxu0 0
        %4096 = vmatmul.mubr.bf16.gmra.mxu0 %v3996
        %v4097 = vpop.f32.mrf.mxu0
        %v4098 = vadd.f32 1e-06, %v4097
        %v4099 = vpop.f32.mrf.mxu0
        %v4100 = vpop.f32.mrf.mxu0
        %v4101 = vadd.f32 1e-06, %v4100
        %v4102 = vpop.f32.mrf.mxu0
        %4103 = vmatprep.mubr.bf16.mxu0 0
        %4104 = vmatmul.mubr.bf16.gmra.mxu0 %v3999
        %v4105 = vpop.f32.mrf.mxu0
        %v4106 = vadd.f32 1e-06, %v4105
        %v4107 = vpop.f32.mrf.mxu0
        %v4108 = vpop.f32.mrf.mxu0
        %v4109 = vadd.f32 1e-06, %v4108
        %v4110 = vpop.f32.mrf.mxu0
        %4111 = vmatprep.mubr.bf16.mxu0 0
        %4112 = vmatmul.mubr.bf16.gmra.mxu0 %v4002
        %v4113 = vpop.f32.mrf.mxu0
        %v4114 = vadd.f32 1e-06, %v4113
        %v4115 = vpop.f32.mrf.mxu0
        %v4116 = vpop.f32.mrf.mxu0
        %v4117 = vadd.f32 1e-06, %v4116
        %v4118 = vpop.f32.mrf.mxu0
        %4119 = vmatprep.mubr.bf16.mxu0 0
        %4120 = vmatmul.mubr.bf16.gmra.mxu0 %v4005
        %v4121 = vpop.f32.mrf.mxu0
        %v4122 = vadd.f32 1e-06, %v4121
        %v4123 = vpop.f32.mrf.mxu0
        %v4124 = vpop.f32.mrf.mxu0
        %v4125 = vadd.f32 1e-06, %v4124
        %v4126 = vpop.f32.mrf.mxu0
        %4127 = vmatprep.mubr.bf16.mxu0 0
        %4128 = vmatmul.mubr.bf16.gmra.mxu0 %v4008
        %v4129 = vpop.f32.mrf.mxu0
        %v4130 = vadd.f32 1e-06, %v4129
        %v4131 = vpop.f32.mrf.mxu0
        %v4132 = vpop.f32.mrf.mxu0
        %v4133 = vadd.f32 1e-06, %v4132
        %v4134 = vpop.f32.mrf.mxu0
        %4135 = vmatprep.mubr.bf16.mxu0 0
        %4136 = vmatmul.mubr.bf16.gmra.mxu0 %v4011
        %v4137 = vpop.f32.mrf.mxu0
        %v4138 = vadd.f32 1e-06, %v4137
        %v4139 = vpop.f32.mrf.mxu0
        %v4140 = vpop.f32.mrf.mxu0
        %v4141 = vadd.f32 1e-06, %v4140
        %v4142 = vpop.f32.mrf.mxu0
        %4143 = vmatprep.mubr.bf16.mxu0 0
        %4144 = vmatmul.mubr.bf16.gmra.mxu0 %v4014
        %v4145 = vpop.f32.mrf.mxu0
        %v4146 = vadd.f32 1e-06, %v4145
        %v4147 = vpop.f32.mrf.mxu0
        %v4148 = vpop.f32.mrf.mxu0
        %v4149 = vadd.f32 1e-06, %v4148
        %v4150 = vpop.f32.mrf.mxu0
        %4151 = vmatprep.mubr.bf16.mxu0 0
        %4152 = vmatmul.mubr.bf16.gmra.mxu0 %v4017
        %v4153 = vpop.f32.mrf.mxu0
        %v4154 = vadd.f32 1e-06, %v4153
        %v4155 = vpop.f32.mrf.mxu0
        %v4156 = vpop.f32.mrf.mxu0
        %v4157 = vadd.f32 1e-06, %v4156
        %v4158 = vpop.f32.mrf.mxu0
        %4159 = vmatprep.mubr.bf16.mxu0 0
        %4160 = vmatmul.mubr.bf16.gmra.mxu0 %v4020
        %v4161 = vpop.f32.mrf.mxu0
        %v4162 = vadd.f32 1e-06, %v4161
        %v4163 = vpop.f32.mrf.mxu0
        %v4164 = vpop.f32.mrf.mxu0
        %v4165 = vadd.f32 1e-06, %v4164
        %v4166 = vpop.f32.mrf.mxu0
        %4167 = vmatprep.mubr.bf16.mxu0 0
        %4168 = vmatmul.mubr.bf16.gmra.mxu0 %v4023
        %v4169 = vpop.f32.mrf.mxu0
        %v4170 = vadd.f32 1e-06, %v4169
        %v4171 = vpop.f32.mrf.mxu0
        %v4172 = vpop.f32.mrf.mxu0
        %v4173 = vadd.f32 1e-06, %v4172
        %v4174 = vpop.f32.mrf.mxu0
        %4175 = vmatprep.mubr.bf16.mxu0 0
        %4176 = vmatmul.mubr.bf16.gmra.mxu0 %v4026
        %v4177 = vpop.f32.mrf.mxu0
        %v4178 = vadd.f32 1e-06, %v4177
        %v4179 = vpop.f32.mrf.mxu0
        %v4180 = vpop.f32.mrf.mxu0
        %v4181 = vadd.f32 1e-06, %v4180
        %v4182 = vpop.f32.mrf.mxu0
        %4183 = vmatprep.mubr.bf16.mxu0 0
        %4184 = vmatmul.mubr.bf16.gmra.mxu0 %v4029
        %v4185 = vpop.f32.mrf.mxu0
        %v4186 = vadd.f32 1e-06, %v4185
        %v4187 = vpop.f32.mrf.mxu0
        %v4188 = vpop.f32.mrf.mxu0
        %v4189 = vadd.f32 1e-06, %v4188
        %v4190 = vpop.f32.mrf.mxu0
        %4191 = vdwg.mxu0
        %v4192 = vrcp.pop %v4066
        %v4193 = vrcp.pop %v4069
        %v4194 = vrcp.pop %v4074
        %v4195 = vrcp.pop %v4077
        %v4196 = vrcp.pop %v4082
        %v4197 = vrcp.pop %v4085
        %v4198 = vrcp.pop %v4090
        %v4199 = vrcp.pop %v4093
        %v4200 = vrcp.pop %v4098
        %v4201 = vrcp.pop %v4101
        %v4202 = vrcp.pop %v4106
        %v4203 = vrcp.pop %v4109
        %v4204 = vrcp.pop %v4114
        %v4205 = vrcp.pop %v4117
        %v4206 = vrcp.pop %v4122
        %v4207 = vrcp.pop %v4125
        %v4208 = vrcp.pop %v4130
        %v4209 = vrcp.pop %v4133
        %v4210 = vrcp.pop %v4138
        %v4211 = vrcp.pop %v4141
        %v4212 = vrcp.pop %v4146
        %v4213 = vrcp.pop %v4149
        %v4214 = vrcp.pop %v4154
        %v4215 = vrcp.pop %v4157
        %v4216 = vrcp.pop %v4162
        %v4217 = vrcp.pop %v4165
        %v4218 = vrcp.pop %v4170
        %v4219 = vrcp.pop %v4173
        %v4220 = vrcp.pop %v4178
        %v4221 = vrcp.pop %v4181
        %v4222 = vrcp.pop %v4186
        %v4223 = vrcp.pop %v4189
        %v4224 = vmul.f32 %v3951, %v4192
        %v4225 = vmul.f32 %v3952, %v4193
        %v4226 = vmul.f32 %v3953, %v4194
        %v4227 = vmul.f32 %v3954, %v4195
        %v4228 = vmul.f32 %v3955, %v4196
        %v4229 = vmul.f32 %v3956, %v4197
        %v4230 = vmul.f32 %v3957, %v4198
        %v4231 = vmul.f32 %v3958, %v4199
        %v4232 = vmul.f32 %v3959, %v4200
        %v4233 = vmul.f32 %v3960, %v4201
        %v4234 = vmul.f32 %v3961, %v4202
        %v4235 = vmul.f32 %v3962, %v4203
        %v4236 = vmul.f32 %v3963, %v4204
        %v4237 = vmul.f32 %v3964, %v4205
        %v4238 = vmul.f32 %v3965, %v4206
        %v4239 = vmul.f32 %v3966, %v4207
        %v4240 = vmul.f32 %v3967, %v4208
        %v4241 = vmul.f32 %v3968, %v4209
        %v4242 = vmul.f32 %v3969, %v4210
        %v4243 = vmul.f32 %v3970, %v4211
        %v4244 = vmul.f32 %v3971, %v4212
        %v4245 = vmul.f32 %v3972, %v4213
        %v4246 = vmul.f32 %v3973, %v4214
        %v4247 = vmul.f32 %v3974, %v4215
        %v4248 = vmul.f32 %v3975, %v4216
        %v4249 = vmul.f32 %v3976, %v4217
        %v4250 = vmul.f32 %v3977, %v4218
        %v4251 = vmul.f32 %v3978, %v4219
        %v4252 = vmul.f32 %v3979, %v4220
        %v4253 = vmul.f32 %v3980, %v4221
        %v4254 = vmul.f32 %v3981, %v4222
        %v4255 = vmul.f32 %v3982, %v4223
        %v4256 = vpack.c.bf16 %v4225, %v4224
        %v4257 = vpack.c.bf16 %v4227, %v4226
        %v4258 = vpack.c.bf16 %v4229, %v4228
        %v4259 = vpack.c.bf16 %v4231, %v4230
        %v4260 = vpack.c.bf16 %v4233, %v4232
        %v4261 = vpack.c.bf16 %v4235, %v4234
        %v4262 = vpack.c.bf16 %v4237, %v4236
        %v4263 = vpack.c.bf16 %v4239, %v4238
        %v4264 = vpack.c.bf16 %v4241, %v4240
        %v4265 = vpack.c.bf16 %v4243, %v4242
        %v4266 = vpack.c.bf16 %v4245, %v4244
        %v4267 = vpack.c.bf16 %v4247, %v4246
        %v4268 = vpack.c.bf16 %v4249, %v4248
        %v4269 = vpack.c.bf16 %v4251, %v4250
        %v4270 = vpack.c.bf16 %v4253, %v4252
        %v4271 = vpack.c.bf16 %v4255, %v4254
        %4272 = vmatprep.subr.bf16.mxu0 0
        %4273 = vmatpush1.bf16.msra.mxu0 %v4263
        %4274 = vmatprep.subr.bf16.mxu0 0
        %4275 = vmatpush1.bf16.msra.mxu0 %v4262
        %4276 = vmatprep.subr.bf16.mxu0 0
        %4277 = vmatpush1.bf16.msra.mxu0 %v4261
        %4278 = vmatprep.subr.bf16.mxu0 0
        %4279 = vmatpush1.bf16.msra.mxu0 %v4260
        %4280 = vmatprep.subr.bf16.mxu0 0
        %4281 = vmatpush1.bf16.msra.mxu0 %v4259
        %4282 = vmatprep.subr.bf16.mxu0 0
        %4283 = vmatpush1.bf16.msra.mxu0 %v4258
        %4284 = vmatprep.subr.bf16.mxu0 0
        %4285 = vmatpush1.bf16.msra.mxu0 %v4257
        %4286 = vmatprep.subr.bf16.mxu0 0
        %4287 = vmatpush1.bf16.msra.mxu0 %v4256
        %4288 = vmatprep.subr.bf16.mxu0 0
        %4289 = vmatpush2.bf16.msra.mxu0 %v4271
        %4290 = vmatprep.subr.bf16.mxu0 0
        %4291 = vmatpush2.bf16.msra.mxu0 %v4270
        %4292 = vmatprep.subr.bf16.mxu0 0
        %4293 = vmatpush2.bf16.msra.mxu0 %v4269
        %4294 = vmatprep.subr.bf16.mxu0 0
        %4295 = vmatpush2.bf16.msra.mxu0 %v4268
        %4296 = vmatprep.subr.bf16.mxu0 0
        %4297 = vmatpush2.bf16.msra.mxu0 %v4267
        %4298 = vmatprep.subr.bf16.mxu0 0
        %4299 = vmatpush2.bf16.msra.mxu0 %v4266
        %4300 = vmatprep.subr.bf16.mxu0 0
        %4301 = vmatpush2.bf16.msra.mxu0 %v4265
        %4302 = vmatprep.subr.bf16.mxu0 0
        %4303 = vmatpush2.bf16.msra.mxu0 %v4264
        %4304 = vmatprep.mubr.bf16.mxu0 %v1415
        %4305 = vmatmul.mubr.bf16.gmra.mxu0 %v1414
        %v4306 = vpop.f32.mrf.mxu0
        %v4307 = vadd.f32 0.0, %v4306
        %v4308 = vpop.f32.mrf.mxu0
        %v4309 = vpop.f32.mrf.mxu0
        %v4310 = vadd.f32 0.0, %v4309
        %v4311 = vpop.f32.mrf.mxu0
        %4312 = vmatprep.mubr.bf16.mxu0 %v1417
        %4313 = vmatmul.mubr.bf16.gmra.mxu0 %v1416
        %v4314 = vpop.f32.mrf.mxu0
        %v4315 = vadd.f32 0.0, %v4314
        %v4316 = vpop.f32.mrf.mxu0
        %v4317 = vpop.f32.mrf.mxu0
        %v4318 = vadd.f32 0.0, %v4317
        %v4319 = vpop.f32.mrf.mxu0
        %4320 = vmatprep.mubr.bf16.mxu0 %v1419
        %4321 = vmatmul.mubr.bf16.gmra.mxu0 %v1418
        %v4322 = vpop.f32.mrf.mxu0
        %v4323 = vadd.f32 0.0, %v4322
        %v4324 = vpop.f32.mrf.mxu0
        %v4325 = vpop.f32.mrf.mxu0
        %v4326 = vadd.f32 0.0, %v4325
        %v4327 = vpop.f32.mrf.mxu0
        %4328 = vmatprep.mubr.bf16.mxu0 %v1421
        %4329 = vmatmul.mubr.bf16.gmra.mxu0 %v1420
        %v4330 = vpop.f32.mrf.mxu0
        %v4331 = vadd.f32 0.0, %v4330
        %v4332 = vpop.f32.mrf.mxu0
        %v4333 = vpop.f32.mrf.mxu0
        %v4334 = vadd.f32 0.0, %v4333
        %v4335 = vpop.f32.mrf.mxu0
        %4336 = vmatprep.mubr.bf16.mxu0 %v1423
        %4337 = vmatmul.mubr.bf16.gmra.mxu0 %v1422
        %v4338 = vpop.f32.mrf.mxu0
        %v4339 = vadd.f32 0.0, %v4338
        %v4340 = vpop.f32.mrf.mxu0
        %v4341 = vpop.f32.mrf.mxu0
        %v4342 = vadd.f32 0.0, %v4341
        %v4343 = vpop.f32.mrf.mxu0
        %4344 = vmatprep.mubr.bf16.mxu0 %v1425
        %4345 = vmatmul.mubr.bf16.gmra.mxu0 %v1424
        %v4346 = vpop.f32.mrf.mxu0
        %v4347 = vadd.f32 0.0, %v4346
        %v4348 = vpop.f32.mrf.mxu0
        %v4349 = vpop.f32.mrf.mxu0
        %v4350 = vadd.f32 0.0, %v4349
        %v4351 = vpop.f32.mrf.mxu0
        %4352 = vmatprep.mubr.bf16.mxu0 %v1427
        %4353 = vmatmul.mubr.bf16.gmra.mxu0 %v1426
        %v4354 = vpop.f32.mrf.mxu0
        %v4355 = vadd.f32 0.0, %v4354
        %v4356 = vpop.f32.mrf.mxu0
        %v4357 = vpop.f32.mrf.mxu0
        %v4358 = vadd.f32 0.0, %v4357
        %v4359 = vpop.f32.mrf.mxu0
        %4360 = vmatprep.mubr.bf16.mxu0 %v1429
        %4361 = vmatmul.mubr.bf16.gmra.mxu0 %v1428
        %v4362 = vpop.f32.mrf.mxu0
        %v4363 = vadd.f32 0.0, %v4362
        %v4364 = vpop.f32.mrf.mxu0
        %v4365 = vpop.f32.mrf.mxu0
        %v4366 = vadd.f32 0.0, %v4365
        %v4367 = vpop.f32.mrf.mxu0
        %4368 = vdwg.mxu0
        %4369 = vxpose.xlu0.c.b16.start [1/8] %v4256, 128
        %4370 = vxpose.xlu0.c.b16.cont [2/8] %v4257, 128
        %4371 = vxpose.xlu0.c.b16.cont [3/8] %v4258, 128
        %4372 = vxpose.xlu0.c.b16.cont [4/8] %v4259, 128
        %4373 = vxpose.xlu0.c.b16.cont [5/8] %v4260, 128
        %4374 = vxpose.xlu0.c.b16.cont [6/8] %v4261, 128
        %4375 = vxpose.xlu0.c.b16.cont [7/8] %v4262, 128
        %4376 = vxpose.xlu0.c.b16.end [8/8] %v4263, 128
        %v4377 = vpop.trf.xlu0
        %v4378 = vpop.trf.xlu0
        %v4379 = vpop.trf.xlu0
        %v4380 = vpop.trf.xlu0
        %v4381 = vpop.trf.xlu0
        %v4382 = vpop.trf.xlu0
        %v4383 = vpop.trf.xlu0
        %v4384 = vpop.trf.xlu0
        %4385 = vxpose.xlu0.c.b16.start [1/8] %v4264, 128
        %4386 = vxpose.xlu0.c.b16.cont [2/8] %v4265, 128
        %4387 = vxpose.xlu0.c.b16.cont [3/8] %v4266, 128
        %4388 = vxpose.xlu0.c.b16.cont [4/8] %v4267, 128
        %4389 = vxpose.xlu0.c.b16.cont [5/8] %v4268, 128
        %4390 = vxpose.xlu0.c.b16.cont [6/8] %v4269, 128
        %4391 = vxpose.xlu0.c.b16.cont [7/8] %v4270, 128
        %4392 = vxpose.xlu0.c.b16.end [8/8] %v4271, 128
        %v4393 = vpop.trf.xlu0
        %v4394 = vpop.trf.xlu0
        %v4395 = vpop.trf.xlu0
        %v4396 = vpop.trf.xlu0
        %v4397 = vpop.trf.xlu0
        %v4398 = vpop.trf.xlu0
        %v4399 = vpop.trf.xlu0
        %v4400 = vpop.trf.xlu0
        %4401 = vmatprep.subr.bf16.mxu0 0
        %4402 = vmatpush1.bf16.msra.mxu0 %v4263
        %4403 = vmatprep.subr.bf16.mxu0 0
        %4404 = vmatpush1.bf16.msra.mxu0 %v4262
        %4405 = vmatprep.subr.bf16.mxu0 0
        %4406 = vmatpush1.bf16.msra.mxu0 %v4261
        %4407 = vmatprep.subr.bf16.mxu0 0
        %4408 = vmatpush1.bf16.msra.mxu0 %v4260
        %4409 = vmatprep.subr.bf16.mxu0 0
        %4410 = vmatpush1.bf16.msra.mxu0 %v4259
        %4411 = vmatprep.subr.bf16.mxu0 0
        %4412 = vmatpush1.bf16.msra.mxu0 %v4258
        %4413 = vmatprep.subr.bf16.mxu0 0
        %4414 = vmatpush1.bf16.msra.mxu0 %v4257
        %4415 = vmatprep.subr.bf16.mxu0 0
        %4416 = vmatpush1.bf16.msra.mxu0 %v4256
        %4417 = vmatprep.subr.bf16.mxu0 0
        %4418 = vmatpush2.bf16.msra.mxu0 %v4271
        %4419 = vmatprep.subr.bf16.mxu0 0
        %4420 = vmatpush2.bf16.msra.mxu0 %v4270
        %4421 = vmatprep.subr.bf16.mxu0 0
        %4422 = vmatpush2.bf16.msra.mxu0 %v4269
        %4423 = vmatprep.subr.bf16.mxu0 0
        %4424 = vmatpush2.bf16.msra.mxu0 %v4268
        %4425 = vmatprep.subr.bf16.mxu0 0
        %4426 = vmatpush2.bf16.msra.mxu0 %v4267
        %4427 = vmatprep.subr.bf16.mxu0 0
        %4428 = vmatpush2.bf16.msra.mxu0 %v4266
        %4429 = vmatprep.subr.bf16.mxu0 0
        %4430 = vmatpush2.bf16.msra.mxu0 %v4265
        %4431 = vmatprep.subr.bf16.mxu0 0
        %4432 = vmatpush2.bf16.msra.mxu0 %v4264
        %4433 = vmatprep.mubr.bf16.mxu0 %v4393
        %4434 = vmatmul.mubr.bf16.gmra.mxu0 %v4377
        %v4435 = vpop.f32.mrf.mxu0
        %v4436 = vadd.f32 0.0, %v4435
        %v4437 = vpop.f32.mrf.mxu0
        %v4438 = vpop.f32.mrf.mxu0
        %v4439 = vadd.f32 0.0, %v4438
        %v4440 = vpop.f32.mrf.mxu0
        %4441 = vmatprep.mubr.bf16.mxu0 %v4394
        %4442 = vmatmul.mubr.bf16.gmra.mxu0 %v4378
        %v4443 = vpop.f32.mrf.mxu0
        %v4444 = vadd.f32 0.0, %v4443
        %v4445 = vpop.f32.mrf.mxu0
        %v4446 = vpop.f32.mrf.mxu0
        %v4447 = vadd.f32 0.0, %v4446
        %v4448 = vpop.f32.mrf.mxu0
        %4449 = vmatprep.mubr.bf16.mxu0 %v4395
        %4450 = vmatmul.mubr.bf16.gmra.mxu0 %v4379
        %v4451 = vpop.f32.mrf.mxu0
        %v4452 = vadd.f32 0.0, %v4451
        %v4453 = vpop.f32.mrf.mxu0
        %v4454 = vpop.f32.mrf.mxu0
        %v4455 = vadd.f32 0.0, %v4454
        %v4456 = vpop.f32.mrf.mxu0
        %4457 = vmatprep.mubr.bf16.mxu0 %v4396
        %4458 = vmatmul.mubr.bf16.gmra.mxu0 %v4380
        %v4459 = vpop.f32.mrf.mxu0
        %v4460 = vadd.f32 0.0, %v4459
        %v4461 = vpop.f32.mrf.mxu0
        %v4462 = vpop.f32.mrf.mxu0
        %v4463 = vadd.f32 0.0, %v4462
        %v4464 = vpop.f32.mrf.mxu0
        %4465 = vdwg.mxu0
        %v4466 = vpack.c.bf16 %v4439, %v4436
        %v4467 = vpack.c.bf16 %v4447, %v4444
        %v4468 = vpack.c.bf16 %v4455, %v4452
        %v4469 = vpack.c.bf16 %v4463, %v4460
        %v4470 = vmul.f32 %v3681, %v4307
        %v4471 = vmul.f32 %v3682, %v4310
        %v4472 = vmul.f32 %v3683, %v4315
        %v4473 = vmul.f32 %v3684, %v4318
        %v4474 = vmul.f32 %v3685, %v4323
        %v4475 = vmul.f32 %v3686, %v4326
        %v4476 = vmul.f32 %v3687, %v4331
        %v4477 = vmul.f32 %v3688, %v4334
        %v4478 = vmul.f32 %v3689, %v4339
        %v4479 = vmul.f32 %v3690, %v4342
        %v4480 = vmul.f32 %v3691, %v4347
        %v4481 = vmul.f32 %v3692, %v4350
        %v4482 = vmul.f32 %v3693, %v4355
        %v4483 = vmul.f32 %v3694, %v4358
        %v4484 = vmul.f32 %v3695, %v4363
        %v4485 = vmul.f32 %v3696, %v4366
        %v4487 = vsel %vm559, %v3697, 0
        %v4490 = vsel %vm559, %v3698, 0
        %v4493 = vsel %vm559, %v3699, 0
        %v4496 = vsel %vm559, %v3700, 0
        %v4499 = vsel %vm559, %v3701, 0
        %v4502 = vsel %vm559, %v3702, 0
        %v4505 = vsel %vm559, %v3703, 0
        %v4508 = vsel %vm559, %v3704, 0
        %4510 = vmatprep.subr.bf16.mxu0 0
        %4511 = vmatpush1.bf16.msra.mxu0 0
        %4512 = vmatprep.subr.bf16.mxu0 0
        %4513 = vmatpush1.bf16.msra.mxu0 0
        %4514 = vmatprep.subr.bf16.mxu0 0
        %4515 = vmatpush1.bf16.msra.mxu0 0
        %4516 = vmatprep.subr.bf16.mxu0 0
        %4517 = vmatpush1.bf16.msra.mxu0 0
        %4518 = vmatprep.subr.bf16.mxu0 0
        %4519 = vmatpush1.bf16.msra.mxu0 %v4469
        %4520 = vmatprep.subr.bf16.mxu0 0
        %4521 = vmatpush1.bf16.msra.mxu0 %v4468
        %4522 = vmatprep.subr.bf16.mxu0 0
        %4523 = vmatpush1.bf16.msra.mxu0 %v4467
        %4524 = vmatprep.subr.bf16.mxu0 0
        %4525 = vmatpush1.bf16.msra.mxu0 %v4466
        %4526 = vmatprep.subr.bf16.mxu0 0
        %4527 = vmatpush2.bf16.msra.mxu0 0
        %4528 = vmatprep.subr.bf16.mxu0 0
        %4529 = vmatpush2.bf16.msra.mxu0 0
        %4530 = vmatprep.subr.bf16.mxu0 0
        %4531 = vmatpush2.bf16.msra.mxu0 0
        %4532 = vmatprep.subr.bf16.mxu0 0
        %4533 = vmatpush2.bf16.msra.mxu0 0
        %4534 = vmatprep.subr.bf16.mxu0 0
        %4535 = vmatpush2.bf16.msra.mxu0 0
        %4536 = vmatprep.subr.bf16.mxu0 0
        %4537 = vmatpush2.bf16.msra.mxu0 0
        %4538 = vmatprep.subr.bf16.mxu0 0
        %4539 = vmatpush2.bf16.msra.mxu0 0
        %4540 = vmatprep.subr.bf16.mxu0 0
        %4541 = vmatpush2.bf16.msra.mxu0 0
        %4542 = vmatprep.mubr.bf16.mxu0 0
        %4543 = vmatmul.mubr.bf16.gmra.mxu0 %v4487
        %v4544 = vpop.f32.mrf.mxu0
        %v4545 = vadd.f32 1e-06, %v4544
        %v4546 = vpop.f32.mrf.mxu0
        %v4547 = vpop.f32.mrf.mxu0
        %v4548 = vadd.f32 1e-06, %v4547
        %v4549 = vpop.f32.mrf.mxu0
        %4550 = vmatprep.mubr.bf16.mxu0 0
        %4551 = vmatmul.mubr.bf16.gmra.mxu0 %v4490
        %v4552 = vpop.f32.mrf.mxu0
        %v4553 = vadd.f32 1e-06, %v4552
        %v4554 = vpop.f32.mrf.mxu0
        %v4555 = vpop.f32.mrf.mxu0
        %v4556 = vadd.f32 1e-06, %v4555
        %v4557 = vpop.f32.mrf.mxu0
        %4558 = vmatprep.mubr.bf16.mxu0 0
        %4559 = vmatmul.mubr.bf16.gmra.mxu0 %v4493
        %v4560 = vpop.f32.mrf.mxu0
        %v4561 = vadd.f32 1e-06, %v4560
        %v4562 = vpop.f32.mrf.mxu0
        %v4563 = vpop.f32.mrf.mxu0
        %v4564 = vadd.f32 1e-06, %v4563
        %v4565 = vpop.f32.mrf.mxu0
        %4566 = vmatprep.mubr.bf16.mxu0 0
        %4567 = vmatmul.mubr.bf16.gmra.mxu0 %v4496
        %v4568 = vpop.f32.mrf.mxu0
        %v4569 = vadd.f32 1e-06, %v4568
        %v4570 = vpop.f32.mrf.mxu0
        %v4571 = vpop.f32.mrf.mxu0
        %v4572 = vadd.f32 1e-06, %v4571
        %v4573 = vpop.f32.mrf.mxu0
        %4574 = vmatprep.mubr.bf16.mxu0 0
        %4575 = vmatmul.mubr.bf16.gmra.mxu0 %v4499
        %v4576 = vpop.f32.mrf.mxu0
        %v4577 = vadd.f32 1e-06, %v4576
        %v4578 = vpop.f32.mrf.mxu0
        %v4579 = vpop.f32.mrf.mxu0
        %v4580 = vadd.f32 1e-06, %v4579
        %v4581 = vpop.f32.mrf.mxu0
        %4582 = vmatprep.mubr.bf16.mxu0 0
        %4583 = vmatmul.mubr.bf16.gmra.mxu0 %v4502
        %v4584 = vpop.f32.mrf.mxu0
        %v4585 = vadd.f32 1e-06, %v4584
        %v4586 = vpop.f32.mrf.mxu0
        %v4587 = vpop.f32.mrf.mxu0
        %v4588 = vadd.f32 1e-06, %v4587
        %v4589 = vpop.f32.mrf.mxu0
        %4590 = vmatprep.mubr.bf16.mxu0 0
        %4591 = vmatmul.mubr.bf16.gmra.mxu0 %v4505
        %v4592 = vpop.f32.mrf.mxu0
        %v4593 = vadd.f32 1e-06, %v4592
        %v4594 = vpop.f32.mrf.mxu0
        %v4595 = vpop.f32.mrf.mxu0
        %v4596 = vadd.f32 1e-06, %v4595
        %v4597 = vpop.f32.mrf.mxu0
        %4598 = vmatprep.mubr.bf16.mxu0 0
        %4599 = vmatmul.mubr.bf16.gmra.mxu0 %v4508
        %v4600 = vpop.f32.mrf.mxu0
        %v4601 = vadd.f32 1e-06, %v4600
        %v4602 = vpop.f32.mrf.mxu0
        %v4603 = vpop.f32.mrf.mxu0
        %v4604 = vadd.f32 1e-06, %v4603
        %v4605 = vpop.f32.mrf.mxu0
        %4606 = vdwg.mxu0
        %v4607 = vrcp.pop %v4545
        %v4608 = vrcp.pop %v4548
        %v4609 = vrcp.pop %v4553
        %v4610 = vrcp.pop %v4556
        %v4611 = vrcp.pop %v4561
        %v4612 = vrcp.pop %v4564
        %v4613 = vrcp.pop %v4569
        %v4614 = vrcp.pop %v4572
        %v4615 = vrcp.pop %v4577
        %v4616 = vrcp.pop %v4580
        %v4617 = vrcp.pop %v4585
        %v4618 = vrcp.pop %v4588
        %v4619 = vrcp.pop %v4593
        %v4620 = vrcp.pop %v4596
        %v4621 = vrcp.pop %v4601
        %v4622 = vrcp.pop %v4604
        %v4623 = vmul.f32 %v4470, %v4607
        %v4624 = vmul.f32 %v4471, %v4608
        %v4625 = vmul.f32 %v4472, %v4609
        %v4626 = vmul.f32 %v4473, %v4610
        %v4627 = vmul.f32 %v4474, %v4611
        %v4628 = vmul.f32 %v4475, %v4612
        %v4629 = vmul.f32 %v4476, %v4613
        %v4630 = vmul.f32 %v4477, %v4614
        %v4631 = vmul.f32 %v4478, %v4615
        %v4632 = vmul.f32 %v4479, %v4616
        %v4633 = vmul.f32 %v4480, %v4617
        %v4634 = vmul.f32 %v4481, %v4618
        %v4635 = vmul.f32 %v4482, %v4619
        %v4636 = vmul.f32 %v4483, %v4620
        %v4637 = vmul.f32 %v4484, %v4621
        %v4638 = vmul.f32 %v4485, %v4622
        %v4639 = vpack.c.bf16 %v4624, %v4623
        %v4640 = vpack.c.bf16 %v4626, %v4625
        %v4641 = vpack.c.bf16 %v4628, %v4627
        %v4642 = vpack.c.bf16 %v4630, %v4629
        %v4643 = vpack.c.bf16 %v4632, %v4631
        %v4644 = vpack.c.bf16 %v4634, %v4633
        %v4645 = vpack.c.bf16 %v4636, %v4635
        %v4646 = vpack.c.bf16 %v4638, %v4637
        %4647 = vmatprep.subr.bf16.mxu0 0
        %4648 = vmatpush1.bf16.msra.mxu0 %v4646
        %4649 = vmatprep.subr.bf16.mxu0 0
        %4650 = vmatpush1.bf16.msra.mxu0 %v4645
        %4651 = vmatprep.subr.bf16.mxu0 0
        %4652 = vmatpush1.bf16.msra.mxu0 %v4644
        %4653 = vmatprep.subr.bf16.mxu0 0
        %4654 = vmatpush1.bf16.msra.mxu0 %v4643
        %4655 = vmatprep.subr.bf16.mxu0 0
        %4656 = vmatpush1.bf16.msra.mxu0 %v4642
        %4657 = vmatprep.subr.bf16.mxu0 0
        %4658 = vmatpush1.bf16.msra.mxu0 %v4641
        %4659 = vmatprep.subr.bf16.mxu0 0
        %4660 = vmatpush1.bf16.msra.mxu0 %v4640
        %4661 = vmatprep.subr.bf16.mxu0 0
        %4662 = vmatpush1.bf16.msra.mxu0 %v4639
        %4663 = vmatprep.subr.bf16.mxu0 0
        %4664 = vmatpush2.bf16.msra.mxu0 0
        %4665 = vmatprep.subr.bf16.mxu0 0
        %4666 = vmatpush2.bf16.msra.mxu0 0
        %4667 = vmatprep.subr.bf16.mxu0 0
        %4668 = vmatpush2.bf16.msra.mxu0 0
        %4669 = vmatprep.subr.bf16.mxu0 0
        %4670 = vmatpush2.bf16.msra.mxu0 0
        %4671 = vmatprep.subr.bf16.mxu0 0
        %4672 = vmatpush2.bf16.msra.mxu0 0
        %4673 = vmatprep.subr.bf16.mxu0 0
        %4674 = vmatpush2.bf16.msra.mxu0 0
        %4675 = vmatprep.subr.bf16.mxu0 0
        %4676 = vmatpush2.bf16.msra.mxu0 0
        %4677 = vmatprep.subr.bf16.mxu0 0
        %4678 = vmatpush2.bf16.msra.mxu0 0
        %4679 = vmatprep.mubr.bf16.mxu0 0
        %4680 = vmatmul.mubr.bf16.gmra.mxu0 %v366
        %v4681 = vpop.f32.mrf.mxu0
        %v4682 = vadd.f32 0.0, %v4681
        %v4683 = vpop.f32.mrf.mxu0
        %v4684 = vpop.f32.mrf.mxu0
        %v4685 = vadd.f32 0.0, %v4684
        %v4686 = vpop.f32.mrf.mxu0
        %4687 = vmatprep.mubr.bf16.mxu0 0
        %4688 = vmatmul.mubr.bf16.gmra.mxu0 %v367
        %v4689 = vpop.f32.mrf.mxu0
        %v4690 = vadd.f32 0.0, %v4689
        %v4691 = vpop.f32.mrf.mxu0
        %v4692 = vpop.f32.mrf.mxu0
        %v4693 = vadd.f32 0.0, %v4692
        %v4694 = vpop.f32.mrf.mxu0
        %4695 = vmatprep.mubr.bf16.mxu0 0
        %4696 = vmatmul.mubr.bf16.gmra.mxu0 %v368
        %v4697 = vpop.f32.mrf.mxu0
        %v4698 = vadd.f32 0.0, %v4697
        %v4699 = vpop.f32.mrf.mxu0
        %v4700 = vpop.f32.mrf.mxu0
        %v4701 = vadd.f32 0.0, %v4700
        %v4702 = vpop.f32.mrf.mxu0
        %4703 = vmatprep.mubr.bf16.mxu0 0
        %4704 = vmatmul.mubr.bf16.gmra.mxu0 %v369
        %v4705 = vpop.f32.mrf.mxu0
        %v4706 = vadd.f32 0.0, %v4705
        %v4707 = vpop.f32.mrf.mxu0
        %v4708 = vpop.f32.mrf.mxu0
        %v4709 = vadd.f32 0.0, %v4708
        %v4710 = vpop.f32.mrf.mxu0
        %4711 = vmatprep.mubr.bf16.mxu0 0
        %4712 = vmatmul.mubr.bf16.gmra.mxu0 %v370
        %v4713 = vpop.f32.mrf.mxu0
        %v4714 = vadd.f32 0.0, %v4713
        %v4715 = vpop.f32.mrf.mxu0
        %v4716 = vpop.f32.mrf.mxu0
        %v4717 = vadd.f32 0.0, %v4716
        %v4718 = vpop.f32.mrf.mxu0
        %4719 = vmatprep.mubr.bf16.mxu0 0
        %4720 = vmatmul.mubr.bf16.gmra.mxu0 %v371
        %v4721 = vpop.f32.mrf.mxu0
        %v4722 = vadd.f32 0.0, %v4721
        %v4723 = vpop.f32.mrf.mxu0
        %v4724 = vpop.f32.mrf.mxu0
        %v4725 = vadd.f32 0.0, %v4724
        %v4726 = vpop.f32.mrf.mxu0
        %4727 = vmatprep.mubr.bf16.mxu0 0
        %4728 = vmatmul.mubr.bf16.gmra.mxu0 %v372
        %v4729 = vpop.f32.mrf.mxu0
        %v4730 = vadd.f32 0.0, %v4729
        %v4731 = vpop.f32.mrf.mxu0
        %v4732 = vpop.f32.mrf.mxu0
        %v4733 = vadd.f32 0.0, %v4732
        %v4734 = vpop.f32.mrf.mxu0
        %4735 = vmatprep.mubr.bf16.mxu0 0
        %4736 = vmatmul.mubr.bf16.gmra.mxu0 %v373
        %v4737 = vpop.f32.mrf.mxu0
        %v4738 = vadd.f32 0.0, %v4737
        %v4739 = vpop.f32.mrf.mxu0
        %v4740 = vpop.f32.mrf.mxu0
        %v4741 = vadd.f32 0.0, %v4740
        %v4742 = vpop.f32.mrf.mxu0
        %4743 = vmatprep.mubr.bf16.mxu0 0
        %4744 = vmatmul.mubr.bf16.gmra.mxu0 %v374
        %v4745 = vpop.f32.mrf.mxu0
        %v4746 = vadd.f32 0.0, %v4745
        %v4747 = vpop.f32.mrf.mxu0
        %v4748 = vpop.f32.mrf.mxu0
        %v4749 = vadd.f32 0.0, %v4748
        %v4750 = vpop.f32.mrf.mxu0
        %4751 = vmatprep.mubr.bf16.mxu0 0
        %4752 = vmatmul.mubr.bf16.gmra.mxu0 %v375
        %v4753 = vpop.f32.mrf.mxu0
        %v4754 = vadd.f32 0.0, %v4753
        %v4755 = vpop.f32.mrf.mxu0
        %v4756 = vpop.f32.mrf.mxu0
        %v4757 = vadd.f32 0.0, %v4756
        %v4758 = vpop.f32.mrf.mxu0
        %4759 = vmatprep.mubr.bf16.mxu0 0
        %4760 = vmatmul.mubr.bf16.gmra.mxu0 %v376
        %v4761 = vpop.f32.mrf.mxu0
        %v4762 = vadd.f32 0.0, %v4761
        %v4763 = vpop.f32.mrf.mxu0
        %v4764 = vpop.f32.mrf.mxu0
        %v4765 = vadd.f32 0.0, %v4764
        %v4766 = vpop.f32.mrf.mxu0
        %4767 = vmatprep.mubr.bf16.mxu0 0
        %4768 = vmatmul.mubr.bf16.gmra.mxu0 %v377
        %v4769 = vpop.f32.mrf.mxu0
        %v4770 = vadd.f32 0.0, %v4769
        %v4771 = vpop.f32.mrf.mxu0
        %v4772 = vpop.f32.mrf.mxu0
        %v4773 = vadd.f32 0.0, %v4772
        %v4774 = vpop.f32.mrf.mxu0
        %4775 = vmatprep.mubr.bf16.mxu0 0
        %4776 = vmatmul.mubr.bf16.gmra.mxu0 %v378
        %v4777 = vpop.f32.mrf.mxu0
        %v4778 = vadd.f32 0.0, %v4777
        %v4779 = vpop.f32.mrf.mxu0
        %v4780 = vpop.f32.mrf.mxu0
        %v4781 = vadd.f32 0.0, %v4780
        %v4782 = vpop.f32.mrf.mxu0
        %4783 = vmatprep.mubr.bf16.mxu0 0
        %4784 = vmatmul.mubr.bf16.gmra.mxu0 %v379
        %v4785 = vpop.f32.mrf.mxu0
        %v4786 = vadd.f32 0.0, %v4785
        %v4787 = vpop.f32.mrf.mxu0
        %v4788 = vpop.f32.mrf.mxu0
        %v4789 = vadd.f32 0.0, %v4788
        %v4790 = vpop.f32.mrf.mxu0
        %4791 = vmatprep.mubr.bf16.mxu0 0
        %4792 = vmatmul.mubr.bf16.gmra.mxu0 %v380
        %v4793 = vpop.f32.mrf.mxu0
        %v4794 = vadd.f32 0.0, %v4793
        %v4795 = vpop.f32.mrf.mxu0
        %v4796 = vpop.f32.mrf.mxu0
        %v4797 = vadd.f32 0.0, %v4796
        %v4798 = vpop.f32.mrf.mxu0
        %4799 = vmatprep.mubr.bf16.mxu0 0
        %4800 = vmatmul.mubr.bf16.gmra.mxu0 %v381
        %v4801 = vpop.f32.mrf.mxu0
        %v4802 = vadd.f32 0.0, %v4801
        %v4803 = vpop.f32.mrf.mxu0
        %v4804 = vpop.f32.mrf.mxu0
        %v4805 = vadd.f32 0.0, %v4804
        %v4806 = vpop.f32.mrf.mxu0
        %4807 = vdwg.mxu0
        %4808 = vxpose.xlu0.c.b16.start [1/8] %v4639, 128
        %4809 = vxpose.xlu0.c.b16.cont [2/8] %v4640, 128
        %4810 = vxpose.xlu0.c.b16.cont [3/8] %v4641, 128
        %4811 = vxpose.xlu0.c.b16.cont [4/8] %v4642, 128
        %4812 = vxpose.xlu0.c.b16.cont [5/8] %v4643, 128
        %4813 = vxpose.xlu0.c.b16.cont [6/8] %v4644, 128
        %4814 = vxpose.xlu0.c.b16.cont [7/8] %v4645, 128
        %4815 = vxpose.xlu0.c.b16.end [8/8] %v4646, 128
        %v4816 = vpop.trf.xlu0
        %v4817 = vpop.trf.xlu0
        %v4818 = vpop.trf.xlu0
        %v4819 = vpop.trf.xlu0
        %v4820 = vpop.trf.xlu0
        %v4821 = vpop.trf.xlu0
        %v4822 = vpop.trf.xlu0
        %v4823 = vpop.trf.xlu0
        %4824 = vmatprep.subr.bf16.mxu0 0
        %4825 = vmatpush1.bf16.msra.mxu0 %v4646
        %4826 = vmatprep.subr.bf16.mxu0 0
        %4827 = vmatpush1.bf16.msra.mxu0 %v4645
        %4828 = vmatprep.subr.bf16.mxu0 0
        %4829 = vmatpush1.bf16.msra.mxu0 %v4644
        %4830 = vmatprep.subr.bf16.mxu0 0
        %4831 = vmatpush1.bf16.msra.mxu0 %v4643
        %4832 = vmatprep.subr.bf16.mxu0 0
        %4833 = vmatpush1.bf16.msra.mxu0 %v4642
        %4834 = vmatprep.subr.bf16.mxu0 0
        %4835 = vmatpush1.bf16.msra.mxu0 %v4641
        %4836 = vmatprep.subr.bf16.mxu0 0
        %4837 = vmatpush1.bf16.msra.mxu0 %v4640
        %4838 = vmatprep.subr.bf16.mxu0 0
        %4839 = vmatpush1.bf16.msra.mxu0 %v4639
        %4840 = vmatprep.subr.bf16.mxu0 0
        %4841 = vmatpush2.bf16.msra.mxu0 0
        %4842 = vmatprep.subr.bf16.mxu0 0
        %4843 = vmatpush2.bf16.msra.mxu0 0
        %4844 = vmatprep.subr.bf16.mxu0 0
        %4845 = vmatpush2.bf16.msra.mxu0 0
        %4846 = vmatprep.subr.bf16.mxu0 0
        %4847 = vmatpush2.bf16.msra.mxu0 0
        %4848 = vmatprep.subr.bf16.mxu0 0
        %4849 = vmatpush2.bf16.msra.mxu0 0
        %4850 = vmatprep.subr.bf16.mxu0 0
        %4851 = vmatpush2.bf16.msra.mxu0 0
        %4852 = vmatprep.subr.bf16.mxu0 0
        %4853 = vmatpush2.bf16.msra.mxu0 0
        %4854 = vmatprep.subr.bf16.mxu0 0
        %4855 = vmatpush2.bf16.msra.mxu0 0
        %4856 = vmatprep.mubr.bf16.mxu0 0
        %4857 = vmatmul.mubr.bf16.gmra.mxu0 %v4816
        %v4858 = vpop.f32.mrf.mxu0
        %v4859 = vadd.f32 0.0, %v4858
        %v4860 = vpop.f32.mrf.mxu0
        %v4861 = vpop.f32.mrf.mxu0
        %v4862 = vadd.f32 0.0, %v4861
        %v4863 = vpop.f32.mrf.mxu0
        %4864 = vmatprep.mubr.bf16.mxu0 0
        %4865 = vmatmul.mubr.bf16.gmra.mxu0 %v4817
        %v4866 = vpop.f32.mrf.mxu0
        %v4867 = vadd.f32 0.0, %v4866
        %v4868 = vpop.f32.mrf.mxu0
        %v4869 = vpop.f32.mrf.mxu0
        %v4870 = vadd.f32 0.0, %v4869
        %v4871 = vpop.f32.mrf.mxu0
        %4872 = vmatprep.mubr.bf16.mxu0 0
        %4873 = vmatmul.mubr.bf16.gmra.mxu0 %v4818
        %v4874 = vpop.f32.mrf.mxu0
        %v4875 = vadd.f32 0.0, %v4874
        %v4876 = vpop.f32.mrf.mxu0
        %v4877 = vpop.f32.mrf.mxu0
        %v4878 = vadd.f32 0.0, %v4877
        %v4879 = vpop.f32.mrf.mxu0
        %4880 = vmatprep.mubr.bf16.mxu0 0
        %4881 = vmatmul.mubr.bf16.gmra.mxu0 %v4819
        %v4882 = vpop.f32.mrf.mxu0
        %v4883 = vadd.f32 0.0, %v4882
        %v4884 = vpop.f32.mrf.mxu0
        %v4885 = vpop.f32.mrf.mxu0
        %v4886 = vadd.f32 0.0, %v4885
        %v4887 = vpop.f32.mrf.mxu0
        %4888 = vdwg.mxu0
        %v4889 = vpack.c.bf16 %v4862, %v4859
        %v4890 = vpack.c.bf16 %v4870, %v4867
        %v4891 = vpack.c.bf16 %v4878, %v4875
        %v4892 = vpack.c.bf16 %v4886, %v4883
        %v4893 = vmul.f32 %v4224, %v4682
        %v4894 = vmul.f32 %v4225, %v4685
        %v4895 = vmul.f32 %v4226, %v4690
        %v4896 = vmul.f32 %v4227, %v4693
        %v4897 = vmul.f32 %v4228, %v4698
        %v4898 = vmul.f32 %v4229, %v4701
        %v4899 = vmul.f32 %v4230, %v4706
        %v4900 = vmul.f32 %v4231, %v4709
        %v4901 = vmul.f32 %v4232, %v4714
        %v4902 = vmul.f32 %v4233, %v4717
        %v4903 = vmul.f32 %v4234, %v4722
        %v4904 = vmul.f32 %v4235, %v4725
        %v4905 = vmul.f32 %v4236, %v4730
        %v4906 = vmul.f32 %v4237, %v4733
        %v4907 = vmul.f32 %v4238, %v4738
        %v4908 = vmul.f32 %v4239, %v4741
        %v4909 = vmul.f32 %v4240, %v4746
        %v4910 = vmul.f32 %v4241, %v4749
        %v4911 = vmul.f32 %v4242, %v4754
        %v4912 = vmul.f32 %v4243, %v4757
        %v4913 = vmul.f32 %v4244, %v4762
        %v4914 = vmul.f32 %v4245, %v4765
        %v4915 = vmul.f32 %v4246, %v4770
        %v4916 = vmul.f32 %v4247, %v4773
        %v4917 = vmul.f32 %v4248, %v4778
        %v4918 = vmul.f32 %v4249, %v4781
        %v4919 = vmul.f32 %v4250, %v4786
        %v4920 = vmul.f32 %v4251, %v4789
        %v4921 = vmul.f32 %v4252, %v4794
        %v4922 = vmul.f32 %v4253, %v4797
        %v4923 = vmul.f32 %v4254, %v4802
        %v4924 = vmul.f32 %v4255, %v4805
        %v4926 = vsel %vm559, %v4256, 0
        %v4929 = vsel %vm559, %v4257, 0
        %v4932 = vsel %vm559, %v4258, 0
        %v4935 = vsel %vm559, %v4259, 0
        %v4938 = vsel %vm559, %v4260, 0
        %v4941 = vsel %vm559, %v4261, 0
        %v4944 = vsel %vm559, %v4262, 0
        %v4947 = vsel %vm559, %v4263, 0
        %v4950 = vsel %vm559, %v4264, 0
        %v4953 = vsel %vm559, %v4265, 0
        %v4956 = vsel %vm559, %v4266, 0
        %v4959 = vsel %vm559, %v4267, 0
        %v4962 = vsel %vm559, %v4268, 0
        %v4965 = vsel %vm559, %v4269, 0
        %v4968 = vsel %vm559, %v4270, 0
        %v4971 = vsel %vm559, %v4271, 0
        %4973 = vmatprep.subr.bf16.mxu0 0
        %4974 = vmatpush1.bf16.msra.mxu0 0
        %4975 = vmatprep.subr.bf16.mxu0 0
        %4976 = vmatpush1.bf16.msra.mxu0 0
        %4977 = vmatprep.subr.bf16.mxu0 0
        %4978 = vmatpush1.bf16.msra.mxu0 0
        %4979 = vmatprep.subr.bf16.mxu0 0
        %4980 = vmatpush1.bf16.msra.mxu0 0
        %4981 = vmatprep.subr.bf16.mxu0 0
        %4982 = vmatpush1.bf16.msra.mxu0 %v4892
        %4983 = vmatprep.subr.bf16.mxu0 0
        %4984 = vmatpush1.bf16.msra.mxu0 %v4891
        %4985 = vmatprep.subr.bf16.mxu0 0
        %4986 = vmatpush1.bf16.msra.mxu0 %v4890
        %4987 = vmatprep.subr.bf16.mxu0 0
        %4988 = vmatpush1.bf16.msra.mxu0 %v4889
        %4989 = vmatprep.subr.bf16.mxu0 0
        %4990 = vmatpush2.bf16.msra.mxu0 0
        %4991 = vmatprep.subr.bf16.mxu0 0
        %4992 = vmatpush2.bf16.msra.mxu0 0
        %4993 = vmatprep.subr.bf16.mxu0 0
        %4994 = vmatpush2.bf16.msra.mxu0 0
        %4995 = vmatprep.subr.bf16.mxu0 0
        %4996 = vmatpush2.bf16.msra.mxu0 0
        %4997 = vmatprep.subr.bf16.mxu0 0
        %4998 = vmatpush2.bf16.msra.mxu0 0
        %4999 = vmatprep.subr.bf16.mxu0 0
        %5000 = vmatpush2.bf16.msra.mxu0 0
        %5001 = vmatprep.subr.bf16.mxu0 0
        %5002 = vmatpush2.bf16.msra.mxu0 0
        %5003 = vmatprep.subr.bf16.mxu0 0
        %5004 = vmatpush2.bf16.msra.mxu0 0
        %5005 = vmatprep.mubr.bf16.mxu0 0
        %5006 = vmatmul.mubr.bf16.gmra.mxu0 %v4926
        %v5007 = vpop.f32.mrf.mxu0
        %v5008 = vadd.f32 1e-06, %v5007
        %v5009 = vpop.f32.mrf.mxu0
        %v5010 = vpop.f32.mrf.mxu0
        %v5011 = vadd.f32 1e-06, %v5010
        %v5012 = vpop.f32.mrf.mxu0
        %5013 = vmatprep.mubr.bf16.mxu0 0
        %5014 = vmatmul.mubr.bf16.gmra.mxu0 %v4929
        %v5015 = vpop.f32.mrf.mxu0
        %v5016 = vadd.f32 1e-06, %v5015
        %v5017 = vpop.f32.mrf.mxu0
        %v5018 = vpop.f32.mrf.mxu0
        %v5019 = vadd.f32 1e-06, %v5018
        %v5020 = vpop.f32.mrf.mxu0
        %5021 = vmatprep.mubr.bf16.mxu0 0
        %5022 = vmatmul.mubr.bf16.gmra.mxu0 %v4932
        %v5023 = vpop.f32.mrf.mxu0
        %v5024 = vadd.f32 1e-06, %v5023
        %v5025 = vpop.f32.mrf.mxu0
        %v5026 = vpop.f32.mrf.mxu0
        %v5027 = vadd.f32 1e-06, %v5026
        %v5028 = vpop.f32.mrf.mxu0
        %5029 = vmatprep.mubr.bf16.mxu0 0
        %5030 = vmatmul.mubr.bf16.gmra.mxu0 %v4935
        %v5031 = vpop.f32.mrf.mxu0
        %v5032 = vadd.f32 1e-06, %v5031
        %v5033 = vpop.f32.mrf.mxu0
        %v5034 = vpop.f32.mrf.mxu0
        %v5035 = vadd.f32 1e-06, %v5034
        %v5036 = vpop.f32.mrf.mxu0
        %5037 = vmatprep.mubr.bf16.mxu0 0
        %5038 = vmatmul.mubr.bf16.gmra.mxu0 %v4938
        %v5039 = vpop.f32.mrf.mxu0
        %v5040 = vadd.f32 1e-06, %v5039
        %v5041 = vpop.f32.mrf.mxu0
        %v5042 = vpop.f32.mrf.mxu0
        %v5043 = vadd.f32 1e-06, %v5042
        %v5044 = vpop.f32.mrf.mxu0
        %5045 = vmatprep.mubr.bf16.mxu0 0
        %5046 = vmatmul.mubr.bf16.gmra.mxu0 %v4941
        %v5047 = vpop.f32.mrf.mxu0
        %v5048 = vadd.f32 1e-06, %v5047
        %v5049 = vpop.f32.mrf.mxu0
        %v5050 = vpop.f32.mrf.mxu0
        %v5051 = vadd.f32 1e-06, %v5050
        %v5052 = vpop.f32.mrf.mxu0
        %5053 = vmatprep.mubr.bf16.mxu0 0
        %5054 = vmatmul.mubr.bf16.gmra.mxu0 %v4944
        %v5055 = vpop.f32.mrf.mxu0
        %v5056 = vadd.f32 1e-06, %v5055
        %v5057 = vpop.f32.mrf.mxu0
        %v5058 = vpop.f32.mrf.mxu0
        %v5059 = vadd.f32 1e-06, %v5058
        %v5060 = vpop.f32.mrf.mxu0
        %5061 = vmatprep.mubr.bf16.mxu0 0
        %5062 = vmatmul.mubr.bf16.gmra.mxu0 %v4947
        %v5063 = vpop.f32.mrf.mxu0
        %v5064 = vadd.f32 1e-06, %v5063
        %v5065 = vpop.f32.mrf.mxu0
        %v5066 = vpop.f32.mrf.mxu0
        %v5067 = vadd.f32 1e-06, %v5066
        %v5068 = vpop.f32.mrf.mxu0
        %5069 = vmatprep.mubr.bf16.mxu0 0
        %5070 = vmatmul.mubr.bf16.gmra.mxu0 %v4950
        %v5071 = vpop.f32.mrf.mxu0
        %v5072 = vadd.f32 1e-06, %v5071
        %v5073 = vpop.f32.mrf.mxu0
        %v5074 = vpop.f32.mrf.mxu0
        %v5075 = vadd.f32 1e-06, %v5074
        %v5076 = vpop.f32.mrf.mxu0
        %5077 = vmatprep.mubr.bf16.mxu0 0
        %5078 = vmatmul.mubr.bf16.gmra.mxu0 %v4953
        %v5079 = vpop.f32.mrf.mxu0
        %v5080 = vadd.f32 1e-06, %v5079
        %v5081 = vpop.f32.mrf.mxu0
        %v5082 = vpop.f32.mrf.mxu0
        %v5083 = vadd.f32 1e-06, %v5082
        %v5084 = vpop.f32.mrf.mxu0
        %5085 = vmatprep.mubr.bf16.mxu0 0
        %5086 = vmatmul.mubr.bf16.gmra.mxu0 %v4956
        %v5087 = vpop.f32.mrf.mxu0
        %v5088 = vadd.f32 1e-06, %v5087
        %v5089 = vpop.f32.mrf.mxu0
        %v5090 = vpop.f32.mrf.mxu0
        %v5091 = vadd.f32 1e-06, %v5090
        %v5092 = vpop.f32.mrf.mxu0
        %5093 = vmatprep.mubr.bf16.mxu0 0
        %5094 = vmatmul.mubr.bf16.gmra.mxu0 %v4959
        %v5095 = vpop.f32.mrf.mxu0
        %v5096 = vadd.f32 1e-06, %v5095
        %v5097 = vpop.f32.mrf.mxu0
        %v5098 = vpop.f32.mrf.mxu0
        %v5099 = vadd.f32 1e-06, %v5098
        %v5100 = vpop.f32.mrf.mxu0
        %5101 = vmatprep.mubr.bf16.mxu0 0
        %5102 = vmatmul.mubr.bf16.gmra.mxu0 %v4962
        %v5103 = vpop.f32.mrf.mxu0
        %v5104 = vadd.f32 1e-06, %v5103
        %v5105 = vpop.f32.mrf.mxu0
        %v5106 = vpop.f32.mrf.mxu0
        %v5107 = vadd.f32 1e-06, %v5106
        %v5108 = vpop.f32.mrf.mxu0
        %5109 = vmatprep.mubr.bf16.mxu0 0
        %5110 = vmatmul.mubr.bf16.gmra.mxu0 %v4965
        %v5111 = vpop.f32.mrf.mxu0
        %v5112 = vadd.f32 1e-06, %v5111
        %v5113 = vpop.f32.mrf.mxu0
        %v5114 = vpop.f32.mrf.mxu0
        %v5115 = vadd.f32 1e-06, %v5114
        %v5116 = vpop.f32.mrf.mxu0
        %5117 = vmatprep.mubr.bf16.mxu0 0
        %5118 = vmatmul.mubr.bf16.gmra.mxu0 %v4968
        %v5119 = vpop.f32.mrf.mxu0
        %v5120 = vadd.f32 1e-06, %v5119
        %v5121 = vpop.f32.mrf.mxu0
        %v5122 = vpop.f32.mrf.mxu0
        %v5123 = vadd.f32 1e-06, %v5122
        %v5124 = vpop.f32.mrf.mxu0
        %5125 = vmatprep.mubr.bf16.mxu0 0
        %5126 = vmatmul.mubr.bf16.gmra.mxu0 %v4971
        %v5127 = vpop.f32.mrf.mxu0
        %v5128 = vadd.f32 1e-06, %v5127
        %v5129 = vpop.f32.mrf.mxu0
        %v5130 = vpop.f32.mrf.mxu0
        %v5131 = vadd.f32 1e-06, %v5130
        %v5132 = vpop.f32.mrf.mxu0
        %5133 = vdwg.mxu0
        %v5134 = vrcp.pop %v5008
        %v5135 = vrcp.pop %v5011
        %v5136 = vrcp.pop %v5016
        %v5137 = vrcp.pop %v5019
        %v5138 = vrcp.pop %v5024
        %v5139 = vrcp.pop %v5027
        %v5140 = vrcp.pop %v5032
        %v5141 = vrcp.pop %v5035
        %v5142 = vrcp.pop %v5040
        %v5143 = vrcp.pop %v5043
        %v5144 = vrcp.pop %v5048
        %v5145 = vrcp.pop %v5051
        %v5146 = vrcp.pop %v5056
        %v5147 = vrcp.pop %v5059
        %v5148 = vrcp.pop %v5064
        %v5149 = vrcp.pop %v5067
        %v5150 = vrcp.pop %v5072
        %v5151 = vrcp.pop %v5075
        %v5152 = vrcp.pop %v5080
        %v5153 = vrcp.pop %v5083
        %v5154 = vrcp.pop %v5088
        %v5155 = vrcp.pop %v5091
        %v5156 = vrcp.pop %v5096
        %v5157 = vrcp.pop %v5099
        %v5158 = vrcp.pop %v5104
        %v5159 = vrcp.pop %v5107
        %v5160 = vrcp.pop %v5112
        %v5161 = vrcp.pop %v5115
        %v5162 = vrcp.pop %v5120
        %v5163 = vrcp.pop %v5123
        %v5164 = vrcp.pop %v5128
        %v5165 = vrcp.pop %v5131
        %v5166 = vmul.f32 %v4893, %v5134
        %v5167 = vmul.f32 %v4894, %v5135
        %v5168 = vmul.f32 %v4895, %v5136
        %v5169 = vmul.f32 %v4896, %v5137
        %v5170 = vmul.f32 %v4897, %v5138
        %v5171 = vmul.f32 %v4898, %v5139
        %v5172 = vmul.f32 %v4899, %v5140
        %v5173 = vmul.f32 %v4900, %v5141
        %v5174 = vmul.f32 %v4901, %v5142
        %v5175 = vmul.f32 %v4902, %v5143
        %v5176 = vmul.f32 %v4903, %v5144
        %v5177 = vmul.f32 %v4904, %v5145
        %v5178 = vmul.f32 %v4905, %v5146
        %v5179 = vmul.f32 %v4906, %v5147
        %v5180 = vmul.f32 %v4907, %v5148
        %v5181 = vmul.f32 %v4908, %v5149
        %v5182 = vmul.f32 %v4909, %v5150
        %v5183 = vmul.f32 %v4910, %v5151
        %v5184 = vmul.f32 %v4911, %v5152
        %v5185 = vmul.f32 %v4912, %v5153
        %v5186 = vmul.f32 %v4913, %v5154
        %v5187 = vmul.f32 %v4914, %v5155
        %v5188 = vmul.f32 %v4915, %v5156
        %v5189 = vmul.f32 %v4916, %v5157
        %v5190 = vmul.f32 %v4917, %v5158
        %v5191 = vmul.f32 %v4918, %v5159
        %v5192 = vmul.f32 %v4919, %v5160
        %v5193 = vmul.f32 %v4920, %v5161
        %v5194 = vmul.f32 %v4921, %v5162
        %v5195 = vmul.f32 %v4922, %v5163
        %v5196 = vmul.f32 %v4923, %v5164
        %v5197 = vmul.f32 %v4924, %v5165
        %v5198 = vpack.c.bf16 %v5167, %v5166
        %v5199 = vpack.c.bf16 %v5169, %v5168
        %v5200 = vpack.c.bf16 %v5171, %v5170
        %v5201 = vpack.c.bf16 %v5173, %v5172
        %v5202 = vpack.c.bf16 %v5175, %v5174
        %v5203 = vpack.c.bf16 %v5177, %v5176
        %v5204 = vpack.c.bf16 %v5179, %v5178
        %v5205 = vpack.c.bf16 %v5181, %v5180
        %v5206 = vpack.c.bf16 %v5183, %v5182
        %v5207 = vpack.c.bf16 %v5185, %v5184
        %v5208 = vpack.c.bf16 %v5187, %v5186
        %v5209 = vpack.c.bf16 %v5189, %v5188
        %v5210 = vpack.c.bf16 %v5191, %v5190
        %v5211 = vpack.c.bf16 %v5193, %v5192
        %v5212 = vpack.c.bf16 %v5195, %v5194
        %v5213 = vpack.c.bf16 %v5197, %v5196
        %5214 = vmatprep.subr.bf16.mxu0 0
        %5215 = vmatpush1.bf16.msra.mxu0 %v5205
        %5216 = vmatprep.subr.bf16.mxu0 0
        %5217 = vmatpush1.bf16.msra.mxu0 %v5204
        %5218 = vmatprep.subr.bf16.mxu0 0
        %5219 = vmatpush1.bf16.msra.mxu0 %v5203
        %5220 = vmatprep.subr.bf16.mxu0 0
        %5221 = vmatpush1.bf16.msra.mxu0 %v5202
        %5222 = vmatprep.subr.bf16.mxu0 0
        %5223 = vmatpush1.bf16.msra.mxu0 %v5201
        %5224 = vmatprep.subr.bf16.mxu0 0
        %5225 = vmatpush1.bf16.msra.mxu0 %v5200
        %5226 = vmatprep.subr.bf16.mxu0 0
        %5227 = vmatpush1.bf16.msra.mxu0 %v5199
        %5228 = vmatprep.subr.bf16.mxu0 0
        %5229 = vmatpush1.bf16.msra.mxu0 %v5198
        %5230 = vmatprep.subr.bf16.mxu0 0
        %5231 = vmatpush2.bf16.msra.mxu0 %v5213
        %5232 = vmatprep.subr.bf16.mxu0 0
        %5233 = vmatpush2.bf16.msra.mxu0 %v5212
        %5234 = vmatprep.subr.bf16.mxu0 0
        %5235 = vmatpush2.bf16.msra.mxu0 %v5211
        %5236 = vmatprep.subr.bf16.mxu0 0
        %5237 = vmatpush2.bf16.msra.mxu0 %v5210
        %5238 = vmatprep.subr.bf16.mxu0 0
        %5239 = vmatpush2.bf16.msra.mxu0 %v5209
        %5240 = vmatprep.subr.bf16.mxu0 0
        %5241 = vmatpush2.bf16.msra.mxu0 %v5208
        %5242 = vmatprep.subr.bf16.mxu0 0
        %5243 = vmatpush2.bf16.msra.mxu0 %v5207
        %5244 = vmatprep.subr.bf16.mxu0 0
        %5245 = vmatpush2.bf16.msra.mxu0 %v5206
        %5246 = vmatprep.mubr.bf16.mxu0 %v1415
        %5247 = vmatmul.mubr.bf16.gmra.mxu0 %v1414
        %v5248 = vpop.f32.mrf.mxu0
        %v5249 = vadd.f32 0.0, %v5248
        %v5250 = vpop.f32.mrf.mxu0
        %v5251 = vpop.f32.mrf.mxu0
        %v5252 = vadd.f32 0.0, %v5251
        %v5253 = vpop.f32.mrf.mxu0
        %5254 = vmatprep.mubr.bf16.mxu0 %v1417
        %5255 = vmatmul.mubr.bf16.gmra.mxu0 %v1416
        %v5256 = vpop.f32.mrf.mxu0
        %v5257 = vadd.f32 0.0, %v5256
        %v5258 = vpop.f32.mrf.mxu0
        %v5259 = vpop.f32.mrf.mxu0
        %v5260 = vadd.f32 0.0, %v5259
        %v5261 = vpop.f32.mrf.mxu0
        %5262 = vmatprep.mubr.bf16.mxu0 %v1419
        %5263 = vmatmul.mubr.bf16.gmra.mxu0 %v1418
        %v5264 = vpop.f32.mrf.mxu0
        %v5265 = vadd.f32 0.0, %v5264
        %v5266 = vpop.f32.mrf.mxu0
        %v5267 = vpop.f32.mrf.mxu0
        %v5268 = vadd.f32 0.0, %v5267
        %v5269 = vpop.f32.mrf.mxu0
        %5270 = vmatprep.mubr.bf16.mxu0 %v1421
        %5271 = vmatmul.mubr.bf16.gmra.mxu0 %v1420
        %v5272 = vpop.f32.mrf.mxu0
        %v5273 = vadd.f32 0.0, %v5272
        %v5274 = vpop.f32.mrf.mxu0
        %v5275 = vpop.f32.mrf.mxu0
        %v5276 = vadd.f32 0.0, %v5275
        %v5277 = vpop.f32.mrf.mxu0
        %5278 = vmatprep.mubr.bf16.mxu0 %v1423
        %5279 = vmatmul.mubr.bf16.gmra.mxu0 %v1422
        %v5280 = vpop.f32.mrf.mxu0
        %v5281 = vadd.f32 0.0, %v5280
        %v5282 = vpop.f32.mrf.mxu0
        %v5283 = vpop.f32.mrf.mxu0
        %v5284 = vadd.f32 0.0, %v5283
        %v5285 = vpop.f32.mrf.mxu0
        %5286 = vmatprep.mubr.bf16.mxu0 %v1425
        %5287 = vmatmul.mubr.bf16.gmra.mxu0 %v1424
        %v5288 = vpop.f32.mrf.mxu0
        %v5289 = vadd.f32 0.0, %v5288
        %v5290 = vpop.f32.mrf.mxu0
        %v5291 = vpop.f32.mrf.mxu0
        %v5292 = vadd.f32 0.0, %v5291
        %v5293 = vpop.f32.mrf.mxu0
        %5294 = vmatprep.mubr.bf16.mxu0 %v1427
        %5295 = vmatmul.mubr.bf16.gmra.mxu0 %v1426
        %v5296 = vpop.f32.mrf.mxu0
        %v5297 = vadd.f32 0.0, %v5296
        %v5298 = vpop.f32.mrf.mxu0
        %v5299 = vpop.f32.mrf.mxu0
        %v5300 = vadd.f32 0.0, %v5299
        %v5301 = vpop.f32.mrf.mxu0
        %5302 = vmatprep.mubr.bf16.mxu0 %v1429
        %5303 = vmatmul.mubr.bf16.gmra.mxu0 %v1428
        %v5304 = vpop.f32.mrf.mxu0
        %v5305 = vadd.f32 0.0, %v5304
        %v5306 = vpop.f32.mrf.mxu0
        %v5307 = vpop.f32.mrf.mxu0
        %v5308 = vadd.f32 0.0, %v5307
        %v5309 = vpop.f32.mrf.mxu0
        %5310 = vdwg.mxu0
        %5311 = vxpose.xlu0.c.b16.start [1/8] %v5198, 128
        %5312 = vxpose.xlu0.c.b16.cont [2/8] %v5199, 128
        %5313 = vxpose.xlu0.c.b16.cont [3/8] %v5200, 128
        %5314 = vxpose.xlu0.c.b16.cont [4/8] %v5201, 128
        %5315 = vxpose.xlu0.c.b16.cont [5/8] %v5202, 128
        %5316 = vxpose.xlu0.c.b16.cont [6/8] %v5203, 128
        %5317 = vxpose.xlu0.c.b16.cont [7/8] %v5204, 128
        %5318 = vxpose.xlu0.c.b16.end [8/8] %v5205, 128
        %v5319 = vpop.trf.xlu0
        %v5320 = vpop.trf.xlu0
        %v5321 = vpop.trf.xlu0
        %v5322 = vpop.trf.xlu0
        %v5323 = vpop.trf.xlu0
        %v5324 = vpop.trf.xlu0
        %v5325 = vpop.trf.xlu0
        %v5326 = vpop.trf.xlu0
        %5327 = vxpose.xlu0.c.b16.start [1/8] %v5206, 128
        %5328 = vxpose.xlu0.c.b16.cont [2/8] %v5207, 128
        %5329 = vxpose.xlu0.c.b16.cont [3/8] %v5208, 128
        %5330 = vxpose.xlu0.c.b16.cont [4/8] %v5209, 128
        %5331 = vxpose.xlu0.c.b16.cont [5/8] %v5210, 128
        %5332 = vxpose.xlu0.c.b16.cont [6/8] %v5211, 128
        %5333 = vxpose.xlu0.c.b16.cont [7/8] %v5212, 128
        %5334 = vxpose.xlu0.c.b16.end [8/8] %v5213, 128
        %v5335 = vpop.trf.xlu0
        %v5336 = vpop.trf.xlu0
        %v5337 = vpop.trf.xlu0
        %v5338 = vpop.trf.xlu0
        %v5339 = vpop.trf.xlu0
        %v5340 = vpop.trf.xlu0
        %v5341 = vpop.trf.xlu0
        %v5342 = vpop.trf.xlu0
        %5343 = vmatprep.subr.bf16.mxu0 0
        %5344 = vmatpush1.bf16.msra.mxu0 %v5205
        %5345 = vmatprep.subr.bf16.mxu0 0
        %5346 = vmatpush1.bf16.msra.mxu0 %v5204
        %5347 = vmatprep.subr.bf16.mxu0 0
        %5348 = vmatpush1.bf16.msra.mxu0 %v5203
        %5349 = vmatprep.subr.bf16.mxu0 0
        %5350 = vmatpush1.bf16.msra.mxu0 %v5202
        %5351 = vmatprep.subr.bf16.mxu0 0
        %5352 = vmatpush1.bf16.msra.mxu0 %v5201
        %5353 = vmatprep.subr.bf16.mxu0 0
        %5354 = vmatpush1.bf16.msra.mxu0 %v5200
        %5355 = vmatprep.subr.bf16.mxu0 0
        %5356 = vmatpush1.bf16.msra.mxu0 %v5199
        %5357 = vmatprep.subr.bf16.mxu0 0
        %5358 = vmatpush1.bf16.msra.mxu0 %v5198
        %5359 = vmatprep.subr.bf16.mxu0 0
        %5360 = vmatpush2.bf16.msra.mxu0 %v5213
        %5361 = vmatprep.subr.bf16.mxu0 0
        %5362 = vmatpush2.bf16.msra.mxu0 %v5212
        %5363 = vmatprep.subr.bf16.mxu0 0
        %5364 = vmatpush2.bf16.msra.mxu0 %v5211
        %5365 = vmatprep.subr.bf16.mxu0 0
        %5366 = vmatpush2.bf16.msra.mxu0 %v5210
        %5367 = vmatprep.subr.bf16.mxu0 0
        %5368 = vmatpush2.bf16.msra.mxu0 %v5209
        %5369 = vmatprep.subr.bf16.mxu0 0
        %5370 = vmatpush2.bf16.msra.mxu0 %v5208
        %5371 = vmatprep.subr.bf16.mxu0 0
        %5372 = vmatpush2.bf16.msra.mxu0 %v5207
        %5373 = vmatprep.subr.bf16.mxu0 0
        %5374 = vmatpush2.bf16.msra.mxu0 %v5206
        %5375 = vmatprep.mubr.bf16.mxu0 %v5335
        %5376 = vmatmul.mubr.bf16.gmra.mxu0 %v5319
        %v5377 = vpop.f32.mrf.mxu0
        %v5378 = vadd.f32 0.0, %v5377
        %v5379 = vpop.f32.mrf.mxu0
        %v5380 = vpop.f32.mrf.mxu0
        %v5381 = vadd.f32 0.0, %v5380
        %v5382 = vpop.f32.mrf.mxu0
        %5383 = vmatprep.mubr.bf16.mxu0 %v5336
        %5384 = vmatmul.mubr.bf16.gmra.mxu0 %v5320
        %v5385 = vpop.f32.mrf.mxu0
        %v5386 = vadd.f32 0.0, %v5385
        %v5387 = vpop.f32.mrf.mxu0
        %v5388 = vpop.f32.mrf.mxu0
        %v5389 = vadd.f32 0.0, %v5388
        %v5390 = vpop.f32.mrf.mxu0
        %5391 = vmatprep.mubr.bf16.mxu0 %v5337
        %5392 = vmatmul.mubr.bf16.gmra.mxu0 %v5321
        %v5393 = vpop.f32.mrf.mxu0
        %v5394 = vadd.f32 0.0, %v5393
        %v5395 = vpop.f32.mrf.mxu0
        %v5396 = vpop.f32.mrf.mxu0
        %v5397 = vadd.f32 0.0, %v5396
        %v5398 = vpop.f32.mrf.mxu0
        %5399 = vmatprep.mubr.bf16.mxu0 %v5338
        %5400 = vmatmul.mubr.bf16.gmra.mxu0 %v5322
        %v5401 = vpop.f32.mrf.mxu0
        %v5402 = vadd.f32 0.0, %v5401
        %v5403 = vpop.f32.mrf.mxu0
        %v5404 = vpop.f32.mrf.mxu0
        %v5405 = vadd.f32 0.0, %v5404
        %v5406 = vpop.f32.mrf.mxu0
        %5407 = vdwg.mxu0
        %v5408 = vpack.c.bf16 %v5381, %v5378
        %v5409 = vpack.c.bf16 %v5389, %v5386
        %v5410 = vpack.c.bf16 %v5397, %v5394
        %v5411 = vpack.c.bf16 %v5405, %v5402
        %v5412 = vmul.f32 %v4623, %v5249
        %v5413 = vmul.f32 %v4624, %v5252
        %v5414 = vmul.f32 %v4625, %v5257
        %v5415 = vmul.f32 %v4626, %v5260
        %v5416 = vmul.f32 %v4627, %v5265
        %v5417 = vmul.f32 %v4628, %v5268
        %v5418 = vmul.f32 %v4629, %v5273
        %v5419 = vmul.f32 %v4630, %v5276
        %v5420 = vmul.f32 %v4631, %v5281
        %v5421 = vmul.f32 %v4632, %v5284
        %v5422 = vmul.f32 %v4633, %v5289
        %v5423 = vmul.f32 %v4634, %v5292
        %v5424 = vmul.f32 %v4635, %v5297
        %v5425 = vmul.f32 %v4636, %v5300
        %v5426 = vmul.f32 %v4637, %v5305
        %v5427 = vmul.f32 %v4638, %v5308
        %v5429 = vsel %vm559, %v4639, 0
        %v5432 = vsel %vm559, %v4640, 0
        %v5435 = vsel %vm559, %v4641, 0
        %v5438 = vsel %vm559, %v4642, 0
        %v5441 = vsel %vm559, %v4643, 0
        %v5444 = vsel %vm559, %v4644, 0
        %v5447 = vsel %vm559, %v4645, 0
        %v5450 = vsel %vm559, %v4646, 0
        %5452 = vmatprep.subr.bf16.mxu0 0
        %5453 = vmatpush1.bf16.msra.mxu0 0
        %5454 = vmatprep.subr.bf16.mxu0 0
        %5455 = vmatpush1.bf16.msra.mxu0 0
        %5456 = vmatprep.subr.bf16.mxu0 0
        %5457 = vmatpush1.bf16.msra.mxu0 0
        %5458 = vmatprep.subr.bf16.mxu0 0
        %5459 = vmatpush1.bf16.msra.mxu0 0
        %5460 = vmatprep.subr.bf16.mxu0 0
        %5461 = vmatpush1.bf16.msra.mxu0 %v5411
        %5462 = vmatprep.subr.bf16.mxu0 0
        %5463 = vmatpush1.bf16.msra.mxu0 %v5410
        %5464 = vmatprep.subr.bf16.mxu0 0
        %5465 = vmatpush1.bf16.msra.mxu0 %v5409
        %5466 = vmatprep.subr.bf16.mxu0 0
        %5467 = vmatpush1.bf16.msra.mxu0 %v5408
        %5468 = vmatprep.subr.bf16.mxu0 0
        %5469 = vmatpush2.bf16.msra.mxu0 0
        %5470 = vmatprep.subr.bf16.mxu0 0
        %5471 = vmatpush2.bf16.msra.mxu0 0
        %5472 = vmatprep.subr.bf16.mxu0 0
        %5473 = vmatpush2.bf16.msra.mxu0 0
        %5474 = vmatprep.subr.bf16.mxu0 0
        %5475 = vmatpush2.bf16.msra.mxu0 0
        %5476 = vmatprep.subr.bf16.mxu0 0
        %5477 = vmatpush2.bf16.msra.mxu0 0
        %5478 = vmatprep.subr.bf16.mxu0 0
        %5479 = vmatpush2.bf16.msra.mxu0 0
        %5480 = vmatprep.subr.bf16.mxu0 0
        %5481 = vmatpush2.bf16.msra.mxu0 0
        %5482 = vmatprep.subr.bf16.mxu0 0
        %5483 = vmatpush2.bf16.msra.mxu0 0
        %5484 = vmatprep.mubr.bf16.mxu0 0
        %5485 = vmatmul.mubr.bf16.gmra.mxu0 %v5429
        %v5486 = vpop.f32.mrf.mxu0
        %v5487 = vadd.f32 1e-06, %v5486
        %v5488 = vpop.f32.mrf.mxu0
        %v5489 = vpop.f32.mrf.mxu0
        %v5490 = vadd.f32 1e-06, %v5489
        %v5491 = vpop.f32.mrf.mxu0
        %5492 = vmatprep.mubr.bf16.mxu0 0
        %5493 = vmatmul.mubr.bf16.gmra.mxu0 %v5432
        %v5494 = vpop.f32.mrf.mxu0
        %v5495 = vadd.f32 1e-06, %v5494
        %v5496 = vpop.f32.mrf.mxu0
        %v5497 = vpop.f32.mrf.mxu0
        %v5498 = vadd.f32 1e-06, %v5497
        %v5499 = vpop.f32.mrf.mxu0
        %5500 = vmatprep.mubr.bf16.mxu0 0
        %5501 = vmatmul.mubr.bf16.gmra.mxu0 %v5435
        %v5502 = vpop.f32.mrf.mxu0
        %v5503 = vadd.f32 1e-06, %v5502
        %v5504 = vpop.f32.mrf.mxu0
        %v5505 = vpop.f32.mrf.mxu0
        %v5506 = vadd.f32 1e-06, %v5505
        %v5507 = vpop.f32.mrf.mxu0
        %5508 = vmatprep.mubr.bf16.mxu0 0
        %5509 = vmatmul.mubr.bf16.gmra.mxu0 %v5438
        %v5510 = vpop.f32.mrf.mxu0
        %v5511 = vadd.f32 1e-06, %v5510
        %v5512 = vpop.f32.mrf.mxu0
        %v5513 = vpop.f32.mrf.mxu0
        %v5514 = vadd.f32 1e-06, %v5513
        %v5515 = vpop.f32.mrf.mxu0
        %5516 = vmatprep.mubr.bf16.mxu0 0
        %5517 = vmatmul.mubr.bf16.gmra.mxu0 %v5441
        %v5518 = vpop.f32.mrf.mxu0
        %v5519 = vadd.f32 1e-06, %v5518
        %v5520 = vpop.f32.mrf.mxu0
        %v5521 = vpop.f32.mrf.mxu0
        %v5522 = vadd.f32 1e-06, %v5521
        %v5523 = vpop.f32.mrf.mxu0
        %5524 = vmatprep.mubr.bf16.mxu0 0
        %5525 = vmatmul.mubr.bf16.gmra.mxu0 %v5444
        %v5526 = vpop.f32.mrf.mxu0
        %v5527 = vadd.f32 1e-06, %v5526
        %v5528 = vpop.f32.mrf.mxu0
        %v5529 = vpop.f32.mrf.mxu0
        %v5530 = vadd.f32 1e-06, %v5529
        %v5531 = vpop.f32.mrf.mxu0
        %5532 = vmatprep.mubr.bf16.mxu0 0
        %5533 = vmatmul.mubr.bf16.gmra.mxu0 %v5447
        %v5534 = vpop.f32.mrf.mxu0
        %v5535 = vadd.f32 1e-06, %v5534
        %v5536 = vpop.f32.mrf.mxu0
        %v5537 = vpop.f32.mrf.mxu0
        %v5538 = vadd.f32 1e-06, %v5537
        %v5539 = vpop.f32.mrf.mxu0
        %5540 = vmatprep.mubr.bf16.mxu0 0
        %5541 = vmatmul.mubr.bf16.gmra.mxu0 %v5450
        %v5542 = vpop.f32.mrf.mxu0
        %v5543 = vadd.f32 1e-06, %v5542
        %v5544 = vpop.f32.mrf.mxu0
        %v5545 = vpop.f32.mrf.mxu0
        %v5546 = vadd.f32 1e-06, %v5545
        %v5547 = vpop.f32.mrf.mxu0
        %5548 = vdwg.mxu0
        %v5549 = vrcp.pop %v5487
        %v5550 = vrcp.pop %v5490
        %v5551 = vrcp.pop %v5495
        %v5552 = vrcp.pop %v5498
        %v5553 = vrcp.pop %v5503
        %v5554 = vrcp.pop %v5506
        %v5555 = vrcp.pop %v5511
        %v5556 = vrcp.pop %v5514
        %v5557 = vrcp.pop %v5519
        %v5558 = vrcp.pop %v5522
        %v5559 = vrcp.pop %v5527
        %v5560 = vrcp.pop %v5530
        %v5561 = vrcp.pop %v5535
        %v5562 = vrcp.pop %v5538
        %v5563 = vrcp.pop %v5543
        %v5564 = vrcp.pop %v5546
        %v5565 = vmul.f32 %v5412, %v5549
        %v5566 = vmul.f32 %v5413, %v5550
        %v5567 = vmul.f32 %v5414, %v5551
        %v5568 = vmul.f32 %v5415, %v5552
        %v5569 = vmul.f32 %v5416, %v5553
        %v5570 = vmul.f32 %v5417, %v5554
        %v5571 = vmul.f32 %v5418, %v5555
        %v5572 = vmul.f32 %v5419, %v5556
        %v5573 = vmul.f32 %v5420, %v5557
        %v5574 = vmul.f32 %v5421, %v5558
        %v5575 = vmul.f32 %v5422, %v5559
        %v5576 = vmul.f32 %v5423, %v5560
        %v5577 = vmul.f32 %v5424, %v5561
        %v5578 = vmul.f32 %v5425, %v5562
        %v5579 = vmul.f32 %v5426, %v5563
        %v5580 = vmul.f32 %v5427, %v5564
        %v5581 = vpack.c.bf16 %v5566, %v5565
        %v5582 = vpack.c.bf16 %v5568, %v5567
        %v5583 = vpack.c.bf16 %v5570, %v5569
        %v5584 = vpack.c.bf16 %v5572, %v5571
        %v5585 = vpack.c.bf16 %v5574, %v5573
        %v5586 = vpack.c.bf16 %v5576, %v5575
        %v5587 = vpack.c.bf16 %v5578, %v5577
        %v5588 = vpack.c.bf16 %v5580, %v5579
        %5589 = vmatprep.subr.bf16.mxu0 0
        %5590 = vmatpush1.bf16.msra.mxu0 %v5588
        %5591 = vmatprep.subr.bf16.mxu0 0
        %5592 = vmatpush1.bf16.msra.mxu0 %v5587
        %5593 = vmatprep.subr.bf16.mxu0 0
        %5594 = vmatpush1.bf16.msra.mxu0 %v5586
        %5595 = vmatprep.subr.bf16.mxu0 0
        %5596 = vmatpush1.bf16.msra.mxu0 %v5585
        %5597 = vmatprep.subr.bf16.mxu0 0
        %5598 = vmatpush1.bf16.msra.mxu0 %v5584
        %5599 = vmatprep.subr.bf16.mxu0 0
        %5600 = vmatpush1.bf16.msra.mxu0 %v5583
        %5601 = vmatprep.subr.bf16.mxu0 0
        %5602 = vmatpush1.bf16.msra.mxu0 %v5582
        %5603 = vmatprep.subr.bf16.mxu0 0
        %5604 = vmatpush1.bf16.msra.mxu0 %v5581
        %5605 = vmatprep.subr.bf16.mxu0 0
        %5606 = vmatpush2.bf16.msra.mxu0 0
        %5607 = vmatprep.subr.bf16.mxu0 0
        %5608 = vmatpush2.bf16.msra.mxu0 0
        %5609 = vmatprep.subr.bf16.mxu0 0
        %5610 = vmatpush2.bf16.msra.mxu0 0
        %5611 = vmatprep.subr.bf16.mxu0 0
        %5612 = vmatpush2.bf16.msra.mxu0 0
        %5613 = vmatprep.subr.bf16.mxu0 0
        %5614 = vmatpush2.bf16.msra.mxu0 0
        %5615 = vmatprep.subr.bf16.mxu0 0
        %5616 = vmatpush2.bf16.msra.mxu0 0
        %5617 = vmatprep.subr.bf16.mxu0 0
        %5618 = vmatpush2.bf16.msra.mxu0 0
        %5619 = vmatprep.subr.bf16.mxu0 0
        %5620 = vmatpush2.bf16.msra.mxu0 0
        %5621 = vmatprep.mubr.bf16.mxu0 0
        %5622 = vmatmul.mubr.bf16.gmra.mxu0 %v366
        %v5623 = vpop.f32.mrf.mxu0
        %v5624 = vadd.f32 0.0, %v5623
        %v5625 = vpop.f32.mrf.mxu0
        %v5626 = vpop.f32.mrf.mxu0
        %v5627 = vadd.f32 0.0, %v5626
        %v5628 = vpop.f32.mrf.mxu0
        %5629 = vmatprep.mubr.bf16.mxu0 0
        %5630 = vmatmul.mubr.bf16.gmra.mxu0 %v367
        %v5631 = vpop.f32.mrf.mxu0
        %v5632 = vadd.f32 0.0, %v5631
        %v5633 = vpop.f32.mrf.mxu0
        %v5634 = vpop.f32.mrf.mxu0
        %v5635 = vadd.f32 0.0, %v5634
        %v5636 = vpop.f32.mrf.mxu0
        %5637 = vmatprep.mubr.bf16.mxu0 0
        %5638 = vmatmul.mubr.bf16.gmra.mxu0 %v368
        %v5639 = vpop.f32.mrf.mxu0
        %v5640 = vadd.f32 0.0, %v5639
        %v5641 = vpop.f32.mrf.mxu0
        %v5642 = vpop.f32.mrf.mxu0
        %v5643 = vadd.f32 0.0, %v5642
        %v5644 = vpop.f32.mrf.mxu0
        %5645 = vmatprep.mubr.bf16.mxu0 0
        %5646 = vmatmul.mubr.bf16.gmra.mxu0 %v369
        %v5647 = vpop.f32.mrf.mxu0
        %v5648 = vadd.f32 0.0, %v5647
        %v5649 = vpop.f32.mrf.mxu0
        %v5650 = vpop.f32.mrf.mxu0
        %v5651 = vadd.f32 0.0, %v5650
        %v5652 = vpop.f32.mrf.mxu0
        %5653 = vmatprep.mubr.bf16.mxu0 0
        %5654 = vmatmul.mubr.bf16.gmra.mxu0 %v370
        %v5655 = vpop.f32.mrf.mxu0
        %v5656 = vadd.f32 0.0, %v5655
        %v5657 = vpop.f32.mrf.mxu0
        %v5658 = vpop.f32.mrf.mxu0
        %v5659 = vadd.f32 0.0, %v5658
        %v5660 = vpop.f32.mrf.mxu0
        %5661 = vmatprep.mubr.bf16.mxu0 0
        %5662 = vmatmul.mubr.bf16.gmra.mxu0 %v371
        %v5663 = vpop.f32.mrf.mxu0
        %v5664 = vadd.f32 0.0, %v5663
        %v5665 = vpop.f32.mrf.mxu0
        %v5666 = vpop.f32.mrf.mxu0
        %v5667 = vadd.f32 0.0, %v5666
        %v5668 = vpop.f32.mrf.mxu0
        %5669 = vmatprep.mubr.bf16.mxu0 0
        %5670 = vmatmul.mubr.bf16.gmra.mxu0 %v372
        %v5671 = vpop.f32.mrf.mxu0
        %v5672 = vadd.f32 0.0, %v5671
        %v5673 = vpop.f32.mrf.mxu0
        %v5674 = vpop.f32.mrf.mxu0
        %v5675 = vadd.f32 0.0, %v5674
        %v5676 = vpop.f32.mrf.mxu0
        %5677 = vmatprep.mubr.bf16.mxu0 0
        %5678 = vmatmul.mubr.bf16.gmra.mxu0 %v373
        %v5679 = vpop.f32.mrf.mxu0
        %v5680 = vadd.f32 0.0, %v5679
        %v5681 = vpop.f32.mrf.mxu0
        %v5682 = vpop.f32.mrf.mxu0
        %v5683 = vadd.f32 0.0, %v5682
        %v5684 = vpop.f32.mrf.mxu0
        %5685 = vmatprep.mubr.bf16.mxu0 0
        %5686 = vmatmul.mubr.bf16.gmra.mxu0 %v374
        %v5687 = vpop.f32.mrf.mxu0
        %v5688 = vadd.f32 0.0, %v5687
        %v5689 = vpop.f32.mrf.mxu0
        %v5690 = vpop.f32.mrf.mxu0
        %v5691 = vadd.f32 0.0, %v5690
        %v5692 = vpop.f32.mrf.mxu0
        %5693 = vmatprep.mubr.bf16.mxu0 0
        %5694 = vmatmul.mubr.bf16.gmra.mxu0 %v375
        %v5695 = vpop.f32.mrf.mxu0
        %v5696 = vadd.f32 0.0, %v5695
        %v5697 = vpop.f32.mrf.mxu0
        %v5698 = vpop.f32.mrf.mxu0
        %v5699 = vadd.f32 0.0, %v5698
        %v5700 = vpop.f32.mrf.mxu0
        %5701 = vmatprep.mubr.bf16.mxu0 0
        %5702 = vmatmul.mubr.bf16.gmra.mxu0 %v376
        %v5703 = vpop.f32.mrf.mxu0
        %v5704 = vadd.f32 0.0, %v5703
        %v5705 = vpop.f32.mrf.mxu0
        %v5706 = vpop.f32.mrf.mxu0
        %v5707 = vadd.f32 0.0, %v5706
        %v5708 = vpop.f32.mrf.mxu0
        %5709 = vmatprep.mubr.bf16.mxu0 0
        %5710 = vmatmul.mubr.bf16.gmra.mxu0 %v377
        %v5711 = vpop.f32.mrf.mxu0
        %v5712 = vadd.f32 0.0, %v5711
        %v5713 = vpop.f32.mrf.mxu0
        %v5714 = vpop.f32.mrf.mxu0
        %v5715 = vadd.f32 0.0, %v5714
        %v5716 = vpop.f32.mrf.mxu0
        %5717 = vmatprep.mubr.bf16.mxu0 0
        %5718 = vmatmul.mubr.bf16.gmra.mxu0 %v378
        %v5719 = vpop.f32.mrf.mxu0
        %v5720 = vadd.f32 0.0, %v5719
        %v5721 = vpop.f32.mrf.mxu0
        %v5722 = vpop.f32.mrf.mxu0
        %v5723 = vadd.f32 0.0, %v5722
        %v5724 = vpop.f32.mrf.mxu0
        %5725 = vmatprep.mubr.bf16.mxu0 0
        %5726 = vmatmul.mubr.bf16.gmra.mxu0 %v379
        %v5727 = vpop.f32.mrf.mxu0
        %v5728 = vadd.f32 0.0, %v5727
        %v5729 = vpop.f32.mrf.mxu0
        %v5730 = vpop.f32.mrf.mxu0
        %v5731 = vadd.f32 0.0, %v5730
        %v5732 = vpop.f32.mrf.mxu0
        %5733 = vmatprep.mubr.bf16.mxu0 0
        %5734 = vmatmul.mubr.bf16.gmra.mxu0 %v380
        %v5735 = vpop.f32.mrf.mxu0
        %v5736 = vadd.f32 0.0, %v5735
        %v5737 = vpop.f32.mrf.mxu0
        %v5738 = vpop.f32.mrf.mxu0
        %v5739 = vadd.f32 0.0, %v5738
        %v5740 = vpop.f32.mrf.mxu0
        %5741 = vmatprep.mubr.bf16.mxu0 0
        %5742 = vmatmul.mubr.bf16.gmra.mxu0 %v381
        %v5743 = vpop.f32.mrf.mxu0
        %v5744 = vadd.f32 0.0, %v5743
        %v5745 = vpop.f32.mrf.mxu0
        %v5746 = vpop.f32.mrf.mxu0
        %v5747 = vadd.f32 0.0, %v5746
        %v5748 = vpop.f32.mrf.mxu0
        %5749 = vdwg.mxu0
        %5750 = vxpose.xlu0.c.b16.start [1/8] %v5581, 128
        %5751 = vxpose.xlu0.c.b16.cont [2/8] %v5582, 128
        %5752 = vxpose.xlu0.c.b16.cont [3/8] %v5583, 128
        %5753 = vxpose.xlu0.c.b16.cont [4/8] %v5584, 128
        %5754 = vxpose.xlu0.c.b16.cont [5/8] %v5585, 128
        %5755 = vxpose.xlu0.c.b16.cont [6/8] %v5586, 128
        %5756 = vxpose.xlu0.c.b16.cont [7/8] %v5587, 128
        %5757 = vxpose.xlu0.c.b16.end [8/8] %v5588, 128
        %v5758 = vpop.trf.xlu0
        %v5759 = vpop.trf.xlu0
        %v5760 = vpop.trf.xlu0
        %v5761 = vpop.trf.xlu0
        %v5762 = vpop.trf.xlu0
        %v5763 = vpop.trf.xlu0
        %v5764 = vpop.trf.xlu0
        %v5765 = vpop.trf.xlu0
        %5766 = vmatprep.subr.bf16.mxu0 0
        %5767 = vmatpush1.bf16.msra.mxu0 %v5588
        %5768 = vmatprep.subr.bf16.mxu0 0
        %5769 = vmatpush1.bf16.msra.mxu0 %v5587
        %5770 = vmatprep.subr.bf16.mxu0 0
        %5771 = vmatpush1.bf16.msra.mxu0 %v5586
        %5772 = vmatprep.subr.bf16.mxu0 0
        %5773 = vmatpush1.bf16.msra.mxu0 %v5585
        %5774 = vmatprep.subr.bf16.mxu0 0
        %5775 = vmatpush1.bf16.msra.mxu0 %v5584
        %5776 = vmatprep.subr.bf16.mxu0 0
        %5777 = vmatpush1.bf16.msra.mxu0 %v5583
        %5778 = vmatprep.subr.bf16.mxu0 0
        %5779 = vmatpush1.bf16.msra.mxu0 %v5582
        %5780 = vmatprep.subr.bf16.mxu0 0
        %5781 = vmatpush1.bf16.msra.mxu0 %v5581
        %5782 = vmatprep.subr.bf16.mxu0 0
        %5783 = vmatpush2.bf16.msra.mxu0 0
        %5784 = vmatprep.subr.bf16.mxu0 0
        %5785 = vmatpush2.bf16.msra.mxu0 0
        %5786 = vmatprep.subr.bf16.mxu0 0
        %5787 = vmatpush2.bf16.msra.mxu0 0
        %5788 = vmatprep.subr.bf16.mxu0 0
        %5789 = vmatpush2.bf16.msra.mxu0 0
        %5790 = vmatprep.subr.bf16.mxu0 0
        %5791 = vmatpush2.bf16.msra.mxu0 0
        %5792 = vmatprep.subr.bf16.mxu0 0
        %5793 = vmatpush2.bf16.msra.mxu0 0
        %5794 = vmatprep.subr.bf16.mxu0 0
        %5795 = vmatpush2.bf16.msra.mxu0 0
        %5796 = vmatprep.subr.bf16.mxu0 0
        %5797 = vmatpush2.bf16.msra.mxu0 0
        %5798 = vmatprep.mubr.bf16.mxu0 0
        %5799 = vmatmul.mubr.bf16.gmra.mxu0 %v5758
        %v5800 = vpop.f32.mrf.mxu0
        %v5801 = vadd.f32 0.0, %v5800
        %v5802 = vpop.f32.mrf.mxu0
        %v5803 = vpop.f32.mrf.mxu0
        %v5804 = vadd.f32 0.0, %v5803
        %v5805 = vpop.f32.mrf.mxu0
        %5806 = vmatprep.mubr.bf16.mxu0 0
        %5807 = vmatmul.mubr.bf16.gmra.mxu0 %v5759
        %v5808 = vpop.f32.mrf.mxu0
        %v5809 = vadd.f32 0.0, %v5808
        %v5810 = vpop.f32.mrf.mxu0
        %v5811 = vpop.f32.mrf.mxu0
        %v5812 = vadd.f32 0.0, %v5811
        %v5813 = vpop.f32.mrf.mxu0
        %5814 = vmatprep.mubr.bf16.mxu0 0
        %5815 = vmatmul.mubr.bf16.gmra.mxu0 %v5760
        %v5816 = vpop.f32.mrf.mxu0
        %v5817 = vadd.f32 0.0, %v5816
        %v5818 = vpop.f32.mrf.mxu0
        %v5819 = vpop.f32.mrf.mxu0
        %v5820 = vadd.f32 0.0, %v5819
        %v5821 = vpop.f32.mrf.mxu0
        %5822 = vmatprep.mubr.bf16.mxu0 0
        %5823 = vmatmul.mubr.bf16.gmra.mxu0 %v5761
        %v5824 = vpop.f32.mrf.mxu0
        %v5825 = vadd.f32 0.0, %v5824
        %v5826 = vpop.f32.mrf.mxu0
        %v5827 = vpop.f32.mrf.mxu0
        %v5828 = vadd.f32 0.0, %v5827
        %v5829 = vpop.f32.mrf.mxu0
        %5830 = vdwg.mxu0
        %v5831 = vpack.c.bf16 %v5804, %v5801
        %v5832 = vpack.c.bf16 %v5812, %v5809
        %v5833 = vpack.c.bf16 %v5820, %v5817
        %v5834 = vpack.c.bf16 %v5828, %v5825
        %v5835 = vmul.f32 %v5166, %v5624
        %v5836 = vmul.f32 %v5167, %v5627
        %v5837 = vmul.f32 %v5168, %v5632
        %v5838 = vmul.f32 %v5169, %v5635
        %v5839 = vmul.f32 %v5170, %v5640
        %v5840 = vmul.f32 %v5171, %v5643
        %v5841 = vmul.f32 %v5172, %v5648
        %v5842 = vmul.f32 %v5173, %v5651
        %v5843 = vmul.f32 %v5174, %v5656
        %v5844 = vmul.f32 %v5175, %v5659
        %v5845 = vmul.f32 %v5176, %v5664
        %v5846 = vmul.f32 %v5177, %v5667
        %v5847 = vmul.f32 %v5178, %v5672
        %v5848 = vmul.f32 %v5179, %v5675
        %v5849 = vmul.f32 %v5180, %v5680
        %v5850 = vmul.f32 %v5181, %v5683
        %v5851 = vmul.f32 %v5182, %v5688
        %v5852 = vmul.f32 %v5183, %v5691
        %v5853 = vmul.f32 %v5184, %v5696
        %v5854 = vmul.f32 %v5185, %v5699
        %v5855 = vmul.f32 %v5186, %v5704
        %v5856 = vmul.f32 %v5187, %v5707
        %v5857 = vmul.f32 %v5188, %v5712
        %v5858 = vmul.f32 %v5189, %v5715
        %v5859 = vmul.f32 %v5190, %v5720
        %v5860 = vmul.f32 %v5191, %v5723
        %v5861 = vmul.f32 %v5192, %v5728
        %v5862 = vmul.f32 %v5193, %v5731
        %v5863 = vmul.f32 %v5194, %v5736
        %v5864 = vmul.f32 %v5195, %v5739
        %v5865 = vmul.f32 %v5196, %v5744
        %v5866 = vmul.f32 %v5197, %v5747
        %v5868 = vsel %vm559, %v5198, 0
        %v5871 = vsel %vm559, %v5199, 0
        %v5874 = vsel %vm559, %v5200, 0
        %v5877 = vsel %vm559, %v5201, 0
        %v5880 = vsel %vm559, %v5202, 0
        %v5883 = vsel %vm559, %v5203, 0
        %v5886 = vsel %vm559, %v5204, 0
        %v5889 = vsel %vm559, %v5205, 0
        %v5892 = vsel %vm559, %v5206, 0
        %v5895 = vsel %vm559, %v5207, 0
        %v5898 = vsel %vm559, %v5208, 0
        %v5901 = vsel %vm559, %v5209, 0
        %v5904 = vsel %vm559, %v5210, 0
        %v5907 = vsel %vm559, %v5211, 0
        %v5910 = vsel %vm559, %v5212, 0
        %v5913 = vsel %vm559, %v5213, 0
        %5915 = vmatprep.subr.bf16.mxu0 0
        %5916 = vmatpush1.bf16.msra.mxu0 0
        %5917 = vmatprep.subr.bf16.mxu0 0
        %5918 = vmatpush1.bf16.msra.mxu0 0
        %5919 = vmatprep.subr.bf16.mxu0 0
        %5920 = vmatpush1.bf16.msra.mxu0 0
        %5921 = vmatprep.subr.bf16.mxu0 0
        %5922 = vmatpush1.bf16.msra.mxu0 0
        %5923 = vmatprep.subr.bf16.mxu0 0
        %5924 = vmatpush1.bf16.msra.mxu0 %v5834
        %5925 = vmatprep.subr.bf16.mxu0 0
        %5926 = vmatpush1.bf16.msra.mxu0 %v5833
        %5927 = vmatprep.subr.bf16.mxu0 0
        %5928 = vmatpush1.bf16.msra.mxu0 %v5832
        %5929 = vmatprep.subr.bf16.mxu0 0
        %5930 = vmatpush1.bf16.msra.mxu0 %v5831
        %5931 = vmatprep.subr.bf16.mxu0 0
        %5932 = vmatpush2.bf16.msra.mxu0 0
        %5933 = vmatprep.subr.bf16.mxu0 0
        %5934 = vmatpush2.bf16.msra.mxu0 0
        %5935 = vmatprep.subr.bf16.mxu0 0
        %5936 = vmatpush2.bf16.msra.mxu0 0
        %5937 = vmatprep.subr.bf16.mxu0 0
        %5938 = vmatpush2.bf16.msra.mxu0 0
        %5939 = vmatprep.subr.bf16.mxu0 0
        %5940 = vmatpush2.bf16.msra.mxu0 0
        %5941 = vmatprep.subr.bf16.mxu0 0
        %5942 = vmatpush2.bf16.msra.mxu0 0
        %5943 = vmatprep.subr.bf16.mxu0 0
        %5944 = vmatpush2.bf16.msra.mxu0 0
        %5945 = vmatprep.subr.bf16.mxu0 0
        %5946 = vmatpush2.bf16.msra.mxu0 0
        %5947 = vmatprep.mubr.bf16.mxu0 0
        %5948 = vmatmul.mubr.bf16.gmra.mxu0 %v5868
        %v5949 = vpop.f32.mrf.mxu0
        %v5950 = vadd.f32 1e-06, %v5949
        %v5951 = vpop.f32.mrf.mxu0
        %v5952 = vpop.f32.mrf.mxu0
        %v5953 = vadd.f32 1e-06, %v5952
        %v5954 = vpop.f32.mrf.mxu0
        %5955 = vmatprep.mubr.bf16.mxu0 0
        %5956 = vmatmul.mubr.bf16.gmra.mxu0 %v5871
        %v5957 = vpop.f32.mrf.mxu0
        %v5958 = vadd.f32 1e-06, %v5957
        %v5959 = vpop.f32.mrf.mxu0
        %v5960 = vpop.f32.mrf.mxu0
        %v5961 = vadd.f32 1e-06, %v5960
        %v5962 = vpop.f32.mrf.mxu0
        %5963 = vmatprep.mubr.bf16.mxu0 0
        %5964 = vmatmul.mubr.bf16.gmra.mxu0 %v5874
        %v5965 = vpop.f32.mrf.mxu0
        %v5966 = vadd.f32 1e-06, %v5965
        %v5967 = vpop.f32.mrf.mxu0
        %v5968 = vpop.f32.mrf.mxu0
        %v5969 = vadd.f32 1e-06, %v5968
        %v5970 = vpop.f32.mrf.mxu0
        %5971 = vmatprep.mubr.bf16.mxu0 0
        %5972 = vmatmul.mubr.bf16.gmra.mxu0 %v5877
        %v5973 = vpop.f32.mrf.mxu0
        %v5974 = vadd.f32 1e-06, %v5973
        %v5975 = vpop.f32.mrf.mxu0
        %v5976 = vpop.f32.mrf.mxu0
        %v5977 = vadd.f32 1e-06, %v5976
        %v5978 = vpop.f32.mrf.mxu0
        %5979 = vmatprep.mubr.bf16.mxu0 0
        %5980 = vmatmul.mubr.bf16.gmra.mxu0 %v5880
        %v5981 = vpop.f32.mrf.mxu0
        %v5982 = vadd.f32 1e-06, %v5981
        %v5983 = vpop.f32.mrf.mxu0
        %v5984 = vpop.f32.mrf.mxu0
        %v5985 = vadd.f32 1e-06, %v5984
        %v5986 = vpop.f32.mrf.mxu0
        %5987 = vmatprep.mubr.bf16.mxu0 0
        %5988 = vmatmul.mubr.bf16.gmra.mxu0 %v5883
        %v5989 = vpop.f32.mrf.mxu0
        %v5990 = vadd.f32 1e-06, %v5989
        %v5991 = vpop.f32.mrf.mxu0
        %v5992 = vpop.f32.mrf.mxu0
        %v5993 = vadd.f32 1e-06, %v5992
        %v5994 = vpop.f32.mrf.mxu0
        %5995 = vmatprep.mubr.bf16.mxu0 0
        %5996 = vmatmul.mubr.bf16.gmra.mxu0 %v5886
        %v5997 = vpop.f32.mrf.mxu0
        %v5998 = vadd.f32 1e-06, %v5997
        %v5999 = vpop.f32.mrf.mxu0
        %v6000 = vpop.f32.mrf.mxu0
        %v6001 = vadd.f32 1e-06, %v6000
        %v6002 = vpop.f32.mrf.mxu0
        %6003 = vmatprep.mubr.bf16.mxu0 0
        %6004 = vmatmul.mubr.bf16.gmra.mxu0 %v5889
        %v6005 = vpop.f32.mrf.mxu0
        %v6006 = vadd.f32 1e-06, %v6005
        %v6007 = vpop.f32.mrf.mxu0
        %v6008 = vpop.f32.mrf.mxu0
        %v6009 = vadd.f32 1e-06, %v6008
        %v6010 = vpop.f32.mrf.mxu0
        %6011 = vmatprep.mubr.bf16.mxu0 0
        %6012 = vmatmul.mubr.bf16.gmra.mxu0 %v5892
        %v6013 = vpop.f32.mrf.mxu0
        %v6014 = vadd.f32 1e-06, %v6013
        %v6015 = vpop.f32.mrf.mxu0
        %v6016 = vpop.f32.mrf.mxu0
        %v6017 = vadd.f32 1e-06, %v6016
        %v6018 = vpop.f32.mrf.mxu0
        %6019 = vmatprep.mubr.bf16.mxu0 0
        %6020 = vmatmul.mubr.bf16.gmra.mxu0 %v5895
        %v6021 = vpop.f32.mrf.mxu0
        %v6022 = vadd.f32 1e-06, %v6021
        %v6023 = vpop.f32.mrf.mxu0
        %v6024 = vpop.f32.mrf.mxu0
        %v6025 = vadd.f32 1e-06, %v6024
        %v6026 = vpop.f32.mrf.mxu0
        %6027 = vmatprep.mubr.bf16.mxu0 0
        %6028 = vmatmul.mubr.bf16.gmra.mxu0 %v5898
        %v6029 = vpop.f32.mrf.mxu0
        %v6030 = vadd.f32 1e-06, %v6029
        %v6031 = vpop.f32.mrf.mxu0
        %v6032 = vpop.f32.mrf.mxu0
        %v6033 = vadd.f32 1e-06, %v6032
        %v6034 = vpop.f32.mrf.mxu0
        %6035 = vmatprep.mubr.bf16.mxu0 0
        %6036 = vmatmul.mubr.bf16.gmra.mxu0 %v5901
        %v6037 = vpop.f32.mrf.mxu0
        %v6038 = vadd.f32 1e-06, %v6037
        %v6039 = vpop.f32.mrf.mxu0
        %v6040 = vpop.f32.mrf.mxu0
        %v6041 = vadd.f32 1e-06, %v6040
        %v6042 = vpop.f32.mrf.mxu0
        %6043 = vmatprep.mubr.bf16.mxu0 0
        %6044 = vmatmul.mubr.bf16.gmra.mxu0 %v5904
        %v6045 = vpop.f32.mrf.mxu0
        %v6046 = vadd.f32 1e-06, %v6045
        %v6047 = vpop.f32.mrf.mxu0
        %v6048 = vpop.f32.mrf.mxu0
        %v6049 = vadd.f32 1e-06, %v6048
        %v6050 = vpop.f32.mrf.mxu0
        %6051 = vmatprep.mubr.bf16.mxu0 0
        %6052 = vmatmul.mubr.bf16.gmra.mxu0 %v5907
        %v6053 = vpop.f32.mrf.mxu0
        %v6054 = vadd.f32 1e-06, %v6053
        %v6055 = vpop.f32.mrf.mxu0
        %v6056 = vpop.f32.mrf.mxu0
        %v6057 = vadd.f32 1e-06, %v6056
        %v6058 = vpop.f32.mrf.mxu0
        %6059 = vmatprep.mubr.bf16.mxu0 0
        %6060 = vmatmul.mubr.bf16.gmra.mxu0 %v5910
        %v6061 = vpop.f32.mrf.mxu0
        %v6062 = vadd.f32 1e-06, %v6061
        %v6063 = vpop.f32.mrf.mxu0
        %v6064 = vpop.f32.mrf.mxu0
        %v6065 = vadd.f32 1e-06, %v6064
        %v6066 = vpop.f32.mrf.mxu0
        %6067 = vmatprep.mubr.bf16.mxu0 0
        %6068 = vmatmul.mubr.bf16.gmra.mxu0 %v5913
        %v6069 = vpop.f32.mrf.mxu0
        %v6070 = vadd.f32 1e-06, %v6069
        %v6071 = vpop.f32.mrf.mxu0
        %v6072 = vpop.f32.mrf.mxu0
        %v6073 = vadd.f32 1e-06, %v6072
        %v6074 = vpop.f32.mrf.mxu0
        %6075 = vdwg.mxu0
        %v6076 = vrcp.pop %v5950
        %v6077 = vrcp.pop %v5953
        %v6078 = vrcp.pop %v5958
        %v6079 = vrcp.pop %v5961
        %v6080 = vrcp.pop %v5966
        %v6081 = vrcp.pop %v5969
        %v6082 = vrcp.pop %v5974
        %v6083 = vrcp.pop %v5977
        %v6084 = vrcp.pop %v5982
        %v6085 = vrcp.pop %v5985
        %v6086 = vrcp.pop %v5990
        %v6087 = vrcp.pop %v5993
        %v6088 = vrcp.pop %v5998
        %v6089 = vrcp.pop %v6001
        %v6090 = vrcp.pop %v6006
        %v6091 = vrcp.pop %v6009
        %v6092 = vrcp.pop %v6014
        %v6093 = vrcp.pop %v6017
        %v6094 = vrcp.pop %v6022
        %v6095 = vrcp.pop %v6025
        %v6096 = vrcp.pop %v6030
        %v6097 = vrcp.pop %v6033
        %v6098 = vrcp.pop %v6038
        %v6099 = vrcp.pop %v6041
        %v6100 = vrcp.pop %v6046
        %v6101 = vrcp.pop %v6049
        %v6102 = vrcp.pop %v6054
        %v6103 = vrcp.pop %v6057
        %v6104 = vrcp.pop %v6062
        %v6105 = vrcp.pop %v6065
        %v6106 = vrcp.pop %v6070
        %v6107 = vrcp.pop %v6073
        %v6108 = vmul.f32 %v5835, %v6076
        %v6109 = vmul.f32 %v5836, %v6077
        %v6110 = vmul.f32 %v5837, %v6078
        %v6111 = vmul.f32 %v5838, %v6079
        %v6112 = vmul.f32 %v5839, %v6080
        %v6113 = vmul.f32 %v5840, %v6081
        %v6114 = vmul.f32 %v5841, %v6082
        %v6115 = vmul.f32 %v5842, %v6083
        %v6116 = vmul.f32 %v5843, %v6084
        %v6117 = vmul.f32 %v5844, %v6085
        %v6118 = vmul.f32 %v5845, %v6086
        %v6119 = vmul.f32 %v5846, %v6087
        %v6120 = vmul.f32 %v5847, %v6088
        %v6121 = vmul.f32 %v5848, %v6089
        %v6122 = vmul.f32 %v5849, %v6090
        %v6123 = vmul.f32 %v5850, %v6091
        %v6124 = vmul.f32 %v5851, %v6092
        %v6125 = vmul.f32 %v5852, %v6093
        %v6126 = vmul.f32 %v5853, %v6094
        %v6127 = vmul.f32 %v5854, %v6095
        %v6128 = vmul.f32 %v5855, %v6096
        %v6129 = vmul.f32 %v5856, %v6097
        %v6130 = vmul.f32 %v5857, %v6098
        %v6131 = vmul.f32 %v5858, %v6099
        %v6132 = vmul.f32 %v5859, %v6100
        %v6133 = vmul.f32 %v5860, %v6101
        %v6134 = vmul.f32 %v5861, %v6102
        %v6135 = vmul.f32 %v5862, %v6103
        %v6136 = vmul.f32 %v5863, %v6104
        %v6137 = vmul.f32 %v5864, %v6105
        %v6138 = vmul.f32 %v5865, %v6106
        %v6139 = vmul.f32 %v5866, %v6107
        %v6140 = vpack.c.bf16 %v6109, %v6108
        %v6141 = vpack.c.bf16 %v6111, %v6110
        %v6142 = vpack.c.bf16 %v6113, %v6112
        %v6143 = vpack.c.bf16 %v6115, %v6114
        %v6144 = vpack.c.bf16 %v6117, %v6116
        %v6145 = vpack.c.bf16 %v6119, %v6118
        %v6146 = vpack.c.bf16 %v6121, %v6120
        %v6147 = vpack.c.bf16 %v6123, %v6122
        %v6148 = vpack.c.bf16 %v6125, %v6124
        %v6149 = vpack.c.bf16 %v6127, %v6126
        %v6150 = vpack.c.bf16 %v6129, %v6128
        %v6151 = vpack.c.bf16 %v6131, %v6130
        %v6152 = vpack.c.bf16 %v6133, %v6132
        %v6153 = vpack.c.bf16 %v6135, %v6134
        %v6154 = vpack.c.bf16 %v6137, %v6136
        %v6155 = vpack.c.bf16 %v6139, %v6138
        %6156 = vmatprep.subr.bf16.mxu0 0
        %6157 = vmatpush1.bf16.msra.mxu0 %v6147
        %6158 = vmatprep.subr.bf16.mxu0 0
        %6159 = vmatpush1.bf16.msra.mxu0 %v6146
        %6160 = vmatprep.subr.bf16.mxu0 0
        %6161 = vmatpush1.bf16.msra.mxu0 %v6145
        %6162 = vmatprep.subr.bf16.mxu0 0
        %6163 = vmatpush1.bf16.msra.mxu0 %v6144
        %6164 = vmatprep.subr.bf16.mxu0 0
        %6165 = vmatpush1.bf16.msra.mxu0 %v6143
        %6166 = vmatprep.subr.bf16.mxu0 0
        %6167 = vmatpush1.bf16.msra.mxu0 %v6142
        %6168 = vmatprep.subr.bf16.mxu0 0
        %6169 = vmatpush1.bf16.msra.mxu0 %v6141
        %6170 = vmatprep.subr.bf16.mxu0 0
        %6171 = vmatpush1.bf16.msra.mxu0 %v6140
        %6172 = vmatprep.subr.bf16.mxu0 0
        %6173 = vmatpush2.bf16.msra.mxu0 %v6155
        %6174 = vmatprep.subr.bf16.mxu0 0
        %6175 = vmatpush2.bf16.msra.mxu0 %v6154
        %6176 = vmatprep.subr.bf16.mxu0 0
        %6177 = vmatpush2.bf16.msra.mxu0 %v6153
        %6178 = vmatprep.subr.bf16.mxu0 0
        %6179 = vmatpush2.bf16.msra.mxu0 %v6152
        %6180 = vmatprep.subr.bf16.mxu0 0
        %6181 = vmatpush2.bf16.msra.mxu0 %v6151
        %6182 = vmatprep.subr.bf16.mxu0 0
        %6183 = vmatpush2.bf16.msra.mxu0 %v6150
        %6184 = vmatprep.subr.bf16.mxu0 0
        %6185 = vmatpush2.bf16.msra.mxu0 %v6149
        %6186 = vmatprep.subr.bf16.mxu0 0
        %6187 = vmatpush2.bf16.msra.mxu0 %v6148
        %6188 = vmatprep.mubr.bf16.mxu0 %v1415
        %6189 = vmatmul.mubr.bf16.gmra.mxu0 %v1414
        %v6190 = vpop.f32.mrf.mxu0
        %v6191 = vadd.f32 0.0, %v6190
        %v6192 = vpop.f32.mrf.mxu0
        %v6193 = vpop.f32.mrf.mxu0
        %v6194 = vadd.f32 0.0, %v6193
        %v6195 = vpop.f32.mrf.mxu0
        %6196 = vmatprep.mubr.bf16.mxu0 %v1417
        %6197 = vmatmul.mubr.bf16.gmra.mxu0 %v1416
        %v6198 = vpop.f32.mrf.mxu0
        %v6199 = vadd.f32 0.0, %v6198
        %v6200 = vpop.f32.mrf.mxu0
        %v6201 = vpop.f32.mrf.mxu0
        %v6202 = vadd.f32 0.0, %v6201
        %v6203 = vpop.f32.mrf.mxu0
        %6204 = vmatprep.mubr.bf16.mxu0 %v1419
        %6205 = vmatmul.mubr.bf16.gmra.mxu0 %v1418
        %v6206 = vpop.f32.mrf.mxu0
        %v6207 = vadd.f32 0.0, %v6206
        %v6208 = vpop.f32.mrf.mxu0
        %v6209 = vpop.f32.mrf.mxu0
        %v6210 = vadd.f32 0.0, %v6209
        %v6211 = vpop.f32.mrf.mxu0
        %6212 = vmatprep.mubr.bf16.mxu0 %v1421
        %6213 = vmatmul.mubr.bf16.gmra.mxu0 %v1420
        %v6214 = vpop.f32.mrf.mxu0
        %v6215 = vadd.f32 0.0, %v6214
        %v6216 = vpop.f32.mrf.mxu0
        %v6217 = vpop.f32.mrf.mxu0
        %v6218 = vadd.f32 0.0, %v6217
        %v6219 = vpop.f32.mrf.mxu0
        %6220 = vmatprep.mubr.bf16.mxu0 %v1423
        %6221 = vmatmul.mubr.bf16.gmra.mxu0 %v1422
        %v6222 = vpop.f32.mrf.mxu0
        %v6223 = vadd.f32 0.0, %v6222
        %v6224 = vpop.f32.mrf.mxu0
        %v6225 = vpop.f32.mrf.mxu0
        %v6226 = vadd.f32 0.0, %v6225
        %v6227 = vpop.f32.mrf.mxu0
        %6228 = vmatprep.mubr.bf16.mxu0 %v1425
        %6229 = vmatmul.mubr.bf16.gmra.mxu0 %v1424
        %v6230 = vpop.f32.mrf.mxu0
        %v6231 = vadd.f32 0.0, %v6230
        %v6232 = vpop.f32.mrf.mxu0
        %v6233 = vpop.f32.mrf.mxu0
        %v6234 = vadd.f32 0.0, %v6233
        %v6235 = vpop.f32.mrf.mxu0
        %6236 = vmatprep.mubr.bf16.mxu0 %v1427
        %6237 = vmatmul.mubr.bf16.gmra.mxu0 %v1426
        %v6238 = vpop.f32.mrf.mxu0
        %v6239 = vadd.f32 0.0, %v6238
        %v6240 = vpop.f32.mrf.mxu0
        %v6241 = vpop.f32.mrf.mxu0
        %v6242 = vadd.f32 0.0, %v6241
        %v6243 = vpop.f32.mrf.mxu0
        %6244 = vmatprep.mubr.bf16.mxu0 %v1429
        %6245 = vmatmul.mubr.bf16.gmra.mxu0 %v1428
        %v6246 = vpop.f32.mrf.mxu0
        %v6247 = vadd.f32 0.0, %v6246
        %v6248 = vpop.f32.mrf.mxu0
        %v6249 = vpop.f32.mrf.mxu0
        %v6250 = vadd.f32 0.0, %v6249
        %v6251 = vpop.f32.mrf.mxu0
        %6252 = vdwg.mxu0
        %6253 = vxpose.xlu0.c.b16.start [1/8] %v6140, 128
        %6254 = vxpose.xlu0.c.b16.cont [2/8] %v6141, 128
        %6255 = vxpose.xlu0.c.b16.cont [3/8] %v6142, 128
        %6256 = vxpose.xlu0.c.b16.cont [4/8] %v6143, 128
        %6257 = vxpose.xlu0.c.b16.cont [5/8] %v6144, 128
        %6258 = vxpose.xlu0.c.b16.cont [6/8] %v6145, 128
        %6259 = vxpose.xlu0.c.b16.cont [7/8] %v6146, 128
        %6260 = vxpose.xlu0.c.b16.end [8/8] %v6147, 128
        %v6261 = vpop.trf.xlu0
        %v6262 = vpop.trf.xlu0
        %v6263 = vpop.trf.xlu0
        %v6264 = vpop.trf.xlu0
        %v6265 = vpop.trf.xlu0
        %v6266 = vpop.trf.xlu0
        %v6267 = vpop.trf.xlu0
        %v6268 = vpop.trf.xlu0
        %6269 = vxpose.xlu0.c.b16.start [1/8] %v6148, 128
        %6270 = vxpose.xlu0.c.b16.cont [2/8] %v6149, 128
        %6271 = vxpose.xlu0.c.b16.cont [3/8] %v6150, 128
        %6272 = vxpose.xlu0.c.b16.cont [4/8] %v6151, 128
        %6273 = vxpose.xlu0.c.b16.cont [5/8] %v6152, 128
        %6274 = vxpose.xlu0.c.b16.cont [6/8] %v6153, 128
        %6275 = vxpose.xlu0.c.b16.cont [7/8] %v6154, 128
        %6276 = vxpose.xlu0.c.b16.end [8/8] %v6155, 128
        %v6277 = vpop.trf.xlu0
        %v6278 = vpop.trf.xlu0
        %v6279 = vpop.trf.xlu0
        %v6280 = vpop.trf.xlu0
        %v6281 = vpop.trf.xlu0
        %v6282 = vpop.trf.xlu0
        %v6283 = vpop.trf.xlu0
        %v6284 = vpop.trf.xlu0
        %6285 = vmatprep.subr.bf16.mxu0 0
        %6286 = vmatpush1.bf16.msra.mxu0 %v6147
        %6287 = vmatprep.subr.bf16.mxu0 0
        %6288 = vmatpush1.bf16.msra.mxu0 %v6146
        %6289 = vmatprep.subr.bf16.mxu0 0
        %6290 = vmatpush1.bf16.msra.mxu0 %v6145
        %6291 = vmatprep.subr.bf16.mxu0 0
        %6292 = vmatpush1.bf16.msra.mxu0 %v6144
        %6293 = vmatprep.subr.bf16.mxu0 0
        %6294 = vmatpush1.bf16.msra.mxu0 %v6143
        %6295 = vmatprep.subr.bf16.mxu0 0
        %6296 = vmatpush1.bf16.msra.mxu0 %v6142
        %6297 = vmatprep.subr.bf16.mxu0 0
        %6298 = vmatpush1.bf16.msra.mxu0 %v6141
        %6299 = vmatprep.subr.bf16.mxu0 0
        %6300 = vmatpush1.bf16.msra.mxu0 %v6140
        %6301 = vmatprep.subr.bf16.mxu0 0
        %6302 = vmatpush2.bf16.msra.mxu0 %v6155
        %6303 = vmatprep.subr.bf16.mxu0 0
        %6304 = vmatpush2.bf16.msra.mxu0 %v6154
        %6305 = vmatprep.subr.bf16.mxu0 0
        %6306 = vmatpush2.bf16.msra.mxu0 %v6153
        %6307 = vmatprep.subr.bf16.mxu0 0
        %6308 = vmatpush2.bf16.msra.mxu0 %v6152
        %6309 = vmatprep.subr.bf16.mxu0 0
        %6310 = vmatpush2.bf16.msra.mxu0 %v6151
        %6311 = vmatprep.subr.bf16.mxu0 0
        %6312 = vmatpush2.bf16.msra.mxu0 %v6150
        %6313 = vmatprep.subr.bf16.mxu0 0
        %6314 = vmatpush2.bf16.msra.mxu0 %v6149
        %6315 = vmatprep.subr.bf16.mxu0 0
        %6316 = vmatpush2.bf16.msra.mxu0 %v6148
        %6317 = vmatprep.mubr.bf16.mxu0 %v6277
        %6318 = vmatmul.mubr.bf16.gmra.mxu0 %v6261
        %v6319 = vpop.f32.mrf.mxu0
        %v6320 = vadd.f32 0.0, %v6319
        %v6321 = vpop.f32.mrf.mxu0
        %v6322 = vpop.f32.mrf.mxu0
        %v6323 = vadd.f32 0.0, %v6322
        %v6324 = vpop.f32.mrf.mxu0
        %6325 = vmatprep.mubr.bf16.mxu0 %v6278
        %6326 = vmatmul.mubr.bf16.gmra.mxu0 %v6262
        %v6327 = vpop.f32.mrf.mxu0
        %v6328 = vadd.f32 0.0, %v6327
        %v6329 = vpop.f32.mrf.mxu0
        %v6330 = vpop.f32.mrf.mxu0
        %v6331 = vadd.f32 0.0, %v6330
        %v6332 = vpop.f32.mrf.mxu0
        %6333 = vmatprep.mubr.bf16.mxu0 %v6279
        %6334 = vmatmul.mubr.bf16.gmra.mxu0 %v6263
        %v6335 = vpop.f32.mrf.mxu0
        %v6336 = vadd.f32 0.0, %v6335
        %v6337 = vpop.f32.mrf.mxu0
        %v6338 = vpop.f32.mrf.mxu0
        %v6339 = vadd.f32 0.0, %v6338
        %v6340 = vpop.f32.mrf.mxu0
        %6341 = vmatprep.mubr.bf16.mxu0 %v6280
        %6342 = vmatmul.mubr.bf16.gmra.mxu0 %v6264
        %v6343 = vpop.f32.mrf.mxu0
        %v6344 = vadd.f32 0.0, %v6343
        %v6345 = vpop.f32.mrf.mxu0
        %v6346 = vpop.f32.mrf.mxu0
        %v6347 = vadd.f32 0.0, %v6346
        %v6348 = vpop.f32.mrf.mxu0
        %6349 = vdwg.mxu0
        %v6350 = vpack.c.bf16 %v6323, %v6320
        %v6351 = vpack.c.bf16 %v6331, %v6328
        %v6352 = vpack.c.bf16 %v6339, %v6336
        %v6353 = vpack.c.bf16 %v6347, %v6344
        %v6354 = vmul.f32 %v5565, %v6191
        %v6355 = vmul.f32 %v5566, %v6194
        %v6356 = vmul.f32 %v5567, %v6199
        %v6357 = vmul.f32 %v5568, %v6202
        %v6358 = vmul.f32 %v5569, %v6207
        %v6359 = vmul.f32 %v5570, %v6210
        %v6360 = vmul.f32 %v5571, %v6215
        %v6361 = vmul.f32 %v5572, %v6218
        %v6362 = vmul.f32 %v5573, %v6223
        %v6363 = vmul.f32 %v5574, %v6226
        %v6364 = vmul.f32 %v5575, %v6231
        %v6365 = vmul.f32 %v5576, %v6234
        %v6366 = vmul.f32 %v5577, %v6239
        %v6367 = vmul.f32 %v5578, %v6242
        %v6368 = vmul.f32 %v5579, %v6247
        %v6369 = vmul.f32 %v5580, %v6250
        %v6371 = vsel %vm559, %v5581, 0
        %v6374 = vsel %vm559, %v5582, 0
        %v6377 = vsel %vm559, %v5583, 0
        %v6380 = vsel %vm559, %v5584, 0
        %v6383 = vsel %vm559, %v5585, 0
        %v6386 = vsel %vm559, %v5586, 0
        %v6389 = vsel %vm559, %v5587, 0
        %v6392 = vsel %vm559, %v5588, 0
        %6394 = vmatprep.subr.bf16.mxu0 0
        %6395 = vmatpush1.bf16.msra.mxu0 0
        %6396 = vmatprep.subr.bf16.mxu0 0
        %6397 = vmatpush1.bf16.msra.mxu0 0
        %6398 = vmatprep.subr.bf16.mxu0 0
        %6399 = vmatpush1.bf16.msra.mxu0 0
        %6400 = vmatprep.subr.bf16.mxu0 0
        %6401 = vmatpush1.bf16.msra.mxu0 0
        %6402 = vmatprep.subr.bf16.mxu0 0
        %6403 = vmatpush1.bf16.msra.mxu0 %v6353
        %6404 = vmatprep.subr.bf16.mxu0 0
        %6405 = vmatpush1.bf16.msra.mxu0 %v6352
        %6406 = vmatprep.subr.bf16.mxu0 0
        %6407 = vmatpush1.bf16.msra.mxu0 %v6351
        %6408 = vmatprep.subr.bf16.mxu0 0
        %6409 = vmatpush1.bf16.msra.mxu0 %v6350
        %6410 = vmatprep.subr.bf16.mxu0 0
        %6411 = vmatpush2.bf16.msra.mxu0 0
        %6412 = vmatprep.subr.bf16.mxu0 0
        %6413 = vmatpush2.bf16.msra.mxu0 0
        %6414 = vmatprep.subr.bf16.mxu0 0
        %6415 = vmatpush2.bf16.msra.mxu0 0
        %6416 = vmatprep.subr.bf16.mxu0 0
        %6417 = vmatpush2.bf16.msra.mxu0 0
        %6418 = vmatprep.subr.bf16.mxu0 0
        %6419 = vmatpush2.bf16.msra.mxu0 0
        %6420 = vmatprep.subr.bf16.mxu0 0
        %6421 = vmatpush2.bf16.msra.mxu0 0
        %6422 = vmatprep.subr.bf16.mxu0 0
        %6423 = vmatpush2.bf16.msra.mxu0 0
        %6424 = vmatprep.subr.bf16.mxu0 0
        %6425 = vmatpush2.bf16.msra.mxu0 0
        %6426 = vmatprep.mubr.bf16.mxu0 0
        %6427 = vmatmul.mubr.bf16.gmra.mxu0 %v6371
        %v6428 = vpop.f32.mrf.mxu0
        %v6429 = vadd.f32 1e-06, %v6428
        %v6430 = vpop.f32.mrf.mxu0
        %v6431 = vpop.f32.mrf.mxu0
        %v6432 = vadd.f32 1e-06, %v6431
        %v6433 = vpop.f32.mrf.mxu0
        %6434 = vmatprep.mubr.bf16.mxu0 0
        %6435 = vmatmul.mubr.bf16.gmra.mxu0 %v6374
        %v6436 = vpop.f32.mrf.mxu0
        %v6437 = vadd.f32 1e-06, %v6436
        %v6438 = vpop.f32.mrf.mxu0
        %v6439 = vpop.f32.mrf.mxu0
        %v6440 = vadd.f32 1e-06, %v6439
        %v6441 = vpop.f32.mrf.mxu0
        %6442 = vmatprep.mubr.bf16.mxu0 0
        %6443 = vmatmul.mubr.bf16.gmra.mxu0 %v6377
        %v6444 = vpop.f32.mrf.mxu0
        %v6445 = vadd.f32 1e-06, %v6444
        %v6446 = vpop.f32.mrf.mxu0
        %v6447 = vpop.f32.mrf.mxu0
        %v6448 = vadd.f32 1e-06, %v6447
        %v6449 = vpop.f32.mrf.mxu0
        %6450 = vmatprep.mubr.bf16.mxu0 0
        %6451 = vmatmul.mubr.bf16.gmra.mxu0 %v6380
        %v6452 = vpop.f32.mrf.mxu0
        %v6453 = vadd.f32 1e-06, %v6452
        %v6454 = vpop.f32.mrf.mxu0
        %v6455 = vpop.f32.mrf.mxu0
        %v6456 = vadd.f32 1e-06, %v6455
        %v6457 = vpop.f32.mrf.mxu0
        %6458 = vmatprep.mubr.bf16.mxu0 0
        %6459 = vmatmul.mubr.bf16.gmra.mxu0 %v6383
        %v6460 = vpop.f32.mrf.mxu0
        %v6461 = vadd.f32 1e-06, %v6460
        %v6462 = vpop.f32.mrf.mxu0
        %v6463 = vpop.f32.mrf.mxu0
        %v6464 = vadd.f32 1e-06, %v6463
        %v6465 = vpop.f32.mrf.mxu0
        %6466 = vmatprep.mubr.bf16.mxu0 0
        %6467 = vmatmul.mubr.bf16.gmra.mxu0 %v6386
        %v6468 = vpop.f32.mrf.mxu0
        %v6469 = vadd.f32 1e-06, %v6468
        %v6470 = vpop.f32.mrf.mxu0
        %v6471 = vpop.f32.mrf.mxu0
        %v6472 = vadd.f32 1e-06, %v6471
        %v6473 = vpop.f32.mrf.mxu0
        %6474 = vmatprep.mubr.bf16.mxu0 0
        %6475 = vmatmul.mubr.bf16.gmra.mxu0 %v6389
        %v6476 = vpop.f32.mrf.mxu0
        %v6477 = vadd.f32 1e-06, %v6476
        %v6478 = vpop.f32.mrf.mxu0
        %v6479 = vpop.f32.mrf.mxu0
        %v6480 = vadd.f32 1e-06, %v6479
        %v6481 = vpop.f32.mrf.mxu0
        %6482 = vmatprep.mubr.bf16.mxu0 0
        %6483 = vmatmul.mubr.bf16.gmra.mxu0 %v6392
        %v6484 = vpop.f32.mrf.mxu0
        %v6485 = vadd.f32 1e-06, %v6484
        %v6486 = vpop.f32.mrf.mxu0
        %v6487 = vpop.f32.mrf.mxu0
        %v6488 = vadd.f32 1e-06, %v6487
        %v6489 = vpop.f32.mrf.mxu0
        %6490 = vdwg.mxu0
        %v6491 = vrcp.pop %v6429
        %v6492 = vrcp.pop %v6432
        %v6493 = vrcp.pop %v6437
        %v6494 = vrcp.pop %v6440
        %v6495 = vrcp.pop %v6445
        %v6496 = vrcp.pop %v6448
        %v6497 = vrcp.pop %v6453
        %v6498 = vrcp.pop %v6456
        %v6499 = vrcp.pop %v6461
        %v6500 = vrcp.pop %v6464
        %v6501 = vrcp.pop %v6469
        %v6502 = vrcp.pop %v6472
        %v6503 = vrcp.pop %v6477
        %v6504 = vrcp.pop %v6480
        %v6505 = vrcp.pop %v6485
        %v6506 = vrcp.pop %v6488
        %v6507 = vmul.f32 %v6354, %v6491
        %v6508 = vmul.f32 %v6355, %v6492
        %v6509 = vmul.f32 %v6356, %v6493
        %v6510 = vmul.f32 %v6357, %v6494
        %v6511 = vmul.f32 %v6358, %v6495
        %v6512 = vmul.f32 %v6359, %v6496
        %v6513 = vmul.f32 %v6360, %v6497
        %v6514 = vmul.f32 %v6361, %v6498
        %v6515 = vmul.f32 %v6362, %v6499
        %v6516 = vmul.f32 %v6363, %v6500
        %v6517 = vmul.f32 %v6364, %v6501
        %v6518 = vmul.f32 %v6365, %v6502
        %v6519 = vmul.f32 %v6366, %v6503
        %v6520 = vmul.f32 %v6367, %v6504
        %v6521 = vmul.f32 %v6368, %v6505
        %v6522 = vmul.f32 %v6369, %v6506
        %v6523 = vpack.c.bf16 %v6508, %v6507
        %v6524 = vpack.c.bf16 %v6510, %v6509
        %v6525 = vpack.c.bf16 %v6512, %v6511
        %v6526 = vpack.c.bf16 %v6514, %v6513
        %v6527 = vpack.c.bf16 %v6516, %v6515
        %v6528 = vpack.c.bf16 %v6518, %v6517
        %v6529 = vpack.c.bf16 %v6520, %v6519
        %v6530 = vpack.c.bf16 %v6522, %v6521
        %6531 = vmatprep.subr.bf16.mxu0 0
        %6532 = vmatpush1.bf16.msra.mxu0 %v6530
        %6533 = vmatprep.subr.bf16.mxu0 0
        %6534 = vmatpush1.bf16.msra.mxu0 %v6529
        %6535 = vmatprep.subr.bf16.mxu0 0
        %6536 = vmatpush1.bf16.msra.mxu0 %v6528
        %6537 = vmatprep.subr.bf16.mxu0 0
        %6538 = vmatpush1.bf16.msra.mxu0 %v6527
        %6539 = vmatprep.subr.bf16.mxu0 0
        %6540 = vmatpush1.bf16.msra.mxu0 %v6526
        %6541 = vmatprep.subr.bf16.mxu0 0
        %6542 = vmatpush1.bf16.msra.mxu0 %v6525
        %6543 = vmatprep.subr.bf16.mxu0 0
        %6544 = vmatpush1.bf16.msra.mxu0 %v6524
        %6545 = vmatprep.subr.bf16.mxu0 0
        %6546 = vmatpush1.bf16.msra.mxu0 %v6523
        %6547 = vmatprep.subr.bf16.mxu0 0
        %6548 = vmatpush2.bf16.msra.mxu0 0
        %6549 = vmatprep.subr.bf16.mxu0 0
        %6550 = vmatpush2.bf16.msra.mxu0 0
        %6551 = vmatprep.subr.bf16.mxu0 0
        %6552 = vmatpush2.bf16.msra.mxu0 0
        %6553 = vmatprep.subr.bf16.mxu0 0
        %6554 = vmatpush2.bf16.msra.mxu0 0
        %6555 = vmatprep.subr.bf16.mxu0 0
        %6556 = vmatpush2.bf16.msra.mxu0 0
        %6557 = vmatprep.subr.bf16.mxu0 0
        %6558 = vmatpush2.bf16.msra.mxu0 0
        %6559 = vmatprep.subr.bf16.mxu0 0
        %6560 = vmatpush2.bf16.msra.mxu0 0
        %6561 = vmatprep.subr.bf16.mxu0 0
        %6562 = vmatpush2.bf16.msra.mxu0 0
        %6563 = vmatprep.mubr.bf16.mxu0 0
        %6564 = vmatmul.mubr.bf16.gmra.mxu0 %v366
        %v6565 = vpop.f32.mrf.mxu0
        %v6566 = vadd.f32 0.0, %v6565
        %v6567 = vpop.f32.mrf.mxu0
        %v6568 = vpop.f32.mrf.mxu0
        %v6569 = vadd.f32 0.0, %v6568
        %v6570 = vpop.f32.mrf.mxu0
        %6571 = vmatprep.mubr.bf16.mxu0 0
        %6572 = vmatmul.mubr.bf16.gmra.mxu0 %v367
        %v6573 = vpop.f32.mrf.mxu0
        %v6574 = vadd.f32 0.0, %v6573
        %v6575 = vpop.f32.mrf.mxu0
        %v6576 = vpop.f32.mrf.mxu0
        %v6577 = vadd.f32 0.0, %v6576
        %v6578 = vpop.f32.mrf.mxu0
        %6579 = vmatprep.mubr.bf16.mxu0 0
        %6580 = vmatmul.mubr.bf16.gmra.mxu0 %v368
        %v6581 = vpop.f32.mrf.mxu0
        %v6582 = vadd.f32 0.0, %v6581
        %v6583 = vpop.f32.mrf.mxu0
        %v6584 = vpop.f32.mrf.mxu0
        %v6585 = vadd.f32 0.0, %v6584
        %v6586 = vpop.f32.mrf.mxu0
        %6587 = vmatprep.mubr.bf16.mxu0 0
        %6588 = vmatmul.mubr.bf16.gmra.mxu0 %v369
        %v6589 = vpop.f32.mrf.mxu0
        %v6590 = vadd.f32 0.0, %v6589
        %v6591 = vpop.f32.mrf.mxu0
        %v6592 = vpop.f32.mrf.mxu0
        %v6593 = vadd.f32 0.0, %v6592
        %v6594 = vpop.f32.mrf.mxu0
        %6595 = vmatprep.mubr.bf16.mxu0 0
        %6596 = vmatmul.mubr.bf16.gmra.mxu0 %v370
        %v6597 = vpop.f32.mrf.mxu0
        %v6598 = vadd.f32 0.0, %v6597
        %v6599 = vpop.f32.mrf.mxu0
        %v6600 = vpop.f32.mrf.mxu0
        %v6601 = vadd.f32 0.0, %v6600
        %v6602 = vpop.f32.mrf.mxu0
        %6603 = vmatprep.mubr.bf16.mxu0 0
        %6604 = vmatmul.mubr.bf16.gmra.mxu0 %v371
        %v6605 = vpop.f32.mrf.mxu0
        %v6606 = vadd.f32 0.0, %v6605
        %v6607 = vpop.f32.mrf.mxu0
        %v6608 = vpop.f32.mrf.mxu0
        %v6609 = vadd.f32 0.0, %v6608
        %v6610 = vpop.f32.mrf.mxu0
        %6611 = vmatprep.mubr.bf16.mxu0 0
        %6612 = vmatmul.mubr.bf16.gmra.mxu0 %v372
        %v6613 = vpop.f32.mrf.mxu0
        %v6614 = vadd.f32 0.0, %v6613
        %v6615 = vpop.f32.mrf.mxu0
        %v6616 = vpop.f32.mrf.mxu0
        %v6617 = vadd.f32 0.0, %v6616
        %v6618 = vpop.f32.mrf.mxu0
        %6619 = vmatprep.mubr.bf16.mxu0 0
        %6620 = vmatmul.mubr.bf16.gmra.mxu0 %v373
        %v6621 = vpop.f32.mrf.mxu0
        %v6622 = vadd.f32 0.0, %v6621
        %v6623 = vpop.f32.mrf.mxu0
        %v6624 = vpop.f32.mrf.mxu0
        %v6625 = vadd.f32 0.0, %v6624
        %v6626 = vpop.f32.mrf.mxu0
        %6627 = vmatprep.mubr.bf16.mxu0 0
        %6628 = vmatmul.mubr.bf16.gmra.mxu0 %v374
        %v6629 = vpop.f32.mrf.mxu0
        %v6630 = vadd.f32 0.0, %v6629
        %v6631 = vpop.f32.mrf.mxu0
        %v6632 = vpop.f32.mrf.mxu0
        %v6633 = vadd.f32 0.0, %v6632
        %v6634 = vpop.f32.mrf.mxu0
        %6635 = vmatprep.mubr.bf16.mxu0 0
        %6636 = vmatmul.mubr.bf16.gmra.mxu0 %v375
        %v6637 = vpop.f32.mrf.mxu0
        %v6638 = vadd.f32 0.0, %v6637
        %v6639 = vpop.f32.mrf.mxu0
        %v6640 = vpop.f32.mrf.mxu0
        %v6641 = vadd.f32 0.0, %v6640
        %v6642 = vpop.f32.mrf.mxu0
        %6643 = vmatprep.mubr.bf16.mxu0 0
        %6644 = vmatmul.mubr.bf16.gmra.mxu0 %v376
        %v6645 = vpop.f32.mrf.mxu0
        %v6646 = vadd.f32 0.0, %v6645
        %v6647 = vpop.f32.mrf.mxu0
        %v6648 = vpop.f32.mrf.mxu0
        %v6649 = vadd.f32 0.0, %v6648
        %v6650 = vpop.f32.mrf.mxu0
        %6651 = vmatprep.mubr.bf16.mxu0 0
        %6652 = vmatmul.mubr.bf16.gmra.mxu0 %v377
        %v6653 = vpop.f32.mrf.mxu0
        %v6654 = vadd.f32 0.0, %v6653
        %v6655 = vpop.f32.mrf.mxu0
        %v6656 = vpop.f32.mrf.mxu0
        %v6657 = vadd.f32 0.0, %v6656
        %v6658 = vpop.f32.mrf.mxu0
        %6659 = vmatprep.mubr.bf16.mxu0 0
        %6660 = vmatmul.mubr.bf16.gmra.mxu0 %v378
        %v6661 = vpop.f32.mrf.mxu0
        %v6662 = vadd.f32 0.0, %v6661
        %v6663 = vpop.f32.mrf.mxu0
        %v6664 = vpop.f32.mrf.mxu0
        %v6665 = vadd.f32 0.0, %v6664
        %v6666 = vpop.f32.mrf.mxu0
        %6667 = vmatprep.mubr.bf16.mxu0 0
        %6668 = vmatmul.mubr.bf16.gmra.mxu0 %v379
        %v6669 = vpop.f32.mrf.mxu0
        %v6670 = vadd.f32 0.0, %v6669
        %v6671 = vpop.f32.mrf.mxu0
        %v6672 = vpop.f32.mrf.mxu0
        %v6673 = vadd.f32 0.0, %v6672
        %v6674 = vpop.f32.mrf.mxu0
        %6675 = vmatprep.mubr.bf16.mxu0 0
        %6676 = vmatmul.mubr.bf16.gmra.mxu0 %v380
        %v6677 = vpop.f32.mrf.mxu0
        %v6678 = vadd.f32 0.0, %v6677
        %v6679 = vpop.f32.mrf.mxu0
        %v6680 = vpop.f32.mrf.mxu0
        %v6681 = vadd.f32 0.0, %v6680
        %v6682 = vpop.f32.mrf.mxu0
        %6683 = vmatprep.mubr.bf16.mxu0 0
        %6684 = vmatmul.mubr.bf16.gmra.mxu0 %v381
        %v6685 = vpop.f32.mrf.mxu0
        %v6686 = vadd.f32 0.0, %v6685
        %v6687 = vpop.f32.mrf.mxu0
        %v6688 = vpop.f32.mrf.mxu0
        %v6689 = vadd.f32 0.0, %v6688
        %v6690 = vpop.f32.mrf.mxu0
        %6691 = vdwg.mxu0
        %6692 = vxpose.xlu0.c.b16.start [1/8] %v6523, 128
        %6693 = vxpose.xlu0.c.b16.cont [2/8] %v6524, 128
        %6694 = vxpose.xlu0.c.b16.cont [3/8] %v6525, 128
        %6695 = vxpose.xlu0.c.b16.cont [4/8] %v6526, 128
        %6696 = vxpose.xlu0.c.b16.cont [5/8] %v6527, 128
        %6697 = vxpose.xlu0.c.b16.cont [6/8] %v6528, 128
        %6698 = vxpose.xlu0.c.b16.cont [7/8] %v6529, 128
        %6699 = vxpose.xlu0.c.b16.end [8/8] %v6530, 128
        %v6700 = vpop.trf.xlu0
        %v6701 = vpop.trf.xlu0
        %v6702 = vpop.trf.xlu0
        %v6703 = vpop.trf.xlu0
        %v6704 = vpop.trf.xlu0
        %v6705 = vpop.trf.xlu0
        %v6706 = vpop.trf.xlu0
        %v6707 = vpop.trf.xlu0
        %6708 = vmatprep.subr.bf16.mxu0 0
        %6709 = vmatpush1.bf16.msra.mxu0 %v6530
        %6710 = vmatprep.subr.bf16.mxu0 0
        %6711 = vmatpush1.bf16.msra.mxu0 %v6529
        %6712 = vmatprep.subr.bf16.mxu0 0
        %6713 = vmatpush1.bf16.msra.mxu0 %v6528
        %6714 = vmatprep.subr.bf16.mxu0 0
        %6715 = vmatpush1.bf16.msra.mxu0 %v6527
        %6716 = vmatprep.subr.bf16.mxu0 0
        %6717 = vmatpush1.bf16.msra.mxu0 %v6526
        %6718 = vmatprep.subr.bf16.mxu0 0
        %6719 = vmatpush1.bf16.msra.mxu0 %v6525
        %6720 = vmatprep.subr.bf16.mxu0 0
        %6721 = vmatpush1.bf16.msra.mxu0 %v6524
        %6722 = vmatprep.subr.bf16.mxu0 0
        %6723 = vmatpush1.bf16.msra.mxu0 %v6523
        %6724 = vmatprep.subr.bf16.mxu0 0
        %6725 = vmatpush2.bf16.msra.mxu0 0
        %6726 = vmatprep.subr.bf16.mxu0 0
        %6727 = vmatpush2.bf16.msra.mxu0 0
        %6728 = vmatprep.subr.bf16.mxu0 0
        %6729 = vmatpush2.bf16.msra.mxu0 0
        %6730 = vmatprep.subr.bf16.mxu0 0
        %6731 = vmatpush2.bf16.msra.mxu0 0
        %6732 = vmatprep.subr.bf16.mxu0 0
        %6733 = vmatpush2.bf16.msra.mxu0 0
        %6734 = vmatprep.subr.bf16.mxu0 0
        %6735 = vmatpush2.bf16.msra.mxu0 0
        %6736 = vmatprep.subr.bf16.mxu0 0
        %6737 = vmatpush2.bf16.msra.mxu0 0
        %6738 = vmatprep.subr.bf16.mxu0 0
        %6739 = vmatpush2.bf16.msra.mxu0 0
        %6740 = vmatprep.mubr.bf16.mxu0 0
        %6741 = vmatmul.mubr.bf16.gmra.mxu0 %v6700
        %v6742 = vpop.f32.mrf.mxu0
        %v6743 = vadd.f32 0.0, %v6742
        %v6744 = vpop.f32.mrf.mxu0
        %v6745 = vpop.f32.mrf.mxu0
        %v6746 = vadd.f32 0.0, %v6745
        %v6747 = vpop.f32.mrf.mxu0
        %6748 = vmatprep.mubr.bf16.mxu0 0
        %6749 = vmatmul.mubr.bf16.gmra.mxu0 %v6701
        %v6750 = vpop.f32.mrf.mxu0
        %v6751 = vadd.f32 0.0, %v6750
        %v6752 = vpop.f32.mrf.mxu0
        %v6753 = vpop.f32.mrf.mxu0
        %v6754 = vadd.f32 0.0, %v6753
        %v6755 = vpop.f32.mrf.mxu0
        %6756 = vmatprep.mubr.bf16.mxu0 0
        %6757 = vmatmul.mubr.bf16.gmra.mxu0 %v6702
        %v6758 = vpop.f32.mrf.mxu0
        %v6759 = vadd.f32 0.0, %v6758
        %v6760 = vpop.f32.mrf.mxu0
        %v6761 = vpop.f32.mrf.mxu0
        %v6762 = vadd.f32 0.0, %v6761
        %v6763 = vpop.f32.mrf.mxu0
        %6764 = vmatprep.mubr.bf16.mxu0 0
        %6765 = vmatmul.mubr.bf16.gmra.mxu0 %v6703
        %v6766 = vpop.f32.mrf.mxu0
        %v6767 = vadd.f32 0.0, %v6766
        %v6768 = vpop.f32.mrf.mxu0
        %v6769 = vpop.f32.mrf.mxu0
        %v6770 = vadd.f32 0.0, %v6769
        %v6771 = vpop.f32.mrf.mxu0
        %6772 = vdwg.mxu0
        %v6773 = vpack.c.bf16 %v6746, %v6743
        %v6774 = vpack.c.bf16 %v6754, %v6751
        %v6775 = vpack.c.bf16 %v6762, %v6759
        %v6776 = vpack.c.bf16 %v6770, %v6767
        %v6777 = vmul.f32 %v6108, %v6566
        %v6778 = vmul.f32 %v6109, %v6569
        %v6779 = vmul.f32 %v6110, %v6574
        %v6780 = vmul.f32 %v6111, %v6577
        %v6781 = vmul.f32 %v6112, %v6582
        %v6782 = vmul.f32 %v6113, %v6585
        %v6783 = vmul.f32 %v6114, %v6590
        %v6784 = vmul.f32 %v6115, %v6593
        %v6785 = vmul.f32 %v6116, %v6598
        %v6786 = vmul.f32 %v6117, %v6601
        %v6787 = vmul.f32 %v6118, %v6606
        %v6788 = vmul.f32 %v6119, %v6609
        %v6789 = vmul.f32 %v6120, %v6614
        %v6790 = vmul.f32 %v6121, %v6617
        %v6791 = vmul.f32 %v6122, %v6622
        %v6792 = vmul.f32 %v6123, %v6625
        %v6793 = vmul.f32 %v6124, %v6630
        %v6794 = vmul.f32 %v6125, %v6633
        %v6795 = vmul.f32 %v6126, %v6638
        %v6796 = vmul.f32 %v6127, %v6641
        %v6797 = vmul.f32 %v6128, %v6646
        %v6798 = vmul.f32 %v6129, %v6649
        %v6799 = vmul.f32 %v6130, %v6654
        %v6800 = vmul.f32 %v6131, %v6657
        %v6801 = vmul.f32 %v6132, %v6662
        %v6802 = vmul.f32 %v6133, %v6665
        %v6803 = vmul.f32 %v6134, %v6670
        %v6804 = vmul.f32 %v6135, %v6673
        %v6805 = vmul.f32 %v6136, %v6678
        %v6806 = vmul.f32 %v6137, %v6681
        %v6807 = vmul.f32 %v6138, %v6686
        %v6808 = vmul.f32 %v6139, %v6689
        %v6810 = vsel %vm559, %v6140, 0
        %v6813 = vsel %vm559, %v6141, 0
        %v6816 = vsel %vm559, %v6142, 0
        %v6819 = vsel %vm559, %v6143, 0
        %v6822 = vsel %vm559, %v6144, 0
        %v6825 = vsel %vm559, %v6145, 0
        %v6828 = vsel %vm559, %v6146, 0
        %v6831 = vsel %vm559, %v6147, 0
        %v6834 = vsel %vm559, %v6148, 0
        %v6837 = vsel %vm559, %v6149, 0
        %v6840 = vsel %vm559, %v6150, 0
        %v6843 = vsel %vm559, %v6151, 0
        %v6846 = vsel %vm559, %v6152, 0
        %v6849 = vsel %vm559, %v6153, 0
        %v6852 = vsel %vm559, %v6154, 0
        %v6855 = vsel %vm559, %v6155, 0
        %6857 = vmatprep.subr.bf16.mxu0 0
        %6858 = vmatpush1.bf16.msra.mxu0 0
        %6859 = vmatprep.subr.bf16.mxu0 0
        %6860 = vmatpush1.bf16.msra.mxu0 0
        %6861 = vmatprep.subr.bf16.mxu0 0
        %6862 = vmatpush1.bf16.msra.mxu0 0
        %6863 = vmatprep.subr.bf16.mxu0 0
        %6864 = vmatpush1.bf16.msra.mxu0 0
        %6865 = vmatprep.subr.bf16.mxu0 0
        %6866 = vmatpush1.bf16.msra.mxu0 %v6776
        %6867 = vmatprep.subr.bf16.mxu0 0
        %6868 = vmatpush1.bf16.msra.mxu0 %v6775
        %6869 = vmatprep.subr.bf16.mxu0 0
        %6870 = vmatpush1.bf16.msra.mxu0 %v6774
        %6871 = vmatprep.subr.bf16.mxu0 0
        %6872 = vmatpush1.bf16.msra.mxu0 %v6773
        %6873 = vmatprep.subr.bf16.mxu0 0
        %6874 = vmatpush2.bf16.msra.mxu0 0
        %6875 = vmatprep.subr.bf16.mxu0 0
        %6876 = vmatpush2.bf16.msra.mxu0 0
        %6877 = vmatprep.subr.bf16.mxu0 0
        %6878 = vmatpush2.bf16.msra.mxu0 0
        %6879 = vmatprep.subr.bf16.mxu0 0
        %6880 = vmatpush2.bf16.msra.mxu0 0
        %6881 = vmatprep.subr.bf16.mxu0 0
        %6882 = vmatpush2.bf16.msra.mxu0 0
        %6883 = vmatprep.subr.bf16.mxu0 0
        %6884 = vmatpush2.bf16.msra.mxu0 0
        %6885 = vmatprep.subr.bf16.mxu0 0
        %6886 = vmatpush2.bf16.msra.mxu0 0
        %6887 = vmatprep.subr.bf16.mxu0 0
        %6888 = vmatpush2.bf16.msra.mxu0 0
        %6889 = vmatprep.mubr.bf16.mxu0 0
        %6890 = vmatmul.mubr.bf16.gmra.mxu0 %v6810
        %v6891 = vpop.f32.mrf.mxu0
        %v6892 = vadd.f32 1e-06, %v6891
        %v6893 = vpop.f32.mrf.mxu0
        %v6894 = vpop.f32.mrf.mxu0
        %v6895 = vadd.f32 1e-06, %v6894
        %v6896 = vpop.f32.mrf.mxu0
        %6897 = vmatprep.mubr.bf16.mxu0 0
        %6898 = vmatmul.mubr.bf16.gmra.mxu0 %v6813
        %v6899 = vpop.f32.mrf.mxu0
        %v6900 = vadd.f32 1e-06, %v6899
        %v6901 = vpop.f32.mrf.mxu0
        %v6902 = vpop.f32.mrf.mxu0
        %v6903 = vadd.f32 1e-06, %v6902
        %v6904 = vpop.f32.mrf.mxu0
        %6905 = vmatprep.mubr.bf16.mxu0 0
        %6906 = vmatmul.mubr.bf16.gmra.mxu0 %v6816
        %v6907 = vpop.f32.mrf.mxu0
        %v6908 = vadd.f32 1e-06, %v6907
        %v6909 = vpop.f32.mrf.mxu0
        %v6910 = vpop.f32.mrf.mxu0
        %v6911 = vadd.f32 1e-06, %v6910
        %v6912 = vpop.f32.mrf.mxu0
        %6913 = vmatprep.mubr.bf16.mxu0 0
        %6914 = vmatmul.mubr.bf16.gmra.mxu0 %v6819
        %v6915 = vpop.f32.mrf.mxu0
        %v6916 = vadd.f32 1e-06, %v6915
        %v6917 = vpop.f32.mrf.mxu0
        %v6918 = vpop.f32.mrf.mxu0
        %v6919 = vadd.f32 1e-06, %v6918
        %v6920 = vpop.f32.mrf.mxu0
        %6921 = vmatprep.mubr.bf16.mxu0 0
        %6922 = vmatmul.mubr.bf16.gmra.mxu0 %v6822
        %v6923 = vpop.f32.mrf.mxu0
        %v6924 = vadd.f32 1e-06, %v6923
        %v6925 = vpop.f32.mrf.mxu0
        %v6926 = vpop.f32.mrf.mxu0
        %v6927 = vadd.f32 1e-06, %v6926
        %v6928 = vpop.f32.mrf.mxu0
        %6929 = vmatprep.mubr.bf16.mxu0 0
        %6930 = vmatmul.mubr.bf16.gmra.mxu0 %v6825
        %v6931 = vpop.f32.mrf.mxu0
        %v6932 = vadd.f32 1e-06, %v6931
        %v6933 = vpop.f32.mrf.mxu0
        %v6934 = vpop.f32.mrf.mxu0
        %v6935 = vadd.f32 1e-06, %v6934
        %v6936 = vpop.f32.mrf.mxu0
        %6937 = vmatprep.mubr.bf16.mxu0 0
        %6938 = vmatmul.mubr.bf16.gmra.mxu0 %v6828
        %v6939 = vpop.f32.mrf.mxu0
        %v6940 = vadd.f32 1e-06, %v6939
        %v6941 = vpop.f32.mrf.mxu0
        %v6942 = vpop.f32.mrf.mxu0
        %v6943 = vadd.f32 1e-06, %v6942
        %v6944 = vpop.f32.mrf.mxu0
        %6945 = vmatprep.mubr.bf16.mxu0 0
        %6946 = vmatmul.mubr.bf16.gmra.mxu0 %v6831
        %v6947 = vpop.f32.mrf.mxu0
        %v6948 = vadd.f32 1e-06, %v6947
        %v6949 = vpop.f32.mrf.mxu0
        %v6950 = vpop.f32.mrf.mxu0
        %v6951 = vadd.f32 1e-06, %v6950
        %v6952 = vpop.f32.mrf.mxu0
        %6953 = vmatprep.mubr.bf16.mxu0 0
        %6954 = vmatmul.mubr.bf16.gmra.mxu0 %v6834
        %v6955 = vpop.f32.mrf.mxu0
        %v6956 = vadd.f32 1e-06, %v6955
        %v6957 = vpop.f32.mrf.mxu0
        %v6958 = vpop.f32.mrf.mxu0
        %v6959 = vadd.f32 1e-06, %v6958
        %v6960 = vpop.f32.mrf.mxu0
        %6961 = vmatprep.mubr.bf16.mxu0 0
        %6962 = vmatmul.mubr.bf16.gmra.mxu0 %v6837
        %v6963 = vpop.f32.mrf.mxu0
        %v6964 = vadd.f32 1e-06, %v6963
        %v6965 = vpop.f32.mrf.mxu0
        %v6966 = vpop.f32.mrf.mxu0
        %v6967 = vadd.f32 1e-06, %v6966
        %v6968 = vpop.f32.mrf.mxu0
        %6969 = vmatprep.mubr.bf16.mxu0 0
        %6970 = vmatmul.mubr.bf16.gmra.mxu0 %v6840
        %v6971 = vpop.f32.mrf.mxu0
        %v6972 = vadd.f32 1e-06, %v6971
        %v6973 = vpop.f32.mrf.mxu0
        %v6974 = vpop.f32.mrf.mxu0
        %v6975 = vadd.f32 1e-06, %v6974
        %v6976 = vpop.f32.mrf.mxu0
        %6977 = vmatprep.mubr.bf16.mxu0 0
        %6978 = vmatmul.mubr.bf16.gmra.mxu0 %v6843
        %v6979 = vpop.f32.mrf.mxu0
        %v6980 = vadd.f32 1e-06, %v6979
        %v6981 = vpop.f32.mrf.mxu0
        %v6982 = vpop.f32.mrf.mxu0
        %v6983 = vadd.f32 1e-06, %v6982
        %v6984 = vpop.f32.mrf.mxu0
        %6985 = vmatprep.mubr.bf16.mxu0 0
        %6986 = vmatmul.mubr.bf16.gmra.mxu0 %v6846
        %v6987 = vpop.f32.mrf.mxu0
        %v6988 = vadd.f32 1e-06, %v6987
        %v6989 = vpop.f32.mrf.mxu0
        %v6990 = vpop.f32.mrf.mxu0
        %v6991 = vadd.f32 1e-06, %v6990
        %v6992 = vpop.f32.mrf.mxu0
        %6993 = vmatprep.mubr.bf16.mxu0 0
        %6994 = vmatmul.mubr.bf16.gmra.mxu0 %v6849
        %v6995 = vpop.f32.mrf.mxu0
        %v6996 = vadd.f32 1e-06, %v6995
        %v6997 = vpop.f32.mrf.mxu0
        %v6998 = vpop.f32.mrf.mxu0
        %v6999 = vadd.f32 1e-06, %v6998
        %v7000 = vpop.f32.mrf.mxu0
        %7001 = vmatprep.mubr.bf16.mxu0 0
        %7002 = vmatmul.mubr.bf16.gmra.mxu0 %v6852
        %v7003 = vpop.f32.mrf.mxu0
        %v7004 = vadd.f32 1e-06, %v7003
        %v7005 = vpop.f32.mrf.mxu0
        %v7006 = vpop.f32.mrf.mxu0
        %v7007 = vadd.f32 1e-06, %v7006
        %v7008 = vpop.f32.mrf.mxu0
        %7009 = vmatprep.mubr.bf16.mxu0 0
        %7010 = vmatmul.mubr.bf16.gmra.mxu0 %v6855
        %v7011 = vpop.f32.mrf.mxu0
        %v7012 = vadd.f32 1e-06, %v7011
        %v7013 = vpop.f32.mrf.mxu0
        %v7014 = vpop.f32.mrf.mxu0
        %v7015 = vadd.f32 1e-06, %v7014
        %v7016 = vpop.f32.mrf.mxu0
        %7017 = vdwg.mxu0
        %v7018 = vrcp.pop %v6892
        %v7019 = vmul.f32 %v6777, %v7018
        %v7020 = vrcp.pop %v6895
        %v7021 = vmul.f32 %v6778, %v7020
        %v7022 = vrcp.pop %v6900
        %v7023 = vmul.f32 %v6779, %v7022
        %v7024 = vrcp.pop %v6903
        %v7025 = vmul.f32 %v6780, %v7024
        %v7026 = vrcp.pop %v6908
        %v7027 = vmul.f32 %v6781, %v7026
        %v7028 = vrcp.pop %v6911
        %v7029 = vmul.f32 %v6782, %v7028
        %v7030 = vrcp.pop %v6916
        %v7031 = vmul.f32 %v6783, %v7030
        %v7032 = vrcp.pop %v6919
        %v7033 = vmul.f32 %v6784, %v7032
        %v7034 = vrcp.pop %v6924
        %v7035 = vmul.f32 %v6785, %v7034
        %v7036 = vrcp.pop %v6927
        %v7037 = vmul.f32 %v6786, %v7036
        %v7038 = vrcp.pop %v6932
        %v7039 = vmul.f32 %v6787, %v7038
        %v7040 = vrcp.pop %v6935
        %v7041 = vmul.f32 %v6788, %v7040
        %v7042 = vrcp.pop %v6940
        %v7043 = vmul.f32 %v6789, %v7042
        %v7044 = vrcp.pop %v6943
        %v7045 = vmul.f32 %v6790, %v7044
        %v7046 = vrcp.pop %v6948
        %v7047 = vmul.f32 %v6791, %v7046
        %v7048 = vrcp.pop %v6951
        %v7049 = vmul.f32 %v6792, %v7048
        %v7050 = vrcp.pop %v6956
        %v7051 = vmul.f32 %v6793, %v7050
        %v7052 = vrcp.pop %v6959
        %v7053 = vmul.f32 %v6794, %v7052
        %v7054 = vrcp.pop %v6964
        %v7055 = vmul.f32 %v6795, %v7054
        %v7056 = vrcp.pop %v6967
        %v7057 = vmul.f32 %v6796, %v7056
        %v7058 = vrcp.pop %v6972
        %v7059 = vmul.f32 %v6797, %v7058
        %v7060 = vrcp.pop %v6975
        %v7061 = vmul.f32 %v6798, %v7060
        %v7062 = vrcp.pop %v6980
        %v7063 = vmul.f32 %v6799, %v7062
        %v7064 = vrcp.pop %v6983
        %v7065 = vmul.f32 %v6800, %v7064
        %v7066 = vrcp.pop %v6988
        %v7067 = vmul.f32 %v6801, %v7066
        %v7068 = vrcp.pop %v6991
        %v7069 = vmul.f32 %v6802, %v7068
        %v7070 = vrcp.pop %v6996
        %v7071 = vmul.f32 %v6803, %v7070
        %v7072 = vrcp.pop %v6999
        %v7073 = vmul.f32 %v6804, %v7072
        %v7074 = vrcp.pop %v7004
        %v7075 = vmul.f32 %v6805, %v7074
        %v7076 = vrcp.pop %v7007
        %v7077 = vmul.f32 %v6806, %v7076
        %v7078 = vrcp.pop %v7012
        %v7079 = vmul.f32 %v6807, %v7078
        %v7080 = vrcp.pop %v7015
        %v7081 = vmul.f32 %v6808, %v7080
        %v7082 = vpack.c.bf16 %v7021, %v7019
        %v7083 = vpack.c.bf16 %v7025, %v7023
        %v7084 = vpack.c.bf16 %v7029, %v7027
        %v7085 = vpack.c.bf16 %v7033, %v7031
        %v7086 = vpack.c.bf16 %v7037, %v7035
        %v7087 = vpack.c.bf16 %v7041, %v7039
        %v7088 = vpack.c.bf16 %v7045, %v7043
        %v7089 = vpack.c.bf16 %v7049, %v7047
        %v7090 = vpack.c.bf16 %v7053, %v7051
        %v7091 = vpack.c.bf16 %v7057, %v7055
        %v7092 = vpack.c.bf16 %v7061, %v7059
        %v7093 = vpack.c.bf16 %v7065, %v7063
        %v7094 = vpack.c.bf16 %v7069, %v7067
        %v7095 = vpack.c.bf16 %v7073, %v7071
        %v7096 = vpack.c.bf16 %v7077, %v7075
        %v7097 = vpack.c.bf16 %v7081, %v7079
        %v7099 = vsel %vm559, %v6523, 0
        %v7102 = vsel %vm559, %v6524, 0
        %v7105 = vsel %vm559, %v6525, 0
        %v7108 = vsel %vm559, %v6526, 0
        %v7111 = vsel %vm559, %v6527, 0
        %v7114 = vsel %vm559, %v6528, 0
        %v7117 = vsel %vm559, %v6529, 0
        %v7120 = vsel %vm559, %v6530, 0
        %v7123 = vsel %vm559, %v7082, 0
        %v7126 = vsel %vm559, %v7083, 0
        %v7129 = vsel %vm559, %v7084, 0
        %v7132 = vsel %vm559, %v7085, 0
        %v7135 = vsel %vm559, %v7086, 0
        %v7138 = vsel %vm559, %v7087, 0
        %v7141 = vsel %vm559, %v7088, 0
        %v7144 = vsel %vm559, %v7089, 0
        %v7147 = vsel %vm559, %v7090, 0
        %v7150 = vsel %vm559, %v7091, 0
        %v7153 = vsel %vm559, %v7092, 0
        %v7156 = vsel %vm559, %v7093, 0
        %v7159 = vsel %vm559, %v7094, 0
        %v7162 = vsel %vm559, %v7095, 0
        %v7165 = vsel %vm559, %v7096, 0
        %v7168 = vsel %vm559, %v7097, 0
        %7170 = vmatprep.subr.bf16.mxu0 0
        %7171 = vmatpush1.bf16.xpose.msra.mxu0 %v7144
        %7172 = vmatprep.subr.bf16.mxu0 0
        %7173 = vmatpush1.bf16.xpose.msra.mxu0 %v7141
        %7174 = vmatprep.subr.bf16.mxu0 0
        %7175 = vmatpush1.bf16.xpose.msra.mxu0 %v7138
        %7176 = vmatprep.subr.bf16.mxu0 0
        %7177 = vmatpush1.bf16.xpose.msra.mxu0 %v7135
        %7178 = vmatprep.subr.bf16.mxu0 0
        %7179 = vmatpush1.bf16.xpose.msra.mxu0 %v7132
        %7180 = vmatprep.subr.bf16.mxu0 0
        %7181 = vmatpush1.bf16.xpose.msra.mxu0 %v7129
        %7182 = vmatprep.subr.bf16.mxu0 0
        %7183 = vmatpush1.bf16.xpose.msra.mxu0 %v7126
        %7184 = vmatprep.subr.bf16.mxu0 0
        %7185 = vmatpush1.bf16.xpose.msra.mxu0 %v7123
        %7186 = vmatprep.subr.bf16.mxu0 0
        %7187 = vmatpush2.bf16.xpose.msra.mxu0 %v7168
        %7188 = vmatprep.subr.bf16.mxu0 0
        %7189 = vmatpush2.bf16.xpose.msra.mxu0 %v7165
        %7190 = vmatprep.subr.bf16.mxu0 0
        %7191 = vmatpush2.bf16.xpose.msra.mxu0 %v7162
        %7192 = vmatprep.subr.bf16.mxu0 0
        %7193 = vmatpush2.bf16.xpose.msra.mxu0 %v7159
        %7194 = vmatprep.subr.bf16.mxu0 0
        %7195 = vmatpush2.bf16.xpose.msra.mxu0 %v7156
        %7196 = vmatprep.subr.bf16.mxu0 0
        %7197 = vmatpush2.bf16.xpose.msra.mxu0 %v7153
        %7198 = vmatprep.subr.bf16.mxu0 0
        %7199 = vmatpush2.bf16.xpose.msra.mxu0 %v7150
        %7200 = vmatprep.subr.bf16.mxu0 0
        %7201 = vmatpush2.bf16.xpose.msra.mxu0 %v7147
        %7202 = vmatprep.mubr.bf16.mxu0 0
        %7203 = vmatmul.mubr.bf16.gmra.mxu0 %v7099
        %v7204 = vpop.f32.mrf.mxu0
        %v7205 = vadd.f32 0.0, %v7204
        %v7206 = vpop.f32.mrf.mxu0
        %v7207 = vadd.f32 0.0, %v7206
        %v7208 = vpop.f32.mrf.mxu0
        %v7209 = vadd.f32 0.0, %v7208
        %v7210 = vpop.f32.mrf.mxu0
        %v7211 = vadd.f32 0.0, %v7210
        %7212 = vmatprep.mubr.bf16.mxu0 0
        %7213 = vmatmul.mubr.bf16.gmra.mxu0 %v7102
        %v7214 = vpop.f32.mrf.mxu0
        %v7215 = vadd.f32 0.0, %v7214
        %v7216 = vpop.f32.mrf.mxu0
        %v7217 = vadd.f32 0.0, %v7216
        %v7218 = vpop.f32.mrf.mxu0
        %v7219 = vadd.f32 0.0, %v7218
        %v7220 = vpop.f32.mrf.mxu0
        %v7221 = vadd.f32 0.0, %v7220
        %7222 = vmatprep.mubr.bf16.mxu0 0
        %7223 = vmatmul.mubr.bf16.gmra.mxu0 %v7105
        %v7224 = vpop.f32.mrf.mxu0
        %v7225 = vadd.f32 0.0, %v7224
        %v7226 = vpop.f32.mrf.mxu0
        %v7227 = vadd.f32 0.0, %v7226
        %v7228 = vpop.f32.mrf.mxu0
        %v7229 = vadd.f32 0.0, %v7228
        %v7230 = vpop.f32.mrf.mxu0
        %v7231 = vadd.f32 0.0, %v7230
        %7232 = vmatprep.mubr.bf16.mxu0 0
        %7233 = vmatmul.mubr.bf16.gmra.mxu0 %v7108
        %v7234 = vpop.f32.mrf.mxu0
        %v7235 = vadd.f32 0.0, %v7234
        %v7236 = vpop.f32.mrf.mxu0
        %v7237 = vadd.f32 0.0, %v7236
        %v7238 = vpop.f32.mrf.mxu0
        %v7239 = vadd.f32 0.0, %v7238
        %v7240 = vpop.f32.mrf.mxu0
        %v7241 = vadd.f32 0.0, %v7240
        %7242 = vmatprep.mubr.bf16.mxu0 0
        %7243 = vmatmul.mubr.bf16.gmra.mxu0 %v7111
        %v7244 = vpop.f32.mrf.mxu0
        %v7245 = vadd.f32 0.0, %v7244
        %v7246 = vpop.f32.mrf.mxu0
        %v7247 = vadd.f32 0.0, %v7246
        %v7248 = vpop.f32.mrf.mxu0
        %v7249 = vadd.f32 0.0, %v7248
        %v7250 = vpop.f32.mrf.mxu0
        %v7251 = vadd.f32 0.0, %v7250
        %7252 = vmatprep.mubr.bf16.mxu0 0
        %7253 = vmatmul.mubr.bf16.gmra.mxu0 %v7114
        %v7254 = vpop.f32.mrf.mxu0
        %v7255 = vadd.f32 0.0, %v7254
        %v7256 = vpop.f32.mrf.mxu0
        %v7257 = vadd.f32 0.0, %v7256
        %v7258 = vpop.f32.mrf.mxu0
        %v7259 = vadd.f32 0.0, %v7258
        %v7260 = vpop.f32.mrf.mxu0
        %v7261 = vadd.f32 0.0, %v7260
        %7262 = vmatprep.mubr.bf16.mxu0 0
        %7263 = vmatmul.mubr.bf16.gmra.mxu0 %v7117
        %v7264 = vpop.f32.mrf.mxu0
        %v7265 = vadd.f32 0.0, %v7264
        %v7266 = vpop.f32.mrf.mxu0
        %v7267 = vadd.f32 0.0, %v7266
        %v7268 = vpop.f32.mrf.mxu0
        %v7269 = vadd.f32 0.0, %v7268
        %v7270 = vpop.f32.mrf.mxu0
        %v7271 = vadd.f32 0.0, %v7270
        %7272 = vmatprep.mubr.bf16.mxu0 0
        %7273 = vmatmul.mubr.bf16.gmra.mxu0 %v7120
        %v7274 = vpop.f32.mrf.mxu0
        %v7275 = vadd.f32 0.0, %v7274
        %v7276 = vpop.f32.mrf.mxu0
        %v7277 = vadd.f32 0.0, %v7276
        %v7278 = vpop.f32.mrf.mxu0
        %v7279 = vadd.f32 0.0, %v7278
        %v7280 = vpop.f32.mrf.mxu0
        %v7281 = vadd.f32 0.0, %v7280
        %7282 = vdwg.mxu0
        %7283 = vst [vmem:[%s218] sm:$0xff] %v7205
        %7284 = vst [vmem:[%s218 + $0x8] sm:$0xff] %v7207
        %7285 = vst [vmem:[%s218 + $0x10] sm:$0xff] %v7209
        %7286 = vst [vmem:[%s218 + $0x18] sm:$0xff] %v7211
        %7287 = vst [vmem:[%s218 + $0x20] sm:$0xff] %v7215
        %7288 = vst [vmem:[%s218 + $0x28] sm:$0xff] %v7217
        %7289 = vst [vmem:[%s218 + $0x30] sm:$0xff] %v7219
        %7290 = vst [vmem:[%s218 + $0x38] sm:$0xff] %v7221
        %7291 = vst [vmem:[%s218 + $0x40] sm:$0xff] %v7225
        %7292 = vst [vmem:[%s218 + $0x48] sm:$0xff] %v7227
        %7293 = vst [vmem:[%s218 + $0x50] sm:$0xff] %v7229
        %7294 = vst [vmem:[%s218 + $0x58] sm:$0xff] %v7231
        %7295 = vst [vmem:[%s218 + $0x60] sm:$0xff] %v7235
        %7296 = vst [vmem:[%s218 + $0x68] sm:$0xff] %v7237
        %7297 = vst [vmem:[%s218 + $0x70] sm:$0xff] %v7239
        %7298 = vst [vmem:[%s218 + $0x78] sm:$0xff] %v7241
        %7299 = vst [vmem:[%s218 + $0x80] sm:$0xff] %v7245
        %7300 = vst [vmem:[%s218 + $0x88] sm:$0xff] %v7247
        %7301 = vst [vmem:[%s218 + $0x90] sm:$0xff] %v7249
        %7302 = vst [vmem:[%s218 + $0x98] sm:$0xff] %v7251
        %7303 = vst [vmem:[%s218 + $0xa0] sm:$0xff] %v7255
        %7304 = vst [vmem:[%s218 + $0xa8] sm:$0xff] %v7257
        %7305 = vst [vmem:[%s218 + $0xb0] sm:$0xff] %v7259
        %7306 = vst [vmem:[%s218 + $0xb8] sm:$0xff] %v7261
        %7307 = vst [vmem:[%s218 + $0xc0] sm:$0xff] %v7265
        %7308 = vst [vmem:[%s218 + $0xc8] sm:$0xff] %v7267
        %7309 = vst [vmem:[%s218 + $0xd0] sm:$0xff] %v7269
        %7310 = vst [vmem:[%s218 + $0xd8] sm:$0xff] %v7271
        %7311 = vst [vmem:[%s218 + $0xe0] sm:$0xff] %v7275
        %7312 = vst [vmem:[%s218 + $0xe8] sm:$0xff] %v7277
        %7313 = vst [vmem:[%s218 + $0xf0] sm:$0xff] %v7279
        %7314 = vst [vmem:[%s218 + $0xf8] sm:$0xff] %v7281
        %s7315 = sand.u32 %s106, 1
        %s7316 = scalar_lea.sflag [#allocation4], %s7315
        %s7317 = sand.u32 %s106, 1
        %s7318 = smul.addr %s7317, 256
        %s7319 = scalar_lea.vmem [#allocation5], %s7318
        // Predicated region
        $region37: #{tpu_custom_call.1} parent=31 // pred_check
          %p7320 = pneg %p116
        $region38: #{tpu_custom_call.1} parent=31 // pred_check_branch
          %7322 = sbr.rel (%p7320) target = $region40
        $region39: #{tpu_custom_call.1} parent=31 // pred_region
          %s7324 = ssub.s32 4096, 4096
          %7325 = vsyncadd %s7316, %s7324
          %s7326 = smul.addr %s20, 32
          %s7327 = smul.addr %s7326, 128
          %s7328 = scalar_lea.hbm %s3, %s7327
          %s7329 = sshll.u32 %s7319, 4
          %s7330 = int_to_ptr.vmem [resolvable:$true] %s7329
          %7335 = dma.vmem_to_hbm [thread:$0]  %s7330, 4096, %s7328, %s7316, 256, 256, 16
        $region40: #{tpu_custom_call.1} parent=31 // pred_fallthru
          _
      $region32: #{tpu_custom_call.1} parent=5 // pred_fallthru
        _
      %p7336 = scmp.le.s32.totalorder 2, %s15
      // Predicated region
      $region41: #{tpu_custom_call.1} parent=5 // pred_check
        %p7337 = pneg %p7336
      $region42: #{tpu_custom_call.1} parent=5 // pred_check_branch
        %7339 = sbr.rel (%p7337) target = $region44
      $region43: #{tpu_custom_call.1} parent=5 // pred_region
        %s7340 = ssub.s32 %s15, 2
        // Predicated region
        $region45: #{tpu_custom_call.1} parent=43 // pred_check
          %p7341 = pneg %p122
        $region46: #{tpu_custom_call.1} parent=43 // pred_check_branch
          %7343 = sbr.rel (%p7341) target = $region48
        $region47: #{tpu_custom_call.1} parent=43 // pred_region
          %s7344 = sand.u32 %s107, 1
          %s7345 = scalar_lea.sflag [#allocation4], %s7344
          %s7346 = sand.u32 %s107, 1
          %s7347 = smul.addr %s7346, 256
          %s7348 = scalar_lea.vmem [#allocation5], %s7347
          %7349 = dma.done %s7345, 4096
        $region48: #{tpu_custom_call.1} parent=43 // pred_fallthru
          _
      $region44: #{tpu_custom_call.1} parent=5 // pred_fallthru
        _
    $region6: #{tpu_custom_call.1} parent=1 // loop_footer
      %s19 = sadd.s32 1, %s15
    $region7: #{tpu_custom_call.1} parent=1 // loop_footer_branch
      %14 = sbr.rel target = $region3
    $region8: #{tpu_custom_call.1} parent=1 // loop_exit
      _
    %7350 = vsyncpa [#allocation3], 1
    %s7351 = scalar_lea.sflag [#allocation3], 1
    %7352 = vsyncpa %s7351, 1
    %7353 = vsyncpa [#allocation4], 1
    %s7354 = scalar_lea.sflag [#allocation4], 1
    %7355 = vsyncpa %s7354, 1

</llo_original>
